<compile_context>
chip_gen: v7x
topology: tpu7x:2x2x1
jax: 0.10.0
libtpu: 0.0.40
codegen_flags: <defaults>
</compile_context>

<pallas_src>
import functools

import numpy as np
import jax
import jax.numpy as jnp
from jax.experimental import pallas as pl
from jax.experimental.pallas import tpu as pltpu


# =============================================================================
# Kernel 1: two depthwise 3x3x3 Conv3d (+bias) + folded BatchNorm3d (eval) +
#           LeakyReLU(0.1) on a halo-padded, flattened, lane-dense voxel grid
#           (C, L), L = round_up((R+2)^3, 128).
#
# The 1-voxel halo of the flattened grid *is* the conv zero padding (the
# voxelization scatter only writes interior cells).  Every tap is a pltpu.roll
# of the full lane-dense slab; interior outputs never wrap (|off| <= P^2+P+1
# is absorbed by the halo).  Between the two conv layers the halo is re-zeroed
# with a precomputed interior mask.  The per-channel BN scales are folded into
# the tap weights at init, so only the shift add remains in the epilogue.
# =============================================================================
def _conv3ds_kernel(x_ref, w1_ref, t1_ref, w2_ref, t2_ref, mask_ref, out_ref,
                    *, P):
    L = x_ref.shape[-1]
    x = x_ref[...]                 # (C, L)
    w1 = w1_ref[...]               # (C, 27)  BN scale already folded in
    w2 = w2_ref[...]               # (C, 27)
    mask = mask_ref[...]           # (1, L)   1.0 on interior cells, 0.0 on halo

    def dwconv(v, w):
        acc = None
        for kd in range(3):
            for kh in range(3):
                for kw in range(3):
                    t = (kd * 3 + kh) * 3 + kw
                    off = (kd - 1) * P * P + (kh - 1) * P + (kw - 1)
                    # out[:, i] needs v[:, i + off]  ->  roll by (-off) mod L
                    tap = v if off == 0 else pltpu.roll(v, (-off) % L, 1)
                    term = tap * w[:, t:t + 1]
                    acc = term if acc is None else acc + term
        return acc

    # layer 1: depthwise conv (scale folded) -> shift -> LeakyReLU(0.1)
    y1 = dwconv(x, w1) + t1_ref[...]
    y1 = jnp.maximum(y1, 0.1 * y1)
    y1 = y1 * mask                 # re-zero halo == zero padding for layer 2

    # layer 2
    y2 = dwconv(y1, w2) + t2_ref[...]
    out_ref[...] = jnp.maximum(y2, 0.1 * y2)


def _interior_mask(R, L):
    P = R + 2
    m = np.zeros((P, P, P), np.float32)
    m[1:P - 1, 1:P - 1, 1:P - 1] = 1.0
    flat = np.zeros((1, L), np.float32)
    flat[0, :P ** 3] = m.reshape(-1)
    return jnp.asarray(flat)


def conv3ds_pallas(vox_flat, params, R):
    B, C, L = vox_flat.shape
    P = R + 2
    mask = _interior_mask(R, L)
    kern = functools.partial(_conv3ds_kernel, P=P)
    flops = B * 2 * 27 * 2 * C * L
    bytes_acc = 4 * (2 * B * C * L + 2 * C * 27 + 2 * C + L)
    return pl.pallas_call(
        kern,
        out_shape=jax.ShapeDtypeStruct((B, C, L), jnp.float32),
        grid=(B,),
        in_specs=[
            pl.BlockSpec((None, C, L), lambda b: (b, 0, 0)),
            pl.BlockSpec((C, 27), lambda b: (0, 0)),
            pl.BlockSpec((C, 1), lambda b: (0, 0)),
            pl.BlockSpec((C, 27), lambda b: (0, 0)),
            pl.BlockSpec((C, 1), lambda b: (0, 0)),
            pl.BlockSpec((1, L), lambda b: (0, 0)),
        ],
        out_specs=pl.BlockSpec((None, C, L), lambda b: (b, 0, 0)),
        # batch axis fully independent -> both v7x TensorCores can take it
        compiler_params=pltpu.CompilerParams(
            dimension_semantics=("parallel",),
            vmem_limit_bytes=64 * 1024 * 1024),
        cost_estimate=pl.CostEstimate(flops=flops, transcendentals=0,
                                      bytes_accessed=bytes_acc),
    )(vox_flat, params['w3d1f'], params['t1'][:, None],
      params['w3d2f'], params['t2'][:, None], mask)


# =============================================================================
# Kernel 2 (channel-major): neighbor gather + projection + weighting + BN/ReLU
#           + max over K + add of the devoxelized voxel branch.
#
#   xcat = [x ; xyz]                    (C+3, N)  gather source (fused gather)
#   xj   = xcat @ onehot                (C+3, M)  M = K*TN, columns k-major
#   G    = Wpre @ xj                    (6, M)    rows 0-2: xyz_j, rows 3-5:
#                                                  W1f @ x_j (proj_conv fold)
#   per K-slab:  g  = G_k - (Wpre@xci - tpre)     = [dp1 ; W1f@df + t3]
#                win = max(g, g*mtop)             (pass dp1 / ReLU h)
#                w  = Wstack @ win                (3->3 conv o repeat fused)
#                y  = ReLU(x_j * w * sC + tC)
#                p_p = max(p_p, y)
#   out  = p_p + p_v_x                             (C, TN), lane-dense store
#
# grid = (B, N // TN): both axes independent -> "parallel".
# NOTE: any idx outside [0, N) would gather an all-zero row; production KNN
# padding values (e.g. -1 / N) must be masked upstream.
# =============================================================================
def _group_agg_kernel(xcat_ref, xci_ref, idxf_ref, pvx_ref,
                      wpre_ref, tpre_ref, mtop_ref, wstk_ref, sc_ref, tc_ref,
                      out_ref, *, n_chunk):
    Cp3, N = xcat_ref.shape
    C = Cp3 - 3
    M = idxf_ref.shape[-1]
    TN = xci_ref.shape[-1]
    K = M // TN

    idx_row = idxf_ref[...]          # (1, M) int32, k-major flattened neighbors
    xci = xci_ref[...]               # (C+3, TN) centers: [x_i ; xyz_i]

    # fused neighbor gather: ONE one-hot matmul pulls x_j and xyz_j together.
    # The contraction (N) axis is chunked to bound the one-hot working set.
    xj = None
    for c0 in range(0, N, n_chunk):
        nc = min(n_chunk, N - c0)
        iota = jax.lax.broadcasted_iota(jnp.int32, (nc, M), 0) + c0
        oh = (iota == idx_row).astype(jnp.float32)             # (nc, M)
        part = jnp.dot(xcat_ref[:, c0:c0 + nc], oh,
                       preferred_element_type=jnp.float32)     # (C+3, M)
        xj = part if xj is None else xj + part

    wpre = wpre_ref[...]             # (6, C+3)
    tpre = tpre_ref[...]             # (6, 1)
    mtop = mtop_ref[...]             # (6, 1)   1 = pass-through, 0 = ReLU row
    wstk = wstk_ref[...]             # (C, 6)
    sc = sc_ref[...]                 # (C, 1)
    tc = tc_ref[...]                 # (C, 1)

    # one wide projection pass over all M columns; per-slab work is tiny.
    G = jnp.dot(wpre, xj, preferred_element_type=jnp.float32)         # (6, M)
    gci = jnp.dot(wpre, xci, preferred_element_type=jnp.float32) - tpre  # (6,TN)

    p_p = None
    for k in range(K):
        sl = slice(k * TN, (k + 1) * TN)
        g = G[:, sl] - gci                           # [dp1 ; W1f@df + t3]
        win = jnp.maximum(g, g * mtop)               # rows 0-2 pass, 3-5 ReLU
        w = jnp.dot(wstk, win, preferred_element_type=jnp.float32)    # (C, TN)
        y = jnp.maximum(xj[:C, sl] * w * sc + tc, 0.0)
        p_p = y if p_p is None else jnp.maximum(p_p, y)

    out_ref[...] = p_p + pvx_ref[...]                # agg_way == 'add'


def group_agg_pallas(x, xyz, idx, pvx, params, tile_n=None, n_chunk=512):
    B, C, N = x.shape
    K = idx.shape[-1]
    TN = N if tile_n is None else min(tile_n, N)
    assert N % TN == 0
    assert TN == N or TN % 128 == 0, "tile_n must be a multiple of 128"
    T = N // TN
    M = K * TN
    nck = N if (N <= n_chunk or N % n_chunk != 0) else n_chunk

    # gather source: x and xyz concatenated channel-wise -> single one-hot dot.
    xcat = jnp.concatenate([x, xyz], axis=1)                       # (B, C+3, N)
    # neighbor indices, k-major-flattened per N-tile: column m = k*TN + t.
    idx_f = (idx.astype(jnp.int32)
             .reshape(B, T, TN, K).transpose(0, 1, 3, 2).reshape(B, T, M))

    Cp3 = C + 3
    kern = functools.partial(_group_agg_kernel, n_chunk=nck)
    flops = B * T * (2 * Cp3 * N * M + 2 * 6 * Cp3 * M
                     + 2 * C * 6 * M + 6 * C * M)
    bytes_acc = (B * T * 4 * (Cp3 * N + Cp3 * TN + M + 2 * C * TN)
                 + 4 * (6 * Cp3 + 12 + 6 * C + 2 * C))
    return pl.pallas_call(
        kern,
        out_shape=jax.ShapeDtypeStruct((B, C, N), jnp.float32),
        grid=(B, T),
        in_specs=[
            pl.BlockSpec((None, Cp3, N), lambda b, t: (b, 0, 0)),   # gather src
            pl.BlockSpec((None, Cp3, TN), lambda b, t: (b, 0, t)),  # centers
            pl.BlockSpec((None, 1, M), lambda b, t: (b, t, 0)),     # neighbors
            pl.BlockSpec((None, C, TN), lambda b, t: (b, 0, t)),    # voxel branch
            pl.BlockSpec((6, Cp3), lambda b, t: (0, 0)),
            pl.BlockSpec((6, 1), lambda b, t: (0, 0)),
            pl.BlockSpec((6, 1), lambda b, t: (0, 0)),
            pl.BlockSpec((C, 6), lambda b, t: (0, 0)),
            pl.BlockSpec((C, 1), lambda b, t: (0, 0)),
            pl.BlockSpec((C, 1), lambda b, t: (0, 0)),
        ],
        out_specs=pl.BlockSpec((None, C, TN), lambda b, t: (b, 0, t)),
        compiler_params=pltpu.CompilerParams(
            dimension_semantics=("parallel", "parallel"),
            vmem_limit_bytes=64 * 1024 * 1024),
        cost_estimate=pl.CostEstimate(flops=flops, transcendentals=0,
                                      bytes_accessed=bytes_acc),
    )(xcat, xcat, idx_f, pvx,
      params['Wpre'], params['tpre'][:, None], params['mtop'][:, None],
      params['Wstack'], params['sC'][:, None], params['tC'][:, None])


# -----------------------------------------------------------------------------
# Plain-JAX glue: scatter-average voxelization and trilinear devoxelization
# (data-dependent scatter/gather).  Parameterized by strides/offset so the
# Pallas path can use the halo-padded flat layout directly.
# -----------------------------------------------------------------------------
def _voxelize(x, xyz, R, strides, offset, num_cells):
    # PVCNN avg_voxelize semantics (normalize=False, eps=0); torch.round used.
    B, C, N = x.shape
    norm = xyz - xyz.mean(axis=2, keepdims=True)
    norm = (norm + 1.0) / 2.0
    norm = jnp.clip(norm * R, 0.0, R - 1)
    vc = jnp.round(norm).astype(jnp.int32)
    flat = (vc[:, 0] * strides[0] + vc[:, 1] * strides[1]
            + vc[:, 2] * strides[2] + offset)                  # (B, N)

    def per_batch(xb, fb):
        cnt = jnp.zeros((num_cells,), x.dtype).at[fb].add(1.0)
        sums = jnp.zeros((C, num_cells), x.dtype).at[:, fb].add(xb)
        return sums / jnp.maximum(cnt, 1.0)[None, :]

    vox = jax.vmap(per_batch)(x, flat)                         # (B, C, num_cells)
    return vox, norm


def _devoxelize(feat, coords, strides, offset):
    # trilinear interpolation at coords in [0, R-1]; feat is (B, C, cells)
    def axis_terms(v):
        lo = jnp.floor(v)
        frac = v - lo
        lo_i = lo.astype(jnp.int32)
        hi_i = lo_i + (frac > 0).astype(jnp.int32)
        return lo_i, hi_i, 1.0 - frac, frac

    xl, xh, wx0, wx1 = axis_terms(coords[:, 0])
    yl, yh, wy0, wy1 = axis_terms(coords[:, 1])
    zl, zh, wz0, wz1 = axis_terms(coords[:, 2])
    gather = jax.vmap(lambda fb, ib: fb[:, ib])
    out = 0.0
    for xi_, wx in ((xl, wx0), (xh, wx1)):
        for yi_, wy in ((yl, wy0), (yh, wy1)):
            for zi_, wz in ((zl, wz0), (zh, wz1)):
                cell = (xi_ * strides[0] + yi_ * strides[1]
                        + zi_ * strides[2] + offset)
                out = out + gather(feat, cell) * (wx * wy * wz)[:, None, :]
    return out


# -----------------------------------------------------------------------------
# Full PVB forward (Pallas path)
# -----------------------------------------------------------------------------
def pvb_forward(x, xyz, idx, params, resolution, tile_n=None):
    B, C, N = x.shape
    R = resolution
    P = R + 2
    L = ((P ** 3 + 127) // 128) * 128
    pstrides = (P * P, P, 1)
    poffset = P * P + P + 1          # (+1, +1, +1) halo shift

    # 1) voxelize straight into the halo-padded, lane-dense flat layout
    vox_flat, norm = _voxelize(x, xyz, R, pstrides, poffset, L)   # (B,C,L), (B,3,N)

    # 2) depthwise Conv3d x2 + BN + LeakyReLU  (Pallas)
    conv_flat = conv3ds_pallas(vox_flat, params, R)               # (B, C, L)

    # 3) trilinear devoxelize (reads interior cells only)
    p_v_x = _devoxelize(conv_flat, norm, pstrides, poffset)       # (B, C, N)

    # 4/5) neighbor projection / weighting / pooling / aggregation (Pallas,
    #      channel-major in and out, gather fused in-kernel)
    return group_agg_pallas(x, xyz, idx, p_v_x, params, tile_n=tile_n)


# -----------------------------------------------------------------------------
# Pure-JAX reference (standard layouts, unfused weights)
# -----------------------------------------------------------------------------
def pvb_forward_ref(x, xyz, idx, params, resolution):
    B, C, N = x.shape
    R = resolution
    vox_flat, norm = _voxelize(x, xyz, R, (R * R, R, 1), 0, R ** 3)
    vox = vox_flat.reshape(B, C, R, R, R)

    def dw(v, w):
        vp = jnp.pad(v, ((0, 0), (0, 0), (1, 1), (1, 1), (1, 1)))
        acc = 0.0
        for kd in range(3):
            for kh in range(3):
                for kw in range(3):
                    t = (kd * 3 + kh) * 3 + kw
                    acc = acc + (vp[:, :, kd:kd + R, kh:kh + R, kw:kw + R]
                                 * w[:, t][None, :, None, None, None])
        return acc

    bc = lambda v: v[None, :, None, None, None]
    y = dw(vox, params['w3d1']) * bc(params['s1']) + bc(params['t1'])
    y = jnp.maximum(y, 0.1 * y)
    y = dw(y, params['w3d2']) * bc(params['s2']) + bc(params['t2'])
    conv = jnp.maximum(y, 0.1 * y)

    p_v_x = _devoxelize(conv.reshape(B, C, R ** 3), norm, (R * R, R, 1), 0)

    x_cl = jnp.transpose(x, (0, 2, 1))
    xyz_cl = jnp.transpose(xyz, (0, 2, 1))
    gather = jax.vmap(lambda a, i: a[i])
    x_j = gather(x_cl, idx)                     # (B, N, K, C)
    xyz_j = gather(xyz_cl, idx)                 # (B, N, K, 3)
    df = x_j - x_cl[:, :, None, :]
    dp1 = xyz_j - xyz_cl[:, :, None, :]
    h = jnp.maximum(jnp.einsum('bnkc,cp->bnkp', df, params['w1f'])
                    + params['t3'], 0.0)
    dp2 = jnp.einsum('bnkp,pq->bnkq', h, params['w2t'])
    wgt = (jnp.einsum('bnkp,pc->bnkc', dp1, params['S1'])
           + jnp.einsum('bnkp,pc->bnkc', dp2, params['S2']))
    yv = jnp.maximum(x_j * wgt * params['sC'] + params['tC'], 0.0)
    p_p = jnp.max(yv, axis=2)
    return p_v_x + jnp.transpose(p_p, (0, 2, 1))


# -----------------------------------------------------------------------------
# Deterministic parameter init (eval-mode BN stats folded into scale/shift)
# -----------------------------------------------------------------------------
def init_params(key, C, eps3d=1e-4, eps2d=1e-5):
    ks = jax.random.split(key, 10)

    def bn(k, n):
        kg, kb, km, kv = jax.random.split(k, 4)
        g = jax.random.uniform(kg, (n,), jnp.float32, 0.8, 1.2)
        b = 0.1 * jax.random.normal(kb, (n,), jnp.float32)
        m = 0.1 * jax.random.normal(km, (n,), jnp.float32)
        v = jax.random.uniform(kv, (n,), jnp.float32, 0.5, 1.5)
        return g, b, m, v

    # conv3ds layer 1 (depthwise); weights stored (C, 27) = (channel, kd*kh*kw)
    w3d1 = 0.2 * jax.random.normal(ks[0], (C, 27), jnp.float32)
    b3d1 = 0.1 * jax.random.normal(ks[1], (C,), jnp.float32)
    g1, be1, rm1, rv1 = bn(ks[2], C)
    s1 = g1 / jnp.sqrt(rv1 + eps3d)
    t1 = (b3d1 - rm1) * s1 + be1

    # conv3ds layer 2
    w3d2 = 0.2 * jax.random.normal(ks[3], (C, 27), jnp.float32)
    b3d2 = 0.1 * jax.random.normal(ks[4], (C,), jnp.float32)
    g2, be2, rm2, rv2 = bn(ks[5], C)
    s2 = g2 / jnp.sqrt(rv2 + eps3d)
    t2 = (b3d2 - rm2) * s2 + be2

    # proj_conv: Conv2d(C->3,1x1,no bias) + BN(3) + ReLU + Conv2d(3->3,1x1,no bias)
    W1 = 0.2 * jax.random.normal(ks[6], (3, C), jnp.float32)   # torch (out, in)
    gp, bp, rmp, rvp = bn(ks[7], 3)
    s3 = gp / jnp.sqrt(rvp + eps2d)
    w1f = W1.T * s3[None, :]                                   # (C, 3) BN folded
    t3 = bp - rmp * s3                                         # (3,)
    W2 = 0.2 * jax.random.normal(ks[8], (3, 3), jnp.float32)
    w2t = W2.T                                                 # (3, 3)

    # proj_transform: BN(C) + ReLU
    gc, bc_, rmc, rvc = bn(ks[9], C)
    sC = gc / jnp.sqrt(rvc + eps2d)
    tC = bc_ - rmc * sC

    # repeat_interleave selection matrices (part = 6)
    part = 6
    rd = C // part
    repeats = [rd] * (part - 1) + [C - rd * (part - 1)]
    S = np.zeros((part, C), np.float32)
    col = 0
    for p, r in enumerate(repeats):
        S[p, col:col + r] = 1.0
        col += r
    S1 = jnp.asarray(S[:3])
    S2 = jnp.asarray(S[3:])

    # ---- kernel-side fused / channel-major parameters ----
    w3d1f = w3d1 * s1[:, None]          # BN scale folded into depthwise taps
    w3d2f = w3d2 * s2[:, None]
    w1f_cm = jnp.transpose(w1f)         # (3, C)
    Cp3 = C + 3
    Wpre = jnp.zeros((6, Cp3), jnp.float32)
    Wpre = Wpre.at[0:3, C:].set(jnp.eye(3, dtype=jnp.float32))   # pass-through dp1
    Wpre = Wpre.at[3:6, :C].set(w1f_cm)                          # proj_conv fold
    tpre = jnp.concatenate([jnp.zeros((3,), jnp.float32), t3])   # (6,)
    mtop = jnp.asarray([1., 1., 1., 0., 0., 0.], jnp.float32)    # pass/ReLU rows
    Wstack = jnp.concatenate(
        [jnp.transpose(S1), jnp.dot(jnp.transpose(S2), W2)], axis=1)  # (C, 6)

    return dict(
        w3d1=w3d1, s1=s1, t1=t1, w3d2=w3d2, s2=s2, t2=t2,
        w1f=w1f, t3=t3, w2t=w2t, S1=S1, S2=S2, sC=sC, tC=tC,
        w3d1f=w3d1f, w3d2f=w3d2f,
        Wpre=Wpre, tpre=tpre, mtop=mtop, Wstack=Wstack,
    )
    # TODO(synk): lift_conv / softmax / beta are defined in PVB.__init__ but
    # never used in forward(), so they are intentionally not instantiated.


if __name__ == "__main__":
    B, C, N, K, R = 2, 24, 64, 8, 8   # batch, channels, points, nsample, resolution
    root = jax.random.PRNGKey(0)
    kx, kxyz, kidx, kp = jax.random.split(root, 4)
    x = jax.random.normal(kx, (B, C, N), jnp.float32)
    xyz = jax.random.uniform(kxyz, (B, 3, N), jnp.float32)
    idx = jax.random.randint(kidx, (B, N, K), 0, N, jnp.int32)
    params = init_params(kp, C)

    fwd = jax.jit(functools.partial(pvb_forward, resolution=R))
    out = jax.block_until_ready(fwd(x, xyz, idx, params))

    ref = jax.jit(functools.partial(pvb_forward_ref, resolution=R))(x, xyz, idx, params)
    assert out.shape == (B, C, N), out.shape
    if not jnp.allclose(out, ref, rtol=1e-2, atol=1e-2):
        raise AssertionError(
            "Pallas vs reference mismatch, max abs err = "
            f"{jnp.max(jnp.abs(out - ref))}")
    print("KERNEL_OK")
</pallas_src>

<mosaic_0001>
module attributes {stable_mosaic.version = 11 : i64} {
  func.func private @main(%arg0: i32) attributes {dimension_semantics = [#tpu.dimension_semantics<core_parallel>], iteration_bounds = array<i64: 2>, tpu.core_type = #tpu.core_type<sc_scalar_subcore>, window_params = []} {
    return
  }
}

module attributes {stable_mosaic.version = 11 : i64} {
  func.func private @main(%arg0: i32) attributes {dimension_semantics = [#tpu.dimension_semantics<core_parallel>], iteration_bounds = array<i64: 2>, tpu.core_type = #tpu.core_type<sc_scalar_subcore>, window_params = []} {
    return
  }
}

module attributes {stable_mosaic.version = 11 : i64} {
  func.func @_conv3ds_kernel(%arg0: i32, %arg1: memref<1x24x1024xf32, #tpu.memory_space<vmem>>, %arg2: memref<24x27xf32, #tpu.memory_space<vmem>>, %arg3: memref<24x1xf32, #tpu.memory_space<vmem>>, %arg4: memref<24x27xf32, #tpu.memory_space<vmem>>, %arg5: memref<24x1xf32, #tpu.memory_space<vmem>>, %arg6: memref<1x1024xf32, #tpu.memory_space<vmem>>, %arg7: memref<1x24x1024xf32, #tpu.memory_space<vmem>>) attributes {dimension_semantics = [#tpu.dimension_semantics<parallel>], iteration_bounds = array<i64: 2>, scalar_prefetch = 0 : i64, scratch_operands = 0 : i64, tpu.core_type = #tpu.core_type<tc>, window_params = [{transform_indices = @transform_0, window_bounds = array<i64: 1, 24, 1024>}, {pipeline_mode = #tpu.pipeline_mode<synchronous>, transform_indices = @transform_1, window_bounds = array<i64: 24, 27>}, {pipeline_mode = #tpu.pipeline_mode<synchronous>, transform_indices = @transform_2, window_bounds = array<i64: 24, 1>}, {pipeline_mode = #tpu.pipeline_mode<synchronous>, transform_indices = @transform_3, window_bounds = array<i64: 24, 27>}, {pipeline_mode = #tpu.pipeline_mode<synchronous>, transform_indices = @transform_4, window_bounds = array<i64: 24, 1>}, {pipeline_mode = #tpu.pipeline_mode<synchronous>, transform_indices = @transform_5, window_bounds = array<i64: 1, 1024>}, {transform_indices = @transform_6, window_bounds = array<i64: 1, 24, 1024>}]} {
    %c0 = arith.constant 0 : index
    %c0_0 = arith.constant 0 : index
    %c0_1 = arith.constant 0 : index
    %0 = vector.load %arg1[%c0, %c0_0, %c0_1] : memref<1x24x1024xf32, #tpu.memory_space<vmem>>, vector<1x24x1024xf32>
    %1 = vector.shape_cast %0 : vector<1x24x1024xf32> to vector<24x1024xf32>
    %c0_2 = arith.constant 0 : index
    %c0_3 = arith.constant 0 : index
    %2 = vector.load %arg2[%c0_2, %c0_3] : memref<24x27xf32, #tpu.memory_space<vmem>>, vector<24x27xf32>
    %c0_4 = arith.constant 0 : index
    %c0_5 = arith.constant 0 : index
    %3 = vector.load %arg4[%c0_4, %c0_5] : memref<24x27xf32, #tpu.memory_space<vmem>>, vector<24x27xf32>
    %c0_6 = arith.constant 0 : index
    %c0_7 = arith.constant 0 : index
    %4 = vector.load %arg6[%c0_6, %c0_7] : memref<1x1024xf32, #tpu.memory_space<vmem>>, vector<1x1024xf32>
    %c111_i32 = arith.constant 111 : i32
    %5 = tpu.dynamic_rotate %1 by %c111_i32 dim 1 : vector<24x1024xf32>, i32 -> vector<24x1024xf32>
    %6 = vector.extract_strided_slice %2 {offsets = [0, 0], sizes = [24, 1], strides = [1, 1]} : vector<24x27xf32> to vector<24x1xf32>
    %7 = vector.broadcast %6 : vector<24x1xf32> to vector<24x1024xf32>
    %8 = arith.mulf %5, %7 : vector<24x1024xf32>
    %c110_i32 = arith.constant 110 : i32
    %9 = tpu.dynamic_rotate %1 by %c110_i32 dim 1 : vector<24x1024xf32>, i32 -> vector<24x1024xf32>
    %10 = vector.extract_strided_slice %2 {offsets = [0, 1], sizes = [24, 1], strides = [1, 1]} : vector<24x27xf32> to vector<24x1xf32>
    %11 = vector.broadcast %10 : vector<24x1xf32> to vector<24x1024xf32>
    %12 = arith.mulf %9, %11 : vector<24x1024xf32>
    %13 = arith.addf %8, %12 : vector<24x1024xf32>
    %c109_i32 = arith.constant 109 : i32
    %14 = tpu.dynamic_rotate %1 by %c109_i32 dim 1 : vector<24x1024xf32>, i32 -> vector<24x1024xf32>
    %15 = vector.extract_strided_slice %2 {offsets = [0, 2], sizes = [24, 1], strides = [1, 1]} : vector<24x27xf32> to vector<24x1xf32>
    %16 = vector.broadcast %15 : vector<24x1xf32> to vector<24x1024xf32>
    %17 = arith.mulf %14, %16 : vector<24x1024xf32>
    %18 = arith.addf %13, %17 : vector<24x1024xf32>
    %c101_i32 = arith.constant 101 : i32
    %19 = tpu.dynamic_rotate %1 by %c101_i32 dim 1 : vector<24x1024xf32>, i32 -> vector<24x1024xf32>
    %20 = vector.extract_strided_slice %2 {offsets = [0, 3], sizes = [24, 1], strides = [1, 1]} : vector<24x27xf32> to vector<24x1xf32>
    %21 = vector.broadcast %20 : vector<24x1xf32> to vector<24x1024xf32>
    %22 = arith.mulf %19, %21 : vector<24x1024xf32>
    %23 = arith.addf %18, %22 : vector<24x1024xf32>
    %c100_i32 = arith.constant 100 : i32
    %24 = tpu.dynamic_rotate %1 by %c100_i32 dim 1 : vector<24x1024xf32>, i32 -> vector<24x1024xf32>
    %25 = vector.extract_strided_slice %2 {offsets = [0, 4], sizes = [24, 1], strides = [1, 1]} : vector<24x27xf32> to vector<24x1xf32>
    %26 = vector.broadcast %25 : vector<24x1xf32> to vector<24x1024xf32>
    %27 = arith.mulf %24, %26 : vector<24x1024xf32>
    %28 = arith.addf %23, %27 : vector<24x1024xf32>
    %c99_i32 = arith.constant 99 : i32
    %29 = tpu.dynamic_rotate %1 by %c99_i32 dim 1 : vector<24x1024xf32>, i32 -> vector<24x1024xf32>
    %30 = vector.extract_strided_slice %2 {offsets = [0, 5], sizes = [24, 1], strides = [1, 1]} : vector<24x27xf32> to vector<24x1xf32>
    %31 = vector.broadcast %30 : vector<24x1xf32> to vector<24x1024xf32>
    %32 = arith.mulf %29, %31 : vector<24x1024xf32>
    %33 = arith.addf %28, %32 : vector<24x1024xf32>
    %c91_i32 = arith.constant 91 : i32
    %34 = tpu.dynamic_rotate %1 by %c91_i32 dim 1 : vector<24x1024xf32>, i32 -> vector<24x1024xf32>
    %35 = vector.extract_strided_slice %2 {offsets = [0, 6], sizes = [24, 1], strides = [1, 1]} : vector<24x27xf32> to vector<24x1xf32>
    %36 = vector.broadcast %35 : vector<24x1xf32> to vector<24x1024xf32>
    %37 = arith.mulf %34, %36 : vector<24x1024xf32>
    %38 = arith.addf %33, %37 : vector<24x1024xf32>
    %c90_i32 = arith.constant 90 : i32
    %39 = tpu.dynamic_rotate %1 by %c90_i32 dim 1 : vector<24x1024xf32>, i32 -> vector<24x1024xf32>
    %40 = vector.extract_strided_slice %2 {offsets = [0, 7], sizes = [24, 1], strides = [1, 1]} : vector<24x27xf32> to vector<24x1xf32>
    %41 = vector.broadcast %40 : vector<24x1xf32> to vector<24x1024xf32>
    %42 = arith.mulf %39, %41 : vector<24x1024xf32>
    %43 = arith.addf %38, %42 : vector<24x1024xf32>
    %c89_i32 = arith.constant 89 : i32
    %44 = tpu.dynamic_rotate %1 by %c89_i32 dim 1 : vector<24x1024xf32>, i32 -> vector<24x1024xf32>
    %45 = vector.extract_strided_slice %2 {offsets = [0, 8], sizes = [24, 1], strides = [1, 1]} : vector<24x27xf32> to vector<24x1xf32>
    %46 = vector.broadcast %45 : vector<24x1xf32> to vector<24x1024xf32>
    %47 = arith.mulf %44, %46 : vector<24x1024xf32>
    %48 = arith.addf %43, %47 : vector<24x1024xf32>
    %c11_i32 = arith.constant 11 : i32
    %49 = tpu.dynamic_rotate %1 by %c11_i32 dim 1 : vector<24x1024xf32>, i32 -> vector<24x1024xf32>
    %50 = vector.extract_strided_slice %2 {offsets = [0, 9], sizes = [24, 1], strides = [1, 1]} : vector<24x27xf32> to vector<24x1xf32>
    %51 = vector.broadcast %50 : vector<24x1xf32> to vector<24x1024xf32>
    %52 = arith.mulf %49, %51 : vector<24x1024xf32>
    %53 = arith.addf %48, %52 : vector<24x1024xf32>
    %c10_i32 = arith.constant 10 : i32
    %54 = tpu.dynamic_rotate %1 by %c10_i32 dim 1 : vector<24x1024xf32>, i32 -> vector<24x1024xf32>
    %55 = vector.extract_strided_slice %2 {offsets = [0, 10], sizes = [24, 1], strides = [1, 1]} : vector<24x27xf32> to vector<24x1xf32>
    %56 = vector.broadcast %55 : vector<24x1xf32> to vector<24x1024xf32>
    %57 = arith.mulf %54, %56 : vector<24x1024xf32>
    %58 = arith.addf %53, %57 : vector<24x1024xf32>
    %c9_i32 = arith.constant 9 : i32
    %59 = tpu.dynamic_rotate %1 by %c9_i32 dim 1 : vector<24x1024xf32>, i32 -> vector<24x1024xf32>
    %60 = vector.extract_strided_slice %2 {offsets = [0, 11], sizes = [24, 1], strides = [1, 1]} : vector<24x27xf32> to vector<24x1xf32>
    %61 = vector.broadcast %60 : vector<24x1xf32> to vector<24x1024xf32>
    %62 = arith.mulf %59, %61 : vector<24x1024xf32>
    %63 = arith.addf %58, %62 : vector<24x1024xf32>
    %c1_i32 = arith.constant 1 : i32
    %64 = tpu.dynamic_rotate %1 by %c1_i32 dim 1 : vector<24x1024xf32>, i32 -> vector<24x1024xf32>
    %65 = vector.extract_strided_slice %2 {offsets = [0, 12], sizes = [24, 1], strides = [1, 1]} : vector<24x27xf32> to vector<24x1xf32>
    %66 = vector.broadcast %65 : vector<24x1xf32> to vector<24x1024xf32>
    %67 = arith.mulf %64, %66 : vector<24x1024xf32>
    %68 = arith.addf %63, %67 : vector<24x1024xf32>
    %69 = vector.extract_strided_slice %2 {offsets = [0, 13], sizes = [24, 1], strides = [1, 1]} : vector<24x27xf32> to vector<24x1xf32>
    %70 = vector.broadcast %69 : vector<24x1xf32> to vector<24x1024xf32>
    %71 = arith.mulf %1, %70 : vector<24x1024xf32>
    %72 = arith.addf %68, %71 : vector<24x1024xf32>
    %c1023_i32 = arith.constant 1023 : i32
    %73 = tpu.dynamic_rotate %1 by %c1023_i32 dim 1 : vector<24x1024xf32>, i32 -> vector<24x1024xf32>
    %74 = vector.extract_strided_slice %2 {offsets = [0, 14], sizes = [24, 1], strides = [1, 1]} : vector<24x27xf32> to vector<24x1xf32>
    %75 = vector.broadcast %74 : vector<24x1xf32> to vector<24x1024xf32>
    %76 = arith.mulf %73, %75 : vector<24x1024xf32>
    %77 = arith.addf %72, %76 : vector<24x1024xf32>
    %c1015_i32 = arith.constant 1015 : i32
    %78 = tpu.dynamic_rotate %1 by %c1015_i32 dim 1 : vector<24x1024xf32>, i32 -> vector<24x1024xf32>
    %79 = vector.extract_strided_slice %2 {offsets = [0, 15], sizes = [24, 1], strides = [1, 1]} : vector<24x27xf32> to vector<24x1xf32>
    %80 = vector.broadcast %79 : vector<24x1xf32> to vector<24x1024xf32>
    %81 = arith.mulf %78, %80 : vector<24x1024xf32>
    %82 = arith.addf %77, %81 : vector<24x1024xf32>
    %c1014_i32 = arith.constant 1014 : i32
    %83 = tpu.dynamic_rotate %1 by %c1014_i32 dim 1 : vector<24x1024xf32>, i32 -> vector<24x1024xf32>
    %84 = vector.extract_strided_slice %2 {offsets = [0, 16], sizes = [24, 1], strides = [1, 1]} : vector<24x27xf32> to vector<24x1xf32>
    %85 = vector.broadcast %84 : vector<24x1xf32> to vector<24x1024xf32>
    %86 = arith.mulf %83, %85 : vector<24x1024xf32>
    %87 = arith.addf %82, %86 : vector<24x1024xf32>
    %c1013_i32 = arith.constant 1013 : i32
    %88 = tpu.dynamic_rotate %1 by %c1013_i32 dim 1 : vector<24x1024xf32>, i32 -> vector<24x1024xf32>
    %89 = vector.extract_strided_slice %2 {offsets = [0, 17], sizes = [24, 1], strides = [1, 1]} : vector<24x27xf32> to vector<24x1xf32>
    %90 = vector.broadcast %89 : vector<24x1xf32> to vector<24x1024xf32>
    %91 = arith.mulf %88, %90 : vector<24x1024xf32>
    %92 = arith.addf %87, %91 : vector<24x1024xf32>
    %c935_i32 = arith.constant 935 : i32
    %93 = tpu.dynamic_rotate %1 by %c935_i32 dim 1 : vector<24x1024xf32>, i32 -> vector<24x1024xf32>
    %94 = vector.extract_strided_slice %2 {offsets = [0, 18], sizes = [24, 1], strides = [1, 1]} : vector<24x27xf32> to vector<24x1xf32>
    %95 = vector.broadcast %94 : vector<24x1xf32> to vector<24x1024xf32>
    %96 = arith.mulf %93, %95 : vector<24x1024xf32>
    %97 = arith.addf %92, %96 : vector<24x1024xf32>
    %c934_i32 = arith.constant 934 : i32
    %98 = tpu.dynamic_rotate %1 by %c934_i32 dim 1 : vector<24x1024xf32>, i32 -> vector<24x1024xf32>
    %99 = vector.extract_strided_slice %2 {offsets = [0, 19], sizes = [24, 1], strides = [1, 1]} : vector<24x27xf32> to vector<24x1xf32>
    %100 = vector.broadcast %99 : vector<24x1xf32> to vector<24x1024xf32>
    %101 = arith.mulf %98, %100 : vector<24x1024xf32>
    %102 = arith.addf %97, %101 : vector<24x1024xf32>
    %c933_i32 = arith.constant 933 : i32
    %103 = tpu.dynamic_rotate %1 by %c933_i32 dim 1 : vector<24x1024xf32>, i32 -> vector<24x1024xf32>
    %104 = vector.extract_strided_slice %2 {offsets = [0, 20], sizes = [24, 1], strides = [1, 1]} : vector<24x27xf32> to vector<24x1xf32>
    %105 = vector.broadcast %104 : vector<24x1xf32> to vector<24x1024xf32>
    %106 = arith.mulf %103, %105 : vector<24x1024xf32>
    %107 = arith.addf %102, %106 : vector<24x1024xf32>
    %c925_i32 = arith.constant 925 : i32
    %108 = tpu.dynamic_rotate %1 by %c925_i32 dim 1 : vector<24x1024xf32>, i32 -> vector<24x1024xf32>
    %109 = vector.extract_strided_slice %2 {offsets = [0, 21], sizes = [24, 1], strides = [1, 1]} : vector<24x27xf32> to vector<24x1xf32>
    %110 = vector.broadcast %109 : vector<24x1xf32> to vector<24x1024xf32>
    %111 = arith.mulf %108, %110 : vector<24x1024xf32>
    %112 = arith.addf %107, %111 : vector<24x1024xf32>
    %c924_i32 = arith.constant 924 : i32
    %113 = tpu.dynamic_rotate %1 by %c924_i32 dim 1 : vector<24x1024xf32>, i32 -> vector<24x1024xf32>
    %114 = vector.extract_strided_slice %2 {offsets = [0, 22], sizes = [24, 1], strides = [1, 1]} : vector<24x27xf32> to vector<24x1xf32>
    %115 = vector.broadcast %114 : vector<24x1xf32> to vector<24x1024xf32>
    %116 = arith.mulf %113, %115 : vector<24x1024xf32>
    %117 = arith.addf %112, %116 : vector<24x1024xf32>
    %c923_i32 = arith.constant 923 : i32
    %118 = tpu.dynamic_rotate %1 by %c923_i32 dim 1 : vector<24x1024xf32>, i32 -> vector<24x1024xf32>
    %119 = vector.extract_strided_slice %2 {offsets = [0, 23], sizes = [24, 1], strides = [1, 1]} : vector<24x27xf32> to vector<24x1xf32>
    %120 = vector.broadcast %119 : vector<24x1xf32> to vector<24x1024xf32>
    %121 = arith.mulf %118, %120 : vector<24x1024xf32>
    %122 = arith.addf %117, %121 : vector<24x1024xf32>
    %c915_i32 = arith.constant 915 : i32
    %123 = tpu.dynamic_rotate %1 by %c915_i32 dim 1 : vector<24x1024xf32>, i32 -> vector<24x1024xf32>
    %124 = vector.extract_strided_slice %2 {offsets = [0, 24], sizes = [24, 1], strides = [1, 1]} : vector<24x27xf32> to vector<24x1xf32>
    %125 = vector.broadcast %124 : vector<24x1xf32> to vector<24x1024xf32>
    %126 = arith.mulf %123, %125 : vector<24x1024xf32>
    %127 = arith.addf %122, %126 : vector<24x1024xf32>
    %c914_i32 = arith.constant 914 : i32
    %128 = tpu.dynamic_rotate %1 by %c914_i32 dim 1 : vector<24x1024xf32>, i32 -> vector<24x1024xf32>
    %129 = vector.extract_strided_slice %2 {offsets = [0, 25], sizes = [24, 1], strides = [1, 1]} : vector<24x27xf32> to vector<24x1xf32>
    %130 = vector.broadcast %129 : vector<24x1xf32> to vector<24x1024xf32>
    %131 = arith.mulf %128, %130 : vector<24x1024xf32>
    %132 = arith.addf %127, %131 : vector<24x1024xf32>
    %c913_i32 = arith.constant 913 : i32
    %133 = tpu.dynamic_rotate %1 by %c913_i32 dim 1 : vector<24x1024xf32>, i32 -> vector<24x1024xf32>
    %134 = vector.extract_strided_slice %2 {offsets = [0, 26], sizes = [24, 1], strides = [1, 1]} : vector<24x27xf32> to vector<24x1xf32>
    %135 = vector.broadcast %134 : vector<24x1xf32> to vector<24x1024xf32>
    %136 = arith.mulf %133, %135 : vector<24x1024xf32>
    %137 = arith.addf %132, %136 : vector<24x1024xf32>
    %c0_8 = arith.constant 0 : index
    %c0_9 = arith.constant 0 : index
    %138 = vector.load %arg3[%c0_8, %c0_9] : memref<24x1xf32, #tpu.memory_space<vmem>>, vector<24x1xf32>
    %139 = vector.broadcast %138 : vector<24x1xf32> to vector<24x1024xf32>
    %140 = arith.addf %137, %139 : vector<24x1024xf32>
    %cst = arith.constant 1.000000e-01 : f32
    %141 = vector.broadcast %cst : f32 to vector<24x1024xf32>
    %142 = arith.mulf %141, %140 : vector<24x1024xf32>
    %143 = arith.maximumf %140, %142 : vector<24x1024xf32>
    %144 = vector.broadcast %4 : vector<1x1024xf32> to vector<24x1024xf32>
    %145 = arith.mulf %143, %144 : vector<24x1024xf32>
    %c111_i32_10 = arith.constant 111 : i32
    %146 = tpu.dynamic_rotate %145 by %c111_i32_10 dim 1 : vector<24x1024xf32>, i32 -> vector<24x1024xf32>
    %147 = vector.extract_strided_slice %3 {offsets = [0, 0], sizes = [24, 1], strides = [1, 1]} : vector<24x27xf32> to vector<24x1xf32>
    %148 = vector.broadcast %147 : vector<24x1xf32> to vector<24x1024xf32>
    %149 = arith.mulf %146, %148 : vector<24x1024xf32>
    %c110_i32_11 = arith.constant 110 : i32
    %150 = tpu.dynamic_rotate %145 by %c110_i32_11 dim 1 : vector<24x1024xf32>, i32 -> vector<24x1024xf32>
    %151 = vector.extract_strided_slice %3 {offsets = [0, 1], sizes = [24, 1], strides = [1, 1]} : vector<24x27xf32> to vector<24x1xf32>
    %152 = vector.broadcast %151 : vector<24x1xf32> to vector<24x1024xf32>
    %153 = arith.mulf %150, %152 : vector<24x1024xf32>
    %154 = arith.addf %149, %153 : vector<24x1024xf32>
    %c109_i32_12 = arith.constant 109 : i32
    %155 = tpu.dynamic_rotate %145 by %c109_i32_12 dim 1 : vector<24x1024xf32>, i32 -> vector<24x1024xf32>
    %156 = vector.extract_strided_slice %3 {offsets = [0, 2], sizes = [24, 1], strides = [1, 1]} : vector<24x27xf32> to vector<24x1xf32>
    %157 = vector.broadcast %156 : vector<24x1xf32> to vector<24x1024xf32>
    %158 = arith.mulf %155, %157 : vector<24x1024xf32>
    %159 = arith.addf %154, %158 : vector<24x1024xf32>
    %c101_i32_13 = arith.constant 101 : i32
    %160 = tpu.dynamic_rotate %145 by %c101_i32_13 dim 1 : vector<24x1024xf32>, i32 -> vector<24x1024xf32>
    %161 = vector.extract_strided_slice %3 {offsets = [0, 3], sizes = [24, 1], strides = [1, 1]} : vector<24x27xf32> to vector<24x1xf32>
    %162 = vector.broadcast %161 : vector<24x1xf32> to vector<24x1024xf32>
    %163 = arith.mulf %160, %162 : vector<24x1024xf32>
    %164 = arith.addf %159, %163 : vector<24x1024xf32>
    %c100_i32_14 = arith.constant 100 : i32
    %165 = tpu.dynamic_rotate %145 by %c100_i32_14 dim 1 : vector<24x1024xf32>, i32 -> vector<24x1024xf32>
    %166 = vector.extract_strided_slice %3 {offsets = [0, 4], sizes = [24, 1], strides = [1, 1]} : vector<24x27xf32> to vector<24x1xf32>
    %167 = vector.broadcast %166 : vector<24x1xf32> to vector<24x1024xf32>
    %168 = arith.mulf %165, %167 : vector<24x1024xf32>
    %169 = arith.addf %164, %168 : vector<24x1024xf32>
    %c99_i32_15 = arith.constant 99 : i32
    %170 = tpu.dynamic_rotate %145 by %c99_i32_15 dim 1 : vector<24x1024xf32>, i32 -> vector<24x1024xf32>
    %171 = vector.extract_strided_slice %3 {offsets = [0, 5], sizes = [24, 1], strides = [1, 1]} : vector<24x27xf32> to vector<24x1xf32>
    %172 = vector.broadcast %171 : vector<24x1xf32> to vector<24x1024xf32>
    %173 = arith.mulf %170, %172 : vector<24x1024xf32>
    %174 = arith.addf %169, %173 : vector<24x1024xf32>
    %c91_i32_16 = arith.constant 91 : i32
    %175 = tpu.dynamic_rotate %145 by %c91_i32_16 dim 1 : vector<24x1024xf32>, i32 -> vector<24x1024xf32>
    %176 = vector.extract_strided_slice %3 {offsets = [0, 6], sizes = [24, 1], strides = [1, 1]} : vector<24x27xf32> to vector<24x1xf32>
    %177 = vector.broadcast %176 : vector<24x1xf32> to vector<24x1024xf32>
    %178 = arith.mulf %175, %177 : vector<24x1024xf32>
    %179 = arith.addf %174, %178 : vector<24x1024xf32>
    %c90_i32_17 = arith.constant 90 : i32
    %180 = tpu.dynamic_rotate %145 by %c90_i32_17 dim 1 : vector<24x1024xf32>, i32 -> vector<24x1024xf32>
    %181 = vector.extract_strided_slice %3 {offsets = [0, 7], sizes = [24, 1], strides = [1, 1]} : vector<24x27xf32> to vector<24x1xf32>
    %182 = vector.broadcast %181 : vector<24x1xf32> to vector<24x1024xf32>
    %183 = arith.mulf %180, %182 : vector<24x1024xf32>
    %184 = arith.addf %179, %183 : vector<24x1024xf32>
    %c89_i32_18 = arith.constant 89 : i32
    %185 = tpu.dynamic_rotate %145 by %c89_i32_18 dim 1 : vector<24x1024xf32>, i32 -> vector<24x1024xf32>
    %186 = vector.extract_strided_slice %3 {offsets = [0, 8], sizes = [24, 1], strides = [1, 1]} : vector<24x27xf32> to vector<24x1xf32>
    %187 = vector.broadcast %186 : vector<24x1xf32> to vector<24x1024xf32>
    %188 = arith.mulf %185, %187 : vector<24x1024xf32>
    %189 = arith.addf %184, %188 : vector<24x1024xf32>
    %c11_i32_19 = arith.constant 11 : i32
    %190 = tpu.dynamic_rotate %145 by %c11_i32_19 dim 1 : vector<24x1024xf32>, i32 -> vector<24x1024xf32>
    %191 = vector.extract_strided_slice %3 {offsets = [0, 9], sizes = [24, 1], strides = [1, 1]} : vector<24x27xf32> to vector<24x1xf32>
    %192 = vector.broadcast %191 : vector<24x1xf32> to vector<24x1024xf32>
    %193 = arith.mulf %190, %192 : vector<24x1024xf32>
    %194 = arith.addf %189, %193 : vector<24x1024xf32>
    %c10_i32_20 = arith.constant 10 : i32
    %195 = tpu.dynamic_rotate %145 by %c10_i32_20 dim 1 : vector<24x1024xf32>, i32 -> vector<24x1024xf32>
    %196 = vector.extract_strided_slice %3 {offsets = [0, 10], sizes = [24, 1], strides = [1, 1]} : vector<24x27xf32> to vector<24x1xf32>
    %197 = vector.broadcast %196 : vector<24x1xf32> to vector<24x1024xf32>
    %198 = arith.mulf %195, %197 : vector<24x1024xf32>
    %199 = arith.addf %194, %198 : vector<24x1024xf32>
    %c9_i32_21 = arith.constant 9 : i32
    %200 = tpu.dynamic_rotate %145 by %c9_i32_21 dim 1 : vector<24x1024xf32>, i32 -> vector<24x1024xf32>
    %201 = vector.extract_strided_slice %3 {offsets = [0, 11], sizes = [24, 1], strides = [1, 1]} : vector<24x27xf32> to vector<24x1xf32>
    %202 = vector.broadcast %201 : vector<24x1xf32> to vector<24x1024xf32>
    %203 = arith.mulf %200, %202 : vector<24x1024xf32>
    %204 = arith.addf %199, %203 : vector<24x1024xf32>
    %c1_i32_22 = arith.constant 1 : i32
    %205 = tpu.dynamic_rotate %145 by %c1_i32_22 dim 1 : vector<24x1024xf32>, i32 -> vector<24x1024xf32>
    %206 = vector.extract_strided_slice %3 {offsets = [0, 12], sizes = [24, 1], strides = [1, 1]} : vector<24x27xf32> to vector<24x1xf32>
    %207 = vector.broadcast %206 : vector<24x1xf32> to vector<24x1024xf32>
    %208 = arith.mulf %205, %207 : vector<24x1024xf32>
    %209 = arith.addf %204, %208 : vector<24x1024xf32>
    %210 = vector.extract_strided_slice %3 {offsets = [0, 13], sizes = [24, 1], strides = [1, 1]} : vector<24x27xf32> to vector<24x1xf32>
    %211 = vector.broadcast %210 : vector<24x1xf32> to vector<24x1024xf32>
    %212 = arith.mulf %145, %211 : vector<24x1024xf32>
    %213 = arith.addf %209, %212 : vector<24x1024xf32>
    %c1023_i32_23 = arith.constant 1023 : i32
    %214 = tpu.dynamic_rotate %145 by %c1023_i32_23 dim 1 : vector<24x1024xf32>, i32 -> vector<24x1024xf32>
    %215 = vector.extract_strided_slice %3 {offsets = [0, 14], sizes = [24, 1], strides = [1, 1]} : vector<24x27xf32> to vector<24x1xf32>
    %216 = vector.broadcast %215 : vector<24x1xf32> to vector<24x1024xf32>
    %217 = arith.mulf %214, %216 : vector<24x1024xf32>
    %218 = arith.addf %213, %217 : vector<24x1024xf32>
    %c1015_i32_24 = arith.constant 1015 : i32
    %219 = tpu.dynamic_rotate %145 by %c1015_i32_24 dim 1 : vector<24x1024xf32>, i32 -> vector<24x1024xf32>
    %220 = vector.extract_strided_slice %3 {offsets = [0, 15], sizes = [24, 1], strides = [1, 1]} : vector<24x27xf32> to vector<24x1xf32>
    %221 = vector.broadcast %220 : vector<24x1xf32> to vector<24x1024xf32>
    %222 = arith.mulf %219, %221 : vector<24x1024xf32>
    %223 = arith.addf %218, %222 : vector<24x1024xf32>
    %c1014_i32_25 = arith.constant 1014 : i32
    %224 = tpu.dynamic_rotate %145 by %c1014_i32_25 dim 1 : vector<24x1024xf32>, i32 -> vector<24x1024xf32>
    %225 = vector.extract_strided_slice %3 {offsets = [0, 16], sizes = [24, 1], strides = [1, 1]} : vector<24x27xf32> to vector<24x1xf32>
    %226 = vector.broadcast %225 : vector<24x1xf32> to vector<24x1024xf32>
    %227 = arith.mulf %224, %226 : vector<24x1024xf32>
    %228 = arith.addf %223, %227 : vector<24x1024xf32>
    %c1013_i32_26 = arith.constant 1013 : i32
    %229 = tpu.dynamic_rotate %145 by %c1013_i32_26 dim 1 : vector<24x1024xf32>, i32 -> vector<24x1024xf32>
    %230 = vector.extract_strided_slice %3 {offsets = [0, 17], sizes = [24, 1], strides = [1, 1]} : vector<24x27xf32> to vector<24x1xf32>
    %231 = vector.broadcast %230 : vector<24x1xf32> to vector<24x1024xf32>
    %232 = arith.mulf %229, %231 : vector<24x1024xf32>
    %233 = arith.addf %228, %232 : vector<24x1024xf32>
    %c935_i32_27 = arith.constant 935 : i32
    %234 = tpu.dynamic_rotate %145 by %c935_i32_27 dim 1 : vector<24x1024xf32>, i32 -> vector<24x1024xf32>
    %235 = vector.extract_strided_slice %3 {offsets = [0, 18], sizes = [24, 1], strides = [1, 1]} : vector<24x27xf32> to vector<24x1xf32>
    %236 = vector.broadcast %235 : vector<24x1xf32> to vector<24x1024xf32>
    %237 = arith.mulf %234, %236 : vector<24x1024xf32>
    %238 = arith.addf %233, %237 : vector<24x1024xf32>
    %c934_i32_28 = arith.constant 934 : i32
    %239 = tpu.dynamic_rotate %145 by %c934_i32_28 dim 1 : vector<24x1024xf32>, i32 -> vector<24x1024xf32>
    %240 = vector.extract_strided_slice %3 {offsets = [0, 19], sizes = [24, 1], strides = [1, 1]} : vector<24x27xf32> to vector<24x1xf32>
    %241 = vector.broadcast %240 : vector<24x1xf32> to vector<24x1024xf32>
    %242 = arith.mulf %239, %241 : vector<24x1024xf32>
    %243 = arith.addf %238, %242 : vector<24x1024xf32>
    %c933_i32_29 = arith.constant 933 : i32
    %244 = tpu.dynamic_rotate %145 by %c933_i32_29 dim 1 : vector<24x1024xf32>, i32 -> vector<24x1024xf32>
    %245 = vector.extract_strided_slice %3 {offsets = [0, 20], sizes = [24, 1], strides = [1, 1]} : vector<24x27xf32> to vector<24x1xf32>
    %246 = vector.broadcast %245 : vector<24x1xf32> to vector<24x1024xf32>
    %247 = arith.mulf %244, %246 : vector<24x1024xf32>
    %248 = arith.addf %243, %247 : vector<24x1024xf32>
    %c925_i32_30 = arith.constant 925 : i32
    %249 = tpu.dynamic_rotate %145 by %c925_i32_30 dim 1 : vector<24x1024xf32>, i32 -> vector<24x1024xf32>
    %250 = vector.extract_strided_slice %3 {offsets = [0, 21], sizes = [24, 1], strides = [1, 1]} : vector<24x27xf32> to vector<24x1xf32>
    %251 = vector.broadcast %250 : vector<24x1xf32> to vector<24x1024xf32>
    %252 = arith.mulf %249, %251 : vector<24x1024xf32>
    %253 = arith.addf %248, %252 : vector<24x1024xf32>
    %c924_i32_31 = arith.constant 924 : i32
    %254 = tpu.dynamic_rotate %145 by %c924_i32_31 dim 1 : vector<24x1024xf32>, i32 -> vector<24x1024xf32>
    %255 = vector.extract_strided_slice %3 {offsets = [0, 22], sizes = [24, 1], strides = [1, 1]} : vector<24x27xf32> to vector<24x1xf32>
    %256 = vector.broadcast %255 : vector<24x1xf32> to vector<24x1024xf32>
    %257 = arith.mulf %254, %256 : vector<24x1024xf32>
    %258 = arith.addf %253, %257 : vector<24x1024xf32>
    %c923_i32_32 = arith.constant 923 : i32
    %259 = tpu.dynamic_rotate %145 by %c923_i32_32 dim 1 : vector<24x1024xf32>, i32 -> vector<24x1024xf32>
    %260 = vector.extract_strided_slice %3 {offsets = [0, 23], sizes = [24, 1], strides = [1, 1]} : vector<24x27xf32> to vector<24x1xf32>
    %261 = vector.broadcast %260 : vector<24x1xf32> to vector<24x1024xf32>
    %262 = arith.mulf %259, %261 : vector<24x1024xf32>
    %263 = arith.addf %258, %262 : vector<24x1024xf32>
    %c915_i32_33 = arith.constant 915 : i32
    %264 = tpu.dynamic_rotate %145 by %c915_i32_33 dim 1 : vector<24x1024xf32>, i32 -> vector<24x1024xf32>
    %265 = vector.extract_strided_slice %3 {offsets = [0, 24], sizes = [24, 1], strides = [1, 1]} : vector<24x27xf32> to vector<24x1xf32>
    %266 = vector.broadcast %265 : vector<24x1xf32> to vector<24x1024xf32>
    %267 = arith.mulf %264, %266 : vector<24x1024xf32>
    %268 = arith.addf %263, %267 : vector<24x1024xf32>
    %c914_i32_34 = arith.constant 914 : i32
    %269 = tpu.dynamic_rotate %145 by %c914_i32_34 dim 1 : vector<24x1024xf32>, i32 -> vector<24x1024xf32>
    %270 = vector.extract_strided_slice %3 {offsets = [0, 25], sizes = [24, 1], strides = [1, 1]} : vector<24x27xf32> to vector<24x1xf32>
    %271 = vector.broadcast %270 : vector<24x1xf32> to vector<24x1024xf32>
    %272 = arith.mulf %269, %271 : vector<24x1024xf32>
    %273 = arith.addf %268, %272 : vector<24x1024xf32>
    %c913_i32_35 = arith.constant 913 : i32
    %274 = tpu.dynamic_rotate %145 by %c913_i32_35 dim 1 : vector<24x1024xf32>, i32 -> vector<24x1024xf32>
    %275 = vector.extract_strided_slice %3 {offsets = [0, 26], sizes = [24, 1], strides = [1, 1]} : vector<24x27xf32> to vector<24x1xf32>
    %276 = vector.broadcast %275 : vector<24x1xf32> to vector<24x1024xf32>
    %277 = arith.mulf %274, %276 : vector<24x1024xf32>
    %278 = arith.addf %273, %277 : vector<24x1024xf32>
    %c0_36 = arith.constant 0 : index
    %c0_37 = arith.constant 0 : index
    %279 = vector.load %arg5[%c0_36, %c0_37] : memref<24x1xf32, #tpu.memory_space<vmem>>, vector<24x1xf32>
    %280 = vector.broadcast %279 : vector<24x1xf32> to vector<24x1024xf32>
    %281 = arith.addf %278, %280 : vector<24x1024xf32>
    %cst_38 = arith.constant 1.000000e-01 : f32
    %282 = vector.broadcast %cst_38 : f32 to vector<24x1024xf32>
    %283 = arith.mulf %282, %281 : vector<24x1024xf32>
    %284 = arith.maximumf %281, %283 : vector<24x1024xf32>
    %c0_39 = arith.constant 0 : index
    %c0_40 = arith.constant 0 : index
    %c0_41 = arith.constant 0 : index
    %285 = vector.load %arg7[%c0_39, %c0_40, %c0_41] : memref<1x24x1024xf32, #tpu.memory_space<vmem>>, vector<1x24x1024xf32>
    %286 = vector.shape_cast %285 : vector<1x24x1024xf32> to vector<24x1024xf32>
    %287 = vector.shape_cast %284 : vector<24x1024xf32> to vector<1x24x1024xf32>
    tpu.vector_store %arg7[%c0_39, %c0_40, %c0_41], %287 {strides = array<i32>} : memref<1x24x1024xf32, #tpu.memory_space<vmem>>, vector<1x24x1024xf32>,
    return
  }
  func.func @transform_0(%arg0: i32) -> (i32, i32, i32) {
    %c0_i32 = arith.constant 0 : i32
    %c0_i32_0 = arith.constant 0 : i32
    %c0_i32_1 = arith.constant 0 : i32
    return %arg0, %c0_i32, %c0_i32_0 : i32, i32, i32
  }
  func.func @transform_1(%arg0: i32) -> (i32, i32) {
    %c0_i32 = arith.constant 0 : i32
    %c0_i32_0 = arith.constant 0 : i32
    %c0_i32_1 = arith.constant 0 : i32
    return %c0_i32, %c0_i32_0 : i32, i32
  }
  func.func @transform_2(%arg0: i32) -> (i32, i32) {
    %c0_i32 = arith.constant 0 : i32
    %c0_i32_0 = arith.constant 0 : i32
    %c0_i32_1 = arith.constant 0 : i32
    return %c0_i32, %c0_i32_0 : i32, i32
  }
  func.func @transform_3(%arg0: i32) -> (i32, i32) {
    %c0_i32 = arith.constant 0 : i32
    %c0_i32_0 = arith.constant 0 : i32
    %c0_i32_1 = arith.constant 0 : i32
    return %c0_i32, %c0_i32_0 : i32, i32
  }
  func.func @transform_4(%arg0: i32) -> (i32, i32) {
    %c0_i32 = arith.constant 0 : i32
    %c0_i32_0 = arith.constant 0 : i32
    %c0_i32_1 = arith.constant 0 : i32
    return %c0_i32, %c0_i32_0 : i32, i32
  }
  func.func @transform_5(%arg0: i32) -> (i32, i32) {
    %c0_i32 = arith.constant 0 : i32
    %c0_i32_0 = arith.constant 0 : i32
    %c0_i32_1 = arith.constant 0 : i32
    return %c0_i32, %c0_i32_0 : i32, i32
  }
  func.func @transform_6(%arg0: i32) -> (i32, i32, i32) {
    %c0_i32 = arith.constant 0 : i32
    %c0_i32_0 = arith.constant 0 : i32
    %c0_i32_1 = arith.constant 0 : i32
    return %arg0, %c0_i32, %c0_i32_0 : i32, i32, i32
  }
}

module attributes {stable_mosaic.version = 11 : i64} {
  func.func @_group_agg_kernel(%arg0: i32, %arg1: i32, %arg2: memref<1x27x64xf32, #tpu.memory_space<vmem>>, %arg3: memref<1x27x64xf32, #tpu.memory_space<vmem>>, %arg4: memref<1x1x512xi32, #tpu.memory_space<vmem>>, %arg5: memref<1x24x64xf32, #tpu.memory_space<vmem>>, %arg6: memref<6x27xf32, #tpu.memory_space<vmem>>, %arg7: memref<6x1xf32, #tpu.memory_space<vmem>>, %arg8: memref<6x1xf32, #tpu.memory_space<vmem>>, %arg9: memref<24x6xf32, #tpu.memory_space<vmem>>, %arg10: memref<24x1xf32, #tpu.memory_space<vmem>>, %arg11: memref<24x1xf32, #tpu.memory_space<vmem>>, %arg12: memref<1x24x64xf32, #tpu.memory_space<vmem>>) attributes {dimension_semantics = [#tpu.dimension_semantics<parallel>, #tpu.dimension_semantics<parallel>], iteration_bounds = array<i64: 2, 1>, scalar_prefetch = 0 : i64, scratch_operands = 0 : i64, tpu.core_type = #tpu.core_type<tc>, window_params = [{transform_indices = @transform_0, window_bounds = array<i64: 1, 27, 64>}, {transform_indices = @transform_1, window_bounds = array<i64: 1, 27, 64>}, {transform_indices = @transform_2, window_bounds = array<i64: 1, 1, 512>}, {transform_indices = @transform_3, window_bounds = array<i64: 1, 24, 64>}, {pipeline_mode = #tpu.pipeline_mode<synchronous>, transform_indices = @transform_4, window_bounds = array<i64: 6, 27>}, {pipeline_mode = #tpu.pipeline_mode<synchronous>, transform_indices = @transform_5, window_bounds = array<i64: 6, 1>}, {pipeline_mode = #tpu.pipeline_mode<synchronous>, transform_indices = @transform_6, window_bounds = array<i64: 6, 1>}, {pipeline_mode = #tpu.pipeline_mode<synchronous>, transform_indices = @transform_7, window_bounds = array<i64: 24, 6>}, {pipeline_mode = #tpu.pipeline_mode<synchronous>, transform_indices = @transform_8, window_bounds = array<i64: 24, 1>}, {pipeline_mode = #tpu.pipeline_mode<synchronous>, transform_indices = @transform_9, window_bounds = array<i64: 24, 1>}, {transform_indices = @transform_10, window_bounds = array<i64: 1, 24, 64>}]} {
    %c0 = arith.constant 0 : index
    %c0_0 = arith.constant 0 : index
    %c0_1 = arith.constant 0 : index
    %0 = vector.load %arg4[%c0, %c0_0, %c0_1] : memref<1x1x512xi32, #tpu.memory_space<vmem>>, vector<1x1x512xi32>
    %1 = vector.shape_cast %0 : vector<1x1x512xi32> to vector<1x512xi32>
    %c0_2 = arith.constant 0 : index
    %c0_3 = arith.constant 0 : index
    %c0_4 = arith.constant 0 : index
    %2 = vector.load %arg3[%c0_2, %c0_3, %c0_4] : memref<1x27x64xf32, #tpu.memory_space<vmem>>, vector<1x27x64xf32>
    %3 = vector.shape_cast %2 : vector<1x27x64xf32> to vector<27x64xf32>
    %4 = tpu.iota {dimensions = array<i32: 0>} : vector<64x512xi32>
    %c0_i32 = arith.constant 0 : i32
    %5 = vector.broadcast %c0_i32 : i32 to vector<64x512xi32>
    %6 = arith.addi %4, %5 : vector<64x512xi32>
    %7 = vector.broadcast %1 : vector<1x512xi32> to vector<64x512xi32>
    %8 = arith.cmpi eq, %6, %7 : vector<64x512xi32>
    %9 = arith.extui %8 : vector<64x512xi1> to vector<64x512xi32>
    %10 = arith.sitofp %9 : vector<64x512xi32> to vector<64x512xf32>
    %c0_5 = arith.constant 0 : index
    %c0_6 = arith.constant 0 : index
    %c0_7 = arith.constant 0 : index
    %11 = vector.load %arg2[%c0_5, %c0_6, %c0_7] : memref<1x27x64xf32, #tpu.memory_space<vmem>>, vector<1x27x64xf32>
    %12 = vector.shape_cast %11 : vector<1x27x64xf32> to vector<27x64xf32>
    %cst = arith.constant dense<0.000000e+00> : vector<27x512xf32>
    %13 = tpu.matmul %12, %10, %cst {dimension_numbers = #tpu.dot_dimension_numbers<[1], [0], [0], [1], [0, 0, 1, 1], [], []>} : vector<27x64xf32>, vector<64x512xf32>, vector<27x512xf32> -> vector<27x512xf32>
    %c0_8 = arith.constant 0 : index
    %c0_9 = arith.constant 0 : index
    %14 = vector.load %arg6[%c0_8, %c0_9] : memref<6x27xf32, #tpu.memory_space<vmem>>, vector<6x27xf32>
    %c0_10 = arith.constant 0 : index
    %c0_11 = arith.constant 0 : index
    %15 = vector.load %arg7[%c0_10, %c0_11] : memref<6x1xf32, #tpu.memory_space<vmem>>, vector<6x1xf32>
    %c0_12 = arith.constant 0 : index
    %c0_13 = arith.constant 0 : index
    %16 = vector.load %arg8[%c0_12, %c0_13] : memref<6x1xf32, #tpu.memory_space<vmem>>, vector<6x1xf32>
    %c0_14 = arith.constant 0 : index
    %c0_15 = arith.constant 0 : index
    %17 = vector.load %arg9[%c0_14, %c0_15] : memref<24x6xf32, #tpu.memory_space<vmem>>, vector<24x6xf32>
    %c0_16 = arith.constant 0 : index
    %c0_17 = arith.constant 0 : index
    %18 = vector.load %arg10[%c0_16, %c0_17] : memref<24x1xf32, #tpu.memory_space<vmem>>, vector<24x1xf32>
    %c0_18 = arith.constant 0 : index
    %c0_19 = arith.constant 0 : index
    %19 = vector.load %arg11[%c0_18, %c0_19] : memref<24x1xf32, #tpu.memory_space<vmem>>, vector<24x1xf32>
    %cst_20 = arith.constant dense<0.000000e+00> : vector<6x512xf32>
    %20 = tpu.matmul %14, %13, %cst_20 {dimension_numbers = #tpu.dot_dimension_numbers<[1], [0], [0], [1], [0, 0, 1, 1], [], []>} : vector<6x27xf32>, vector<27x512xf32>, vector<6x512xf32> -> vector<6x512xf32>
    %cst_21 = arith.constant dense<0.000000e+00> : vector<6x64xf32>
    %21 = tpu.matmul %14, %3, %cst_21 {dimension_numbers = #tpu.dot_dimension_numbers<[1], [0], [0], [1], [0, 0, 1, 1], [], []>} : vector<6x27xf32>, vector<27x64xf32>, vector<6x64xf32> -> vector<6x64xf32>
    %22 = vector.broadcast %15 : vector<6x1xf32> to vector<6x64xf32>
    %23 = arith.subf %21, %22 : vector<6x64xf32>
    %24 = vector.extract_strided_slice %20 {offsets = [0, 0], sizes = [6, 64], strides = [1, 1]} : vector<6x512xf32> to vector<6x64xf32>
    %25 = arith.subf %24, %23 : vector<6x64xf32>
    %26 = vector.broadcast %16 : vector<6x1xf32> to vector<6x64xf32>
    %27 = arith.mulf %25, %26 : vector<6x64xf32>
    %28 = arith.maximumf %25, %27 : vector<6x64xf32>
    %cst_22 = arith.constant dense<0.000000e+00> : vector<24x64xf32>
    %29 = tpu.matmul %17, %28, %cst_22 {dimension_numbers = #tpu.dot_dimension_numbers<[1], [0], [0], [1], [0, 0, 1, 1], [], []>} : vector<24x6xf32>, vector<6x64xf32>, vector<24x64xf32> -> vector<24x64xf32>
    %30 = vector.extract_strided_slice %13 {offsets = [0, 0], sizes = [24, 64], strides = [1, 1]} : vector<27x512xf32> to vector<24x64xf32>
    %31 = arith.mulf %30, %29 : vector<24x64xf32>
    %32 = vector.broadcast %18 : vector<24x1xf32> to vector<24x64xf32>
    %33 = arith.mulf %31, %32 : vector<24x64xf32>
    %34 = vector.broadcast %19 : vector<24x1xf32> to vector<24x64xf32>
    %35 = arith.addf %33, %34 : vector<24x64xf32>
    %cst_23 = arith.constant 0.000000e+00 : f32
    %36 = vector.broadcast %cst_23 : f32 to vector<24x64xf32>
    %37 = arith.maximumf %35, %36 : vector<24x64xf32>
    %38 = vector.extract_strided_slice %20 {offsets = [0, 64], sizes = [6, 64], strides = [1, 1]} : vector<6x512xf32> to vector<6x64xf32>
    %39 = arith.subf %38, %23 : vector<6x64xf32>
    %40 = vector.broadcast %16 : vector<6x1xf32> to vector<6x64xf32>
    %41 = arith.mulf %39, %40 : vector<6x64xf32>
    %42 = arith.maximumf %39, %41 : vector<6x64xf32>
    %cst_24 = arith.constant dense<0.000000e+00> : vector<24x64xf32>
    %43 = tpu.matmul %17, %42, %cst_24 {dimension_numbers = #tpu.dot_dimension_numbers<[1], [0], [0], [1], [0, 0, 1, 1], [], []>} : vector<24x6xf32>, vector<6x64xf32>, vector<24x64xf32> -> vector<24x64xf32>
    %44 = vector.extract_strided_slice %13 {offsets = [0, 64], sizes = [24, 64], strides = [1, 1]} : vector<27x512xf32> to vector<24x64xf32>
    %45 = arith.mulf %44, %43 : vector<24x64xf32>
    %46 = vector.broadcast %18 : vector<24x1xf32> to vector<24x64xf32>
    %47 = arith.mulf %45, %46 : vector<24x64xf32>
    %48 = vector.broadcast %19 : vector<24x1xf32> to vector<24x64xf32>
    %49 = arith.addf %47, %48 : vector<24x64xf32>
    %cst_25 = arith.constant 0.000000e+00 : f32
    %50 = vector.broadcast %cst_25 : f32 to vector<24x64xf32>
    %51 = arith.maximumf %49, %50 : vector<24x64xf32>
    %52 = arith.maximumf %37, %51 : vector<24x64xf32>
    %53 = vector.extract_strided_slice %20 {offsets = [0, 128], sizes = [6, 64], strides = [1, 1]} : vector<6x512xf32> to vector<6x64xf32>
    %54 = arith.subf %53, %23 : vector<6x64xf32>
    %55 = vector.broadcast %16 : vector<6x1xf32> to vector<6x64xf32>
    %56 = arith.mulf %54, %55 : vector<6x64xf32>
    %57 = arith.maximumf %54, %56 : vector<6x64xf32>
    %cst_26 = arith.constant dense<0.000000e+00> : vector<24x64xf32>
    %58 = tpu.matmul %17, %57, %cst_26 {dimension_numbers = #tpu.dot_dimension_numbers<[1], [0], [0], [1], [0, 0, 1, 1], [], []>} : vector<24x6xf32>, vector<6x64xf32>, vector<24x64xf32> -> vector<24x64xf32>
    %59 = vector.extract_strided_slice %13 {offsets = [0, 128], sizes = [24, 64], strides = [1, 1]} : vector<27x512xf32> to vector<24x64xf32>
    %60 = arith.mulf %59, %58 : vector<24x64xf32>
    %61 = vector.broadcast %18 : vector<24x1xf32> to vector<24x64xf32>
    %62 = arith.mulf %60, %61 : vector<24x64xf32>
    %63 = vector.broadcast %19 : vector<24x1xf32> to vector<24x64xf32>
    %64 = arith.addf %62, %63 : vector<24x64xf32>
    %cst_27 = arith.constant 0.000000e+00 : f32
    %65 = vector.broadcast %cst_27 : f32 to vector<24x64xf32>
    %66 = arith.maximumf %64, %65 : vector<24x64xf32>
    %67 = arith.maximumf %52, %66 : vector<24x64xf32>
    %68 = vector.extract_strided_slice %20 {offsets = [0, 192], sizes = [6, 64], strides = [1, 1]} : vector<6x512xf32> to vector<6x64xf32>
    %69 = arith.subf %68, %23 : vector<6x64xf32>
    %70 = vector.broadcast %16 : vector<6x1xf32> to vector<6x64xf32>
    %71 = arith.mulf %69, %70 : vector<6x64xf32>
    %72 = arith.maximumf %69, %71 : vector<6x64xf32>
    %cst_28 = arith.constant dense<0.000000e+00> : vector<24x64xf32>
    %73 = tpu.matmul %17, %72, %cst_28 {dimension_numbers = #tpu.dot_dimension_numbers<[1], [0], [0], [1], [0, 0, 1, 1], [], []>} : vector<24x6xf32>, vector<6x64xf32>, vector<24x64xf32> -> vector<24x64xf32>
    %74 = vector.extract_strided_slice %13 {offsets = [0, 192], sizes = [24, 64], strides = [1, 1]} : vector<27x512xf32> to vector<24x64xf32>
    %75 = arith.mulf %74, %73 : vector<24x64xf32>
    %76 = vector.broadcast %18 : vector<24x1xf32> to vector<24x64xf32>
    %77 = arith.mulf %75, %76 : vector<24x64xf32>
    %78 = vector.broadcast %19 : vector<24x1xf32> to vector<24x64xf32>
    %79 = arith.addf %77, %78 : vector<24x64xf32>
    %cst_29 = arith.constant 0.000000e+00 : f32
    %80 = vector.broadcast %cst_29 : f32 to vector<24x64xf32>
    %81 = arith.maximumf %79, %80 : vector<24x64xf32>
    %82 = arith.maximumf %67, %81 : vector<24x64xf32>
    %83 = vector.extract_strided_slice %20 {offsets = [0, 256], sizes = [6, 64], strides = [1, 1]} : vector<6x512xf32> to vector<6x64xf32>
    %84 = arith.subf %83, %23 : vector<6x64xf32>
    %85 = vector.broadcast %16 : vector<6x1xf32> to vector<6x64xf32>
    %86 = arith.mulf %84, %85 : vector<6x64xf32>
    %87 = arith.maximumf %84, %86 : vector<6x64xf32>
    %cst_30 = arith.constant dense<0.000000e+00> : vector<24x64xf32>
    %88 = tpu.matmul %17, %87, %cst_30 {dimension_numbers = #tpu.dot_dimension_numbers<[1], [0], [0], [1], [0, 0, 1, 1], [], []>} : vector<24x6xf32>, vector<6x64xf32>, vector<24x64xf32> -> vector<24x64xf32>
    %89 = vector.extract_strided_slice %13 {offsets = [0, 256], sizes = [24, 64], strides = [1, 1]} : vector<27x512xf32> to vector<24x64xf32>
    %90 = arith.mulf %89, %88 : vector<24x64xf32>
    %91 = vector.broadcast %18 : vector<24x1xf32> to vector<24x64xf32>
    %92 = arith.mulf %90, %91 : vector<24x64xf32>
    %93 = vector.broadcast %19 : vector<24x1xf32> to vector<24x64xf32>
    %94 = arith.addf %92, %93 : vector<24x64xf32>
    %cst_31 = arith.constant 0.000000e+00 : f32
    %95 = vector.broadcast %cst_31 : f32 to vector<24x64xf32>
    %96 = arith.maximumf %94, %95 : vector<24x64xf32>
    %97 = arith.maximumf %82, %96 : vector<24x64xf32>
    %98 = vector.extract_strided_slice %20 {offsets = [0, 320], sizes = [6, 64], strides = [1, 1]} : vector<6x512xf32> to vector<6x64xf32>
    %99 = arith.subf %98, %23 : vector<6x64xf32>
    %100 = vector.broadcast %16 : vector<6x1xf32> to vector<6x64xf32>
    %101 = arith.mulf %99, %100 : vector<6x64xf32>
    %102 = arith.maximumf %99, %101 : vector<6x64xf32>
    %cst_32 = arith.constant dense<0.000000e+00> : vector<24x64xf32>
    %103 = tpu.matmul %17, %102, %cst_32 {dimension_numbers = #tpu.dot_dimension_numbers<[1], [0], [0], [1], [0, 0, 1, 1], [], []>} : vector<24x6xf32>, vector<6x64xf32>, vector<24x64xf32> -> vector<24x64xf32>
    %104 = vector.extract_strided_slice %13 {offsets = [0, 320], sizes = [24, 64], strides = [1, 1]} : vector<27x512xf32> to vector<24x64xf32>
    %105 = arith.mulf %104, %103 : vector<24x64xf32>
    %106 = vector.broadcast %18 : vector<24x1xf32> to vector<24x64xf32>
    %107 = arith.mulf %105, %106 : vector<24x64xf32>
    %108 = vector.broadcast %19 : vector<24x1xf32> to vector<24x64xf32>
    %109 = arith.addf %107, %108 : vector<24x64xf32>
    %cst_33 = arith.constant 0.000000e+00 : f32
    %110 = vector.broadcast %cst_33 : f32 to vector<24x64xf32>
    %111 = arith.maximumf %109, %110 : vector<24x64xf32>
    %112 = arith.maximumf %97, %111 : vector<24x64xf32>
    %113 = vector.extract_strided_slice %20 {offsets = [0, 384], sizes = [6, 64], strides = [1, 1]} : vector<6x512xf32> to vector<6x64xf32>
    %114 = arith.subf %113, %23 : vector<6x64xf32>
    %115 = vector.broadcast %16 : vector<6x1xf32> to vector<6x64xf32>
    %116 = arith.mulf %114, %115 : vector<6x64xf32>
    %117 = arith.maximumf %114, %116 : vector<6x64xf32>
    %cst_34 = arith.constant dense<0.000000e+00> : vector<24x64xf32>
    %118 = tpu.matmul %17, %117, %cst_34 {dimension_numbers = #tpu.dot_dimension_numbers<[1], [0], [0], [1], [0, 0, 1, 1], [], []>} : vector<24x6xf32>, vector<6x64xf32>, vector<24x64xf32> -> vector<24x64xf32>
    %119 = vector.extract_strided_slice %13 {offsets = [0, 384], sizes = [24, 64], strides = [1, 1]} : vector<27x512xf32> to vector<24x64xf32>
    %120 = arith.mulf %119, %118 : vector<24x64xf32>
    %121 = vector.broadcast %18 : vector<24x1xf32> to vector<24x64xf32>
    %122 = arith.mulf %120, %121 : vector<24x64xf32>
    %123 = vector.broadcast %19 : vector<24x1xf32> to vector<24x64xf32>
    %124 = arith.addf %122, %123 : vector<24x64xf32>
    %cst_35 = arith.constant 0.000000e+00 : f32
    %125 = vector.broadcast %cst_35 : f32 to vector<24x64xf32>
    %126 = arith.maximumf %124, %125 : vector<24x64xf32>
    %127 = arith.maximumf %112, %126 : vector<24x64xf32>
    %128 = vector.extract_strided_slice %20 {offsets = [0, 448], sizes = [6, 64], strides = [1, 1]} : vector<6x512xf32> to vector<6x64xf32>
    %129 = arith.subf %128, %23 : vector<6x64xf32>
    %130 = vector.broadcast %16 : vector<6x1xf32> to vector<6x64xf32>
    %131 = arith.mulf %129, %130 : vector<6x64xf32>
    %132 = arith.maximumf %129, %131 : vector<6x64xf32>
    %cst_36 = arith.constant dense<0.000000e+00> : vector<24x64xf32>
    %133 = tpu.matmul %17, %132, %cst_36 {dimension_numbers = #tpu.dot_dimension_numbers<[1], [0], [0], [1], [0, 0, 1, 1], [], []>} : vector<24x6xf32>, vector<6x64xf32>, vector<24x64xf32> -> vector<24x64xf32>
    %134 = vector.extract_strided_slice %13 {offsets = [0, 448], sizes = [24, 64], strides = [1, 1]} : vector<27x512xf32> to vector<24x64xf32>
    %135 = arith.mulf %134, %133 : vector<24x64xf32>
    %136 = vector.broadcast %18 : vector<24x1xf32> to vector<24x64xf32>
    %137 = arith.mulf %135, %136 : vector<24x64xf32>
    %138 = vector.broadcast %19 : vector<24x1xf32> to vector<24x64xf32>
    %139 = arith.addf %137, %138 : vector<24x64xf32>
    %cst_37 = arith.constant 0.000000e+00 : f32
    %140 = vector.broadcast %cst_37 : f32 to vector<24x64xf32>
    %141 = arith.maximumf %139, %140 : vector<24x64xf32>
    %142 = arith.maximumf %127, %141 : vector<24x64xf32>
    %c0_38 = arith.constant 0 : index
    %c0_39 = arith.constant 0 : index
    %c0_40 = arith.constant 0 : index
    %143 = vector.load %arg5[%c0_38, %c0_39, %c0_40] : memref<1x24x64xf32, #tpu.memory_space<vmem>>, vector<1x24x64xf32>
    %144 = vector.shape_cast %143 : vector<1x24x64xf32> to vector<24x64xf32>
    %145 = arith.addf %142, %144 : vector<24x64xf32>
    %c0_41 = arith.constant 0 : index
    %c0_42 = arith.constant 0 : index
    %c0_43 = arith.constant 0 : index
    %146 = vector.load %arg12[%c0_41, %c0_42, %c0_43] : memref<1x24x64xf32, #tpu.memory_space<vmem>>, vector<1x24x64xf32>
    %147 = vector.shape_cast %146 : vector<1x24x64xf32> to vector<24x64xf32>
    %148 = vector.shape_cast %145 : vector<24x64xf32> to vector<1x24x64xf32>
    tpu.vector_store %arg12[%c0_41, %c0_42, %c0_43], %148 {strides = array<i32>} : memref<1x24x64xf32, #tpu.memory_space<vmem>>, vector<1x24x64xf32>,
    return
  }
  func.func @transform_0(%arg0: i32, %arg1: i32) -> (i32, i32, i32) {
    %c0_i32 = arith.constant 0 : i32
    %c0_i32_0 = arith.constant 0 : i32
    %c0_i32_1 = arith.constant 0 : i32
    return %arg0, %c0_i32, %c0_i32_0 : i32, i32, i32
  }
  func.func @transform_1(%arg0: i32, %arg1: i32) -> (i32, i32, i32) {
    %c0_i32 = arith.constant 0 : i32
    %c0_i32_0 = arith.constant 0 : i32
    return %arg0, %c0_i32, %arg1 : i32, i32, i32
  }
  func.func @transform_2(%arg0: i32, %arg1: i32) -> (i32, i32, i32) {
    %c0_i32 = arith.constant 0 : i32
    %c0_i32_0 = arith.constant 0 : i32
    return %arg0, %arg1, %c0_i32 : i32, i32, i32
  }
  func.func @transform_3(%arg0: i32, %arg1: i32) -> (i32, i32, i32) {
    %c0_i32 = arith.constant 0 : i32
    %c0_i32_0 = arith.constant 0 : i32
    return %arg0, %c0_i32, %arg1 : i32, i32, i32
  }
  func.func @transform_4(%arg0: i32, %arg1: i32) -> (i32, i32) {
    %c0_i32 = arith.constant 0 : i32
    %c0_i32_0 = arith.constant 0 : i32
    %c0_i32_1 = arith.constant 0 : i32
    return %c0_i32, %c0_i32_0 : i32, i32
  }
  func.func @transform_5(%arg0: i32, %arg1: i32) -> (i32, i32) {
    %c0_i32 = arith.constant 0 : i32
    %c0_i32_0 = arith.constant 0 : i32
    %c0_i32_1 = arith.constant 0 : i32
    return %c0_i32, %c0_i32_0 : i32, i32
  }
  func.func @transform_6(%arg0: i32, %arg1: i32) -> (i32, i32) {
    %c0_i32 = arith.constant 0 : i32
    %c0_i32_0 = arith.constant 0 : i32
    %c0_i32_1 = arith.constant 0 : i32
    return %c0_i32, %c0_i32_0 : i32, i32
  }
  func.func @transform_7(%arg0: i32, %arg1: i32) -> (i32, i32) {
    %c0_i32 = arith.constant 0 : i32
    %c0_i32_0 = arith.constant 0 : i32
    %c0_i32_1 = arith.constant 0 : i32
    return %c0_i32, %c0_i32_0 : i32, i32
  }
  func.func @transform_8(%arg0: i32, %arg1: i32) -> (i32, i32) {
    %c0_i32 = arith.constant 0 : i32
    %c0_i32_0 = arith.constant 0 : i32
    %c0_i32_1 = arith.constant 0 : i32
    return %c0_i32, %c0_i32_0 : i32, i32
  }
  func.func @transform_9(%arg0: i32, %arg1: i32) -> (i32, i32) {
    %c0_i32 = arith.constant 0 : i32
    %c0_i32_0 = arith.constant 0 : i32
    %c0_i32_1 = arith.constant 0 : i32
    return %c0_i32, %c0_i32_0 : i32, i32
  }
  func.func @transform_10(%arg0: i32, %arg1: i32) -> (i32, i32, i32) {
    %c0_i32 = arith.constant 0 : i32
    %c0_i32_0 = arith.constant 0 : i32
    return %arg0, %c0_i32, %arg1 : i32, i32, i32
  }
}

</mosaic_0001>

<llo_original>
// kernel: pvb_forward.3
$region0: #{pvb_forward.3}
  #allocation0 [shape = 'u32[]', space=smem, size = 0x4, offset = 0x4, fixed_abs, tag = 'smem constant byte address 0x4 - core index']
  #allocation1 [shape = 'u32[144,128]{1,0:T(1,128)}', space=vmem, size = 0x12000, scoped, tag = 'internal scratch']
  %s0 = inlined_call_operand.hbm [shape: f32[2,27,64], index: 0, kind: input, shape index: {}, may-alias: {0,1}]
  %s1 = inlined_call_operand.hbm [shape: f32[2,27,64], index: 1, kind: input, shape index: {}, may-alias: {0,1}]
  %s2 = inlined_call_operand.hbm [shape: s32[2,1,512], index: 2, kind: input, shape index: {}]
  %s3 = inlined_call_operand.hbm [shape: f32[2,24,64], index: 3, kind: input, shape index: {}]
  %s4 = inlined_call_operand.hbm [shape: f32[6,27], index: 4, kind: input, shape index: {}]
  %s5 = inlined_call_operand.hbm [shape: f32[6,1], index: 5, kind: input, shape index: {}]
  %s6 = inlined_call_operand.hbm [shape: f32[6,1], index: 6, kind: input, shape index: {}]
  %s7 = inlined_call_operand.hbm [shape: f32[24,6], index: 7, kind: input, shape index: {}]
  %s8 = inlined_call_operand.hbm [shape: f32[24,1], index: 8, kind: input, shape index: {}]
  %s9 = inlined_call_operand.hbm [shape: f32[24,1], index: 9, kind: input, shape index: {}]
  %s10 = inlined_call_operand.hbm [shape: f32[2,24,64], index: 10, kind: output, shape index: {}]
  %s11 = sld [smem:[#allocation0]]
  $region113: #{pvb_forward.3} parent=0
    _
  %s13 = ssub.s32 1, %s11
  %s14 = scalar_select 0, %s13, %s11
  $region1: #{pvb_forward.3} parent=0
    #allocation2 [shape = 'u8[32768]{0}', space=vmem, size = 0x8000, scoped, tag = 'input window, operand 0']
    #allocation3 [shape = 's32[2]{0}', space=sflag, size = 0x8, scoped, tag = 'scoped memory for pvb_forward.3']
    #allocation4 [shape = 's32[2]{0}', space=sflag, size = 0x8, scoped, tag = 'scoped memory for pvb_forward.3']
    #allocation5 [shape = 'u8[32768]{0}', space=vmem, size = 0x8000, scoped, tag = 'input window, operand 1']
    #allocation6 [shape = 's32[2]{0}', space=sflag, size = 0x8, scoped, tag = 'scoped memory for pvb_forward.3']
    #allocation7 [shape = 'u8[4096]{0}', space=vmem, size = 0x1000, scoped, tag = 'input window, operand 2']
    #allocation8 [shape = 'u8[24576]{0}', space=vmem, size = 0x6000, scoped, tag = 'input window, operand 3']
    #allocation9 [shape = 's32[2]{0}', space=sflag, size = 0x8, scoped, tag = 'scoped memory for pvb_forward.3']
    #allocation10 [shape = 'u8[4096]{0}', space=vmem, size = 0x1000, scoped, tag = 'input window, operand 4, single buffered']
    #allocation11 [shape = 'u8[4096]{0}', space=vmem, size = 0x1000, scoped, tag = 'input window, operand 5, single buffered']
    #allocation12 [shape = 's32[1]{0}', space=sflag, size = 0x4, scoped, tag = 'scoped memory for pvb_forward.3']
    #allocation13 [shape = 'u8[4096]{0}', space=vmem, size = 0x1000, scoped, tag = 'input window, operand 6, single buffered']
    #allocation14 [shape = 'u8[12288]{0}', space=vmem, size = 0x3000, scoped, tag = 'input window, operand 7, single buffered']
    #allocation15 [shape = 's32[1]{0}', space=sflag, size = 0x4, scoped, tag = 'scoped memory for pvb_forward.3']
    #allocation16 [shape = 'u8[12288]{0}', space=vmem, size = 0x3000, scoped, tag = 'input window, operand 8, single buffered']
    #allocation17 [shape = 'u8[12288]{0}', space=vmem, size = 0x3000, scoped, tag = 'input window, operand 9, single buffered']
    #allocation18 [shape = 's32[1]{0}', space=sflag, size = 0x4, scoped, tag = 'scoped memory for pvb_forward.3']
    #allocation19 [shape = 'u8[24576]{0}', space=vmem, size = 0x6000, scoped, tag = 'output window, operand 0']
    %15 = vsyncpa [#allocation3], 0
    %s16 = scalar_lea.sflag [#allocation3], 1
    %17 = vsyncpa %s16, 0
    %18 = vsyncpa [#allocation6], 0
    %s19 = scalar_lea.sflag [#allocation6], 1
    %20 = vsyncpa %s19, 0
    %21 = vsyncpa [#allocation9], 0
    %s22 = scalar_lea.sflag [#allocation9], 1
    %23 = vsyncpa %s22, 0
    %24 = vsyncpa [#allocation12], 0
    %25 = vsyncpa [#allocation15], 0
    %26 = vsyncpa [#allocation18], 0
    %27 = vsyncpa [#allocation4], 0
    %s28 = scalar_lea.sflag [#allocation4], 1
    %29 = vsyncpa %s28, 0
    loop: start=0, step=1, limit=4
    $region2: #{pvb_forward.3} parent=1 // loop_pre_header
      _
    $region3: #{pvb_forward.3} parent=1 // loop_header
      %s31 = sphi 0, %s35
      %p32 = scmp.ge.s32.totalorder %s31, 4
      %s38 = sphi 0, %s50
      %s39 = sphi 0, %s46
      %s40 = sphi 0, %s38
      %s41 = sphi 0, %s39
      %s42 = sphi 0, %s40
      %s43 = sphi 0, %s41
      %s53 = sphi 0, %s55
      %s56 = sphi 0, %s53
      %s57 = sphi 0, %s56
      %s73 = sphi 0, %s57
      %s81 = sphi 0, %s83
      %s84 = sphi 0, %s81
      %s85 = sphi 0, %s84
      %s101 = sphi 0, %s85
      %s109 = sphi 0, %s111
      %s112 = sphi 0, %s109
      %s113 = sphi 0, %s112
      %s129 = sphi 0, %s113
      %s137 = sphi 0, %s139
      %s140 = sphi 0, %s137
      %s141 = sphi 0, %s140
      %s157 = sphi 0, %s141
      %s161 = sphi 0, %s161
      %s163 = sphi 0, %s161
      %s164 = sphi 0, %s163
      %s178 = sphi 0, %s164
      %s182 = sphi 0, %s182
      %s184 = sphi 0, %s182
      %s185 = sphi 0, %s184
      %s199 = sphi 0, %s185
      %s203 = sphi 0, %s203
      %s205 = sphi 0, %s203
      %s206 = sphi 0, %s205
      %s220 = sphi 0, %s206
      %s224 = sphi 0, %s224
      %s226 = sphi 0, %s224
      %s227 = sphi 0, %s226
      %s241 = sphi 0, %s227
      %s245 = sphi 0, %s245
      %s247 = sphi 0, %s245
      %s248 = sphi 0, %s247
      %s262 = sphi 0, %s248
      %s266 = sphi 0, %s266
      %s268 = sphi 0, %s266
      %s269 = sphi 0, %s268
      %s283 = sphi 0, %s269
      %s291 = sphi 0, %s293
      %s294 = sphi 0, %s291
      %s295 = sphi 0, %s294
      %s311 = sphi 0, %s295
    $region4: #{pvb_forward.3} parent=1 // loop_header_branch
      %34 = sbr.rel (%p32) target = $region8
    $region5: #{pvb_forward.3} parent=1 // loop_body
      %s36 = ssub.s32 %s31, 1
      %s37 = ssub.s32 %s31, 2
      %s44 = sadd.s32 1, %s39
      %p45 = scmp.ge.s32.totalorder %s44, 1
      %s46 = scalar_select %p45, 0, %s44
      %s47 = sadd.s32 1, %s38
      %s48 = scalar_select %p45, %s47, %s38
      %p49 = scmp.ge.s32.totalorder %s48, 2
      %s50 = scalar_select %p49, 0, %s48
      %s51 = ssub.s32 %s38, %s50
      %p52 = scmp.eq.s32.totalorder %s51, 0
      %s54 = sadd.s32 %s53, 1
      %s55 = scalar_select %p52, %s53, %s54
      %p58 = pneg %p52
      %p59 = scmp.eq.s32.totalorder %s31, 1
      %p60 = por %p58, %p59
      %p61 = scmp.ne.s32.totalorder %s53, %s56
      %p62 = scmp.eq.s32.totalorder %s31, 0
      %p63 = por %p61, %p62
      %p64 = scmp.ne.s32.totalorder %s53, %s56
      %p65 = scmp.eq.s32.totalorder %s36, 1
      %p66 = por %p64, %p65
      %p67 = scmp.ne.s32.totalorder %s56, %s57
      %p68 = scmp.eq.s32.totalorder %s36, 0
      %p69 = por %p67, %p68
      %p70 = scmp.ne.s32.totalorder %s56, %s57
      %p71 = scmp.eq.s32.totalorder %s37, 1
      %p72 = por %p70, %p71
      %p74 = scmp.ne.s32.totalorder %s57, %s73
      %p75 = scmp.eq.s32.totalorder %s37, 0
      %p76 = por %p74, %p75
      %s77 = ssub.s32 %s38, %s50
      %s78 = ssub.s32 %s39, %s46
      %s79 = sor.u32 %s77, %s78
      %p80 = scmp.eq.s32.totalorder %s79, 0
      %s82 = sadd.s32 %s81, 1
      %s83 = scalar_select %p80, %s81, %s82
      %p86 = pneg %p80
      %p87 = scmp.eq.s32.totalorder %s31, 1
      %p88 = por %p86, %p87
      %p89 = scmp.ne.s32.totalorder %s81, %s84
      %p90 = scmp.eq.s32.totalorder %s31, 0
      %p91 = por %p89, %p90
      %p92 = scmp.ne.s32.totalorder %s81, %s84
      %p93 = scmp.eq.s32.totalorder %s36, 1
      %p94 = por %p92, %p93
      %p95 = scmp.ne.s32.totalorder %s84, %s85
      %p96 = scmp.eq.s32.totalorder %s36, 0
      %p97 = por %p95, %p96
      %p98 = scmp.ne.s32.totalorder %s84, %s85
      %p99 = scmp.eq.s32.totalorder %s37, 1
      %p100 = por %p98, %p99
      %p102 = scmp.ne.s32.totalorder %s85, %s101
      %p103 = scmp.eq.s32.totalorder %s37, 0
      %p104 = por %p102, %p103
      %s105 = ssub.s32 %s38, %s50
      %s106 = ssub.s32 %s39, %s46
      %s107 = sor.u32 %s105, %s106
      %p108 = scmp.eq.s32.totalorder %s107, 0
      %s110 = sadd.s32 %s109, 1
      %s111 = scalar_select %p108, %s109, %s110
      %p114 = pneg %p108
      %p115 = scmp.eq.s32.totalorder %s31, 1
      %p116 = por %p114, %p115
      %p117 = scmp.ne.s32.totalorder %s109, %s112
      %p118 = scmp.eq.s32.totalorder %s31, 0
      %p119 = por %p117, %p118
      %p120 = scmp.ne.s32.totalorder %s109, %s112
      %p121 = scmp.eq.s32.totalorder %s36, 1
      %p122 = por %p120, %p121
      %p123 = scmp.ne.s32.totalorder %s112, %s113
      %p124 = scmp.eq.s32.totalorder %s36, 0
      %p125 = por %p123, %p124
      %p126 = scmp.ne.s32.totalorder %s112, %s113
      %p127 = scmp.eq.s32.totalorder %s37, 1
      %p128 = por %p126, %p127
      %p130 = scmp.ne.s32.totalorder %s113, %s129
      %p131 = scmp.eq.s32.totalorder %s37, 0
      %p132 = por %p130, %p131
      %s133 = ssub.s32 %s38, %s50
      %s134 = ssub.s32 %s39, %s46
      %s135 = sor.u32 %s133, %s134
      %p136 = scmp.eq.s32.totalorder %s135, 0
      %s138 = sadd.s32 %s137, 1
      %s139 = scalar_select %p136, %s137, %s138
      %p142 = pneg %p136
      %p143 = scmp.eq.s32.totalorder %s31, 1
      %p144 = por %p142, %p143
      %p145 = scmp.ne.s32.totalorder %s137, %s140
      %p146 = scmp.eq.s32.totalorder %s31, 0
      %p147 = por %p145, %p146
      %p148 = scmp.ne.s32.totalorder %s137, %s140
      %p149 = scmp.eq.s32.totalorder %s36, 1
      %p150 = por %p148, %p149
      %p151 = scmp.ne.s32.totalorder %s140, %s141
      %p152 = scmp.eq.s32.totalorder %s36, 0
      %p153 = por %p151, %p152
      %p154 = scmp.ne.s32.totalorder %s140, %s141
      %p155 = scmp.eq.s32.totalorder %s37, 1
      %p156 = por %p154, %p155
      %p158 = scmp.ne.s32.totalorder %s141, %s157
      %p159 = scmp.eq.s32.totalorder %s37, 0
      %p160 = por %p158, %p159
      %s162 = sadd.s32 %s161, 1
      %p165 = scmp.eq.s32.totalorder %s31, 1
      %p166 = scmp.ne.s32.totalorder %s161, %s163
      %p167 = scmp.eq.s32.totalorder %s31, 0
      %p168 = por %p166, %p167
      %p169 = scmp.ne.s32.totalorder %s161, %s163
      %p170 = scmp.eq.s32.totalorder %s36, 1
      %p171 = por %p169, %p170
      %p172 = scmp.ne.s32.totalorder %s163, %s164
      %p173 = scmp.eq.s32.totalorder %s36, 0
      %p174 = por %p172, %p173
      %p175 = scmp.ne.s32.totalorder %s163, %s164
      %p176 = scmp.eq.s32.totalorder %s37, 1
      %p177 = por %p175, %p176
      %p179 = scmp.ne.s32.totalorder %s164, %s178
      %p180 = scmp.eq.s32.totalorder %s37, 0
      %p181 = por %p179, %p180
      %s183 = sadd.s32 %s182, 1
      %p186 = scmp.eq.s32.totalorder %s31, 1
      %p187 = scmp.ne.s32.totalorder %s182, %s184
      %p188 = scmp.eq.s32.totalorder %s31, 0
      %p189 = por %p187, %p188
      %p190 = scmp.ne.s32.totalorder %s182, %s184
      %p191 = scmp.eq.s32.totalorder %s36, 1
      %p192 = por %p190, %p191
      %p193 = scmp.ne.s32.totalorder %s184, %s185
      %p194 = scmp.eq.s32.totalorder %s36, 0
      %p195 = por %p193, %p194
      %p196 = scmp.ne.s32.totalorder %s184, %s185
      %p197 = scmp.eq.s32.totalorder %s37, 1
      %p198 = por %p196, %p197
      %p200 = scmp.ne.s32.totalorder %s185, %s199
      %p201 = scmp.eq.s32.totalorder %s37, 0
      %p202 = por %p200, %p201
      %s204 = sadd.s32 %s203, 1
      %p207 = scmp.eq.s32.totalorder %s31, 1
      %p208 = scmp.ne.s32.totalorder %s203, %s205
      %p209 = scmp.eq.s32.totalorder %s31, 0
      %p210 = por %p208, %p209
      %p211 = scmp.ne.s32.totalorder %s203, %s205
      %p212 = scmp.eq.s32.totalorder %s36, 1
      %p213 = por %p211, %p212
      %p214 = scmp.ne.s32.totalorder %s205, %s206
      %p215 = scmp.eq.s32.totalorder %s36, 0
      %p216 = por %p214, %p215
      %p217 = scmp.ne.s32.totalorder %s205, %s206
      %p218 = scmp.eq.s32.totalorder %s37, 1
      %p219 = por %p217, %p218
      %p221 = scmp.ne.s32.totalorder %s206, %s220
      %p222 = scmp.eq.s32.totalorder %s37, 0
      %p223 = por %p221, %p222
      %s225 = sadd.s32 %s224, 1
      %p228 = scmp.eq.s32.totalorder %s31, 1
      %p229 = scmp.ne.s32.totalorder %s224, %s226
      %p230 = scmp.eq.s32.totalorder %s31, 0
      %p231 = por %p229, %p230
      %p232 = scmp.ne.s32.totalorder %s224, %s226
      %p233 = scmp.eq.s32.totalorder %s36, 1
      %p234 = por %p232, %p233
      %p235 = scmp.ne.s32.totalorder %s226, %s227
      %p236 = scmp.eq.s32.totalorder %s36, 0
      %p237 = por %p235, %p236
      %p238 = scmp.ne.s32.totalorder %s226, %s227
      %p239 = scmp.eq.s32.totalorder %s37, 1
      %p240 = por %p238, %p239
      %p242 = scmp.ne.s32.totalorder %s227, %s241
      %p243 = scmp.eq.s32.totalorder %s37, 0
      %p244 = por %p242, %p243
      %s246 = sadd.s32 %s245, 1
      %p249 = scmp.eq.s32.totalorder %s31, 1
      %p250 = scmp.ne.s32.totalorder %s245, %s247
      %p251 = scmp.eq.s32.totalorder %s31, 0
      %p252 = por %p250, %p251
      %p253 = scmp.ne.s32.totalorder %s245, %s247
      %p254 = scmp.eq.s32.totalorder %s36, 1
      %p255 = por %p253, %p254
      %p256 = scmp.ne.s32.totalorder %s247, %s248
      %p257 = scmp.eq.s32.totalorder %s36, 0
      %p258 = por %p256, %p257
      %p259 = scmp.ne.s32.totalorder %s247, %s248
      %p260 = scmp.eq.s32.totalorder %s37, 1
      %p261 = por %p259, %p260
      %p263 = scmp.ne.s32.totalorder %s248, %s262
      %p264 = scmp.eq.s32.totalorder %s37, 0
      %p265 = por %p263, %p264
      %s267 = sadd.s32 %s266, 1
      %p270 = scmp.eq.s32.totalorder %s31, 1
      %p271 = scmp.ne.s32.totalorder %s266, %s268
      %p272 = scmp.eq.s32.totalorder %s31, 0
      %p273 = por %p271, %p272
      %p274 = scmp.ne.s32.totalorder %s266, %s268
      %p275 = scmp.eq.s32.totalorder %s36, 1
      %p276 = por %p274, %p275
      %p277 = scmp.ne.s32.totalorder %s268, %s269
      %p278 = scmp.eq.s32.totalorder %s36, 0
      %p279 = por %p277, %p278
      %p280 = scmp.ne.s32.totalorder %s268, %s269
      %p281 = scmp.eq.s32.totalorder %s37, 1
      %p282 = por %p280, %p281
      %p284 = scmp.ne.s32.totalorder %s269, %s283
      %p285 = scmp.eq.s32.totalorder %s37, 0
      %p286 = por %p284, %p285
      %s287 = ssub.s32 %s38, %s50
      %s288 = ssub.s32 %s39, %s46
      %s289 = sor.u32 %s287, %s288
      %p290 = scmp.eq.s32.totalorder %s289, 0
      %s292 = sadd.s32 %s291, 1
      %s293 = scalar_select %p290, %s291, %s292
      %p296 = pneg %p290
      %p297 = scmp.eq.s32.totalorder %s31, 1
      %p298 = por %p296, %p297
      %p299 = scmp.ne.s32.totalorder %s291, %s294
      %p300 = scmp.eq.s32.totalorder %s31, 0
      %p301 = por %p299, %p300
      %p302 = scmp.ne.s32.totalorder %s291, %s294
      %p303 = scmp.eq.s32.totalorder %s36, 1
      %p304 = por %p302, %p303
      %p305 = scmp.ne.s32.totalorder %s294, %s295
      %p306 = scmp.eq.s32.totalorder %s36, 0
      %p307 = por %p305, %p306
      %p308 = scmp.ne.s32.totalorder %s294, %s295
      %p309 = scmp.eq.s32.totalorder %s37, 1
      %p310 = por %p308, %p309
      %p312 = scmp.ne.s32.totalorder %s295, %s311
      %p313 = scmp.eq.s32.totalorder %s37, 0
      %p314 = por %p312, %p313
      %p315 = scmp.le.s32.totalorder 1, %s31
      %p316 = scmp.lt.s32.totalorder %s31, 3
      %p317 = pnand %p315, %p316
      %p318 = pneg %p317
      // Predicated region
      $region9: #{pvb_forward.3} parent=5 // pred_check
        _
      $region10: #{pvb_forward.3} parent=5 // pred_check_branch
        %320 = sbr.rel (%p317) target = $region12
      $region11: #{pvb_forward.3} parent=5 // pred_region
        %s321 = ssub.s32 %s31, 1
        // Predicated region
        $region13: #{pvb_forward.3} parent=11 // pred_check
          %p322 = pneg %p174
        $region14: #{pvb_forward.3} parent=11 // pred_check_branch
          %324 = sbr.rel (%p322) target = $region16
        $region15: #{pvb_forward.3} parent=11 // pred_region
          %s326 = ssub.s32 128, 128
          %327 = vsyncadd [#allocation9], %s326
          %s329 = sshll.u32 [#allocation10], 4
          %s330 = int_to_ptr.vmem [resolvable:$true] %s329
          %332 = dma.hbm_to_vmem [thread:$0]  %s4, 128, %s330, [#allocation9]
        $region16: #{pvb_forward.3} parent=11 // pred_fallthru
          _
        // Predicated region
        $region17: #{pvb_forward.3} parent=11 // pred_check
          %p333 = pneg %p195
        $region18: #{pvb_forward.3} parent=11 // pred_check_branch
          %335 = sbr.rel (%p333) target = $region20
        $region19: #{pvb_forward.3} parent=11 // pred_region
          %s337 = ssub.s32 128, 128
          %338 = vsyncadd [#allocation12], %s337
          %s340 = sshll.u32 [#allocation11], 4
          %s341 = int_to_ptr.vmem [resolvable:$true] %s340
          %343 = dma.hbm_to_vmem [thread:$0]  %s5, 128, %s341, [#allocation12]
        $region20: #{pvb_forward.3} parent=11 // pred_fallthru
          _
        // Predicated region
        $region21: #{pvb_forward.3} parent=11 // pred_check
          %p344 = pneg %p216
        $region22: #{pvb_forward.3} parent=11 // pred_check_branch
          %346 = sbr.rel (%p344) target = $region24
        $region23: #{pvb_forward.3} parent=11 // pred_region
          %s348 = ssub.s32 128, 128
          %349 = vsyncadd [#allocation12], %s348
          %s351 = sshll.u32 [#allocation13], 4
          %s352 = int_to_ptr.vmem [resolvable:$true] %s351
          %354 = dma.hbm_to_vmem [thread:$0]  %s6, 128, %s352, [#allocation12]
        $region24: #{pvb_forward.3} parent=11 // pred_fallthru
          _
        // Predicated region
        $region25: #{pvb_forward.3} parent=11 // pred_check
          %p355 = pneg %p237
        $region26: #{pvb_forward.3} parent=11 // pred_check_branch
          %357 = sbr.rel (%p355) target = $region28
        $region27: #{pvb_forward.3} parent=11 // pred_region
          %s359 = ssub.s32 384, 384
          %360 = vsyncadd [#allocation15], %s359
          %s361 = sshll.u32 [#allocation14], 4
          %s362 = int_to_ptr.vmem [resolvable:$true] %s361
          %367 = dma.hbm_to_vmem [thread:$0]  %s7, 384, %s362, [#allocation15], 128, 128, 8
        $region28: #{pvb_forward.3} parent=11 // pred_fallthru
          _
        // Predicated region
        $region29: #{pvb_forward.3} parent=11 // pred_check
          %p368 = pneg %p258
        $region30: #{pvb_forward.3} parent=11 // pred_check_branch
          %370 = sbr.rel (%p368) target = $region32
        $region31: #{pvb_forward.3} parent=11 // pred_region
          %s372 = ssub.s32 384, 384
          %373 = vsyncadd [#allocation15], %s372
          %s374 = sshll.u32 [#allocation16], 4
          %s375 = int_to_ptr.vmem [resolvable:$true] %s374
          %380 = dma.hbm_to_vmem [thread:$0]  %s8, 384, %s375, [#allocation15], 128, 128, 8
        $region32: #{pvb_forward.3} parent=11 // pred_fallthru
          _
        // Predicated region
        $region33: #{pvb_forward.3} parent=11 // pred_check
          %p381 = pneg %p279
        $region34: #{pvb_forward.3} parent=11 // pred_check_branch
          %383 = sbr.rel (%p381) target = $region36
        $region35: #{pvb_forward.3} parent=11 // pred_region
          %s385 = ssub.s32 384, 384
          %386 = vsyncadd [#allocation18], %s385
          %s387 = sshll.u32 [#allocation17], 4
          %s388 = int_to_ptr.vmem [resolvable:$true] %s387
          %393 = dma.hbm_to_vmem [thread:$0]  %s9, 384, %s388, [#allocation18], 128, 128, 8
        $region36: #{pvb_forward.3} parent=11 // pred_fallthru
          _
      $region12: #{pvb_forward.3} parent=5 // pred_fallthru
        _
      %p394 = scmp.lt.s32.totalorder %s31, 2
      // Predicated region
      $region37: #{pvb_forward.3} parent=5 // pred_check
        %p395 = pneg %p394
      $region38: #{pvb_forward.3} parent=5 // pred_check_branch
        %397 = sbr.rel (%p395) target = $region40
      $region39: #{pvb_forward.3} parent=5 // pred_region
        // Predicated region
        $region41: #{pvb_forward.3} parent=39 // pred_check
          %p398 = pneg %p63
        $region42: #{pvb_forward.3} parent=39 // pred_check_branch
          %400 = sbr.rel (%p398) target = $region44
        $region43: #{pvb_forward.3} parent=39 // pred_region
          %s401 = sand.u32 %s53, 1
          %s402 = scalar_lea.sflag [#allocation3], %s401
          %s403 = sand.u32 %s53, 1
          %s404 = smul.addr %s403, 32
          %s405 = scalar_lea.vmem [#allocation2], %s404
          %s407 = ssub.s32 512, 512
          %408 = vsyncadd %s402, %s407
          %s409 = smul.addr %s38, 4
          %s410 = smul.addr %s409, 128
          %s411 = scalar_lea.hbm %s0, %s410
          %s412 = sshll.u32 %s405, 4
          %s413 = int_to_ptr.vmem [resolvable:$true] %s412
          %418 = dma.hbm_to_vmem [thread:$0]  %s411, 512, %s413, %s402, 128, 128, 8
        $region44: #{pvb_forward.3} parent=39 // pred_fallthru
          _
        // Predicated region
        $region45: #{pvb_forward.3} parent=39 // pred_check
          %p419 = pneg %p91
        $region46: #{pvb_forward.3} parent=39 // pred_check_branch
          %421 = sbr.rel (%p419) target = $region48
        $region47: #{pvb_forward.3} parent=39 // pred_region
          %s422 = sand.u32 %s31, 1
          %s423 = scalar_lea.sflag [#allocation6], %s422
          %s424 = sand.u32 %s81, 1
          %s425 = smul.addr %s424, 32
          %s426 = scalar_lea.vmem [#allocation5], %s425
          %s428 = ssub.s32 512, 512
          %429 = vsyncadd %s423, %s428
          %s430 = smul.addr %s38, 4
          %s431 = sadd.s32 %s39, %s430
          %s432 = smul.addr %s431, 128
          %s433 = scalar_lea.hbm %s1, %s432
          %s434 = sshll.u32 %s426, 4
          %s435 = int_to_ptr.vmem [resolvable:$true] %s434
          %440 = dma.hbm_to_vmem [thread:$0]  %s433, 512, %s435, %s423, 128, 128, 8
        $region48: #{pvb_forward.3} parent=39 // pred_fallthru
          _
        // Predicated region
        $region49: #{pvb_forward.3} parent=39 // pred_check
          %p441 = pneg %p119
        $region50: #{pvb_forward.3} parent=39 // pred_check_branch
          %443 = sbr.rel (%p441) target = $region52
        $region51: #{pvb_forward.3} parent=39 // pred_region
          %s444 = sand.u32 %s31, 1
          %s445 = scalar_lea.sflag [#allocation6], %s444
          %s446 = sand.u32 %s109, 1
          %s447 = smul.addr %s446, 4
          %s448 = scalar_lea.vmem [#allocation7], %s447
          %s450 = ssub.s32 64, 64
          %451 = vsyncadd %s445, %s450
          %s452 = smul.addr %s39, 4
          %s453 = smul.addr %s38, 4
          %s454 = sadd.s32 %s452, %s453
          %s455 = smul.addr %s454, 16
          %s456 = scalar_lea.hbm %s2, %s455
          %s458 = sshll.u32 %s448, 4
          %s459 = int_to_ptr.vmem [resolvable:$true] %s458
          %461 = dma.hbm_to_vmem [thread:$0]  %s456, 64, %s459, %s445
        $region52: #{pvb_forward.3} parent=39 // pred_fallthru
          _
        // Predicated region
        $region53: #{pvb_forward.3} parent=39 // pred_check
          %p462 = pneg %p147
        $region54: #{pvb_forward.3} parent=39 // pred_check_branch
          %464 = sbr.rel (%p462) target = $region56
        $region55: #{pvb_forward.3} parent=39 // pred_region
          %s465 = sand.u32 %s31, 1
          %s466 = scalar_lea.sflag [#allocation9], %s465
          %s467 = sand.u32 %s137, 1
          %s468 = smul.addr %s467, 24
          %s469 = scalar_lea.vmem [#allocation8], %s468
          %s471 = ssub.s32 384, 384
          %472 = vsyncadd %s466, %s471
          %s473 = smul.addr %s38, 3
          %s474 = sadd.s32 %s39, %s473
          %s475 = smul.addr %s474, 128
          %s476 = scalar_lea.hbm %s3, %s475
          %s477 = sshll.u32 %s469, 4
          %s478 = int_to_ptr.vmem [resolvable:$true] %s477
          %483 = dma.hbm_to_vmem [thread:$0]  %s476, 384, %s478, %s466, 128, 128, 8
        $region56: #{pvb_forward.3} parent=39 // pred_fallthru
          _
      $region40: #{pvb_forward.3} parent=5 // pred_fallthru
        _
      %p484 = scmp.le.s32.totalorder 1, %s31
      %p485 = scmp.lt.s32.totalorder %s31, 3
      %p486 = pnand %p484, %p485
      %p487 = pneg %p486
      // Predicated region
      $region57: #{pvb_forward.3} parent=5 // pred_check
        _
      $region58: #{pvb_forward.3} parent=5 // pred_check_branch
        %489 = sbr.rel (%p486) target = $region60
      $region59: #{pvb_forward.3} parent=5 // pred_region
        %s490 = ssub.s32 %s31, 1
        %s491 = sand.u32 %s56, 1
        %s492 = scalar_lea.sflag [#allocation3], %s491
        %s493 = sand.u32 %s56, 1
        %s494 = smul.addr %s493, 32
        %s495 = scalar_lea.vmem [#allocation2], %s494
        // Predicated region
        $region61: #{pvb_forward.3} parent=59 // pred_check
          %p496 = pneg %p69
        $region62: #{pvb_forward.3} parent=59 // pred_check_branch
          %498 = sbr.rel (%p496) target = $region64
        $region63: #{pvb_forward.3} parent=59 // pred_region
          %499 = dma.done %s492, 512
        $region64: #{pvb_forward.3} parent=59 // pred_fallthru
          _
        %s500 = sand.u32 %s36, 1
        %s501 = scalar_lea.sflag [#allocation6], %s500
        %s502 = sand.u32 %s84, 1
        %s503 = smul.addr %s502, 32
        %s504 = scalar_lea.vmem [#allocation5], %s503
        // Predicated region
        $region65: #{pvb_forward.3} parent=59 // pred_check
          %p505 = pneg %p97
        $region66: #{pvb_forward.3} parent=59 // pred_check_branch
          %507 = sbr.rel (%p505) target = $region68
        $region67: #{pvb_forward.3} parent=59 // pred_region
          %508 = dma.done %s501, 512
        $region68: #{pvb_forward.3} parent=59 // pred_fallthru
          _
        %s509 = sand.u32 %s36, 1
        %s510 = scalar_lea.sflag [#allocation6], %s509
        %s511 = sand.u32 %s112, 1
        %s512 = smul.addr %s511, 4
        %s513 = scalar_lea.vmem [#allocation7], %s512
        // Predicated region
        $region69: #{pvb_forward.3} parent=59 // pred_check
          %p514 = pneg %p125
        $region70: #{pvb_forward.3} parent=59 // pred_check_branch
          %516 = sbr.rel (%p514) target = $region72
        $region71: #{pvb_forward.3} parent=59 // pred_region
          %517 = dma.done %s510, 64
        $region72: #{pvb_forward.3} parent=59 // pred_fallthru
          _
        %s518 = sand.u32 %s36, 1
        %s519 = scalar_lea.sflag [#allocation9], %s518
        %s520 = sand.u32 %s140, 1
        %s521 = smul.addr %s520, 24
        %s522 = scalar_lea.vmem [#allocation8], %s521
        // Predicated region
        $region73: #{pvb_forward.3} parent=59 // pred_check
          %p523 = pneg %p153
        $region74: #{pvb_forward.3} parent=59 // pred_check_branch
          %525 = sbr.rel (%p523) target = $region76
        $region75: #{pvb_forward.3} parent=59 // pred_region
          %526 = dma.done %s519, 384
        $region76: #{pvb_forward.3} parent=59 // pred_fallthru
          _
        // Predicated region
        $region77: #{pvb_forward.3} parent=59 // pred_check
          %p527 = pneg %p174
        $region78: #{pvb_forward.3} parent=59 // pred_check_branch
          %529 = sbr.rel (%p527) target = $region80
        $region79: #{pvb_forward.3} parent=59 // pred_region
          %530 = dma.done [#allocation9], 128
        $region80: #{pvb_forward.3} parent=59 // pred_fallthru
          _
        // Predicated region
        $region81: #{pvb_forward.3} parent=59 // pred_check
          %p531 = pneg %p195
        $region82: #{pvb_forward.3} parent=59 // pred_check_branch
          %533 = sbr.rel (%p531) target = $region84
        $region83: #{pvb_forward.3} parent=59 // pred_region
          %534 = dma.done [#allocation12], 128
        $region84: #{pvb_forward.3} parent=59 // pred_fallthru
          _
        // Predicated region
        $region85: #{pvb_forward.3} parent=59 // pred_check
          %p535 = pneg %p216
        $region86: #{pvb_forward.3} parent=59 // pred_check_branch
          %537 = sbr.rel (%p535) target = $region88
        $region87: #{pvb_forward.3} parent=59 // pred_region
          %538 = dma.done [#allocation12], 128
        $region88: #{pvb_forward.3} parent=59 // pred_fallthru
          _
        // Predicated region
        $region89: #{pvb_forward.3} parent=59 // pred_check
          %p539 = pneg %p237
        $region90: #{pvb_forward.3} parent=59 // pred_check_branch
          %541 = sbr.rel (%p539) target = $region92
        $region91: #{pvb_forward.3} parent=59 // pred_region
          %542 = dma.done [#allocation15], 384
        $region92: #{pvb_forward.3} parent=59 // pred_fallthru
          _
        // Predicated region
        $region93: #{pvb_forward.3} parent=59 // pred_check
          %p543 = pneg %p258
        $region94: #{pvb_forward.3} parent=59 // pred_check_branch
          %545 = sbr.rel (%p543) target = $region96
        $region95: #{pvb_forward.3} parent=59 // pred_region
          %546 = dma.done [#allocation15], 384
        $region96: #{pvb_forward.3} parent=59 // pred_fallthru
          _
        // Predicated region
        $region97: #{pvb_forward.3} parent=59 // pred_check
          %p547 = pneg %p279
        $region98: #{pvb_forward.3} parent=59 // pred_check_branch
          %549 = sbr.rel (%p547) target = $region100
        $region99: #{pvb_forward.3} parent=59 // pred_region
          %550 = dma.done [#allocation18], 384
        $region100: #{pvb_forward.3} parent=59 // pred_fallthru
          _
        %s551 = sand.u32 %s56, 1
        %s552 = scalar_lea.sflag [#allocation3], %s551
        %s553 = sand.u32 %s56, 1
        %s554 = smul.addr %s553, 32
        %s555 = scalar_lea.vmem [#allocation2], %s554
        %p556 = pneg %p69
        %p557 = pneg %p66
        %s558 = sand.u32 %s36, 1
        %s559 = scalar_lea.sflag [#allocation6], %s558
        %s560 = sand.u32 %s84, 1
        %s561 = smul.addr %s560, 32
        %s562 = scalar_lea.vmem [#allocation5], %s561
        %p563 = pneg %p97
        %p564 = pneg %p94
        %s565 = sand.u32 %s36, 1
        %s566 = scalar_lea.sflag [#allocation6], %s565
        %s567 = sand.u32 %s112, 1
        %s568 = smul.addr %s567, 4
        %s569 = scalar_lea.vmem [#allocation7], %s568
        %p570 = pneg %p125
        %p571 = pneg %p122
        %s572 = sand.u32 %s36, 1
        %s573 = scalar_lea.sflag [#allocation9], %s572
        %s574 = sand.u32 %s140, 1
        %s575 = smul.addr %s574, 24
        %s576 = scalar_lea.vmem [#allocation8], %s575
        %p577 = pneg %p153
        %p578 = pneg %p150
        %p579 = pneg %p174
        %p580 = pneg %p171
        %p581 = pneg %p195
        %p582 = pneg %p192
        %p583 = pneg %p216
        %p584 = pneg %p213
        %p585 = pneg %p237
        %p586 = pneg %p234
        %p587 = pneg %p258
        %p588 = pneg %p255
        %p589 = pneg %p279
        %p590 = pneg %p276
        %p591 = pneg %p307
        %p592 = pneg %p304
        %s593 = sand.u32 %s294, 1
        %s594 = scalar_lea.sflag [#allocation4], %s593
        %s595 = sand.u32 %s294, 1
        %s596 = smul.addr %s595, 24
        %s597 = scalar_lea.vmem [#allocation19], %s596
        %v598 = vld [vmem:[%s513] sm:$0xf]
        %v599 = vld [vmem:[%s504] sm:$0xff]
        %v600 = vld [vmem:[%s504 + $0x8] sm:$0xff]
        %v601 = vld [vmem:[%s504 + $0x10] sm:$0xff]
        %v602 = vld [vmem:[%s504 + $0x18] sm:$0x7]
        %v603 = vlaneseq
        %v604 = vshrl.u32 %v603, 7
        %v605 = vadd.s32 %v604, 8
        %v606 = vadd.s32 %v604, 16
        %v607 = vadd.s32 %v604, 24
        %v608 = vadd.s32 %v604, 32
        %v609 = vadd.s32 %v604, 40
        %v610 = vadd.s32 %v604, 48
        %v611 = vadd.s32 %v604, 56
        %v612 = vlaneseq
        %v613 = vshrl.u32 %v612, 7
        %v614 = vsub.s32 0, %v613
        %v615 = vrot.slane %v598, %v614
        %v616 = vlaneseq
        %v617 = vshrl.u32 %v616, 7
        %v618 = vsub.s32 1, %v617
        %v619 = vrot.slane %v598, %v618
        %v620 = vlaneseq
        %v621 = vshrl.u32 %v620, 7
        %v622 = vsub.s32 2, %v621
        %v623 = vrot.slane %v598, %v622
        %v624 = vlaneseq
        %v625 = vshrl.u32 %v624, 7
        %v626 = vsub.s32 3, %v625
        %v627 = vrot.slane %v598, %v626
        %vm628 = vcmp.eq.s32.totalorder %v604, %v615
        %vm629 = vcmp.eq.s32.totalorder %v604, %v619
        %vm630 = vcmp.eq.s32.totalorder %v604, %v623
        %vm631 = vcmp.eq.s32.totalorder %v604, %v627
        %vm632 = vcmp.eq.s32.totalorder %v605, %v615
        %vm633 = vcmp.eq.s32.totalorder %v605, %v619
        %vm634 = vcmp.eq.s32.totalorder %v605, %v623
        %vm635 = vcmp.eq.s32.totalorder %v605, %v627
        %vm636 = vcmp.eq.s32.totalorder %v606, %v615
        %vm637 = vcmp.eq.s32.totalorder %v606, %v619
        %vm638 = vcmp.eq.s32.totalorder %v606, %v623
        %vm639 = vcmp.eq.s32.totalorder %v606, %v627
        %vm640 = vcmp.eq.s32.totalorder %v607, %v615
        %vm641 = vcmp.eq.s32.totalorder %v607, %v619
        %vm642 = vcmp.eq.s32.totalorder %v607, %v623
        %vm643 = vcmp.eq.s32.totalorder %v607, %v627
        %vm644 = vcmp.eq.s32.totalorder %v608, %v615
        %vm645 = vcmp.eq.s32.totalorder %v608, %v619
        %vm646 = vcmp.eq.s32.totalorder %v608, %v623
        %vm647 = vcmp.eq.s32.totalorder %v608, %v627
        %vm648 = vcmp.eq.s32.totalorder %v609, %v615
        %vm649 = vcmp.eq.s32.totalorder %v609, %v619
        %vm650 = vcmp.eq.s32.totalorder %v609, %v623
        %vm651 = vcmp.eq.s32.totalorder %v609, %v627
        %vm652 = vcmp.eq.s32.totalorder %v610, %v615
        %vm653 = vcmp.eq.s32.totalorder %v610, %v619
        %vm654 = vcmp.eq.s32.totalorder %v610, %v623
        %vm655 = vcmp.eq.s32.totalorder %v610, %v627
        %vm656 = vcmp.eq.s32.totalorder %v611, %v615
        %vm657 = vcmp.eq.s32.totalorder %v611, %v619
        %vm658 = vcmp.eq.s32.totalorder %v611, %v623
        %vm659 = vcmp.eq.s32.totalorder %v611, %v627
        %v660 = vsel %vm628, 1, 0
        %v661 = vsel %vm629, 1, 0
        %v662 = vsel %vm630, 1, 0
        %v663 = vsel %vm631, 1, 0
        %v664 = vsel %vm632, 1, 0
        %v665 = vsel %vm633, 1, 0
        %v666 = vsel %vm634, 1, 0
        %v667 = vsel %vm635, 1, 0
        %v668 = vsel %vm636, 1, 0
        %v669 = vsel %vm637, 1, 0
        %v670 = vsel %vm638, 1, 0
        %v671 = vsel %vm639, 1, 0
        %v672 = vsel %vm640, 1, 0
        %v673 = vsel %vm641, 1, 0
        %v674 = vsel %vm642, 1, 0
        %v675 = vsel %vm643, 1, 0
        %v676 = vsel %vm644, 1, 0
        %v677 = vsel %vm645, 1, 0
        %v678 = vsel %vm646, 1, 0
        %v679 = vsel %vm647, 1, 0
        %v680 = vsel %vm648, 1, 0
        %v681 = vsel %vm649, 1, 0
        %v682 = vsel %vm650, 1, 0
        %v683 = vsel %vm651, 1, 0
        %v684 = vsel %vm652, 1, 0
        %v685 = vsel %vm653, 1, 0
        %v686 = vsel %vm654, 1, 0
        %v687 = vsel %vm655, 1, 0
        %v688 = vsel %vm656, 1, 0
        %v689 = vsel %vm657, 1, 0
        %v690 = vsel %vm658, 1, 0
        %v691 = vsel %vm659, 1, 0
        %v692 = vcvt.s32.f32 %v660
        %v693 = vcvt.s32.f32 %v661
        %v694 = vcvt.s32.f32 %v662
        %v695 = vcvt.s32.f32 %v663
        %v696 = vcvt.s32.f32 %v664
        %v697 = vcvt.s32.f32 %v665
        %v698 = vcvt.s32.f32 %v666
        %v699 = vcvt.s32.f32 %v667
        %v700 = vcvt.s32.f32 %v668
        %v701 = vcvt.s32.f32 %v669
        %v702 = vcvt.s32.f32 %v670
        %v703 = vcvt.s32.f32 %v671
        %v704 = vcvt.s32.f32 %v672
        %v705 = vcvt.s32.f32 %v673
        %v706 = vcvt.s32.f32 %v674
        %v707 = vcvt.s32.f32 %v675
        %v708 = vcvt.s32.f32 %v676
        %v709 = vcvt.s32.f32 %v677
        %v710 = vcvt.s32.f32 %v678
        %v711 = vcvt.s32.f32 %v679
        %v712 = vcvt.s32.f32 %v680
        %v713 = vcvt.s32.f32 %v681
        %v714 = vcvt.s32.f32 %v682
        %v715 = vcvt.s32.f32 %v683
        %v716 = vcvt.s32.f32 %v684
        %v717 = vcvt.s32.f32 %v685
        %v718 = vcvt.s32.f32 %v686
        %v719 = vcvt.s32.f32 %v687
        %v720 = vcvt.s32.f32 %v688
        %v721 = vcvt.s32.f32 %v689
        %v722 = vcvt.s32.f32 %v690
        %v723 = vcvt.s32.f32 %v691
        %v724 = vld [vmem:[%s495] sm:$0xff]
        %v725 = vld [vmem:[%s495 + $0x8] sm:$0xff]
        %v726 = vld [vmem:[%s495 + $0x10] sm:$0xff]
        %v727 = vld [vmem:[%s495 + $0x18] sm:$0x7]
        %vm728 = vcmask 523264
        %v730 = vsel %vm728, %v724, 0
        %v733 = vsel %vm728, %v725, 0
        %v736 = vsel %vm728, %v726, 0
        %v739 = vsel %vm728, %v727, 0
        %741 = vmatprep.subr.mxu0 %v693
        %742 = vmatpush1.msra.mxu0 %v692
        %743 = vmatprep.subr.mxu0 %v697
        %744 = vmatpush1.msra.mxu0 %v696
        %745 = vmatprep.subr.mxu0 %v701
        %746 = vmatpush1.msra.mxu0 %v700
        %747 = vmatprep.subr.mxu0 %v705
        %748 = vmatpush1.msra.mxu0 %v704
        %749 = vmatprep.subr.mxu0 %v709
        %750 = vmatpush1.msra.mxu0 %v708
        %751 = vmatprep.subr.mxu0 %v713
        %752 = vmatpush1.msra.mxu0 %v712
        %753 = vmatprep.subr.mxu0 %v717
        %754 = vmatpush1.msra.mxu0 %v716
        %755 = vmatprep.subr.mxu0 %v721
        %756 = vmatpush1.msra.mxu0 %v720
        %757 = vmatprep.subr.mxu0 0.0
        %758 = vmatpush1.msra.mxu0 0.0
        %759 = vmatprep.subr.mxu0 0.0
        %760 = vmatpush1.msra.mxu0 0.0
        %761 = vmatprep.subr.mxu0 0.0
        %762 = vmatpush1.msra.mxu0 0.0
        %763 = vmatprep.subr.mxu0 0.0
        %764 = vmatpush1.msra.mxu0 0.0
        %765 = vmatprep.subr.mxu0 0.0
        %766 = vmatpush1.msra.mxu0 0.0
        %767 = vmatprep.subr.mxu0 0.0
        %768 = vmatpush1.msra.mxu0 0.0
        %769 = vmatprep.subr.mxu0 0.0
        %770 = vmatpush1.msra.mxu0 0.0
        %771 = vmatprep.subr.mxu0 0.0
        %772 = vmatpush1.msra.mxu0 0.0
        %773 = vmatprep.subr.mxu0 0.0
        %774 = vmatpush1.msra.mxu0 0.0
        %775 = vmatprep.subr.mxu0 0.0
        %776 = vmatpush1.msra.mxu0 0.0
        %777 = vmatprep.subr.mxu0 0.0
        %778 = vmatpush1.msra.mxu0 0.0
        %779 = vmatprep.subr.mxu0 0.0
        %780 = vmatpush1.msra.mxu0 0.0
        %781 = vmatprep.subr.mxu0 0.0
        %782 = vmatpush1.msra.mxu0 0.0
        %783 = vmatprep.subr.mxu0 0.0
        %784 = vmatpush1.msra.mxu0 0.0
        %785 = vmatprep.subr.mxu0 0.0
        %786 = vmatpush1.msra.mxu0 0.0
        %787 = vmatprep.subr.mxu0 0.0
        %788 = vmatpush1.msra.mxu0 0.0
        %789 = vmatprep.subr.mxu0 0.0
        %790 = vmatpush1.msra.mxu0 0.0
        %791 = vmatprep.subr.mxu0 0.0
        %792 = vmatpush1.msra.mxu0 0.0
        %793 = vmatprep.subr.mxu0 0.0
        %794 = vmatpush1.msra.mxu0 0.0
        %795 = vmatprep.subr.mxu0 0.0
        %796 = vmatpush1.msra.mxu0 0.0
        %797 = vmatprep.subr.mxu0 0.0
        %798 = vmatpush1.msra.mxu0 0.0
        %799 = vmatprep.subr.mxu0 0.0
        %800 = vmatpush1.msra.mxu0 0.0
        %801 = vmatprep.subr.mxu0 0.0
        %802 = vmatpush1.msra.mxu0 0.0
        %803 = vmatprep.subr.mxu0 0.0
        %804 = vmatpush1.msra.mxu0 0.0
        %805 = vmatprep.mubr.f32.mxu0 0.0
        %806 = vmatmul.mubr.f32.gmra.mrb[0].mxu0 %v730
        %v807 = vpop.f32.mrb[0].mxu0
        %v808 = vadd.f32 0.0, %v807
        %v809 = vpop.f32.mrb[0].mxu0
        %v810 = vadd.f32 0.0, %v809
        %811 = vmatprep.mubr.f32.mxu0 0.0
        %812 = vmatmul.mubr.f32.gmra.mrb[0].mxu0 %v733
        %v813 = vpop.f32.mrb[0].mxu0
        %v814 = vadd.f32 0.0, %v813
        %v815 = vpop.f32.mrb[0].mxu0
        %v816 = vadd.f32 0.0, %v815
        %817 = vmatprep.mubr.f32.mxu0 0.0
        %818 = vmatmul.mubr.f32.gmra.mrb[0].mxu0 %v736
        %v819 = vpop.f32.mrb[0].mxu0
        %v820 = vadd.f32 0.0, %v819
        %v821 = vpop.f32.mrb[0].mxu0
        %v822 = vadd.f32 0.0, %v821
        %823 = vmatprep.mubr.f32.mxu0 0.0
        %824 = vmatmul.mubr.f32.gmra.mrb[0].mxu0 %v739
        %v825 = vpop.f32.mrb[0].mxu0
        %v826 = vadd.f32 0.0, %v825
        %v827 = vpop.f32.mrb[0].mxu0
        %v828 = vadd.f32 0.0, %v827
        %829 = vdwg.mxu0
        %830 = vmatprep.subr.mxu0 %v695
        %831 = vmatpush1.msra.mxu0 %v694
        %832 = vmatprep.subr.mxu0 %v699
        %833 = vmatpush1.msra.mxu0 %v698
        %834 = vmatprep.subr.mxu0 %v703
        %835 = vmatpush1.msra.mxu0 %v702
        %836 = vmatprep.subr.mxu0 %v707
        %837 = vmatpush1.msra.mxu0 %v706
        %838 = vmatprep.subr.mxu0 %v711
        %839 = vmatpush1.msra.mxu0 %v710
        %840 = vmatprep.subr.mxu0 %v715
        %841 = vmatpush1.msra.mxu0 %v714
        %842 = vmatprep.subr.mxu0 %v719
        %843 = vmatpush1.msra.mxu0 %v718
        %844 = vmatprep.subr.mxu0 %v723
        %845 = vmatpush1.msra.mxu0 %v722
        %846 = vmatprep.subr.mxu0 0.0
        %847 = vmatpush1.msra.mxu0 0.0
        %848 = vmatprep.subr.mxu0 0.0
        %849 = vmatpush1.msra.mxu0 0.0
        %850 = vmatprep.subr.mxu0 0.0
        %851 = vmatpush1.msra.mxu0 0.0
        %852 = vmatprep.subr.mxu0 0.0
        %853 = vmatpush1.msra.mxu0 0.0
        %854 = vmatprep.subr.mxu0 0.0
        %855 = vmatpush1.msra.mxu0 0.0
        %856 = vmatprep.subr.mxu0 0.0
        %857 = vmatpush1.msra.mxu0 0.0
        %858 = vmatprep.subr.mxu0 0.0
        %859 = vmatpush1.msra.mxu0 0.0
        %860 = vmatprep.subr.mxu0 0.0
        %861 = vmatpush1.msra.mxu0 0.0
        %862 = vmatprep.subr.mxu0 0.0
        %863 = vmatpush1.msra.mxu0 0.0
        %864 = vmatprep.subr.mxu0 0.0
        %865 = vmatpush1.msra.mxu0 0.0
        %866 = vmatprep.subr.mxu0 0.0
        %867 = vmatpush1.msra.mxu0 0.0
        %868 = vmatprep.subr.mxu0 0.0
        %869 = vmatpush1.msra.mxu0 0.0
        %870 = vmatprep.subr.mxu0 0.0
        %871 = vmatpush1.msra.mxu0 0.0
        %872 = vmatprep.subr.mxu0 0.0
        %873 = vmatpush1.msra.mxu0 0.0
        %874 = vmatprep.subr.mxu0 0.0
        %875 = vmatpush1.msra.mxu0 0.0
        %876 = vmatprep.subr.mxu0 0.0
        %877 = vmatpush1.msra.mxu0 0.0
        %878 = vmatprep.subr.mxu0 0.0
        %879 = vmatpush1.msra.mxu0 0.0
        %880 = vmatprep.subr.mxu0 0.0
        %881 = vmatpush1.msra.mxu0 0.0
        %882 = vmatprep.subr.mxu0 0.0
        %883 = vmatpush1.msra.mxu0 0.0
        %884 = vmatprep.subr.mxu0 0.0
        %885 = vmatpush1.msra.mxu0 0.0
        %886 = vmatprep.subr.mxu0 0.0
        %887 = vmatpush1.msra.mxu0 0.0
        %888 = vmatprep.subr.mxu0 0.0
        %889 = vmatpush1.msra.mxu0 0.0
        %890 = vmatprep.subr.mxu0 0.0
        %891 = vmatpush1.msra.mxu0 0.0
        %892 = vmatprep.subr.mxu0 0.0
        %893 = vmatpush1.msra.mxu0 0.0
        %894 = vmatprep.mubr.f32.mxu0 0.0
        %895 = vmatmul.mubr.f32.gmra.mrb[0].mxu0 %v730
        %v896 = vpop.f32.mrb[0].mxu0
        %v897 = vadd.f32 0.0, %v896
        %v898 = vpop.f32.mrb[0].mxu0
        %v899 = vadd.f32 0.0, %v898
        %900 = vmatprep.mubr.f32.mxu0 0.0
        %901 = vmatmul.mubr.f32.gmra.mrb[0].mxu0 %v733
        %v902 = vpop.f32.mrb[0].mxu0
        %v903 = vadd.f32 0.0, %v902
        %v904 = vpop.f32.mrb[0].mxu0
        %v905 = vadd.f32 0.0, %v904
        %906 = vmatprep.mubr.f32.mxu0 0.0
        %907 = vmatmul.mubr.f32.gmra.mrb[0].mxu0 %v736
        %v908 = vpop.f32.mrb[0].mxu0
        %v909 = vadd.f32 0.0, %v908
        %v910 = vpop.f32.mrb[0].mxu0
        %v911 = vadd.f32 0.0, %v910
        %912 = vmatprep.mubr.f32.mxu0 0.0
        %913 = vmatmul.mubr.f32.gmra.mrb[0].mxu0 %v739
        %v914 = vpop.f32.mrb[0].mxu0
        %v915 = vadd.f32 0.0, %v914
        %v916 = vpop.f32.mrb[0].mxu0
        %v917 = vadd.f32 0.0, %v916
        %918 = vdwg.mxu0
        %v919 = vld [vmem:[#allocation10] sm:$0x3f]
        %v920 = vld [vmem:[#allocation11] sm:$0x3f]
        %v921 = vld [vmem:[#allocation13] sm:$0x3f]
        %v922 = vld [vmem:[#allocation14] sm:$0xff]
        %v923 = vld [vmem:[#allocation14 + $0x8] sm:$0xff]
        %v924 = vld [vmem:[#allocation14 + $0x10] sm:$0xff]
        %v925 = vld [vmem:[#allocation16] sm:$0xff]
        %v926 = vld [vmem:[#allocation16 + $0x8] sm:$0xff]
        %v927 = vld [vmem:[#allocation16 + $0x10] sm:$0xff]
        %v928 = vld [vmem:[#allocation17] sm:$0xff]
        %v929 = vld [vmem:[#allocation17 + $0x8] sm:$0xff]
        %v930 = vld [vmem:[#allocation17 + $0x10] sm:$0xff]
        %vm931 = vcmask 220160
        %v933 = vsel %vm931, %v919, 0
        %vm935 = vcmask 1042432
        %v937 = vsel %vm935, %v826, 0
        %v940 = vsel %vm935, %v828, 0
        %v943 = vsel %vm935, %v915, 0
        %v946 = vsel %vm935, %v917, 0
        %948 = vmatprep.subr.mxu0 %v810
        %949 = vmatpush1.msra.mxu0 %v808
        %950 = vmatprep.subr.mxu0 %v816
        %951 = vmatpush1.msra.mxu0 %v814
        %952 = vmatprep.subr.mxu0 %v822
        %953 = vmatpush1.msra.mxu0 %v820
        %954 = vmatprep.subr.mxu0 %v940
        %955 = vmatpush1.msra.mxu0 %v937
        %956 = vmatprep.subr.mxu0 0.0
        %957 = vmatpush1.msra.mxu0 0.0
        %958 = vmatprep.subr.mxu0 0.0
        %959 = vmatpush1.msra.mxu0 0.0
        %960 = vmatprep.subr.mxu0 0.0
        %961 = vmatpush1.msra.mxu0 0.0
        %962 = vmatprep.subr.mxu0 0.0
        %963 = vmatpush1.msra.mxu0 0.0
        %964 = vmatprep.subr.mxu0 0.0
        %965 = vmatpush1.msra.mxu0 0.0
        %966 = vmatprep.subr.mxu0 0.0
        %967 = vmatpush1.msra.mxu0 0.0
        %968 = vmatprep.subr.mxu0 0.0
        %969 = vmatpush1.msra.mxu0 0.0
        %970 = vmatprep.subr.mxu0 0.0
        %971 = vmatpush1.msra.mxu0 0.0
        %972 = vmatprep.subr.mxu0 0.0
        %973 = vmatpush1.msra.mxu0 0.0
        %974 = vmatprep.subr.mxu0 0.0
        %975 = vmatpush1.msra.mxu0 0.0
        %976 = vmatprep.subr.mxu0 0.0
        %977 = vmatpush1.msra.mxu0 0.0
        %978 = vmatprep.subr.mxu0 0.0
        %979 = vmatpush1.msra.mxu0 0.0
        %980 = vmatprep.subr.mxu0 0.0
        %981 = vmatpush1.msra.mxu0 0.0
        %982 = vmatprep.subr.mxu0 0.0
        %983 = vmatpush1.msra.mxu0 0.0
        %984 = vmatprep.subr.mxu0 0.0
        %985 = vmatpush1.msra.mxu0 0.0
        %986 = vmatprep.subr.mxu0 0.0
        %987 = vmatpush1.msra.mxu0 0.0
        %988 = vmatprep.subr.mxu0 0.0
        %989 = vmatpush1.msra.mxu0 0.0
        %990 = vmatprep.subr.mxu0 0.0
        %991 = vmatpush1.msra.mxu0 0.0
        %992 = vmatprep.subr.mxu0 0.0
        %993 = vmatpush1.msra.mxu0 0.0
        %994 = vmatprep.subr.mxu0 0.0
        %995 = vmatpush1.msra.mxu0 0.0
        %996 = vmatprep.subr.mxu0 0.0
        %997 = vmatpush1.msra.mxu0 0.0
        %998 = vmatprep.subr.mxu0 0.0
        %999 = vmatpush1.msra.mxu0 0.0
        %1000 = vmatprep.subr.mxu0 0.0
        %1001 = vmatpush1.msra.mxu0 0.0
        %1002 = vmatprep.subr.mxu0 0.0
        %1003 = vmatpush1.msra.mxu0 0.0
        %1004 = vmatprep.subr.mxu0 0.0
        %1005 = vmatpush1.msra.mxu0 0.0
        %1006 = vmatprep.subr.mxu0 0.0
        %1007 = vmatpush1.msra.mxu0 0.0
        %1008 = vmatprep.subr.mxu0 0.0
        %1009 = vmatpush1.msra.mxu0 0.0
        %1010 = vmatprep.subr.mxu0 0.0
        %1011 = vmatpush1.msra.mxu0 0.0
        %1012 = vmatprep.mubr.f32.mxu0 0.0
        %1013 = vmatmul.mubr.f32.gmra.mrb[0].mxu0 %v933
        %v1014 = vpop.f32.mrb[0].mxu0
        %v1015 = vadd.f32 0.0, %v1014
        %v1016 = vpop.f32.mrb[0].mxu0
        %v1017 = vadd.f32 0.0, %v1016
        %1018 = vdwg.mxu0
        %1019 = vmatprep.subr.mxu0 %v899
        %1020 = vmatpush1.msra.mxu0 %v897
        %1021 = vmatprep.subr.mxu0 %v905
        %1022 = vmatpush1.msra.mxu0 %v903
        %1023 = vmatprep.subr.mxu0 %v911
        %1024 = vmatpush1.msra.mxu0 %v909
        %1025 = vmatprep.subr.mxu0 %v946
        %1026 = vmatpush1.msra.mxu0 %v943
        %1027 = vmatprep.subr.mxu0 0.0
        %1028 = vmatpush1.msra.mxu0 0.0
        %1029 = vmatprep.subr.mxu0 0.0
        %1030 = vmatpush1.msra.mxu0 0.0
        %1031 = vmatprep.subr.mxu0 0.0
        %1032 = vmatpush1.msra.mxu0 0.0
        %1033 = vmatprep.subr.mxu0 0.0
        %1034 = vmatpush1.msra.mxu0 0.0
        %1035 = vmatprep.subr.mxu0 0.0
        %1036 = vmatpush1.msra.mxu0 0.0
        %1037 = vmatprep.subr.mxu0 0.0
        %1038 = vmatpush1.msra.mxu0 0.0
        %1039 = vmatprep.subr.mxu0 0.0
        %1040 = vmatpush1.msra.mxu0 0.0
        %1041 = vmatprep.subr.mxu0 0.0
        %1042 = vmatpush1.msra.mxu0 0.0
        %1043 = vmatprep.subr.mxu0 0.0
        %1044 = vmatpush1.msra.mxu0 0.0
        %1045 = vmatprep.subr.mxu0 0.0
        %1046 = vmatpush1.msra.mxu0 0.0
        %1047 = vmatprep.subr.mxu0 0.0
        %1048 = vmatpush1.msra.mxu0 0.0
        %1049 = vmatprep.subr.mxu0 0.0
        %1050 = vmatpush1.msra.mxu0 0.0
        %1051 = vmatprep.subr.mxu0 0.0
        %1052 = vmatpush1.msra.mxu0 0.0
        %1053 = vmatprep.subr.mxu0 0.0
        %1054 = vmatpush1.msra.mxu0 0.0
        %1055 = vmatprep.subr.mxu0 0.0
        %1056 = vmatpush1.msra.mxu0 0.0
        %1057 = vmatprep.subr.mxu0 0.0
        %1058 = vmatpush1.msra.mxu0 0.0
        %1059 = vmatprep.subr.mxu0 0.0
        %1060 = vmatpush1.msra.mxu0 0.0
        %1061 = vmatprep.subr.mxu0 0.0
        %1062 = vmatpush1.msra.mxu0 0.0
        %1063 = vmatprep.subr.mxu0 0.0
        %1064 = vmatpush1.msra.mxu0 0.0
        %1065 = vmatprep.subr.mxu0 0.0
        %1066 = vmatpush1.msra.mxu0 0.0
        %1067 = vmatprep.subr.mxu0 0.0
        %1068 = vmatpush1.msra.mxu0 0.0
        %1069 = vmatprep.subr.mxu0 0.0
        %1070 = vmatpush1.msra.mxu0 0.0
        %1071 = vmatprep.subr.mxu0 0.0
        %1072 = vmatpush1.msra.mxu0 0.0
        %1073 = vmatprep.subr.mxu0 0.0
        %1074 = vmatpush1.msra.mxu0 0.0
        %1075 = vmatprep.subr.mxu0 0.0
        %1076 = vmatpush1.msra.mxu0 0.0
        %1077 = vmatprep.subr.mxu0 0.0
        %1078 = vmatpush1.msra.mxu0 0.0
        %1079 = vmatprep.subr.mxu0 0.0
        %1080 = vmatpush1.msra.mxu0 0.0
        %1081 = vmatprep.subr.mxu0 0.0
        %1082 = vmatpush1.msra.mxu0 0.0
        %1083 = vmatprep.mubr.f32.mxu0 0.0
        %1084 = vmatmul.mubr.f32.gmra.mrb[0].mxu0 %v933
        %v1085 = vpop.f32.mrb[0].mxu0
        %v1086 = vadd.f32 0.0, %v1085
        %v1087 = vpop.f32.mrb[0].mxu0
        %v1088 = vadd.f32 0.0, %v1087
        %1089 = vdwg.mxu0
        %v1091 = vsel %vm935, %v602, 0
        %1093 = vmatprep.subr.mxu0 0.0
        %1094 = vmatpush1.msra.mxu0 %v599
        %1095 = vmatprep.subr.mxu0 0.0
        %1096 = vmatpush1.msra.mxu0 %v600
        %1097 = vmatprep.subr.mxu0 0.0
        %1098 = vmatpush1.msra.mxu0 %v601
        %1099 = vmatprep.subr.mxu0 0.0
        %1100 = vmatpush1.msra.mxu0 %v1091
        %1101 = vmatprep.subr.mxu0 0.0
        %1102 = vmatpush1.msra.mxu0 0.0
        %1103 = vmatprep.subr.mxu0 0.0
        %1104 = vmatpush1.msra.mxu0 0.0
        %1105 = vmatprep.subr.mxu0 0.0
        %1106 = vmatpush1.msra.mxu0 0.0
        %1107 = vmatprep.subr.mxu0 0.0
        %1108 = vmatpush1.msra.mxu0 0.0
        %1109 = vmatprep.subr.mxu0 0.0
        %1110 = vmatpush1.msra.mxu0 0.0
        %1111 = vmatprep.subr.mxu0 0.0
        %1112 = vmatpush1.msra.mxu0 0.0
        %1113 = vmatprep.subr.mxu0 0.0
        %1114 = vmatpush1.msra.mxu0 0.0
        %1115 = vmatprep.subr.mxu0 0.0
        %1116 = vmatpush1.msra.mxu0 0.0
        %1117 = vmatprep.subr.mxu0 0.0
        %1118 = vmatpush1.msra.mxu0 0.0
        %1119 = vmatprep.subr.mxu0 0.0
        %1120 = vmatpush1.msra.mxu0 0.0
        %1121 = vmatprep.subr.mxu0 0.0
        %1122 = vmatpush1.msra.mxu0 0.0
        %1123 = vmatprep.subr.mxu0 0.0
        %1124 = vmatpush1.msra.mxu0 0.0
        %1125 = vmatprep.subr.mxu0 0.0
        %1126 = vmatpush1.msra.mxu0 0.0
        %1127 = vmatprep.subr.mxu0 0.0
        %1128 = vmatpush1.msra.mxu0 0.0
        %1129 = vmatprep.subr.mxu0 0.0
        %1130 = vmatpush1.msra.mxu0 0.0
        %1131 = vmatprep.subr.mxu0 0.0
        %1132 = vmatpush1.msra.mxu0 0.0
        %1133 = vmatprep.subr.mxu0 0.0
        %1134 = vmatpush1.msra.mxu0 0.0
        %1135 = vmatprep.subr.mxu0 0.0
        %1136 = vmatpush1.msra.mxu0 0.0
        %1137 = vmatprep.subr.mxu0 0.0
        %1138 = vmatpush1.msra.mxu0 0.0
        %1139 = vmatprep.subr.mxu0 0.0
        %1140 = vmatpush1.msra.mxu0 0.0
        %1141 = vmatprep.subr.mxu0 0.0
        %1142 = vmatpush1.msra.mxu0 0.0
        %1143 = vmatprep.subr.mxu0 0.0
        %1144 = vmatpush1.msra.mxu0 0.0
        %1145 = vmatprep.subr.mxu0 0.0
        %1146 = vmatpush1.msra.mxu0 0.0
        %1147 = vmatprep.subr.mxu0 0.0
        %1148 = vmatpush1.msra.mxu0 0.0
        %1149 = vmatprep.subr.mxu0 0.0
        %1150 = vmatpush1.msra.mxu0 0.0
        %1151 = vmatprep.subr.mxu0 0.0
        %1152 = vmatpush1.msra.mxu0 0.0
        %1153 = vmatprep.subr.mxu0 0.0
        %1154 = vmatpush1.msra.mxu0 0.0
        %1155 = vmatprep.subr.mxu0 0.0
        %1156 = vmatpush1.msra.mxu0 0.0
        %1157 = vmatprep.mubr.f32.mxu0 0.0
        %1158 = vmatmul.mubr.f32.gmra.mrb[0].mxu0 %v933
        %v1159 = vpop.f32.mrb[0].mxu0
        %v1160 = vadd.f32 0.0, %v1159
        %v1161 = vpop.f32.mrb[0].mxu0
        %1162 = vdwg.mxu0
        %1164 = vset.pattern.permute.xlu0 0
        %1165 = vperm.xlu0 %1164, %v920
        %v1166 = vpop.permute.xlu0 %1165
        %v1168 = vsub.f32 %v1160, %v1166
        %v1169 = vsub.f32 %v1015, %v1168
        %1171 = vset.pattern.permute.xlu0 0
        %1172 = vperm.xlu0 %1171, %v921
        %v1173 = vpop.permute.xlu0 %1172
        %v1175 = vmul.f32 %v1169, %v1173
        %v1176 = vmax.f32 %v1169, %v1175
        %vm1177 = vcmask 48128
        %v1179 = vsel %vm1177, %v922, 0
        %v1182 = vsel %vm1177, %v923, 0
        %v1185 = vsel %vm1177, %v924, 0
        %vm1187 = vcmask 1045504
        %v1189 = vsel %vm1187, %v1176, 0
        %1191 = vmatprep.subr.mxu0 0.0
        %1192 = vmatpush1.msra.mxu0 %v1189
        %1193 = vmatprep.subr.mxu0 0.0
        %1194 = vmatpush1.msra.mxu0 0.0
        %1195 = vmatprep.subr.mxu0 0.0
        %1196 = vmatpush1.msra.mxu0 0.0
        %1197 = vmatprep.subr.mxu0 0.0
        %1198 = vmatpush1.msra.mxu0 0.0
        %1199 = vmatprep.subr.mxu0 0.0
        %1200 = vmatpush1.msra.mxu0 0.0
        %1201 = vmatprep.subr.mxu0 0.0
        %1202 = vmatpush1.msra.mxu0 0.0
        %1203 = vmatprep.subr.mxu0 0.0
        %1204 = vmatpush1.msra.mxu0 0.0
        %1205 = vmatprep.subr.mxu0 0.0
        %1206 = vmatpush1.msra.mxu0 0.0
        %1207 = vmatprep.subr.mxu0 0.0
        %1208 = vmatpush1.msra.mxu0 0.0
        %1209 = vmatprep.subr.mxu0 0.0
        %1210 = vmatpush1.msra.mxu0 0.0
        %1211 = vmatprep.subr.mxu0 0.0
        %1212 = vmatpush1.msra.mxu0 0.0
        %1213 = vmatprep.subr.mxu0 0.0
        %1214 = vmatpush1.msra.mxu0 0.0
        %1215 = vmatprep.subr.mxu0 0.0
        %1216 = vmatpush1.msra.mxu0 0.0
        %1217 = vmatprep.subr.mxu0 0.0
        %1218 = vmatpush1.msra.mxu0 0.0
        %1219 = vmatprep.subr.mxu0 0.0
        %1220 = vmatpush1.msra.mxu0 0.0
        %1221 = vmatprep.subr.mxu0 0.0
        %1222 = vmatpush1.msra.mxu0 0.0
        %1223 = vmatprep.subr.mxu0 0.0
        %1224 = vmatpush1.msra.mxu0 0.0
        %1225 = vmatprep.subr.mxu0 0.0
        %1226 = vmatpush1.msra.mxu0 0.0
        %1227 = vmatprep.subr.mxu0 0.0
        %1228 = vmatpush1.msra.mxu0 0.0
        %1229 = vmatprep.subr.mxu0 0.0
        %1230 = vmatpush1.msra.mxu0 0.0
        %1231 = vmatprep.subr.mxu0 0.0
        %1232 = vmatpush1.msra.mxu0 0.0
        %1233 = vmatprep.subr.mxu0 0.0
        %1234 = vmatpush1.msra.mxu0 0.0
        %1235 = vmatprep.subr.mxu0 0.0
        %1236 = vmatpush1.msra.mxu0 0.0
        %1237 = vmatprep.subr.mxu0 0.0
        %1238 = vmatpush1.msra.mxu0 0.0
        %1239 = vmatprep.subr.mxu0 0.0
        %1240 = vmatpush1.msra.mxu0 0.0
        %1241 = vmatprep.subr.mxu0 0.0
        %1242 = vmatpush1.msra.mxu0 0.0
        %1243 = vmatprep.subr.mxu0 0.0
        %1244 = vmatpush1.msra.mxu0 0.0
        %1245 = vmatprep.subr.mxu0 0.0
        %1246 = vmatpush1.msra.mxu0 0.0
        %1247 = vmatprep.subr.mxu0 0.0
        %1248 = vmatpush1.msra.mxu0 0.0
        %1249 = vmatprep.subr.mxu0 0.0
        %1250 = vmatpush1.msra.mxu0 0.0
        %1251 = vmatprep.subr.mxu0 0.0
        %1252 = vmatpush1.msra.mxu0 0.0
        %1253 = vmatprep.subr.mxu0 0.0
        %1254 = vmatpush1.msra.mxu0 0.0
        %1255 = vmatprep.mubr.f32.mxu0 0.0
        %1256 = vmatmul.mubr.f32.gmra.mrb[0].mxu0 %v1179
        %v1257 = vpop.f32.mrb[0].mxu0
        %v1258 = vadd.f32 0.0, %v1257
        %v1259 = vpop.f32.mrb[0].mxu0
        %1260 = vmatprep.mubr.f32.mxu0 0.0
        %1261 = vmatmul.mubr.f32.gmra.mrb[0].mxu0 %v1182
        %v1262 = vpop.f32.mrb[0].mxu0
        %v1263 = vadd.f32 0.0, %v1262
        %v1264 = vpop.f32.mrb[0].mxu0
        %1265 = vmatprep.mubr.f32.mxu0 0.0
        %1266 = vmatmul.mubr.f32.gmra.mrb[0].mxu0 %v1185
        %v1267 = vpop.f32.mrb[0].mxu0
        %v1268 = vadd.f32 0.0, %v1267
        %v1269 = vpop.f32.mrb[0].mxu0
        %1270 = vdwg.mxu0
        %v1271 = vmul.f32 %v808, %v1258
        %v1272 = vmul.f32 %v814, %v1263
        %v1273 = vmul.f32 %v820, %v1268
        %1275 = vset.pattern.permute.xlu0 0
        %1276 = vperm.xlu0 %1275, %v925
        %v1277 = vpop.permute.xlu0 %1276
        %1280 = vset.pattern.permute.xlu0 0
        %1281 = vperm.xlu0 %1280, %v926
        %v1282 = vpop.permute.xlu0 %1281
        %1285 = vset.pattern.permute.xlu0 0
        %1286 = vperm.xlu0 %1285, %v927
        %v1287 = vpop.permute.xlu0 %1286
        %v1289 = vmul.f32 %v1271, %v1277
        %v1290 = vmul.f32 %v1272, %v1282
        %v1291 = vmul.f32 %v1273, %v1287
        %1293 = vset.pattern.permute.xlu0 0
        %1294 = vperm.xlu0 %1293, %v928
        %v1295 = vpop.permute.xlu0 %1294
        %1298 = vset.pattern.permute.xlu0 0
        %1299 = vperm.xlu0 %1298, %v929
        %v1300 = vpop.permute.xlu0 %1299
        %1303 = vset.pattern.permute.xlu0 0
        %1304 = vperm.xlu0 %1303, %v930
        %v1305 = vpop.permute.xlu0 %1304
        %v1307 = vadd.f32 %v1289, %v1295
        %v1308 = vadd.f32 %v1290, %v1300
        %v1309 = vadd.f32 %v1291, %v1305
        %v1310 = vmax.f32 %v1307, 0.0
        %v1311 = vmax.f32 %v1308, 0.0
        %v1312 = vmax.f32 %v1309, 0.0
        %1314 = vrot.lane.b32.xlu0 %v1168, 64
        %v1315 = vpop.permute.xlu0 %1314
        %v1317 = vsub.f32 %v1015, %v1315
        %v1318 = vmul.f32 %v1317, %v1173
        %v1319 = vmax.f32 %v1317, %v1318
        %1321 = vrot.lane.b32.xlu0 %v1319, 64
        %v1322 = vpop.permute.xlu0 %1321
        %v1323 = vsel %vm1187, %v1322, 0
        %1325 = vmatprep.subr.mxu0 0.0
        %1326 = vmatpush1.msra.mxu0 %v1323
        %1327 = vmatprep.subr.mxu0 0.0
        %1328 = vmatpush1.msra.mxu0 0.0
        %1329 = vmatprep.subr.mxu0 0.0
        %1330 = vmatpush1.msra.mxu0 0.0
        %1331 = vmatprep.subr.mxu0 0.0
        %1332 = vmatpush1.msra.mxu0 0.0
        %1333 = vmatprep.subr.mxu0 0.0
        %1334 = vmatpush1.msra.mxu0 0.0
        %1335 = vmatprep.subr.mxu0 0.0
        %1336 = vmatpush1.msra.mxu0 0.0
        %1337 = vmatprep.subr.mxu0 0.0
        %1338 = vmatpush1.msra.mxu0 0.0
        %1339 = vmatprep.subr.mxu0 0.0
        %1340 = vmatpush1.msra.mxu0 0.0
        %1341 = vmatprep.subr.mxu0 0.0
        %1342 = vmatpush1.msra.mxu0 0.0
        %1343 = vmatprep.subr.mxu0 0.0
        %1344 = vmatpush1.msra.mxu0 0.0
        %1345 = vmatprep.subr.mxu0 0.0
        %1346 = vmatpush1.msra.mxu0 0.0
        %1347 = vmatprep.subr.mxu0 0.0
        %1348 = vmatpush1.msra.mxu0 0.0
        %1349 = vmatprep.subr.mxu0 0.0
        %1350 = vmatpush1.msra.mxu0 0.0
        %1351 = vmatprep.subr.mxu0 0.0
        %1352 = vmatpush1.msra.mxu0 0.0
        %1353 = vmatprep.subr.mxu0 0.0
        %1354 = vmatpush1.msra.mxu0 0.0
        %1355 = vmatprep.subr.mxu0 0.0
        %1356 = vmatpush1.msra.mxu0 0.0
        %1357 = vmatprep.subr.mxu0 0.0
        %1358 = vmatpush1.msra.mxu0 0.0
        %1359 = vmatprep.subr.mxu0 0.0
        %1360 = vmatpush1.msra.mxu0 0.0
        %1361 = vmatprep.subr.mxu0 0.0
        %1362 = vmatpush1.msra.mxu0 0.0
        %1363 = vmatprep.subr.mxu0 0.0
        %1364 = vmatpush1.msra.mxu0 0.0
        %1365 = vmatprep.subr.mxu0 0.0
        %1366 = vmatpush1.msra.mxu0 0.0
        %1367 = vmatprep.subr.mxu0 0.0
        %1368 = vmatpush1.msra.mxu0 0.0
        %1369 = vmatprep.subr.mxu0 0.0
        %1370 = vmatpush1.msra.mxu0 0.0
        %1371 = vmatprep.subr.mxu0 0.0
        %1372 = vmatpush1.msra.mxu0 0.0
        %1373 = vmatprep.subr.mxu0 0.0
        %1374 = vmatpush1.msra.mxu0 0.0
        %1375 = vmatprep.subr.mxu0 0.0
        %1376 = vmatpush1.msra.mxu0 0.0
        %1377 = vmatprep.subr.mxu0 0.0
        %1378 = vmatpush1.msra.mxu0 0.0
        %1379 = vmatprep.subr.mxu0 0.0
        %1380 = vmatpush1.msra.mxu0 0.0
        %1381 = vmatprep.subr.mxu0 0.0
        %1382 = vmatpush1.msra.mxu0 0.0
        %1383 = vmatprep.subr.mxu0 0.0
        %1384 = vmatpush1.msra.mxu0 0.0
        %1385 = vmatprep.subr.mxu0 0.0
        %1386 = vmatpush1.msra.mxu0 0.0
        %1387 = vmatprep.subr.mxu0 0.0
        %1388 = vmatpush1.msra.mxu0 0.0
        %1389 = vmatprep.mubr.f32.mxu0 0.0
        %1390 = vmatmul.mubr.f32.gmra.mrb[0].mxu0 %v1179
        %v1391 = vpop.f32.mrb[0].mxu0
        %v1392 = vadd.f32 0.0, %v1391
        %v1393 = vpop.f32.mrb[0].mxu0
        %1394 = vmatprep.mubr.f32.mxu0 0.0
        %1395 = vmatmul.mubr.f32.gmra.mrb[0].mxu0 %v1182
        %v1396 = vpop.f32.mrb[0].mxu0
        %v1397 = vadd.f32 0.0, %v1396
        %v1398 = vpop.f32.mrb[0].mxu0
        %1399 = vmatprep.mubr.f32.mxu0 0.0
        %1400 = vmatmul.mubr.f32.gmra.mrb[0].mxu0 %v1185
        %v1401 = vpop.f32.mrb[0].mxu0
        %v1402 = vadd.f32 0.0, %v1401
        %v1403 = vpop.f32.mrb[0].mxu0
        %1404 = vdwg.mxu0
        %1408 = vrot.lane.b32.xlu0 %v1392, 64
        %v1409 = vpop.permute.xlu0 %1408
        %1410 = vrot.lane.b32.xlu0 %v1397, 64
        %v1411 = vpop.permute.xlu0 %1410
        %1412 = vrot.lane.b32.xlu0 %v1402, 64
        %v1413 = vpop.permute.xlu0 %1412
        %v1417 = vmul.f32 %v808, %v1409
        %v1418 = vmul.f32 %v814, %v1411
        %v1419 = vmul.f32 %v820, %v1413
        %v1420 = vmul.f32 %v1417, %v1277
        %v1421 = vmul.f32 %v1418, %v1282
        %v1422 = vmul.f32 %v1419, %v1287
        %v1423 = vadd.f32 %v1420, %v1295
        %v1424 = vadd.f32 %v1421, %v1300
        %v1425 = vadd.f32 %v1422, %v1305
        %v1426 = vmax.f32 %v1423, 0.0
        %v1427 = vmax.f32 %v1424, 0.0
        %v1428 = vmax.f32 %v1425, 0.0
        %1432 = vrot.lane.b32.xlu0 %v1426, 64
        %v1433 = vpop.permute.xlu0 %1432
        %1434 = vrot.lane.b32.xlu0 %v1427, 64
        %v1435 = vpop.permute.xlu0 %1434
        %1436 = vrot.lane.b32.xlu0 %v1428, 64
        %v1437 = vpop.permute.xlu0 %1436
        %v1441 = vmax.f32 %v1310, %v1433
        %v1442 = vmax.f32 %v1311, %v1435
        %v1443 = vmax.f32 %v1312, %v1437
        %v1444 = vsub.f32 %v1017, %v1168
        %v1445 = vmul.f32 %v1444, %v1173
        %v1446 = vmax.f32 %v1444, %v1445
        %v1448 = vsel %vm1187, %v1446, 0
        %1450 = vmatprep.subr.mxu0 0.0
        %1451 = vmatpush1.msra.mxu0 %v1448
        %1452 = vmatprep.subr.mxu0 0.0
        %1453 = vmatpush1.msra.mxu0 0.0
        %1454 = vmatprep.subr.mxu0 0.0
        %1455 = vmatpush1.msra.mxu0 0.0
        %1456 = vmatprep.subr.mxu0 0.0
        %1457 = vmatpush1.msra.mxu0 0.0
        %1458 = vmatprep.subr.mxu0 0.0
        %1459 = vmatpush1.msra.mxu0 0.0
        %1460 = vmatprep.subr.mxu0 0.0
        %1461 = vmatpush1.msra.mxu0 0.0
        %1462 = vmatprep.subr.mxu0 0.0
        %1463 = vmatpush1.msra.mxu0 0.0
        %1464 = vmatprep.subr.mxu0 0.0
        %1465 = vmatpush1.msra.mxu0 0.0
        %1466 = vmatprep.subr.mxu0 0.0
        %1467 = vmatpush1.msra.mxu0 0.0
        %1468 = vmatprep.subr.mxu0 0.0
        %1469 = vmatpush1.msra.mxu0 0.0
        %1470 = vmatprep.subr.mxu0 0.0
        %1471 = vmatpush1.msra.mxu0 0.0
        %1472 = vmatprep.subr.mxu0 0.0
        %1473 = vmatpush1.msra.mxu0 0.0
        %1474 = vmatprep.subr.mxu0 0.0
        %1475 = vmatpush1.msra.mxu0 0.0
        %1476 = vmatprep.subr.mxu0 0.0
        %1477 = vmatpush1.msra.mxu0 0.0
        %1478 = vmatprep.subr.mxu0 0.0
        %1479 = vmatpush1.msra.mxu0 0.0
        %1480 = vmatprep.subr.mxu0 0.0
        %1481 = vmatpush1.msra.mxu0 0.0
        %1482 = vmatprep.subr.mxu0 0.0
        %1483 = vmatpush1.msra.mxu0 0.0
        %1484 = vmatprep.subr.mxu0 0.0
        %1485 = vmatpush1.msra.mxu0 0.0
        %1486 = vmatprep.subr.mxu0 0.0
        %1487 = vmatpush1.msra.mxu0 0.0
        %1488 = vmatprep.subr.mxu0 0.0
        %1489 = vmatpush1.msra.mxu0 0.0
        %1490 = vmatprep.subr.mxu0 0.0
        %1491 = vmatpush1.msra.mxu0 0.0
        %1492 = vmatprep.subr.mxu0 0.0
        %1493 = vmatpush1.msra.mxu0 0.0
        %1494 = vmatprep.subr.mxu0 0.0
        %1495 = vmatpush1.msra.mxu0 0.0
        %1496 = vmatprep.subr.mxu0 0.0
        %1497 = vmatpush1.msra.mxu0 0.0
        %1498 = vmatprep.subr.mxu0 0.0
        %1499 = vmatpush1.msra.mxu0 0.0
        %1500 = vmatprep.subr.mxu0 0.0
        %1501 = vmatpush1.msra.mxu0 0.0
        %1502 = vmatprep.subr.mxu0 0.0
        %1503 = vmatpush1.msra.mxu0 0.0
        %1504 = vmatprep.subr.mxu0 0.0
        %1505 = vmatpush1.msra.mxu0 0.0
        %1506 = vmatprep.subr.mxu0 0.0
        %1507 = vmatpush1.msra.mxu0 0.0
        %1508 = vmatprep.subr.mxu0 0.0
        %1509 = vmatpush1.msra.mxu0 0.0
        %1510 = vmatprep.subr.mxu0 0.0
        %1511 = vmatpush1.msra.mxu0 0.0
        %1512 = vmatprep.subr.mxu0 0.0
        %1513 = vmatpush1.msra.mxu0 0.0
        %1514 = vmatprep.mubr.f32.mxu0 0.0
        %1515 = vmatmul.mubr.f32.gmra.mrb[0].mxu0 %v1179
        %v1516 = vpop.f32.mrb[0].mxu0
        %v1517 = vadd.f32 0.0, %v1516
        %v1518 = vpop.f32.mrb[0].mxu0
        %1519 = vmatprep.mubr.f32.mxu0 0.0
        %1520 = vmatmul.mubr.f32.gmra.mrb[0].mxu0 %v1182
        %v1521 = vpop.f32.mrb[0].mxu0
        %v1522 = vadd.f32 0.0, %v1521
        %v1523 = vpop.f32.mrb[0].mxu0
        %1524 = vmatprep.mubr.f32.mxu0 0.0
        %1525 = vmatmul.mubr.f32.gmra.mrb[0].mxu0 %v1185
        %v1526 = vpop.f32.mrb[0].mxu0
        %v1527 = vadd.f32 0.0, %v1526
        %v1528 = vpop.f32.mrb[0].mxu0
        %1529 = vdwg.mxu0
        %v1530 = vmul.f32 %v810, %v1517
        %v1531 = vmul.f32 %v816, %v1522
        %v1532 = vmul.f32 %v822, %v1527
        %v1533 = vmul.f32 %v1530, %v1277
        %v1534 = vmul.f32 %v1531, %v1282
        %v1535 = vmul.f32 %v1532, %v1287
        %v1536 = vadd.f32 %v1533, %v1295
        %v1537 = vadd.f32 %v1534, %v1300
        %v1538 = vadd.f32 %v1535, %v1305
        %v1539 = vmax.f32 %v1536, 0.0
        %v1540 = vmax.f32 %v1537, 0.0
        %v1541 = vmax.f32 %v1538, 0.0
        %v1542 = vmax.f32 %v1441, %v1539
        %v1543 = vmax.f32 %v1442, %v1540
        %v1544 = vmax.f32 %v1443, %v1541
        %v1545 = vsub.f32 %v1017, %v1315
        %v1546 = vmul.f32 %v1545, %v1173
        %v1547 = vmax.f32 %v1545, %v1546
        %1549 = vrot.lane.b32.xlu0 %v1547, 64
        %v1550 = vpop.permute.xlu0 %1549
        %v1551 = vsel %vm1187, %v1550, 0
        %1553 = vmatprep.subr.mxu0 0.0
        %1554 = vmatpush1.msra.mxu0 %v1551
        %1555 = vmatprep.subr.mxu0 0.0
        %1556 = vmatpush1.msra.mxu0 0.0
        %1557 = vmatprep.subr.mxu0 0.0
        %1558 = vmatpush1.msra.mxu0 0.0
        %1559 = vmatprep.subr.mxu0 0.0
        %1560 = vmatpush1.msra.mxu0 0.0
        %1561 = vmatprep.subr.mxu0 0.0
        %1562 = vmatpush1.msra.mxu0 0.0
        %1563 = vmatprep.subr.mxu0 0.0
        %1564 = vmatpush1.msra.mxu0 0.0
        %1565 = vmatprep.subr.mxu0 0.0
        %1566 = vmatpush1.msra.mxu0 0.0
        %1567 = vmatprep.subr.mxu0 0.0
        %1568 = vmatpush1.msra.mxu0 0.0
        %1569 = vmatprep.subr.mxu0 0.0
        %1570 = vmatpush1.msra.mxu0 0.0
        %1571 = vmatprep.subr.mxu0 0.0
        %1572 = vmatpush1.msra.mxu0 0.0
        %1573 = vmatprep.subr.mxu0 0.0
        %1574 = vmatpush1.msra.mxu0 0.0
        %1575 = vmatprep.subr.mxu0 0.0
        %1576 = vmatpush1.msra.mxu0 0.0
        %1577 = vmatprep.subr.mxu0 0.0
        %1578 = vmatpush1.msra.mxu0 0.0
        %1579 = vmatprep.subr.mxu0 0.0
        %1580 = vmatpush1.msra.mxu0 0.0
        %1581 = vmatprep.subr.mxu0 0.0
        %1582 = vmatpush1.msra.mxu0 0.0
        %1583 = vmatprep.subr.mxu0 0.0
        %1584 = vmatpush1.msra.mxu0 0.0
        %1585 = vmatprep.subr.mxu0 0.0
        %1586 = vmatpush1.msra.mxu0 0.0
        %1587 = vmatprep.subr.mxu0 0.0
        %1588 = vmatpush1.msra.mxu0 0.0
        %1589 = vmatprep.subr.mxu0 0.0
        %1590 = vmatpush1.msra.mxu0 0.0
        %1591 = vmatprep.subr.mxu0 0.0
        %1592 = vmatpush1.msra.mxu0 0.0
        %1593 = vmatprep.subr.mxu0 0.0
        %1594 = vmatpush1.msra.mxu0 0.0
        %1595 = vmatprep.subr.mxu0 0.0
        %1596 = vmatpush1.msra.mxu0 0.0
        %1597 = vmatprep.subr.mxu0 0.0
        %1598 = vmatpush1.msra.mxu0 0.0
        %1599 = vmatprep.subr.mxu0 0.0
        %1600 = vmatpush1.msra.mxu0 0.0
        %1601 = vmatprep.subr.mxu0 0.0
        %1602 = vmatpush1.msra.mxu0 0.0
        %1603 = vmatprep.subr.mxu0 0.0
        %1604 = vmatpush1.msra.mxu0 0.0
        %1605 = vmatprep.subr.mxu0 0.0
        %1606 = vmatpush1.msra.mxu0 0.0
        %1607 = vmatprep.subr.mxu0 0.0
        %1608 = vmatpush1.msra.mxu0 0.0
        %1609 = vmatprep.subr.mxu0 0.0
        %1610 = vmatpush1.msra.mxu0 0.0
        %1611 = vmatprep.subr.mxu0 0.0
        %1612 = vmatpush1.msra.mxu0 0.0
        %1613 = vmatprep.subr.mxu0 0.0
        %1614 = vmatpush1.msra.mxu0 0.0
        %1615 = vmatprep.subr.mxu0 0.0
        %1616 = vmatpush1.msra.mxu0 0.0
        %1617 = vmatprep.mubr.f32.mxu0 0.0
        %1618 = vmatmul.mubr.f32.gmra.mrb[0].mxu0 %v1179
        %v1619 = vpop.f32.mrb[0].mxu0
        %v1620 = vadd.f32 0.0, %v1619
        %v1621 = vpop.f32.mrb[0].mxu0
        %1622 = vmatprep.mubr.f32.mxu0 0.0
        %1623 = vmatmul.mubr.f32.gmra.mrb[0].mxu0 %v1182
        %v1624 = vpop.f32.mrb[0].mxu0
        %v1625 = vadd.f32 0.0, %v1624
        %v1626 = vpop.f32.mrb[0].mxu0
        %1627 = vmatprep.mubr.f32.mxu0 0.0
        %1628 = vmatmul.mubr.f32.gmra.mrb[0].mxu0 %v1185
        %v1629 = vpop.f32.mrb[0].mxu0
        %v1630 = vadd.f32 0.0, %v1629
        %v1631 = vpop.f32.mrb[0].mxu0
        %1632 = vdwg.mxu0
        %1636 = vrot.lane.b32.xlu0 %v1620, 64
        %v1637 = vpop.permute.xlu0 %1636
        %1638 = vrot.lane.b32.xlu0 %v1625, 64
        %v1639 = vpop.permute.xlu0 %1638
        %1640 = vrot.lane.b32.xlu0 %v1630, 64
        %v1641 = vpop.permute.xlu0 %1640
        %v1645 = vmul.f32 %v810, %v1637
        %v1646 = vmul.f32 %v816, %v1639
        %v1647 = vmul.f32 %v822, %v1641
        %v1648 = vmul.f32 %v1645, %v1277
        %v1649 = vmul.f32 %v1646, %v1282
        %v1650 = vmul.f32 %v1647, %v1287
        %v1651 = vadd.f32 %v1648, %v1295
        %v1652 = vadd.f32 %v1649, %v1300
        %v1653 = vadd.f32 %v1650, %v1305
        %v1654 = vmax.f32 %v1651, 0.0
        %v1655 = vmax.f32 %v1652, 0.0
        %v1656 = vmax.f32 %v1653, 0.0
        %1660 = vrot.lane.b32.xlu0 %v1654, 64
        %v1661 = vpop.permute.xlu0 %1660
        %1662 = vrot.lane.b32.xlu0 %v1655, 64
        %v1663 = vpop.permute.xlu0 %1662
        %1664 = vrot.lane.b32.xlu0 %v1656, 64
        %v1665 = vpop.permute.xlu0 %1664
        %v1669 = vmax.f32 %v1542, %v1661
        %v1670 = vmax.f32 %v1543, %v1663
        %v1671 = vmax.f32 %v1544, %v1665
        %v1672 = vsub.f32 %v1086, %v1168
        %v1673 = vmul.f32 %v1672, %v1173
        %v1674 = vmax.f32 %v1672, %v1673
        %v1676 = vsel %vm1187, %v1674, 0
        %1678 = vmatprep.subr.mxu0 0.0
        %1679 = vmatpush1.msra.mxu0 %v1676
        %1680 = vmatprep.subr.mxu0 0.0
        %1681 = vmatpush1.msra.mxu0 0.0
        %1682 = vmatprep.subr.mxu0 0.0
        %1683 = vmatpush1.msra.mxu0 0.0
        %1684 = vmatprep.subr.mxu0 0.0
        %1685 = vmatpush1.msra.mxu0 0.0
        %1686 = vmatprep.subr.mxu0 0.0
        %1687 = vmatpush1.msra.mxu0 0.0
        %1688 = vmatprep.subr.mxu0 0.0
        %1689 = vmatpush1.msra.mxu0 0.0
        %1690 = vmatprep.subr.mxu0 0.0
        %1691 = vmatpush1.msra.mxu0 0.0
        %1692 = vmatprep.subr.mxu0 0.0
        %1693 = vmatpush1.msra.mxu0 0.0
        %1694 = vmatprep.subr.mxu0 0.0
        %1695 = vmatpush1.msra.mxu0 0.0
        %1696 = vmatprep.subr.mxu0 0.0
        %1697 = vmatpush1.msra.mxu0 0.0
        %1698 = vmatprep.subr.mxu0 0.0
        %1699 = vmatpush1.msra.mxu0 0.0
        %1700 = vmatprep.subr.mxu0 0.0
        %1701 = vmatpush1.msra.mxu0 0.0
        %1702 = vmatprep.subr.mxu0 0.0
        %1703 = vmatpush1.msra.mxu0 0.0
        %1704 = vmatprep.subr.mxu0 0.0
        %1705 = vmatpush1.msra.mxu0 0.0
        %1706 = vmatprep.subr.mxu0 0.0
        %1707 = vmatpush1.msra.mxu0 0.0
        %1708 = vmatprep.subr.mxu0 0.0
        %1709 = vmatpush1.msra.mxu0 0.0
        %1710 = vmatprep.subr.mxu0 0.0
        %1711 = vmatpush1.msra.mxu0 0.0
        %1712 = vmatprep.subr.mxu0 0.0
        %1713 = vmatpush1.msra.mxu0 0.0
        %1714 = vmatprep.subr.mxu0 0.0
        %1715 = vmatpush1.msra.mxu0 0.0
        %1716 = vmatprep.subr.mxu0 0.0
        %1717 = vmatpush1.msra.mxu0 0.0
        %1718 = vmatprep.subr.mxu0 0.0
        %1719 = vmatpush1.msra.mxu0 0.0
        %1720 = vmatprep.subr.mxu0 0.0
        %1721 = vmatpush1.msra.mxu0 0.0
        %1722 = vmatprep.subr.mxu0 0.0
        %1723 = vmatpush1.msra.mxu0 0.0
        %1724 = vmatprep.subr.mxu0 0.0
        %1725 = vmatpush1.msra.mxu0 0.0
        %1726 = vmatprep.subr.mxu0 0.0
        %1727 = vmatpush1.msra.mxu0 0.0
        %1728 = vmatprep.subr.mxu0 0.0
        %1729 = vmatpush1.msra.mxu0 0.0
        %1730 = vmatprep.subr.mxu0 0.0
        %1731 = vmatpush1.msra.mxu0 0.0
        %1732 = vmatprep.subr.mxu0 0.0
        %1733 = vmatpush1.msra.mxu0 0.0
        %1734 = vmatprep.subr.mxu0 0.0
        %1735 = vmatpush1.msra.mxu0 0.0
        %1736 = vmatprep.subr.mxu0 0.0
        %1737 = vmatpush1.msra.mxu0 0.0
        %1738 = vmatprep.subr.mxu0 0.0
        %1739 = vmatpush1.msra.mxu0 0.0
        %1740 = vmatprep.subr.mxu0 0.0
        %1741 = vmatpush1.msra.mxu0 0.0
        %1742 = vmatprep.mubr.f32.mxu0 0.0
        %1743 = vmatmul.mubr.f32.gmra.mrb[0].mxu0 %v1179
        %v1744 = vpop.f32.mrb[0].mxu0
        %v1745 = vadd.f32 0.0, %v1744
        %v1746 = vpop.f32.mrb[0].mxu0
        %1747 = vmatprep.mubr.f32.mxu0 0.0
        %1748 = vmatmul.mubr.f32.gmra.mrb[0].mxu0 %v1182
        %v1749 = vpop.f32.mrb[0].mxu0
        %v1750 = vadd.f32 0.0, %v1749
        %v1751 = vpop.f32.mrb[0].mxu0
        %1752 = vmatprep.mubr.f32.mxu0 0.0
        %1753 = vmatmul.mubr.f32.gmra.mrb[0].mxu0 %v1185
        %v1754 = vpop.f32.mrb[0].mxu0
        %v1755 = vadd.f32 0.0, %v1754
        %v1756 = vpop.f32.mrb[0].mxu0
        %1757 = vdwg.mxu0
        %v1758 = vmul.f32 %v897, %v1745
        %v1759 = vmul.f32 %v903, %v1750
        %v1760 = vmul.f32 %v909, %v1755
        %v1761 = vmul.f32 %v1758, %v1277
        %v1762 = vmul.f32 %v1759, %v1282
        %v1763 = vmul.f32 %v1760, %v1287
        %v1764 = vadd.f32 %v1761, %v1295
        %v1765 = vadd.f32 %v1762, %v1300
        %v1766 = vadd.f32 %v1763, %v1305
        %v1767 = vmax.f32 %v1764, 0.0
        %v1768 = vmax.f32 %v1765, 0.0
        %v1769 = vmax.f32 %v1766, 0.0
        %v1770 = vmax.f32 %v1669, %v1767
        %v1771 = vmax.f32 %v1670, %v1768
        %v1772 = vmax.f32 %v1671, %v1769
        %v1773 = vsub.f32 %v1086, %v1315
        %v1774 = vmul.f32 %v1773, %v1173
        %v1775 = vmax.f32 %v1773, %v1774
        %1777 = vrot.lane.b32.xlu0 %v1775, 64
        %v1778 = vpop.permute.xlu0 %1777
        %v1779 = vsel %vm1187, %v1778, 0
        %1781 = vmatprep.subr.mxu0 0.0
        %1782 = vmatpush1.msra.mxu0 %v1779
        %1783 = vmatprep.subr.mxu0 0.0
        %1784 = vmatpush1.msra.mxu0 0.0
        %1785 = vmatprep.subr.mxu0 0.0
        %1786 = vmatpush1.msra.mxu0 0.0
        %1787 = vmatprep.subr.mxu0 0.0
        %1788 = vmatpush1.msra.mxu0 0.0
        %1789 = vmatprep.subr.mxu0 0.0
        %1790 = vmatpush1.msra.mxu0 0.0
        %1791 = vmatprep.subr.mxu0 0.0
        %1792 = vmatpush1.msra.mxu0 0.0
        %1793 = vmatprep.subr.mxu0 0.0
        %1794 = vmatpush1.msra.mxu0 0.0
        %1795 = vmatprep.subr.mxu0 0.0
        %1796 = vmatpush1.msra.mxu0 0.0
        %1797 = vmatprep.subr.mxu0 0.0
        %1798 = vmatpush1.msra.mxu0 0.0
        %1799 = vmatprep.subr.mxu0 0.0
        %1800 = vmatpush1.msra.mxu0 0.0
        %1801 = vmatprep.subr.mxu0 0.0
        %1802 = vmatpush1.msra.mxu0 0.0
        %1803 = vmatprep.subr.mxu0 0.0
        %1804 = vmatpush1.msra.mxu0 0.0
        %1805 = vmatprep.subr.mxu0 0.0
        %1806 = vmatpush1.msra.mxu0 0.0
        %1807 = vmatprep.subr.mxu0 0.0
        %1808 = vmatpush1.msra.mxu0 0.0
        %1809 = vmatprep.subr.mxu0 0.0
        %1810 = vmatpush1.msra.mxu0 0.0
        %1811 = vmatprep.subr.mxu0 0.0
        %1812 = vmatpush1.msra.mxu0 0.0
        %1813 = vmatprep.subr.mxu0 0.0
        %1814 = vmatpush1.msra.mxu0 0.0
        %1815 = vmatprep.subr.mxu0 0.0
        %1816 = vmatpush1.msra.mxu0 0.0
        %1817 = vmatprep.subr.mxu0 0.0
        %1818 = vmatpush1.msra.mxu0 0.0
        %1819 = vmatprep.subr.mxu0 0.0
        %1820 = vmatpush1.msra.mxu0 0.0
        %1821 = vmatprep.subr.mxu0 0.0
        %1822 = vmatpush1.msra.mxu0 0.0
        %1823 = vmatprep.subr.mxu0 0.0
        %1824 = vmatpush1.msra.mxu0 0.0
        %1825 = vmatprep.subr.mxu0 0.0
        %1826 = vmatpush1.msra.mxu0 0.0
        %1827 = vmatprep.subr.mxu0 0.0
        %1828 = vmatpush1.msra.mxu0 0.0
        %1829 = vmatprep.subr.mxu0 0.0
        %1830 = vmatpush1.msra.mxu0 0.0
        %1831 = vmatprep.subr.mxu0 0.0
        %1832 = vmatpush1.msra.mxu0 0.0
        %1833 = vmatprep.subr.mxu0 0.0
        %1834 = vmatpush1.msra.mxu0 0.0
        %1835 = vmatprep.subr.mxu0 0.0
        %1836 = vmatpush1.msra.mxu0 0.0
        %1837 = vmatprep.subr.mxu0 0.0
        %1838 = vmatpush1.msra.mxu0 0.0
        %1839 = vmatprep.subr.mxu0 0.0
        %1840 = vmatpush1.msra.mxu0 0.0
        %1841 = vmatprep.subr.mxu0 0.0
        %1842 = vmatpush1.msra.mxu0 0.0
        %1843 = vmatprep.subr.mxu0 0.0
        %1844 = vmatpush1.msra.mxu0 0.0
        %1845 = vmatprep.mubr.f32.mxu0 0.0
        %1846 = vmatmul.mubr.f32.gmra.mrb[0].mxu0 %v1179
        %v1847 = vpop.f32.mrb[0].mxu0
        %v1848 = vadd.f32 0.0, %v1847
        %v1849 = vpop.f32.mrb[0].mxu0
        %1850 = vmatprep.mubr.f32.mxu0 0.0
        %1851 = vmatmul.mubr.f32.gmra.mrb[0].mxu0 %v1182
        %v1852 = vpop.f32.mrb[0].mxu0
        %v1853 = vadd.f32 0.0, %v1852
        %v1854 = vpop.f32.mrb[0].mxu0
        %1855 = vmatprep.mubr.f32.mxu0 0.0
        %1856 = vmatmul.mubr.f32.gmra.mrb[0].mxu0 %v1185
        %v1857 = vpop.f32.mrb[0].mxu0
        %v1858 = vadd.f32 0.0, %v1857
        %v1859 = vpop.f32.mrb[0].mxu0
        %1860 = vdwg.mxu0
        %1864 = vrot.lane.b32.xlu0 %v1848, 64
        %v1865 = vpop.permute.xlu0 %1864
        %1866 = vrot.lane.b32.xlu0 %v1853, 64
        %v1867 = vpop.permute.xlu0 %1866
        %1868 = vrot.lane.b32.xlu0 %v1858, 64
        %v1869 = vpop.permute.xlu0 %1868
        %v1873 = vmul.f32 %v897, %v1865
        %v1874 = vmul.f32 %v903, %v1867
        %v1875 = vmul.f32 %v909, %v1869
        %v1876 = vmul.f32 %v1873, %v1277
        %v1877 = vmul.f32 %v1874, %v1282
        %v1878 = vmul.f32 %v1875, %v1287
        %v1879 = vadd.f32 %v1876, %v1295
        %v1880 = vadd.f32 %v1877, %v1300
        %v1881 = vadd.f32 %v1878, %v1305
        %v1882 = vmax.f32 %v1879, 0.0
        %v1883 = vmax.f32 %v1880, 0.0
        %v1884 = vmax.f32 %v1881, 0.0
        %1888 = vrot.lane.b32.xlu0 %v1882, 64
        %v1889 = vpop.permute.xlu0 %1888
        %1890 = vrot.lane.b32.xlu0 %v1883, 64
        %v1891 = vpop.permute.xlu0 %1890
        %1892 = vrot.lane.b32.xlu0 %v1884, 64
        %v1893 = vpop.permute.xlu0 %1892
        %v1897 = vmax.f32 %v1770, %v1889
        %v1898 = vmax.f32 %v1771, %v1891
        %v1899 = vmax.f32 %v1772, %v1893
        %v1900 = vsub.f32 %v1088, %v1168
        %v1901 = vmul.f32 %v1900, %v1173
        %v1902 = vmax.f32 %v1900, %v1901
        %v1904 = vsel %vm1187, %v1902, 0
        %1906 = vmatprep.subr.mxu0 0.0
        %1907 = vmatpush1.msra.mxu0 %v1904
        %1908 = vmatprep.subr.mxu0 0.0
        %1909 = vmatpush1.msra.mxu0 0.0
        %1910 = vmatprep.subr.mxu0 0.0
        %1911 = vmatpush1.msra.mxu0 0.0
        %1912 = vmatprep.subr.mxu0 0.0
        %1913 = vmatpush1.msra.mxu0 0.0
        %1914 = vmatprep.subr.mxu0 0.0
        %1915 = vmatpush1.msra.mxu0 0.0
        %1916 = vmatprep.subr.mxu0 0.0
        %1917 = vmatpush1.msra.mxu0 0.0
        %1918 = vmatprep.subr.mxu0 0.0
        %1919 = vmatpush1.msra.mxu0 0.0
        %1920 = vmatprep.subr.mxu0 0.0
        %1921 = vmatpush1.msra.mxu0 0.0
        %1922 = vmatprep.subr.mxu0 0.0
        %1923 = vmatpush1.msra.mxu0 0.0
        %1924 = vmatprep.subr.mxu0 0.0
        %1925 = vmatpush1.msra.mxu0 0.0
        %1926 = vmatprep.subr.mxu0 0.0
        %1927 = vmatpush1.msra.mxu0 0.0
        %1928 = vmatprep.subr.mxu0 0.0
        %1929 = vmatpush1.msra.mxu0 0.0
        %1930 = vmatprep.subr.mxu0 0.0
        %1931 = vmatpush1.msra.mxu0 0.0
        %1932 = vmatprep.subr.mxu0 0.0
        %1933 = vmatpush1.msra.mxu0 0.0
        %1934 = vmatprep.subr.mxu0 0.0
        %1935 = vmatpush1.msra.mxu0 0.0
        %1936 = vmatprep.subr.mxu0 0.0
        %1937 = vmatpush1.msra.mxu0 0.0
        %1938 = vmatprep.subr.mxu0 0.0
        %1939 = vmatpush1.msra.mxu0 0.0
        %1940 = vmatprep.subr.mxu0 0.0
        %1941 = vmatpush1.msra.mxu0 0.0
        %1942 = vmatprep.subr.mxu0 0.0
        %1943 = vmatpush1.msra.mxu0 0.0
        %1944 = vmatprep.subr.mxu0 0.0
        %1945 = vmatpush1.msra.mxu0 0.0
        %1946 = vmatprep.subr.mxu0 0.0
        %1947 = vmatpush1.msra.mxu0 0.0
        %1948 = vmatprep.subr.mxu0 0.0
        %1949 = vmatpush1.msra.mxu0 0.0
        %1950 = vmatprep.subr.mxu0 0.0
        %1951 = vmatpush1.msra.mxu0 0.0
        %1952 = vmatprep.subr.mxu0 0.0
        %1953 = vmatpush1.msra.mxu0 0.0
        %1954 = vmatprep.subr.mxu0 0.0
        %1955 = vmatpush1.msra.mxu0 0.0
        %1956 = vmatprep.subr.mxu0 0.0
        %1957 = vmatpush1.msra.mxu0 0.0
        %1958 = vmatprep.subr.mxu0 0.0
        %1959 = vmatpush1.msra.mxu0 0.0
        %1960 = vmatprep.subr.mxu0 0.0
        %1961 = vmatpush1.msra.mxu0 0.0
        %1962 = vmatprep.subr.mxu0 0.0
        %1963 = vmatpush1.msra.mxu0 0.0
        %1964 = vmatprep.subr.mxu0 0.0
        %1965 = vmatpush1.msra.mxu0 0.0
        %1966 = vmatprep.subr.mxu0 0.0
        %1967 = vmatpush1.msra.mxu0 0.0
        %1968 = vmatprep.subr.mxu0 0.0
        %1969 = vmatpush1.msra.mxu0 0.0
        %1970 = vmatprep.mubr.f32.mxu0 0.0
        %1971 = vmatmul.mubr.f32.gmra.mrb[0].mxu0 %v1179
        %v1972 = vpop.f32.mrb[0].mxu0
        %v1973 = vadd.f32 0.0, %v1972
        %v1974 = vpop.f32.mrb[0].mxu0
        %1975 = vmatprep.mubr.f32.mxu0 0.0
        %1976 = vmatmul.mubr.f32.gmra.mrb[0].mxu0 %v1182
        %v1977 = vpop.f32.mrb[0].mxu0
        %v1978 = vadd.f32 0.0, %v1977
        %v1979 = vpop.f32.mrb[0].mxu0
        %1980 = vmatprep.mubr.f32.mxu0 0.0
        %1981 = vmatmul.mubr.f32.gmra.mrb[0].mxu0 %v1185
        %v1982 = vpop.f32.mrb[0].mxu0
        %v1983 = vadd.f32 0.0, %v1982
        %v1984 = vpop.f32.mrb[0].mxu0
        %1985 = vdwg.mxu0
        %v1986 = vmul.f32 %v899, %v1973
        %v1987 = vmul.f32 %v905, %v1978
        %v1988 = vmul.f32 %v911, %v1983
        %v1989 = vmul.f32 %v1986, %v1277
        %v1990 = vmul.f32 %v1987, %v1282
        %v1991 = vmul.f32 %v1988, %v1287
        %v1992 = vadd.f32 %v1989, %v1295
        %v1993 = vadd.f32 %v1990, %v1300
        %v1994 = vadd.f32 %v1991, %v1305
        %v1995 = vmax.f32 %v1992, 0.0
        %v1996 = vmax.f32 %v1993, 0.0
        %v1997 = vmax.f32 %v1994, 0.0
        %v1998 = vmax.f32 %v1897, %v1995
        %v1999 = vmax.f32 %v1898, %v1996
        %v2000 = vmax.f32 %v1899, %v1997
        %v2001 = vsub.f32 %v1088, %v1315
        %v2002 = vmul.f32 %v2001, %v1173
        %v2003 = vmax.f32 %v2001, %v2002
        %2005 = vrot.lane.b32.xlu0 %v2003, 64
        %v2006 = vpop.permute.xlu0 %2005
        %v2007 = vsel %vm1187, %v2006, 0
        %2009 = vmatprep.subr.mxu0 0.0
        %2010 = vmatpush1.msra.mxu0 %v2007
        %2011 = vmatprep.subr.mxu0 0.0
        %2012 = vmatpush1.msra.mxu0 0.0
        %2013 = vmatprep.subr.mxu0 0.0
        %2014 = vmatpush1.msra.mxu0 0.0
        %2015 = vmatprep.subr.mxu0 0.0
        %2016 = vmatpush1.msra.mxu0 0.0
        %2017 = vmatprep.subr.mxu0 0.0
        %2018 = vmatpush1.msra.mxu0 0.0
        %2019 = vmatprep.subr.mxu0 0.0
        %2020 = vmatpush1.msra.mxu0 0.0
        %2021 = vmatprep.subr.mxu0 0.0
        %2022 = vmatpush1.msra.mxu0 0.0
        %2023 = vmatprep.subr.mxu0 0.0
        %2024 = vmatpush1.msra.mxu0 0.0
        %2025 = vmatprep.subr.mxu0 0.0
        %2026 = vmatpush1.msra.mxu0 0.0
        %2027 = vmatprep.subr.mxu0 0.0
        %2028 = vmatpush1.msra.mxu0 0.0
        %2029 = vmatprep.subr.mxu0 0.0
        %2030 = vmatpush1.msra.mxu0 0.0
        %2031 = vmatprep.subr.mxu0 0.0
        %2032 = vmatpush1.msra.mxu0 0.0
        %2033 = vmatprep.subr.mxu0 0.0
        %2034 = vmatpush1.msra.mxu0 0.0
        %2035 = vmatprep.subr.mxu0 0.0
        %2036 = vmatpush1.msra.mxu0 0.0
        %2037 = vmatprep.subr.mxu0 0.0
        %2038 = vmatpush1.msra.mxu0 0.0
        %2039 = vmatprep.subr.mxu0 0.0
        %2040 = vmatpush1.msra.mxu0 0.0
        %2041 = vmatprep.subr.mxu0 0.0
        %2042 = vmatpush1.msra.mxu0 0.0
        %2043 = vmatprep.subr.mxu0 0.0
        %2044 = vmatpush1.msra.mxu0 0.0
        %2045 = vmatprep.subr.mxu0 0.0
        %2046 = vmatpush1.msra.mxu0 0.0
        %2047 = vmatprep.subr.mxu0 0.0
        %2048 = vmatpush1.msra.mxu0 0.0
        %2049 = vmatprep.subr.mxu0 0.0
        %2050 = vmatpush1.msra.mxu0 0.0
        %2051 = vmatprep.subr.mxu0 0.0
        %2052 = vmatpush1.msra.mxu0 0.0
        %2053 = vmatprep.subr.mxu0 0.0
        %2054 = vmatpush1.msra.mxu0 0.0
        %2055 = vmatprep.subr.mxu0 0.0
        %2056 = vmatpush1.msra.mxu0 0.0
        %2057 = vmatprep.subr.mxu0 0.0
        %2058 = vmatpush1.msra.mxu0 0.0
        %2059 = vmatprep.subr.mxu0 0.0
        %2060 = vmatpush1.msra.mxu0 0.0
        %2061 = vmatprep.subr.mxu0 0.0
        %2062 = vmatpush1.msra.mxu0 0.0
        %2063 = vmatprep.subr.mxu0 0.0
        %2064 = vmatpush1.msra.mxu0 0.0
        %2065 = vmatprep.subr.mxu0 0.0
        %2066 = vmatpush1.msra.mxu0 0.0
        %2067 = vmatprep.subr.mxu0 0.0
        %2068 = vmatpush1.msra.mxu0 0.0
        %2069 = vmatprep.subr.mxu0 0.0
        %2070 = vmatpush1.msra.mxu0 0.0
        %2071 = vmatprep.subr.mxu0 0.0
        %2072 = vmatpush1.msra.mxu0 0.0
        %2073 = vmatprep.mubr.f32.mxu0 0.0
        %2074 = vmatmul.mubr.f32.gmra.mrb[0].mxu0 %v1179
        %v2075 = vpop.f32.mrb[0].mxu0
        %v2076 = vadd.f32 0.0, %v2075
        %v2077 = vpop.f32.mrb[0].mxu0
        %2078 = vmatprep.mubr.f32.mxu0 0.0
        %2079 = vmatmul.mubr.f32.gmra.mrb[0].mxu0 %v1182
        %v2080 = vpop.f32.mrb[0].mxu0
        %v2081 = vadd.f32 0.0, %v2080
        %v2082 = vpop.f32.mrb[0].mxu0
        %2083 = vmatprep.mubr.f32.mxu0 0.0
        %2084 = vmatmul.mubr.f32.gmra.mrb[0].mxu0 %v1185
        %v2085 = vpop.f32.mrb[0].mxu0
        %v2086 = vadd.f32 0.0, %v2085
        %v2087 = vpop.f32.mrb[0].mxu0
        %2088 = vdwg.mxu0
        %2092 = vrot.lane.b32.xlu0 %v2076, 64
        %v2093 = vpop.permute.xlu0 %2092
        %2094 = vrot.lane.b32.xlu0 %v2081, 64
        %v2095 = vpop.permute.xlu0 %2094
        %2096 = vrot.lane.b32.xlu0 %v2086, 64
        %v2097 = vpop.permute.xlu0 %2096
        %v2101 = vmul.f32 %v899, %v2093
        %v2102 = vmul.f32 %v905, %v2095
        %v2103 = vmul.f32 %v911, %v2097
        %v2104 = vmul.f32 %v2101, %v1277
        %v2105 = vmul.f32 %v2102, %v1282
        %v2106 = vmul.f32 %v2103, %v1287
        %v2107 = vadd.f32 %v2104, %v1295
        %v2108 = vadd.f32 %v2105, %v1300
        %v2109 = vadd.f32 %v2106, %v1305
        %v2110 = vmax.f32 %v2107, 0.0
        %v2111 = vmax.f32 %v2108, 0.0
        %v2112 = vmax.f32 %v2109, 0.0
        %2116 = vrot.lane.b32.xlu0 %v2110, 64
        %v2117 = vpop.permute.xlu0 %2116
        %2118 = vrot.lane.b32.xlu0 %v2111, 64
        %v2119 = vpop.permute.xlu0 %2118
        %2120 = vrot.lane.b32.xlu0 %v2112, 64
        %v2121 = vpop.permute.xlu0 %2120
        %v2125 = vmax.f32 %v1998, %v2117
        %v2126 = vmax.f32 %v1999, %v2119
        %v2127 = vmax.f32 %v2000, %v2121
        %v2128 = vld [vmem:[%s522] sm:$0xff]
        %v2129 = vld [vmem:[%s522 + $0x8] sm:$0xff]
        %v2130 = vld [vmem:[%s522 + $0x10] sm:$0xff]
        %v2131 = vadd.f32 %v2125, %v2128
        %v2132 = vadd.f32 %v2126, %v2129
        %v2133 = vadd.f32 %v2127, %v2130
        %2134 = vst.msk [vmem:[%s597] sm:$0xff] %vm728, %v2131
        %2135 = vst.msk [vmem:[%s597 + $0x8] sm:$0xff] %vm728, %v2132
        %2136 = vst.msk [vmem:[%s597 + $0x10] sm:$0xff] %vm728, %v2133
        %s2137 = sand.u32 %s294, 1
        %s2138 = scalar_lea.sflag [#allocation4], %s2137
        %s2139 = sand.u32 %s294, 1
        %s2140 = smul.addr %s2139, 24
        %s2141 = scalar_lea.vmem [#allocation19], %s2140
        // Predicated region
        $region101: #{pvb_forward.3} parent=59 // pred_check
          %p2142 = pneg %p304
        $region102: #{pvb_forward.3} parent=59 // pred_check_branch
          %2144 = sbr.rel (%p2142) target = $region104
        $region103: #{pvb_forward.3} parent=59 // pred_region
          %s2146 = ssub.s32 384, 384
          %2147 = vsyncadd %s2138, %s2146
          %s2148 = smul.addr %s40, 3
          %s2149 = sadd.s32 %s41, %s2148
          %s2150 = smul.addr %s2149, 128
          %s2151 = scalar_lea.hbm %s10, %s2150
          %s2152 = sshll.u32 %s2141, 4
          %s2153 = int_to_ptr.vmem [resolvable:$true] %s2152
          %2158 = dma.vmem_to_hbm [thread:$0]  %s2153, 384, %s2151, %s2138, 128, 128, 8
        $region104: #{pvb_forward.3} parent=59 // pred_fallthru
          _
      $region60: #{pvb_forward.3} parent=5 // pred_fallthru
        _
      %p2159 = scmp.le.s32.totalorder 2, %s31
      // Predicated region
      $region105: #{pvb_forward.3} parent=5 // pred_check
        %p2160 = pneg %p2159
      $region106: #{pvb_forward.3} parent=5 // pred_check_branch
        %2162 = sbr.rel (%p2160) target = $region108
      $region107: #{pvb_forward.3} parent=5 // pred_region
        %s2163 = ssub.s32 %s31, 2
        // Predicated region
        $region109: #{pvb_forward.3} parent=107 // pred_check
          %p2164 = pneg %p310
        $region110: #{pvb_forward.3} parent=107 // pred_check_branch
          %2166 = sbr.rel (%p2164) target = $region112
        $region111: #{pvb_forward.3} parent=107 // pred_region
          %s2167 = sand.u32 %s295, 1
          %s2168 = scalar_lea.sflag [#allocation4], %s2167
          %s2169 = sand.u32 %s295, 1
          %s2170 = smul.addr %s2169, 24
          %s2171 = scalar_lea.vmem [#allocation19], %s2170
          %2172 = dma.done %s2168, 384
        $region112: #{pvb_forward.3} parent=107 // pred_fallthru
          _
      $region108: #{pvb_forward.3} parent=5 // pred_fallthru
        _
    $region6: #{pvb_forward.3} parent=1 // loop_footer
      %s35 = sadd.s32 1, %s31
    $region7: #{pvb_forward.3} parent=1 // loop_footer_branch
      %30 = sbr.rel target = $region3
    $region8: #{pvb_forward.3} parent=1 // loop_exit
      _
    %2173 = vsyncpa [#allocation3], 1
    %s2174 = scalar_lea.sflag [#allocation3], 1
    %2175 = vsyncpa %s2174, 1
    %2176 = vsyncpa [#allocation6], 1
    %s2177 = scalar_lea.sflag [#allocation6], 1
    %2178 = vsyncpa %s2177, 1
    %2179 = vsyncpa [#allocation9], 1
    %s2180 = scalar_lea.sflag [#allocation9], 1
    %2181 = vsyncpa %s2180, 1
    %2182 = vsyncpa [#allocation12], 1
    %2183 = vsyncpa [#allocation15], 1
    %2184 = vsyncpa [#allocation18], 1
    %2185 = vsyncpa [#allocation4], 1
    %s2186 = scalar_lea.sflag [#allocation4], 1
    %2187 = vsyncpa %s2186, 1

// kernel: pvb_forward.2
$region0: #{pvb_forward.2}
  #allocation0 [shape = 'u32[]', space=smem, size = 0x4, offset = 0x4, fixed_abs, tag = 'smem constant byte address 0x4 - core index']
  #allocation1 [shape = 'u32[144,128]{1,0:T(1,128)}', space=vmem, size = 0x12000, scoped, tag = 'internal scratch']
  %s0 = inlined_call_operand.hbm [shape: f32[2,24,1024], index: 0, kind: input, shape index: {}]
  %s1 = inlined_call_operand.hbm [shape: f32[24,27], index: 1, kind: input, shape index: {}]
  %s2 = inlined_call_operand.hbm [shape: f32[24,1], index: 2, kind: input, shape index: {}]
  %s3 = inlined_call_operand.hbm [shape: f32[24,27], index: 3, kind: input, shape index: {}]
  %s4 = inlined_call_operand.hbm [shape: f32[24,1], index: 4, kind: input, shape index: {}]
  %s5 = inlined_call_operand.hbm [shape: f32[1,1024], index: 5, kind: input, shape index: {}]
  %s6 = inlined_call_operand.hbm [shape: f32[2,24,1024], index: 6, kind: output, shape index: {}]
  %s7 = sld [smem:[#allocation0]]
  $region81: #{pvb_forward.2} parent=0
    _
  %s9 = ssub.s32 1, %s7
  %s10 = scalar_select 0, %s9, %s7
  $region1: #{pvb_forward.2} parent=0
    #allocation2 [shape = 'u8[196608]{0}', space=vmem, size = 0x30000, scoped, tag = 'input window, operand 0']
    #allocation3 [shape = 's32[2]{0}', space=sflag, size = 0x8, scoped, tag = 'scoped memory for pvb_forward.2']
    #allocation4 [shape = 's32[2]{0}', space=sflag, size = 0x8, scoped, tag = 'scoped memory for pvb_forward.2']
    #allocation5 [shape = 'u8[12288]{0}', space=vmem, size = 0x3000, scoped, tag = 'input window, operand 1, single buffered']
    #allocation6 [shape = 's32[1]{0}', space=sflag, size = 0x4, scoped, tag = 'scoped memory for pvb_forward.2']
    #allocation7 [shape = 'u8[12288]{0}', space=vmem, size = 0x3000, scoped, tag = 'input window, operand 2, single buffered']
    #allocation8 [shape = 'u8[12288]{0}', space=vmem, size = 0x3000, scoped, tag = 'input window, operand 3, single buffered']
    #allocation9 [shape = 's32[1]{0}', space=sflag, size = 0x4, scoped, tag = 'scoped memory for pvb_forward.2']
    #allocation10 [shape = 'u8[12288]{0}', space=vmem, size = 0x3000, scoped, tag = 'input window, operand 4, single buffered']
    #allocation11 [shape = 'u8[4096]{0}', space=vmem, size = 0x1000, scoped, tag = 'input window, operand 5, single buffered']
    #allocation12 [shape = 's32[1]{0}', space=sflag, size = 0x4, scoped, tag = 'scoped memory for pvb_forward.2']
    #allocation13 [shape = 'u8[196608]{0}', space=vmem, size = 0x30000, scoped, tag = 'output window, operand 0']
    %11 = vsyncpa [#allocation3], 0
    %s12 = scalar_lea.sflag [#allocation3], 1
    %13 = vsyncpa %s12, 0
    %14 = vsyncpa [#allocation6], 0
    %15 = vsyncpa [#allocation9], 0
    %16 = vsyncpa [#allocation12], 0
    %17 = vsyncpa [#allocation4], 0
    %s18 = scalar_lea.sflag [#allocation4], 1
    %19 = vsyncpa %s18, 0
    loop: start=0, step=1, limit=4
    $region2: #{pvb_forward.2} parent=1 // loop_pre_header
      _
    $region3: #{pvb_forward.2} parent=1 // loop_header
      %s21 = sphi 0, %s25
      %p22 = scmp.ge.s32.totalorder %s21, 4
      %s31 = sphi 0, %s33
      %s34 = sphi 0, %s31
      %s35 = sphi 0, %s34
      %s51 = sphi 0, %s35
      %s55 = sphi 0, %s55
      %s57 = sphi 0, %s55
      %s58 = sphi 0, %s57
      %s72 = sphi 0, %s58
      %s76 = sphi 0, %s76
      %s78 = sphi 0, %s76
      %s79 = sphi 0, %s78
      %s93 = sphi 0, %s79
      %s97 = sphi 0, %s97
      %s99 = sphi 0, %s97
      %s100 = sphi 0, %s99
      %s114 = sphi 0, %s100
      %s118 = sphi 0, %s118
      %s120 = sphi 0, %s118
      %s121 = sphi 0, %s120
      %s135 = sphi 0, %s121
      %s139 = sphi 0, %s139
      %s141 = sphi 0, %s139
      %s142 = sphi 0, %s141
      %s156 = sphi 0, %s142
      %s162 = sphi 0, %s164
      %s165 = sphi 0, %s162
      %s166 = sphi 0, %s165
      %s182 = sphi 0, %s166
    $region4: #{pvb_forward.2} parent=1 // loop_header_branch
      %24 = sbr.rel (%p22) target = $region8
    $region5: #{pvb_forward.2} parent=1 // loop_body
      %s26 = ssub.s32 %s21, 1
      %s27 = ssub.s32 %s21, 2
      %s28 = sadd.s32 %s21, 1
      %s29 = ssub.s32 %s21, %s28
      %p30 = scmp.eq.s32.totalorder %s29, 0
      %s32 = sadd.s32 %s31, 1
      %s33 = scalar_select %p30, %s31, %s32
      %p36 = pneg %p30
      %p37 = scmp.eq.s32.totalorder %s21, 1
      %p38 = por %p36, %p37
      %p39 = scmp.ne.s32.totalorder %s31, %s34
      %p40 = scmp.eq.s32.totalorder %s21, 0
      %p41 = por %p39, %p40
      %p42 = scmp.ne.s32.totalorder %s31, %s34
      %p43 = scmp.eq.s32.totalorder %s26, 1
      %p44 = por %p42, %p43
      %p45 = scmp.ne.s32.totalorder %s34, %s35
      %p46 = scmp.eq.s32.totalorder %s26, 0
      %p47 = por %p45, %p46
      %p48 = scmp.ne.s32.totalorder %s34, %s35
      %p49 = scmp.eq.s32.totalorder %s27, 1
      %p50 = por %p48, %p49
      %p52 = scmp.ne.s32.totalorder %s35, %s51
      %p53 = scmp.eq.s32.totalorder %s27, 0
      %p54 = por %p52, %p53
      %s56 = sadd.s32 %s55, 1
      %p59 = scmp.eq.s32.totalorder %s21, 1
      %p60 = scmp.ne.s32.totalorder %s55, %s57
      %p61 = scmp.eq.s32.totalorder %s21, 0
      %p62 = por %p60, %p61
      %p63 = scmp.ne.s32.totalorder %s55, %s57
      %p64 = scmp.eq.s32.totalorder %s26, 1
      %p65 = por %p63, %p64
      %p66 = scmp.ne.s32.totalorder %s57, %s58
      %p67 = scmp.eq.s32.totalorder %s26, 0
      %p68 = por %p66, %p67
      %p69 = scmp.ne.s32.totalorder %s57, %s58
      %p70 = scmp.eq.s32.totalorder %s27, 1
      %p71 = por %p69, %p70
      %p73 = scmp.ne.s32.totalorder %s58, %s72
      %p74 = scmp.eq.s32.totalorder %s27, 0
      %p75 = por %p73, %p74
      %s77 = sadd.s32 %s76, 1
      %p80 = scmp.eq.s32.totalorder %s21, 1
      %p81 = scmp.ne.s32.totalorder %s76, %s78
      %p82 = scmp.eq.s32.totalorder %s21, 0
      %p83 = por %p81, %p82
      %p84 = scmp.ne.s32.totalorder %s76, %s78
      %p85 = scmp.eq.s32.totalorder %s26, 1
      %p86 = por %p84, %p85
      %p87 = scmp.ne.s32.totalorder %s78, %s79
      %p88 = scmp.eq.s32.totalorder %s26, 0
      %p89 = por %p87, %p88
      %p90 = scmp.ne.s32.totalorder %s78, %s79
      %p91 = scmp.eq.s32.totalorder %s27, 1
      %p92 = por %p90, %p91
      %p94 = scmp.ne.s32.totalorder %s79, %s93
      %p95 = scmp.eq.s32.totalorder %s27, 0
      %p96 = por %p94, %p95
      %s98 = sadd.s32 %s97, 1
      %p101 = scmp.eq.s32.totalorder %s21, 1
      %p102 = scmp.ne.s32.totalorder %s97, %s99
      %p103 = scmp.eq.s32.totalorder %s21, 0
      %p104 = por %p102, %p103
      %p105 = scmp.ne.s32.totalorder %s97, %s99
      %p106 = scmp.eq.s32.totalorder %s26, 1
      %p107 = por %p105, %p106
      %p108 = scmp.ne.s32.totalorder %s99, %s100
      %p109 = scmp.eq.s32.totalorder %s26, 0
      %p110 = por %p108, %p109
      %p111 = scmp.ne.s32.totalorder %s99, %s100
      %p112 = scmp.eq.s32.totalorder %s27, 1
      %p113 = por %p111, %p112
      %p115 = scmp.ne.s32.totalorder %s100, %s114
      %p116 = scmp.eq.s32.totalorder %s27, 0
      %p117 = por %p115, %p116
      %s119 = sadd.s32 %s118, 1
      %p122 = scmp.eq.s32.totalorder %s21, 1
      %p123 = scmp.ne.s32.totalorder %s118, %s120
      %p124 = scmp.eq.s32.totalorder %s21, 0
      %p125 = por %p123, %p124
      %p126 = scmp.ne.s32.totalorder %s118, %s120
      %p127 = scmp.eq.s32.totalorder %s26, 1
      %p128 = por %p126, %p127
      %p129 = scmp.ne.s32.totalorder %s120, %s121
      %p130 = scmp.eq.s32.totalorder %s26, 0
      %p131 = por %p129, %p130
      %p132 = scmp.ne.s32.totalorder %s120, %s121
      %p133 = scmp.eq.s32.totalorder %s27, 1
      %p134 = por %p132, %p133
      %p136 = scmp.ne.s32.totalorder %s121, %s135
      %p137 = scmp.eq.s32.totalorder %s27, 0
      %p138 = por %p136, %p137
      %s140 = sadd.s32 %s139, 1
      %p143 = scmp.eq.s32.totalorder %s21, 1
      %p144 = scmp.ne.s32.totalorder %s139, %s141
      %p145 = scmp.eq.s32.totalorder %s21, 0
      %p146 = por %p144, %p145
      %p147 = scmp.ne.s32.totalorder %s139, %s141
      %p148 = scmp.eq.s32.totalorder %s26, 1
      %p149 = por %p147, %p148
      %p150 = scmp.ne.s32.totalorder %s141, %s142
      %p151 = scmp.eq.s32.totalorder %s26, 0
      %p152 = por %p150, %p151
      %p153 = scmp.ne.s32.totalorder %s141, %s142
      %p154 = scmp.eq.s32.totalorder %s27, 1
      %p155 = por %p153, %p154
      %p157 = scmp.ne.s32.totalorder %s142, %s156
      %p158 = scmp.eq.s32.totalorder %s27, 0
      %p159 = por %p157, %p158
      %s160 = ssub.s32 %s21, %s28
      %p161 = scmp.eq.s32.totalorder %s160, 0
      %s163 = sadd.s32 %s162, 1
      %s164 = scalar_select %p161, %s162, %s163
      %p167 = pneg %p161
      %p168 = scmp.eq.s32.totalorder %s21, 1
      %p169 = por %p167, %p168
      %p170 = scmp.ne.s32.totalorder %s162, %s165
      %p171 = scmp.eq.s32.totalorder %s21, 0
      %p172 = por %p170, %p171
      %p173 = scmp.ne.s32.totalorder %s162, %s165
      %p174 = scmp.eq.s32.totalorder %s26, 1
      %p175 = por %p173, %p174
      %p176 = scmp.ne.s32.totalorder %s165, %s166
      %p177 = scmp.eq.s32.totalorder %s26, 0
      %p178 = por %p176, %p177
      %p179 = scmp.ne.s32.totalorder %s165, %s166
      %p180 = scmp.eq.s32.totalorder %s27, 1
      %p181 = por %p179, %p180
      %p183 = scmp.ne.s32.totalorder %s166, %s182
      %p184 = scmp.eq.s32.totalorder %s27, 0
      %p185 = por %p183, %p184
      %p186 = scmp.le.s32.totalorder 1, %s21
      %p187 = scmp.lt.s32.totalorder %s21, 3
      %p188 = pnand %p186, %p187
      %p189 = pneg %p188
      // Predicated region
      $region9: #{pvb_forward.2} parent=5 // pred_check
        _
      $region10: #{pvb_forward.2} parent=5 // pred_check_branch
        %191 = sbr.rel (%p188) target = $region12
      $region11: #{pvb_forward.2} parent=5 // pred_region
        %s192 = ssub.s32 %s21, 1
        // Predicated region
        $region13: #{pvb_forward.2} parent=11 // pred_check
          %p193 = pneg %p68
        $region14: #{pvb_forward.2} parent=11 // pred_check_branch
          %195 = sbr.rel (%p193) target = $region16
        $region15: #{pvb_forward.2} parent=11 // pred_region
          %s197 = ssub.s32 384, 384
          %198 = vsyncadd [#allocation6], %s197
          %s199 = sshll.u32 [#allocation5], 4
          %s200 = int_to_ptr.vmem [resolvable:$true] %s199
          %205 = dma.hbm_to_vmem [thread:$0]  %s1, 384, %s200, [#allocation6], 128, 128, 8
        $region16: #{pvb_forward.2} parent=11 // pred_fallthru
          _
        // Predicated region
        $region17: #{pvb_forward.2} parent=11 // pred_check
          %p206 = pneg %p89
        $region18: #{pvb_forward.2} parent=11 // pred_check_branch
          %208 = sbr.rel (%p206) target = $region20
        $region19: #{pvb_forward.2} parent=11 // pred_region
          %s210 = ssub.s32 384, 384
          %211 = vsyncadd [#allocation6], %s210
          %s212 = sshll.u32 [#allocation7], 4
          %s213 = int_to_ptr.vmem [resolvable:$true] %s212
          %218 = dma.hbm_to_vmem [thread:$0]  %s2, 384, %s213, [#allocation6], 128, 128, 8
        $region20: #{pvb_forward.2} parent=11 // pred_fallthru
          _
        // Predicated region
        $region21: #{pvb_forward.2} parent=11 // pred_check
          %p219 = pneg %p110
        $region22: #{pvb_forward.2} parent=11 // pred_check_branch
          %221 = sbr.rel (%p219) target = $region24
        $region23: #{pvb_forward.2} parent=11 // pred_region
          %s223 = ssub.s32 384, 384
          %224 = vsyncadd [#allocation9], %s223
          %s225 = sshll.u32 [#allocation8], 4
          %s226 = int_to_ptr.vmem [resolvable:$true] %s225
          %231 = dma.hbm_to_vmem [thread:$0]  %s3, 384, %s226, [#allocation9], 128, 128, 8
        $region24: #{pvb_forward.2} parent=11 // pred_fallthru
          _
        // Predicated region
        $region25: #{pvb_forward.2} parent=11 // pred_check
          %p232 = pneg %p131
        $region26: #{pvb_forward.2} parent=11 // pred_check_branch
          %234 = sbr.rel (%p232) target = $region28
        $region27: #{pvb_forward.2} parent=11 // pred_region
          %s236 = ssub.s32 384, 384
          %237 = vsyncadd [#allocation9], %s236
          %s238 = sshll.u32 [#allocation10], 4
          %s239 = int_to_ptr.vmem [resolvable:$true] %s238
          %244 = dma.hbm_to_vmem [thread:$0]  %s4, 384, %s239, [#allocation9], 128, 128, 8
        $region28: #{pvb_forward.2} parent=11 // pred_fallthru
          _
        // Predicated region
        $region29: #{pvb_forward.2} parent=11 // pred_check
          %p245 = pneg %p152
        $region30: #{pvb_forward.2} parent=11 // pred_check_branch
          %247 = sbr.rel (%p245) target = $region32
        $region31: #{pvb_forward.2} parent=11 // pred_region
          %s249 = ssub.s32 128, 128
          %250 = vsyncadd [#allocation12], %s249
          %s252 = sshll.u32 [#allocation11], 4
          %s253 = int_to_ptr.vmem [resolvable:$true] %s252
          %255 = dma.hbm_to_vmem [thread:$0]  %s5, 128, %s253, [#allocation12]
        $region32: #{pvb_forward.2} parent=11 // pred_fallthru
          _
      $region12: #{pvb_forward.2} parent=5 // pred_fallthru
        _
      %p256 = scmp.lt.s32.totalorder %s21, 2
      // Predicated region
      $region33: #{pvb_forward.2} parent=5 // pred_check
        %p257 = pneg %p256
      $region34: #{pvb_forward.2} parent=5 // pred_check_branch
        %259 = sbr.rel (%p257) target = $region36
      $region35: #{pvb_forward.2} parent=5 // pred_region
        // Predicated region
        $region37: #{pvb_forward.2} parent=35 // pred_check
          %p260 = pneg %p41
        $region38: #{pvb_forward.2} parent=35 // pred_check_branch
          %262 = sbr.rel (%p260) target = $region40
        $region39: #{pvb_forward.2} parent=35 // pred_region
          %s263 = sand.u32 %s31, 1
          %s264 = scalar_lea.sflag [#allocation3], %s263
          %s265 = sand.u32 %s31, 1
          %s266 = smul.addr %s265, 192
          %s267 = scalar_lea.vmem [#allocation2], %s266
          %s269 = ssub.s32 3072, 3072
          %270 = vsyncadd %s264, %s269
          %s271 = smul.addr %s21, 24
          %s272 = smul.addr %s271, 128
          %s273 = scalar_lea.hbm %s0, %s272
          %s274 = sshll.u32 %s267, 4
          %s275 = int_to_ptr.vmem [resolvable:$true] %s274
          %280 = dma.hbm_to_vmem [thread:$0]  %s273, 3072, %s275, %s264, 1024, 1024, 64
        $region40: #{pvb_forward.2} parent=35 // pred_fallthru
          _
      $region36: #{pvb_forward.2} parent=5 // pred_fallthru
        _
      %p281 = scmp.le.s32.totalorder 1, %s21
      %p282 = scmp.lt.s32.totalorder %s21, 3
      %p283 = pnand %p281, %p282
      %p284 = pneg %p283
      // Predicated region
      $region41: #{pvb_forward.2} parent=5 // pred_check
        _
      $region42: #{pvb_forward.2} parent=5 // pred_check_branch
        %286 = sbr.rel (%p283) target = $region44
      $region43: #{pvb_forward.2} parent=5 // pred_region
        %s287 = ssub.s32 %s21, 1
        %s288 = sand.u32 %s34, 1
        %s289 = scalar_lea.sflag [#allocation3], %s288
        %s290 = sand.u32 %s34, 1
        %s291 = smul.addr %s290, 192
        %s292 = scalar_lea.vmem [#allocation2], %s291
        // Predicated region
        $region45: #{pvb_forward.2} parent=43 // pred_check
          %p293 = pneg %p47
        $region46: #{pvb_forward.2} parent=43 // pred_check_branch
          %295 = sbr.rel (%p293) target = $region48
        $region47: #{pvb_forward.2} parent=43 // pred_region
          %296 = dma.done %s289, 3072
        $region48: #{pvb_forward.2} parent=43 // pred_fallthru
          _
        // Predicated region
        $region49: #{pvb_forward.2} parent=43 // pred_check
          %p297 = pneg %p68
        $region50: #{pvb_forward.2} parent=43 // pred_check_branch
          %299 = sbr.rel (%p297) target = $region52
        $region51: #{pvb_forward.2} parent=43 // pred_region
          %300 = dma.done [#allocation6], 384
        $region52: #{pvb_forward.2} parent=43 // pred_fallthru
          _
        // Predicated region
        $region53: #{pvb_forward.2} parent=43 // pred_check
          %p301 = pneg %p89
        $region54: #{pvb_forward.2} parent=43 // pred_check_branch
          %303 = sbr.rel (%p301) target = $region56
        $region55: #{pvb_forward.2} parent=43 // pred_region
          %304 = dma.done [#allocation6], 384
        $region56: #{pvb_forward.2} parent=43 // pred_fallthru
          _
        // Predicated region
        $region57: #{pvb_forward.2} parent=43 // pred_check
          %p305 = pneg %p110
        $region58: #{pvb_forward.2} parent=43 // pred_check_branch
          %307 = sbr.rel (%p305) target = $region60
        $region59: #{pvb_forward.2} parent=43 // pred_region
          %308 = dma.done [#allocation9], 384
        $region60: #{pvb_forward.2} parent=43 // pred_fallthru
          _
        // Predicated region
        $region61: #{pvb_forward.2} parent=43 // pred_check
          %p309 = pneg %p131
        $region62: #{pvb_forward.2} parent=43 // pred_check_branch
          %311 = sbr.rel (%p309) target = $region64
        $region63: #{pvb_forward.2} parent=43 // pred_region
          %312 = dma.done [#allocation9], 384
        $region64: #{pvb_forward.2} parent=43 // pred_fallthru
          _
        // Predicated region
        $region65: #{pvb_forward.2} parent=43 // pred_check
          %p313 = pneg %p152
        $region66: #{pvb_forward.2} parent=43 // pred_check_branch
          %315 = sbr.rel (%p313) target = $region68
        $region67: #{pvb_forward.2} parent=43 // pred_region
          %316 = dma.done [#allocation12], 128
        $region68: #{pvb_forward.2} parent=43 // pred_fallthru
          _
        %s317 = sand.u32 %s34, 1
        %s318 = scalar_lea.sflag [#allocation3], %s317
        %s319 = sand.u32 %s34, 1
        %s320 = smul.addr %s319, 192
        %s321 = scalar_lea.vmem [#allocation2], %s320
        %p322 = pneg %p47
        %p323 = pneg %p44
        %p324 = pneg %p68
        %p325 = pneg %p65
        %p326 = pneg %p89
        %p327 = pneg %p86
        %p328 = pneg %p110
        %p329 = pneg %p107
        %p330 = pneg %p131
        %p331 = pneg %p128
        %p332 = pneg %p152
        %p333 = pneg %p149
        %p334 = pneg %p178
        %p335 = pneg %p175
        %s336 = sand.u32 %s165, 1
        %s337 = scalar_lea.sflag [#allocation4], %s336
        %s338 = sand.u32 %s165, 1
        %s339 = smul.addr %s338, 192
        %s340 = scalar_lea.vmem [#allocation13], %s339
        %v341 = vld [vmem:[%s292] sm:$0xff]
        %v342 = vld [vmem:[%s292 + $0x8] sm:$0xff]
        %v343 = vld [vmem:[%s292 + $0x10] sm:$0xff]
        %v344 = vld [vmem:[%s292 + $0x18] sm:$0xff]
        %v345 = vld [vmem:[%s292 + $0x20] sm:$0xff]
        %v346 = vld [vmem:[%s292 + $0x28] sm:$0xff]
        %v347 = vld [vmem:[%s292 + $0x30] sm:$0xff]
        %v348 = vld [vmem:[%s292 + $0x38] sm:$0xff]
        %v349 = vld [vmem:[%s292 + $0x40] sm:$0xff]
        %v350 = vld [vmem:[%s292 + $0x48] sm:$0xff]
        %v351 = vld [vmem:[%s292 + $0x50] sm:$0xff]
        %v352 = vld [vmem:[%s292 + $0x58] sm:$0xff]
        %v353 = vld [vmem:[%s292 + $0x60] sm:$0xff]
        %v354 = vld [vmem:[%s292 + $0x68] sm:$0xff]
        %v355 = vld [vmem:[%s292 + $0x70] sm:$0xff]
        %v356 = vld [vmem:[%s292 + $0x78] sm:$0xff]
        %v357 = vld [vmem:[%s292 + $0x80] sm:$0xff]
        %v358 = vld [vmem:[%s292 + $0x88] sm:$0xff]
        %v359 = vld [vmem:[%s292 + $0x90] sm:$0xff]
        %v360 = vld [vmem:[%s292 + $0x98] sm:$0xff]
        %v361 = vld [vmem:[%s292 + $0xa0] sm:$0xff]
        %v362 = vld [vmem:[%s292 + $0xa8] sm:$0xff]
        %v363 = vld [vmem:[%s292 + $0xb0] sm:$0xff]
        %v364 = vld [vmem:[%s292 + $0xb8] sm:$0xff]
        %v365 = vld [vmem:[#allocation5] sm:$0xff]
        %v366 = vld [vmem:[#allocation5 + $0x8] sm:$0xff]
        %v367 = vld [vmem:[#allocation5 + $0x10] sm:$0xff]
        %v368 = vld [vmem:[#allocation8] sm:$0xff]
        %v369 = vld [vmem:[#allocation8 + $0x8] sm:$0xff]
        %v370 = vld [vmem:[#allocation8 + $0x10] sm:$0xff]
        %v371 = vld [vmem:[#allocation11] sm:$0xff]
        %372 = vrot.lane.b32.xlu0 %v341, 111
        %v373 = vpop.permute.xlu0 %372
        %374 = vrot.lane.b32.xlu0 %v349, 111
        %v375 = vpop.permute.xlu0 %374
        %376 = vrot.lane.b32.xlu0 %v357, 111
        %v377 = vpop.permute.xlu0 %376
        %378 = vrot.lane.b32.xlu0 %v342, 111
        %v379 = vpop.permute.xlu0 %378
        %380 = vrot.lane.b32.xlu0 %v350, 111
        %v381 = vpop.permute.xlu0 %380
        %382 = vrot.lane.b32.xlu0 %v358, 111
        %v383 = vpop.permute.xlu0 %382
        %384 = vrot.lane.b32.xlu0 %v343, 111
        %v385 = vpop.permute.xlu0 %384
        %386 = vrot.lane.b32.xlu0 %v351, 111
        %v387 = vpop.permute.xlu0 %386
        %388 = vrot.lane.b32.xlu0 %v359, 111
        %v389 = vpop.permute.xlu0 %388
        %390 = vrot.lane.b32.xlu0 %v344, 111
        %v391 = vpop.permute.xlu0 %390
        %392 = vrot.lane.b32.xlu0 %v352, 111
        %v393 = vpop.permute.xlu0 %392
        %394 = vrot.lane.b32.xlu0 %v360, 111
        %v395 = vpop.permute.xlu0 %394
        %396 = vrot.lane.b32.xlu0 %v345, 111
        %v397 = vpop.permute.xlu0 %396
        %398 = vrot.lane.b32.xlu0 %v353, 111
        %v399 = vpop.permute.xlu0 %398
        %400 = vrot.lane.b32.xlu0 %v361, 111
        %v401 = vpop.permute.xlu0 %400
        %402 = vrot.lane.b32.xlu0 %v346, 111
        %v403 = vpop.permute.xlu0 %402
        %404 = vrot.lane.b32.xlu0 %v354, 111
        %v405 = vpop.permute.xlu0 %404
        %406 = vrot.lane.b32.xlu0 %v362, 111
        %v407 = vpop.permute.xlu0 %406
        %408 = vrot.lane.b32.xlu0 %v347, 111
        %v409 = vpop.permute.xlu0 %408
        %410 = vrot.lane.b32.xlu0 %v355, 111
        %v411 = vpop.permute.xlu0 %410
        %412 = vrot.lane.b32.xlu0 %v363, 111
        %v413 = vpop.permute.xlu0 %412
        %414 = vrot.lane.b32.xlu0 %v348, 111
        %v415 = vpop.permute.xlu0 %414
        %416 = vrot.lane.b32.xlu0 %v356, 111
        %v417 = vpop.permute.xlu0 %416
        %418 = vrot.lane.b32.xlu0 %v364, 111
        %v419 = vpop.permute.xlu0 %418
        %v420 = vlaneseq
        %v421 = vand.u32 %v420, 127
        %vm422 = vcmp.lt.s32.totalorder %v421, 111
        %v423 = vsel %vm422, %v409, %v415
        %v424 = vsel %vm422, %v411, %v417
        %v425 = vsel %vm422, %v413, %v419
        %v426 = vsel %vm422, %v403, %v409
        %v427 = vsel %vm422, %v405, %v411
        %v428 = vsel %vm422, %v407, %v413
        %v429 = vsel %vm422, %v397, %v403
        %v430 = vsel %vm422, %v399, %v405
        %v431 = vsel %vm422, %v401, %v407
        %v432 = vsel %vm422, %v391, %v397
        %v433 = vsel %vm422, %v393, %v399
        %v434 = vsel %vm422, %v395, %v401
        %v435 = vsel %vm422, %v385, %v391
        %v436 = vsel %vm422, %v387, %v393
        %v437 = vsel %vm422, %v389, %v395
        %v438 = vsel %vm422, %v379, %v385
        %v439 = vsel %vm422, %v381, %v387
        %v440 = vsel %vm422, %v383, %v389
        %v441 = vsel %vm422, %v373, %v379
        %v442 = vsel %vm422, %v375, %v381
        %v443 = vsel %vm422, %v377, %v383
        %v444 = vsel %vm422, %v415, %v373
        %v445 = vsel %vm422, %v417, %v375
        %v446 = vsel %vm422, %v419, %v377
        %448 = vset.pattern.permute.xlu0 0
        %449 = vperm.xlu0 %448, %v365
        %v450 = vpop.permute.xlu0 %449
        %453 = vset.pattern.permute.xlu0 0
        %454 = vperm.xlu0 %453, %v366
        %v455 = vpop.permute.xlu0 %454
        %458 = vset.pattern.permute.xlu0 0
        %459 = vperm.xlu0 %458, %v367
        %v460 = vpop.permute.xlu0 %459
        %v462 = vmul.f32 %v444, %v450
        %v463 = vmul.f32 %v441, %v450
        %v464 = vmul.f32 %v438, %v450
        %v465 = vmul.f32 %v435, %v450
        %v466 = vmul.f32 %v432, %v450
        %v467 = vmul.f32 %v429, %v450
        %v468 = vmul.f32 %v426, %v450
        %v469 = vmul.f32 %v423, %v450
        %v470 = vmul.f32 %v445, %v455
        %v471 = vmul.f32 %v442, %v455
        %v472 = vmul.f32 %v439, %v455
        %v473 = vmul.f32 %v436, %v455
        %v474 = vmul.f32 %v433, %v455
        %v475 = vmul.f32 %v430, %v455
        %v476 = vmul.f32 %v427, %v455
        %v477 = vmul.f32 %v424, %v455
        %v478 = vmul.f32 %v446, %v460
        %v479 = vmul.f32 %v443, %v460
        %v480 = vmul.f32 %v440, %v460
        %v481 = vmul.f32 %v437, %v460
        %v482 = vmul.f32 %v434, %v460
        %v483 = vmul.f32 %v431, %v460
        %v484 = vmul.f32 %v428, %v460
        %v485 = vmul.f32 %v425, %v460
        %486 = vrot.lane.b32.xlu0 %v341, 110
        %v487 = vpop.permute.xlu0 %486
        %488 = vrot.lane.b32.xlu0 %v349, 110
        %v489 = vpop.permute.xlu0 %488
        %490 = vrot.lane.b32.xlu0 %v357, 110
        %v491 = vpop.permute.xlu0 %490
        %492 = vrot.lane.b32.xlu0 %v342, 110
        %v493 = vpop.permute.xlu0 %492
        %494 = vrot.lane.b32.xlu0 %v350, 110
        %v495 = vpop.permute.xlu0 %494
        %496 = vrot.lane.b32.xlu0 %v358, 110
        %v497 = vpop.permute.xlu0 %496
        %498 = vrot.lane.b32.xlu0 %v343, 110
        %v499 = vpop.permute.xlu0 %498
        %500 = vrot.lane.b32.xlu0 %v351, 110
        %v501 = vpop.permute.xlu0 %500
        %502 = vrot.lane.b32.xlu0 %v359, 110
        %v503 = vpop.permute.xlu0 %502
        %504 = vrot.lane.b32.xlu0 %v344, 110
        %v505 = vpop.permute.xlu0 %504
        %506 = vrot.lane.b32.xlu0 %v352, 110
        %v507 = vpop.permute.xlu0 %506
        %508 = vrot.lane.b32.xlu0 %v360, 110
        %v509 = vpop.permute.xlu0 %508
        %510 = vrot.lane.b32.xlu0 %v345, 110
        %v511 = vpop.permute.xlu0 %510
        %512 = vrot.lane.b32.xlu0 %v353, 110
        %v513 = vpop.permute.xlu0 %512
        %514 = vrot.lane.b32.xlu0 %v361, 110
        %v515 = vpop.permute.xlu0 %514
        %516 = vrot.lane.b32.xlu0 %v346, 110
        %v517 = vpop.permute.xlu0 %516
        %518 = vrot.lane.b32.xlu0 %v354, 110
        %v519 = vpop.permute.xlu0 %518
        %520 = vrot.lane.b32.xlu0 %v362, 110
        %v521 = vpop.permute.xlu0 %520
        %522 = vrot.lane.b32.xlu0 %v347, 110
        %v523 = vpop.permute.xlu0 %522
        %524 = vrot.lane.b32.xlu0 %v355, 110
        %v525 = vpop.permute.xlu0 %524
        %526 = vrot.lane.b32.xlu0 %v363, 110
        %v527 = vpop.permute.xlu0 %526
        %528 = vrot.lane.b32.xlu0 %v348, 110
        %v529 = vpop.permute.xlu0 %528
        %530 = vrot.lane.b32.xlu0 %v356, 110
        %v531 = vpop.permute.xlu0 %530
        %532 = vrot.lane.b32.xlu0 %v364, 110
        %v533 = vpop.permute.xlu0 %532
        %vm534 = vcmp.lt.s32.totalorder %v421, 110
        %v535 = vsel %vm534, %v523, %v529
        %v536 = vsel %vm534, %v525, %v531
        %v537 = vsel %vm534, %v527, %v533
        %v538 = vsel %vm534, %v517, %v523
        %v539 = vsel %vm534, %v519, %v525
        %v540 = vsel %vm534, %v521, %v527
        %v541 = vsel %vm534, %v511, %v517
        %v542 = vsel %vm534, %v513, %v519
        %v543 = vsel %vm534, %v515, %v521
        %v544 = vsel %vm534, %v505, %v511
        %v545 = vsel %vm534, %v507, %v513
        %v546 = vsel %vm534, %v509, %v515
        %v547 = vsel %vm534, %v499, %v505
        %v548 = vsel %vm534, %v501, %v507
        %v549 = vsel %vm534, %v503, %v509
        %v550 = vsel %vm534, %v493, %v499
        %v551 = vsel %vm534, %v495, %v501
        %v552 = vsel %vm534, %v497, %v503
        %v553 = vsel %vm534, %v487, %v493
        %v554 = vsel %vm534, %v489, %v495
        %v555 = vsel %vm534, %v491, %v497
        %v556 = vsel %vm534, %v529, %v487
        %v557 = vsel %vm534, %v531, %v489
        %v558 = vsel %vm534, %v533, %v491
        %559 = vset.pattern.permute.xlu0 1
        %560 = vperm.xlu0 %559, %v365
        %v561 = vpop.permute.xlu0 %560
        %563 = vset.pattern.permute.xlu0 1
        %564 = vperm.xlu0 %563, %v366
        %v565 = vpop.permute.xlu0 %564
        %567 = vset.pattern.permute.xlu0 1
        %568 = vperm.xlu0 %567, %v367
        %v569 = vpop.permute.xlu0 %568
        %v571 = vmul.f32 %v556, %v561
        %v572 = vmul.f32 %v553, %v561
        %v573 = vmul.f32 %v550, %v561
        %v574 = vmul.f32 %v547, %v561
        %v575 = vmul.f32 %v544, %v561
        %v576 = vmul.f32 %v541, %v561
        %v577 = vmul.f32 %v538, %v561
        %v578 = vmul.f32 %v535, %v561
        %v579 = vmul.f32 %v557, %v565
        %v580 = vmul.f32 %v554, %v565
        %v581 = vmul.f32 %v551, %v565
        %v582 = vmul.f32 %v548, %v565
        %v583 = vmul.f32 %v545, %v565
        %v584 = vmul.f32 %v542, %v565
        %v585 = vmul.f32 %v539, %v565
        %v586 = vmul.f32 %v536, %v565
        %v587 = vmul.f32 %v558, %v569
        %v588 = vmul.f32 %v555, %v569
        %v589 = vmul.f32 %v552, %v569
        %v590 = vmul.f32 %v549, %v569
        %v591 = vmul.f32 %v546, %v569
        %v592 = vmul.f32 %v543, %v569
        %v593 = vmul.f32 %v540, %v569
        %v594 = vmul.f32 %v537, %v569
        %v595 = vadd.f32 %v462, %v571
        %v596 = vadd.f32 %v463, %v572
        %v597 = vadd.f32 %v464, %v573
        %v598 = vadd.f32 %v465, %v574
        %v599 = vadd.f32 %v466, %v575
        %v600 = vadd.f32 %v467, %v576
        %v601 = vadd.f32 %v468, %v577
        %v602 = vadd.f32 %v469, %v578
        %v603 = vadd.f32 %v470, %v579
        %v604 = vadd.f32 %v471, %v580
        %v605 = vadd.f32 %v472, %v581
        %v606 = vadd.f32 %v473, %v582
        %v607 = vadd.f32 %v474, %v583
        %v608 = vadd.f32 %v475, %v584
        %v609 = vadd.f32 %v476, %v585
        %v610 = vadd.f32 %v477, %v586
        %v611 = vadd.f32 %v478, %v587
        %v612 = vadd.f32 %v479, %v588
        %v613 = vadd.f32 %v480, %v589
        %v614 = vadd.f32 %v481, %v590
        %v615 = vadd.f32 %v482, %v591
        %v616 = vadd.f32 %v483, %v592
        %v617 = vadd.f32 %v484, %v593
        %v618 = vadd.f32 %v485, %v594
        %619 = vrot.lane.b32.xlu0 %v341, 109
        %v620 = vpop.permute.xlu0 %619
        %621 = vrot.lane.b32.xlu0 %v349, 109
        %v622 = vpop.permute.xlu0 %621
        %623 = vrot.lane.b32.xlu0 %v357, 109
        %v624 = vpop.permute.xlu0 %623
        %625 = vrot.lane.b32.xlu0 %v342, 109
        %v626 = vpop.permute.xlu0 %625
        %627 = vrot.lane.b32.xlu0 %v350, 109
        %v628 = vpop.permute.xlu0 %627
        %629 = vrot.lane.b32.xlu0 %v358, 109
        %v630 = vpop.permute.xlu0 %629
        %631 = vrot.lane.b32.xlu0 %v343, 109
        %v632 = vpop.permute.xlu0 %631
        %633 = vrot.lane.b32.xlu0 %v351, 109
        %v634 = vpop.permute.xlu0 %633
        %635 = vrot.lane.b32.xlu0 %v359, 109
        %v636 = vpop.permute.xlu0 %635
        %637 = vrot.lane.b32.xlu0 %v344, 109
        %v638 = vpop.permute.xlu0 %637
        %639 = vrot.lane.b32.xlu0 %v352, 109
        %v640 = vpop.permute.xlu0 %639
        %641 = vrot.lane.b32.xlu0 %v360, 109
        %v642 = vpop.permute.xlu0 %641
        %643 = vrot.lane.b32.xlu0 %v345, 109
        %v644 = vpop.permute.xlu0 %643
        %645 = vrot.lane.b32.xlu0 %v353, 109
        %v646 = vpop.permute.xlu0 %645
        %647 = vrot.lane.b32.xlu0 %v361, 109
        %v648 = vpop.permute.xlu0 %647
        %649 = vrot.lane.b32.xlu0 %v346, 109
        %v650 = vpop.permute.xlu0 %649
        %651 = vrot.lane.b32.xlu0 %v354, 109
        %v652 = vpop.permute.xlu0 %651
        %653 = vrot.lane.b32.xlu0 %v362, 109
        %v654 = vpop.permute.xlu0 %653
        %655 = vrot.lane.b32.xlu0 %v347, 109
        %v656 = vpop.permute.xlu0 %655
        %657 = vrot.lane.b32.xlu0 %v355, 109
        %v658 = vpop.permute.xlu0 %657
        %659 = vrot.lane.b32.xlu0 %v363, 109
        %v660 = vpop.permute.xlu0 %659
        %661 = vrot.lane.b32.xlu0 %v348, 109
        %v662 = vpop.permute.xlu0 %661
        %663 = vrot.lane.b32.xlu0 %v356, 109
        %v664 = vpop.permute.xlu0 %663
        %665 = vrot.lane.b32.xlu0 %v364, 109
        %v666 = vpop.permute.xlu0 %665
        %vm667 = vcmp.lt.s32.totalorder %v421, 109
        %v668 = vsel %vm667, %v656, %v662
        %v669 = vsel %vm667, %v658, %v664
        %v670 = vsel %vm667, %v660, %v666
        %v671 = vsel %vm667, %v650, %v656
        %v672 = vsel %vm667, %v652, %v658
        %v673 = vsel %vm667, %v654, %v660
        %v674 = vsel %vm667, %v644, %v650
        %v675 = vsel %vm667, %v646, %v652
        %v676 = vsel %vm667, %v648, %v654
        %v677 = vsel %vm667, %v638, %v644
        %v678 = vsel %vm667, %v640, %v646
        %v679 = vsel %vm667, %v642, %v648
        %v680 = vsel %vm667, %v632, %v638
        %v681 = vsel %vm667, %v634, %v640
        %v682 = vsel %vm667, %v636, %v642
        %v683 = vsel %vm667, %v626, %v632
        %v684 = vsel %vm667, %v628, %v634
        %v685 = vsel %vm667, %v630, %v636
        %v686 = vsel %vm667, %v620, %v626
        %v687 = vsel %vm667, %v622, %v628
        %v688 = vsel %vm667, %v624, %v630
        %v689 = vsel %vm667, %v662, %v620
        %v690 = vsel %vm667, %v664, %v622
        %v691 = vsel %vm667, %v666, %v624
        %692 = vset.pattern.permute.xlu0 2
        %693 = vperm.xlu0 %692, %v365
        %v694 = vpop.permute.xlu0 %693
        %696 = vset.pattern.permute.xlu0 2
        %697 = vperm.xlu0 %696, %v366
        %v698 = vpop.permute.xlu0 %697
        %700 = vset.pattern.permute.xlu0 2
        %701 = vperm.xlu0 %700, %v367
        %v702 = vpop.permute.xlu0 %701
        %v704 = vmul.f32 %v689, %v694
        %v705 = vmul.f32 %v686, %v694
        %v706 = vmul.f32 %v683, %v694
        %v707 = vmul.f32 %v680, %v694
        %v708 = vmul.f32 %v677, %v694
        %v709 = vmul.f32 %v674, %v694
        %v710 = vmul.f32 %v671, %v694
        %v711 = vmul.f32 %v668, %v694
        %v712 = vmul.f32 %v690, %v698
        %v713 = vmul.f32 %v687, %v698
        %v714 = vmul.f32 %v684, %v698
        %v715 = vmul.f32 %v681, %v698
        %v716 = vmul.f32 %v678, %v698
        %v717 = vmul.f32 %v675, %v698
        %v718 = vmul.f32 %v672, %v698
        %v719 = vmul.f32 %v669, %v698
        %v720 = vmul.f32 %v691, %v702
        %v721 = vmul.f32 %v688, %v702
        %v722 = vmul.f32 %v685, %v702
        %v723 = vmul.f32 %v682, %v702
        %v724 = vmul.f32 %v679, %v702
        %v725 = vmul.f32 %v676, %v702
        %v726 = vmul.f32 %v673, %v702
        %v727 = vmul.f32 %v670, %v702
        %v728 = vadd.f32 %v595, %v704
        %v729 = vadd.f32 %v596, %v705
        %v730 = vadd.f32 %v597, %v706
        %v731 = vadd.f32 %v598, %v707
        %v732 = vadd.f32 %v599, %v708
        %v733 = vadd.f32 %v600, %v709
        %v734 = vadd.f32 %v601, %v710
        %v735 = vadd.f32 %v602, %v711
        %v736 = vadd.f32 %v603, %v712
        %v737 = vadd.f32 %v604, %v713
        %v738 = vadd.f32 %v605, %v714
        %v739 = vadd.f32 %v606, %v715
        %v740 = vadd.f32 %v607, %v716
        %v741 = vadd.f32 %v608, %v717
        %v742 = vadd.f32 %v609, %v718
        %v743 = vadd.f32 %v610, %v719
        %v744 = vadd.f32 %v611, %v720
        %v745 = vadd.f32 %v612, %v721
        %v746 = vadd.f32 %v613, %v722
        %v747 = vadd.f32 %v614, %v723
        %v748 = vadd.f32 %v615, %v724
        %v749 = vadd.f32 %v616, %v725
        %v750 = vadd.f32 %v617, %v726
        %v751 = vadd.f32 %v618, %v727
        %752 = vrot.lane.b32.xlu0 %v341, 101
        %v753 = vpop.permute.xlu0 %752
        %754 = vrot.lane.b32.xlu0 %v349, 101
        %v755 = vpop.permute.xlu0 %754
        %756 = vrot.lane.b32.xlu0 %v357, 101
        %v757 = vpop.permute.xlu0 %756
        %758 = vrot.lane.b32.xlu0 %v342, 101
        %v759 = vpop.permute.xlu0 %758
        %760 = vrot.lane.b32.xlu0 %v350, 101
        %v761 = vpop.permute.xlu0 %760
        %762 = vrot.lane.b32.xlu0 %v358, 101
        %v763 = vpop.permute.xlu0 %762
        %764 = vrot.lane.b32.xlu0 %v343, 101
        %v765 = vpop.permute.xlu0 %764
        %766 = vrot.lane.b32.xlu0 %v351, 101
        %v767 = vpop.permute.xlu0 %766
        %768 = vrot.lane.b32.xlu0 %v359, 101
        %v769 = vpop.permute.xlu0 %768
        %770 = vrot.lane.b32.xlu0 %v344, 101
        %v771 = vpop.permute.xlu0 %770
        %772 = vrot.lane.b32.xlu0 %v352, 101
        %v773 = vpop.permute.xlu0 %772
        %774 = vrot.lane.b32.xlu0 %v360, 101
        %v775 = vpop.permute.xlu0 %774
        %776 = vrot.lane.b32.xlu0 %v345, 101
        %v777 = vpop.permute.xlu0 %776
        %778 = vrot.lane.b32.xlu0 %v353, 101
        %v779 = vpop.permute.xlu0 %778
        %780 = vrot.lane.b32.xlu0 %v361, 101
        %v781 = vpop.permute.xlu0 %780
        %782 = vrot.lane.b32.xlu0 %v346, 101
        %v783 = vpop.permute.xlu0 %782
        %784 = vrot.lane.b32.xlu0 %v354, 101
        %v785 = vpop.permute.xlu0 %784
        %786 = vrot.lane.b32.xlu0 %v362, 101
        %v787 = vpop.permute.xlu0 %786
        %788 = vrot.lane.b32.xlu0 %v347, 101
        %v789 = vpop.permute.xlu0 %788
        %790 = vrot.lane.b32.xlu0 %v355, 101
        %v791 = vpop.permute.xlu0 %790
        %792 = vrot.lane.b32.xlu0 %v363, 101
        %v793 = vpop.permute.xlu0 %792
        %794 = vrot.lane.b32.xlu0 %v348, 101
        %v795 = vpop.permute.xlu0 %794
        %796 = vrot.lane.b32.xlu0 %v356, 101
        %v797 = vpop.permute.xlu0 %796
        %798 = vrot.lane.b32.xlu0 %v364, 101
        %v799 = vpop.permute.xlu0 %798
        %vm800 = vcmp.lt.s32.totalorder %v421, 101
        %v801 = vsel %vm800, %v789, %v795
        %v802 = vsel %vm800, %v791, %v797
        %v803 = vsel %vm800, %v793, %v799
        %v804 = vsel %vm800, %v783, %v789
        %v805 = vsel %vm800, %v785, %v791
        %v806 = vsel %vm800, %v787, %v793
        %v807 = vsel %vm800, %v777, %v783
        %v808 = vsel %vm800, %v779, %v785
        %v809 = vsel %vm800, %v781, %v787
        %v810 = vsel %vm800, %v771, %v777
        %v811 = vsel %vm800, %v773, %v779
        %v812 = vsel %vm800, %v775, %v781
        %v813 = vsel %vm800, %v765, %v771
        %v814 = vsel %vm800, %v767, %v773
        %v815 = vsel %vm800, %v769, %v775
        %v816 = vsel %vm800, %v759, %v765
        %v817 = vsel %vm800, %v761, %v767
        %v818 = vsel %vm800, %v763, %v769
        %v819 = vsel %vm800, %v753, %v759
        %v820 = vsel %vm800, %v755, %v761
        %v821 = vsel %vm800, %v757, %v763
        %v822 = vsel %vm800, %v795, %v753
        %v823 = vsel %vm800, %v797, %v755
        %v824 = vsel %vm800, %v799, %v757
        %825 = vset.pattern.permute.xlu0 3
        %826 = vperm.xlu0 %825, %v365
        %v827 = vpop.permute.xlu0 %826
        %829 = vset.pattern.permute.xlu0 3
        %830 = vperm.xlu0 %829, %v366
        %v831 = vpop.permute.xlu0 %830
        %833 = vset.pattern.permute.xlu0 3
        %834 = vperm.xlu0 %833, %v367
        %v835 = vpop.permute.xlu0 %834
        %v837 = vmul.f32 %v822, %v827
        %v838 = vmul.f32 %v819, %v827
        %v839 = vmul.f32 %v816, %v827
        %v840 = vmul.f32 %v813, %v827
        %v841 = vmul.f32 %v810, %v827
        %v842 = vmul.f32 %v807, %v827
        %v843 = vmul.f32 %v804, %v827
        %v844 = vmul.f32 %v801, %v827
        %v845 = vmul.f32 %v823, %v831
        %v846 = vmul.f32 %v820, %v831
        %v847 = vmul.f32 %v817, %v831
        %v848 = vmul.f32 %v814, %v831
        %v849 = vmul.f32 %v811, %v831
        %v850 = vmul.f32 %v808, %v831
        %v851 = vmul.f32 %v805, %v831
        %v852 = vmul.f32 %v802, %v831
        %v853 = vmul.f32 %v824, %v835
        %v854 = vmul.f32 %v821, %v835
        %v855 = vmul.f32 %v818, %v835
        %v856 = vmul.f32 %v815, %v835
        %v857 = vmul.f32 %v812, %v835
        %v858 = vmul.f32 %v809, %v835
        %v859 = vmul.f32 %v806, %v835
        %v860 = vmul.f32 %v803, %v835
        %v861 = vadd.f32 %v728, %v837
        %v862 = vadd.f32 %v729, %v838
        %v863 = vadd.f32 %v730, %v839
        %v864 = vadd.f32 %v731, %v840
        %v865 = vadd.f32 %v732, %v841
        %v866 = vadd.f32 %v733, %v842
        %v867 = vadd.f32 %v734, %v843
        %v868 = vadd.f32 %v735, %v844
        %v869 = vadd.f32 %v736, %v845
        %v870 = vadd.f32 %v737, %v846
        %v871 = vadd.f32 %v738, %v847
        %v872 = vadd.f32 %v739, %v848
        %v873 = vadd.f32 %v740, %v849
        %v874 = vadd.f32 %v741, %v850
        %v875 = vadd.f32 %v742, %v851
        %v876 = vadd.f32 %v743, %v852
        %v877 = vadd.f32 %v744, %v853
        %v878 = vadd.f32 %v745, %v854
        %v879 = vadd.f32 %v746, %v855
        %v880 = vadd.f32 %v747, %v856
        %v881 = vadd.f32 %v748, %v857
        %v882 = vadd.f32 %v749, %v858
        %v883 = vadd.f32 %v750, %v859
        %v884 = vadd.f32 %v751, %v860
        %885 = vrot.lane.b32.xlu0 %v341, 100
        %v886 = vpop.permute.xlu0 %885
        %887 = vrot.lane.b32.xlu0 %v349, 100
        %v888 = vpop.permute.xlu0 %887
        %889 = vrot.lane.b32.xlu0 %v357, 100
        %v890 = vpop.permute.xlu0 %889
        %891 = vrot.lane.b32.xlu0 %v342, 100
        %v892 = vpop.permute.xlu0 %891
        %893 = vrot.lane.b32.xlu0 %v350, 100
        %v894 = vpop.permute.xlu0 %893
        %895 = vrot.lane.b32.xlu0 %v358, 100
        %v896 = vpop.permute.xlu0 %895
        %897 = vrot.lane.b32.xlu0 %v343, 100
        %v898 = vpop.permute.xlu0 %897
        %899 = vrot.lane.b32.xlu0 %v351, 100
        %v900 = vpop.permute.xlu0 %899
        %901 = vrot.lane.b32.xlu0 %v359, 100
        %v902 = vpop.permute.xlu0 %901
        %903 = vrot.lane.b32.xlu0 %v344, 100
        %v904 = vpop.permute.xlu0 %903
        %905 = vrot.lane.b32.xlu0 %v352, 100
        %v906 = vpop.permute.xlu0 %905
        %907 = vrot.lane.b32.xlu0 %v360, 100
        %v908 = vpop.permute.xlu0 %907
        %909 = vrot.lane.b32.xlu0 %v345, 100
        %v910 = vpop.permute.xlu0 %909
        %911 = vrot.lane.b32.xlu0 %v353, 100
        %v912 = vpop.permute.xlu0 %911
        %913 = vrot.lane.b32.xlu0 %v361, 100
        %v914 = vpop.permute.xlu0 %913
        %915 = vrot.lane.b32.xlu0 %v346, 100
        %v916 = vpop.permute.xlu0 %915
        %917 = vrot.lane.b32.xlu0 %v354, 100
        %v918 = vpop.permute.xlu0 %917
        %919 = vrot.lane.b32.xlu0 %v362, 100
        %v920 = vpop.permute.xlu0 %919
        %921 = vrot.lane.b32.xlu0 %v347, 100
        %v922 = vpop.permute.xlu0 %921
        %923 = vrot.lane.b32.xlu0 %v355, 100
        %v924 = vpop.permute.xlu0 %923
        %925 = vrot.lane.b32.xlu0 %v363, 100
        %v926 = vpop.permute.xlu0 %925
        %927 = vrot.lane.b32.xlu0 %v348, 100
        %v928 = vpop.permute.xlu0 %927
        %929 = vrot.lane.b32.xlu0 %v356, 100
        %v930 = vpop.permute.xlu0 %929
        %931 = vrot.lane.b32.xlu0 %v364, 100
        %v932 = vpop.permute.xlu0 %931
        %vm933 = vcmp.lt.s32.totalorder %v421, 100
        %v934 = vsel %vm933, %v922, %v928
        %v935 = vsel %vm933, %v924, %v930
        %v936 = vsel %vm933, %v926, %v932
        %v937 = vsel %vm933, %v916, %v922
        %v938 = vsel %vm933, %v918, %v924
        %v939 = vsel %vm933, %v920, %v926
        %v940 = vsel %vm933, %v910, %v916
        %v941 = vsel %vm933, %v912, %v918
        %v942 = vsel %vm933, %v914, %v920
        %v943 = vsel %vm933, %v904, %v910
        %v944 = vsel %vm933, %v906, %v912
        %v945 = vsel %vm933, %v908, %v914
        %v946 = vsel %vm933, %v898, %v904
        %v947 = vsel %vm933, %v900, %v906
        %v948 = vsel %vm933, %v902, %v908
        %v949 = vsel %vm933, %v892, %v898
        %v950 = vsel %vm933, %v894, %v900
        %v951 = vsel %vm933, %v896, %v902
        %v952 = vsel %vm933, %v886, %v892
        %v953 = vsel %vm933, %v888, %v894
        %v954 = vsel %vm933, %v890, %v896
        %v955 = vsel %vm933, %v928, %v886
        %v956 = vsel %vm933, %v930, %v888
        %v957 = vsel %vm933, %v932, %v890
        %958 = vset.pattern.permute.xlu0 4
        %959 = vperm.xlu0 %958, %v365
        %v960 = vpop.permute.xlu0 %959
        %962 = vset.pattern.permute.xlu0 4
        %963 = vperm.xlu0 %962, %v366
        %v964 = vpop.permute.xlu0 %963
        %966 = vset.pattern.permute.xlu0 4
        %967 = vperm.xlu0 %966, %v367
        %v968 = vpop.permute.xlu0 %967
        %v970 = vmul.f32 %v955, %v960
        %v971 = vmul.f32 %v952, %v960
        %v972 = vmul.f32 %v949, %v960
        %v973 = vmul.f32 %v946, %v960
        %v974 = vmul.f32 %v943, %v960
        %v975 = vmul.f32 %v940, %v960
        %v976 = vmul.f32 %v937, %v960
        %v977 = vmul.f32 %v934, %v960
        %v978 = vmul.f32 %v956, %v964
        %v979 = vmul.f32 %v953, %v964
        %v980 = vmul.f32 %v950, %v964
        %v981 = vmul.f32 %v947, %v964
        %v982 = vmul.f32 %v944, %v964
        %v983 = vmul.f32 %v941, %v964
        %v984 = vmul.f32 %v938, %v964
        %v985 = vmul.f32 %v935, %v964
        %v986 = vmul.f32 %v957, %v968
        %v987 = vmul.f32 %v954, %v968
        %v988 = vmul.f32 %v951, %v968
        %v989 = vmul.f32 %v948, %v968
        %v990 = vmul.f32 %v945, %v968
        %v991 = vmul.f32 %v942, %v968
        %v992 = vmul.f32 %v939, %v968
        %v993 = vmul.f32 %v936, %v968
        %v994 = vadd.f32 %v861, %v970
        %v995 = vadd.f32 %v862, %v971
        %v996 = vadd.f32 %v863, %v972
        %v997 = vadd.f32 %v864, %v973
        %v998 = vadd.f32 %v865, %v974
        %v999 = vadd.f32 %v866, %v975
        %v1000 = vadd.f32 %v867, %v976
        %v1001 = vadd.f32 %v868, %v977
        %v1002 = vadd.f32 %v869, %v978
        %v1003 = vadd.f32 %v870, %v979
        %v1004 = vadd.f32 %v871, %v980
        %v1005 = vadd.f32 %v872, %v981
        %v1006 = vadd.f32 %v873, %v982
        %v1007 = vadd.f32 %v874, %v983
        %v1008 = vadd.f32 %v875, %v984
        %v1009 = vadd.f32 %v876, %v985
        %v1010 = vadd.f32 %v877, %v986
        %v1011 = vadd.f32 %v878, %v987
        %v1012 = vadd.f32 %v879, %v988
        %v1013 = vadd.f32 %v880, %v989
        %v1014 = vadd.f32 %v881, %v990
        %v1015 = vadd.f32 %v882, %v991
        %v1016 = vadd.f32 %v883, %v992
        %v1017 = vadd.f32 %v884, %v993
        %1018 = vrot.lane.b32.xlu0 %v341, 99
        %v1019 = vpop.permute.xlu0 %1018
        %1020 = vrot.lane.b32.xlu0 %v349, 99
        %v1021 = vpop.permute.xlu0 %1020
        %1022 = vrot.lane.b32.xlu0 %v357, 99
        %v1023 = vpop.permute.xlu0 %1022
        %1024 = vrot.lane.b32.xlu0 %v342, 99
        %v1025 = vpop.permute.xlu0 %1024
        %1026 = vrot.lane.b32.xlu0 %v350, 99
        %v1027 = vpop.permute.xlu0 %1026
        %1028 = vrot.lane.b32.xlu0 %v358, 99
        %v1029 = vpop.permute.xlu0 %1028
        %1030 = vrot.lane.b32.xlu0 %v343, 99
        %v1031 = vpop.permute.xlu0 %1030
        %1032 = vrot.lane.b32.xlu0 %v351, 99
        %v1033 = vpop.permute.xlu0 %1032
        %1034 = vrot.lane.b32.xlu0 %v359, 99
        %v1035 = vpop.permute.xlu0 %1034
        %1036 = vrot.lane.b32.xlu0 %v344, 99
        %v1037 = vpop.permute.xlu0 %1036
        %1038 = vrot.lane.b32.xlu0 %v352, 99
        %v1039 = vpop.permute.xlu0 %1038
        %1040 = vrot.lane.b32.xlu0 %v360, 99
        %v1041 = vpop.permute.xlu0 %1040
        %1042 = vrot.lane.b32.xlu0 %v345, 99
        %v1043 = vpop.permute.xlu0 %1042
        %1044 = vrot.lane.b32.xlu0 %v353, 99
        %v1045 = vpop.permute.xlu0 %1044
        %1046 = vrot.lane.b32.xlu0 %v361, 99
        %v1047 = vpop.permute.xlu0 %1046
        %1048 = vrot.lane.b32.xlu0 %v346, 99
        %v1049 = vpop.permute.xlu0 %1048
        %1050 = vrot.lane.b32.xlu0 %v354, 99
        %v1051 = vpop.permute.xlu0 %1050
        %1052 = vrot.lane.b32.xlu0 %v362, 99
        %v1053 = vpop.permute.xlu0 %1052
        %1054 = vrot.lane.b32.xlu0 %v347, 99
        %v1055 = vpop.permute.xlu0 %1054
        %1056 = vrot.lane.b32.xlu0 %v355, 99
        %v1057 = vpop.permute.xlu0 %1056
        %1058 = vrot.lane.b32.xlu0 %v363, 99
        %v1059 = vpop.permute.xlu0 %1058
        %1060 = vrot.lane.b32.xlu0 %v348, 99
        %v1061 = vpop.permute.xlu0 %1060
        %1062 = vrot.lane.b32.xlu0 %v356, 99
        %v1063 = vpop.permute.xlu0 %1062
        %1064 = vrot.lane.b32.xlu0 %v364, 99
        %v1065 = vpop.permute.xlu0 %1064
        %vm1066 = vcmp.lt.s32.totalorder %v421, 99
        %v1067 = vsel %vm1066, %v1055, %v1061
        %v1068 = vsel %vm1066, %v1057, %v1063
        %v1069 = vsel %vm1066, %v1059, %v1065
        %v1070 = vsel %vm1066, %v1049, %v1055
        %v1071 = vsel %vm1066, %v1051, %v1057
        %v1072 = vsel %vm1066, %v1053, %v1059
        %v1073 = vsel %vm1066, %v1043, %v1049
        %v1074 = vsel %vm1066, %v1045, %v1051
        %v1075 = vsel %vm1066, %v1047, %v1053
        %v1076 = vsel %vm1066, %v1037, %v1043
        %v1077 = vsel %vm1066, %v1039, %v1045
        %v1078 = vsel %vm1066, %v1041, %v1047
        %v1079 = vsel %vm1066, %v1031, %v1037
        %v1080 = vsel %vm1066, %v1033, %v1039
        %v1081 = vsel %vm1066, %v1035, %v1041
        %v1082 = vsel %vm1066, %v1025, %v1031
        %v1083 = vsel %vm1066, %v1027, %v1033
        %v1084 = vsel %vm1066, %v1029, %v1035
        %v1085 = vsel %vm1066, %v1019, %v1025
        %v1086 = vsel %vm1066, %v1021, %v1027
        %v1087 = vsel %vm1066, %v1023, %v1029
        %v1088 = vsel %vm1066, %v1061, %v1019
        %v1089 = vsel %vm1066, %v1063, %v1021
        %v1090 = vsel %vm1066, %v1065, %v1023
        %1091 = vset.pattern.permute.xlu0 5
        %1092 = vperm.xlu0 %1091, %v365
        %v1093 = vpop.permute.xlu0 %1092
        %1095 = vset.pattern.permute.xlu0 5
        %1096 = vperm.xlu0 %1095, %v366
        %v1097 = vpop.permute.xlu0 %1096
        %1099 = vset.pattern.permute.xlu0 5
        %1100 = vperm.xlu0 %1099, %v367
        %v1101 = vpop.permute.xlu0 %1100
        %v1103 = vmul.f32 %v1088, %v1093
        %v1104 = vmul.f32 %v1085, %v1093
        %v1105 = vmul.f32 %v1082, %v1093
        %v1106 = vmul.f32 %v1079, %v1093
        %v1107 = vmul.f32 %v1076, %v1093
        %v1108 = vmul.f32 %v1073, %v1093
        %v1109 = vmul.f32 %v1070, %v1093
        %v1110 = vmul.f32 %v1067, %v1093
        %v1111 = vmul.f32 %v1089, %v1097
        %v1112 = vmul.f32 %v1086, %v1097
        %v1113 = vmul.f32 %v1083, %v1097
        %v1114 = vmul.f32 %v1080, %v1097
        %v1115 = vmul.f32 %v1077, %v1097
        %v1116 = vmul.f32 %v1074, %v1097
        %v1117 = vmul.f32 %v1071, %v1097
        %v1118 = vmul.f32 %v1068, %v1097
        %v1119 = vmul.f32 %v1090, %v1101
        %v1120 = vmul.f32 %v1087, %v1101
        %v1121 = vmul.f32 %v1084, %v1101
        %v1122 = vmul.f32 %v1081, %v1101
        %v1123 = vmul.f32 %v1078, %v1101
        %v1124 = vmul.f32 %v1075, %v1101
        %v1125 = vmul.f32 %v1072, %v1101
        %v1126 = vmul.f32 %v1069, %v1101
        %v1127 = vadd.f32 %v994, %v1103
        %v1128 = vadd.f32 %v995, %v1104
        %v1129 = vadd.f32 %v996, %v1105
        %v1130 = vadd.f32 %v997, %v1106
        %v1131 = vadd.f32 %v998, %v1107
        %v1132 = vadd.f32 %v999, %v1108
        %v1133 = vadd.f32 %v1000, %v1109
        %v1134 = vadd.f32 %v1001, %v1110
        %v1135 = vadd.f32 %v1002, %v1111
        %v1136 = vadd.f32 %v1003, %v1112
        %v1137 = vadd.f32 %v1004, %v1113
        %v1138 = vadd.f32 %v1005, %v1114
        %v1139 = vadd.f32 %v1006, %v1115
        %v1140 = vadd.f32 %v1007, %v1116
        %v1141 = vadd.f32 %v1008, %v1117
        %v1142 = vadd.f32 %v1009, %v1118
        %v1143 = vadd.f32 %v1010, %v1119
        %v1144 = vadd.f32 %v1011, %v1120
        %v1145 = vadd.f32 %v1012, %v1121
        %v1146 = vadd.f32 %v1013, %v1122
        %v1147 = vadd.f32 %v1014, %v1123
        %v1148 = vadd.f32 %v1015, %v1124
        %v1149 = vadd.f32 %v1016, %v1125
        %v1150 = vadd.f32 %v1017, %v1126
        %1151 = vrot.lane.b32.xlu0 %v341, 91
        %v1152 = vpop.permute.xlu0 %1151
        %1153 = vrot.lane.b32.xlu0 %v349, 91
        %v1154 = vpop.permute.xlu0 %1153
        %1155 = vrot.lane.b32.xlu0 %v357, 91
        %v1156 = vpop.permute.xlu0 %1155
        %1157 = vrot.lane.b32.xlu0 %v342, 91
        %v1158 = vpop.permute.xlu0 %1157
        %1159 = vrot.lane.b32.xlu0 %v350, 91
        %v1160 = vpop.permute.xlu0 %1159
        %1161 = vrot.lane.b32.xlu0 %v358, 91
        %v1162 = vpop.permute.xlu0 %1161
        %1163 = vrot.lane.b32.xlu0 %v343, 91
        %v1164 = vpop.permute.xlu0 %1163
        %1165 = vrot.lane.b32.xlu0 %v351, 91
        %v1166 = vpop.permute.xlu0 %1165
        %1167 = vrot.lane.b32.xlu0 %v359, 91
        %v1168 = vpop.permute.xlu0 %1167
        %1169 = vrot.lane.b32.xlu0 %v344, 91
        %v1170 = vpop.permute.xlu0 %1169
        %1171 = vrot.lane.b32.xlu0 %v352, 91
        %v1172 = vpop.permute.xlu0 %1171
        %1173 = vrot.lane.b32.xlu0 %v360, 91
        %v1174 = vpop.permute.xlu0 %1173
        %1175 = vrot.lane.b32.xlu0 %v345, 91
        %v1176 = vpop.permute.xlu0 %1175
        %1177 = vrot.lane.b32.xlu0 %v353, 91
        %v1178 = vpop.permute.xlu0 %1177
        %1179 = vrot.lane.b32.xlu0 %v361, 91
        %v1180 = vpop.permute.xlu0 %1179
        %1181 = vrot.lane.b32.xlu0 %v346, 91
        %v1182 = vpop.permute.xlu0 %1181
        %1183 = vrot.lane.b32.xlu0 %v354, 91
        %v1184 = vpop.permute.xlu0 %1183
        %1185 = vrot.lane.b32.xlu0 %v362, 91
        %v1186 = vpop.permute.xlu0 %1185
        %1187 = vrot.lane.b32.xlu0 %v347, 91
        %v1188 = vpop.permute.xlu0 %1187
        %1189 = vrot.lane.b32.xlu0 %v355, 91
        %v1190 = vpop.permute.xlu0 %1189
        %1191 = vrot.lane.b32.xlu0 %v363, 91
        %v1192 = vpop.permute.xlu0 %1191
        %1193 = vrot.lane.b32.xlu0 %v348, 91
        %v1194 = vpop.permute.xlu0 %1193
        %1195 = vrot.lane.b32.xlu0 %v356, 91
        %v1196 = vpop.permute.xlu0 %1195
        %1197 = vrot.lane.b32.xlu0 %v364, 91
        %v1198 = vpop.permute.xlu0 %1197
        %vm1199 = vcmp.lt.s32.totalorder %v421, 91
        %v1200 = vsel %vm1199, %v1188, %v1194
        %v1201 = vsel %vm1199, %v1190, %v1196
        %v1202 = vsel %vm1199, %v1192, %v1198
        %v1203 = vsel %vm1199, %v1182, %v1188
        %v1204 = vsel %vm1199, %v1184, %v1190
        %v1205 = vsel %vm1199, %v1186, %v1192
        %v1206 = vsel %vm1199, %v1176, %v1182
        %v1207 = vsel %vm1199, %v1178, %v1184
        %v1208 = vsel %vm1199, %v1180, %v1186
        %v1209 = vsel %vm1199, %v1170, %v1176
        %v1210 = vsel %vm1199, %v1172, %v1178
        %v1211 = vsel %vm1199, %v1174, %v1180
        %v1212 = vsel %vm1199, %v1164, %v1170
        %v1213 = vsel %vm1199, %v1166, %v1172
        %v1214 = vsel %vm1199, %v1168, %v1174
        %v1215 = vsel %vm1199, %v1158, %v1164
        %v1216 = vsel %vm1199, %v1160, %v1166
        %v1217 = vsel %vm1199, %v1162, %v1168
        %v1218 = vsel %vm1199, %v1152, %v1158
        %v1219 = vsel %vm1199, %v1154, %v1160
        %v1220 = vsel %vm1199, %v1156, %v1162
        %v1221 = vsel %vm1199, %v1194, %v1152
        %v1222 = vsel %vm1199, %v1196, %v1154
        %v1223 = vsel %vm1199, %v1198, %v1156
        %1224 = vset.pattern.permute.xlu0 6
        %1225 = vperm.xlu0 %1224, %v365
        %v1226 = vpop.permute.xlu0 %1225
        %1228 = vset.pattern.permute.xlu0 6
        %1229 = vperm.xlu0 %1228, %v366
        %v1230 = vpop.permute.xlu0 %1229
        %1232 = vset.pattern.permute.xlu0 6
        %1233 = vperm.xlu0 %1232, %v367
        %v1234 = vpop.permute.xlu0 %1233
        %v1236 = vmul.f32 %v1221, %v1226
        %v1237 = vmul.f32 %v1218, %v1226
        %v1238 = vmul.f32 %v1215, %v1226
        %v1239 = vmul.f32 %v1212, %v1226
        %v1240 = vmul.f32 %v1209, %v1226
        %v1241 = vmul.f32 %v1206, %v1226
        %v1242 = vmul.f32 %v1203, %v1226
        %v1243 = vmul.f32 %v1200, %v1226
        %v1244 = vmul.f32 %v1222, %v1230
        %v1245 = vmul.f32 %v1219, %v1230
        %v1246 = vmul.f32 %v1216, %v1230
        %v1247 = vmul.f32 %v1213, %v1230
        %v1248 = vmul.f32 %v1210, %v1230
        %v1249 = vmul.f32 %v1207, %v1230
        %v1250 = vmul.f32 %v1204, %v1230
        %v1251 = vmul.f32 %v1201, %v1230
        %v1252 = vmul.f32 %v1223, %v1234
        %v1253 = vmul.f32 %v1220, %v1234
        %v1254 = vmul.f32 %v1217, %v1234
        %v1255 = vmul.f32 %v1214, %v1234
        %v1256 = vmul.f32 %v1211, %v1234
        %v1257 = vmul.f32 %v1208, %v1234
        %v1258 = vmul.f32 %v1205, %v1234
        %v1259 = vmul.f32 %v1202, %v1234
        %v1260 = vadd.f32 %v1127, %v1236
        %v1261 = vadd.f32 %v1128, %v1237
        %v1262 = vadd.f32 %v1129, %v1238
        %v1263 = vadd.f32 %v1130, %v1239
        %v1264 = vadd.f32 %v1131, %v1240
        %v1265 = vadd.f32 %v1132, %v1241
        %v1266 = vadd.f32 %v1133, %v1242
        %v1267 = vadd.f32 %v1134, %v1243
        %v1268 = vadd.f32 %v1135, %v1244
        %v1269 = vadd.f32 %v1136, %v1245
        %v1270 = vadd.f32 %v1137, %v1246
        %v1271 = vadd.f32 %v1138, %v1247
        %v1272 = vadd.f32 %v1139, %v1248
        %v1273 = vadd.f32 %v1140, %v1249
        %v1274 = vadd.f32 %v1141, %v1250
        %v1275 = vadd.f32 %v1142, %v1251
        %v1276 = vadd.f32 %v1143, %v1252
        %v1277 = vadd.f32 %v1144, %v1253
        %v1278 = vadd.f32 %v1145, %v1254
        %v1279 = vadd.f32 %v1146, %v1255
        %v1280 = vadd.f32 %v1147, %v1256
        %v1281 = vadd.f32 %v1148, %v1257
        %v1282 = vadd.f32 %v1149, %v1258
        %v1283 = vadd.f32 %v1150, %v1259
        %1284 = vrot.lane.b32.xlu0 %v341, 90
        %v1285 = vpop.permute.xlu0 %1284
        %1286 = vrot.lane.b32.xlu0 %v349, 90
        %v1287 = vpop.permute.xlu0 %1286
        %1288 = vrot.lane.b32.xlu0 %v357, 90
        %v1289 = vpop.permute.xlu0 %1288
        %1290 = vrot.lane.b32.xlu0 %v342, 90
        %v1291 = vpop.permute.xlu0 %1290
        %1292 = vrot.lane.b32.xlu0 %v350, 90
        %v1293 = vpop.permute.xlu0 %1292
        %1294 = vrot.lane.b32.xlu0 %v358, 90
        %v1295 = vpop.permute.xlu0 %1294
        %1296 = vrot.lane.b32.xlu0 %v343, 90
        %v1297 = vpop.permute.xlu0 %1296
        %1298 = vrot.lane.b32.xlu0 %v351, 90
        %v1299 = vpop.permute.xlu0 %1298
        %1300 = vrot.lane.b32.xlu0 %v359, 90
        %v1301 = vpop.permute.xlu0 %1300
        %1302 = vrot.lane.b32.xlu0 %v344, 90
        %v1303 = vpop.permute.xlu0 %1302
        %1304 = vrot.lane.b32.xlu0 %v352, 90
        %v1305 = vpop.permute.xlu0 %1304
        %1306 = vrot.lane.b32.xlu0 %v360, 90
        %v1307 = vpop.permute.xlu0 %1306
        %1308 = vrot.lane.b32.xlu0 %v345, 90
        %v1309 = vpop.permute.xlu0 %1308
        %1310 = vrot.lane.b32.xlu0 %v353, 90
        %v1311 = vpop.permute.xlu0 %1310
        %1312 = vrot.lane.b32.xlu0 %v361, 90
        %v1313 = vpop.permute.xlu0 %1312
        %1314 = vrot.lane.b32.xlu0 %v346, 90
        %v1315 = vpop.permute.xlu0 %1314
        %1316 = vrot.lane.b32.xlu0 %v354, 90
        %v1317 = vpop.permute.xlu0 %1316
        %1318 = vrot.lane.b32.xlu0 %v362, 90
        %v1319 = vpop.permute.xlu0 %1318
        %1320 = vrot.lane.b32.xlu0 %v347, 90
        %v1321 = vpop.permute.xlu0 %1320
        %1322 = vrot.lane.b32.xlu0 %v355, 90
        %v1323 = vpop.permute.xlu0 %1322
        %1324 = vrot.lane.b32.xlu0 %v363, 90
        %v1325 = vpop.permute.xlu0 %1324
        %1326 = vrot.lane.b32.xlu0 %v348, 90
        %v1327 = vpop.permute.xlu0 %1326
        %1328 = vrot.lane.b32.xlu0 %v356, 90
        %v1329 = vpop.permute.xlu0 %1328
        %1330 = vrot.lane.b32.xlu0 %v364, 90
        %v1331 = vpop.permute.xlu0 %1330
        %vm1332 = vcmp.lt.s32.totalorder %v421, 90
        %v1333 = vsel %vm1332, %v1321, %v1327
        %v1334 = vsel %vm1332, %v1323, %v1329
        %v1335 = vsel %vm1332, %v1325, %v1331
        %v1336 = vsel %vm1332, %v1315, %v1321
        %v1337 = vsel %vm1332, %v1317, %v1323
        %v1338 = vsel %vm1332, %v1319, %v1325
        %v1339 = vsel %vm1332, %v1309, %v1315
        %v1340 = vsel %vm1332, %v1311, %v1317
        %v1341 = vsel %vm1332, %v1313, %v1319
        %v1342 = vsel %vm1332, %v1303, %v1309
        %v1343 = vsel %vm1332, %v1305, %v1311
        %v1344 = vsel %vm1332, %v1307, %v1313
        %v1345 = vsel %vm1332, %v1297, %v1303
        %v1346 = vsel %vm1332, %v1299, %v1305
        %v1347 = vsel %vm1332, %v1301, %v1307
        %v1348 = vsel %vm1332, %v1291, %v1297
        %v1349 = vsel %vm1332, %v1293, %v1299
        %v1350 = vsel %vm1332, %v1295, %v1301
        %v1351 = vsel %vm1332, %v1285, %v1291
        %v1352 = vsel %vm1332, %v1287, %v1293
        %v1353 = vsel %vm1332, %v1289, %v1295
        %v1354 = vsel %vm1332, %v1327, %v1285
        %v1355 = vsel %vm1332, %v1329, %v1287
        %v1356 = vsel %vm1332, %v1331, %v1289
        %1357 = vset.pattern.permute.xlu0 7
        %1358 = vperm.xlu0 %1357, %v365
        %v1359 = vpop.permute.xlu0 %1358
        %1361 = vset.pattern.permute.xlu0 7
        %1362 = vperm.xlu0 %1361, %v366
        %v1363 = vpop.permute.xlu0 %1362
        %1365 = vset.pattern.permute.xlu0 7
        %1366 = vperm.xlu0 %1365, %v367
        %v1367 = vpop.permute.xlu0 %1366
        %v1369 = vmul.f32 %v1354, %v1359
        %v1370 = vmul.f32 %v1351, %v1359
        %v1371 = vmul.f32 %v1348, %v1359
        %v1372 = vmul.f32 %v1345, %v1359
        %v1373 = vmul.f32 %v1342, %v1359
        %v1374 = vmul.f32 %v1339, %v1359
        %v1375 = vmul.f32 %v1336, %v1359
        %v1376 = vmul.f32 %v1333, %v1359
        %v1377 = vmul.f32 %v1355, %v1363
        %v1378 = vmul.f32 %v1352, %v1363
        %v1379 = vmul.f32 %v1349, %v1363
        %v1380 = vmul.f32 %v1346, %v1363
        %v1381 = vmul.f32 %v1343, %v1363
        %v1382 = vmul.f32 %v1340, %v1363
        %v1383 = vmul.f32 %v1337, %v1363
        %v1384 = vmul.f32 %v1334, %v1363
        %v1385 = vmul.f32 %v1356, %v1367
        %v1386 = vmul.f32 %v1353, %v1367
        %v1387 = vmul.f32 %v1350, %v1367
        %v1388 = vmul.f32 %v1347, %v1367
        %v1389 = vmul.f32 %v1344, %v1367
        %v1390 = vmul.f32 %v1341, %v1367
        %v1391 = vmul.f32 %v1338, %v1367
        %v1392 = vmul.f32 %v1335, %v1367
        %v1393 = vadd.f32 %v1260, %v1369
        %v1394 = vadd.f32 %v1261, %v1370
        %v1395 = vadd.f32 %v1262, %v1371
        %v1396 = vadd.f32 %v1263, %v1372
        %v1397 = vadd.f32 %v1264, %v1373
        %v1398 = vadd.f32 %v1265, %v1374
        %v1399 = vadd.f32 %v1266, %v1375
        %v1400 = vadd.f32 %v1267, %v1376
        %v1401 = vadd.f32 %v1268, %v1377
        %v1402 = vadd.f32 %v1269, %v1378
        %v1403 = vadd.f32 %v1270, %v1379
        %v1404 = vadd.f32 %v1271, %v1380
        %v1405 = vadd.f32 %v1272, %v1381
        %v1406 = vadd.f32 %v1273, %v1382
        %v1407 = vadd.f32 %v1274, %v1383
        %v1408 = vadd.f32 %v1275, %v1384
        %v1409 = vadd.f32 %v1276, %v1385
        %v1410 = vadd.f32 %v1277, %v1386
        %v1411 = vadd.f32 %v1278, %v1387
        %v1412 = vadd.f32 %v1279, %v1388
        %v1413 = vadd.f32 %v1280, %v1389
        %v1414 = vadd.f32 %v1281, %v1390
        %v1415 = vadd.f32 %v1282, %v1391
        %v1416 = vadd.f32 %v1283, %v1392
        %1417 = vrot.lane.b32.xlu0 %v341, 89
        %v1418 = vpop.permute.xlu0 %1417
        %1419 = vrot.lane.b32.xlu0 %v349, 89
        %v1420 = vpop.permute.xlu0 %1419
        %1421 = vrot.lane.b32.xlu0 %v357, 89
        %v1422 = vpop.permute.xlu0 %1421
        %1423 = vrot.lane.b32.xlu0 %v342, 89
        %v1424 = vpop.permute.xlu0 %1423
        %1425 = vrot.lane.b32.xlu0 %v350, 89
        %v1426 = vpop.permute.xlu0 %1425
        %1427 = vrot.lane.b32.xlu0 %v358, 89
        %v1428 = vpop.permute.xlu0 %1427
        %1429 = vrot.lane.b32.xlu0 %v343, 89
        %v1430 = vpop.permute.xlu0 %1429
        %1431 = vrot.lane.b32.xlu0 %v351, 89
        %v1432 = vpop.permute.xlu0 %1431
        %1433 = vrot.lane.b32.xlu0 %v359, 89
        %v1434 = vpop.permute.xlu0 %1433
        %1435 = vrot.lane.b32.xlu0 %v344, 89
        %v1436 = vpop.permute.xlu0 %1435
        %1437 = vrot.lane.b32.xlu0 %v352, 89
        %v1438 = vpop.permute.xlu0 %1437
        %1439 = vrot.lane.b32.xlu0 %v360, 89
        %v1440 = vpop.permute.xlu0 %1439
        %1441 = vrot.lane.b32.xlu0 %v345, 89
        %v1442 = vpop.permute.xlu0 %1441
        %1443 = vrot.lane.b32.xlu0 %v353, 89
        %v1444 = vpop.permute.xlu0 %1443
        %1445 = vrot.lane.b32.xlu0 %v361, 89
        %v1446 = vpop.permute.xlu0 %1445
        %1447 = vrot.lane.b32.xlu0 %v346, 89
        %v1448 = vpop.permute.xlu0 %1447
        %1449 = vrot.lane.b32.xlu0 %v354, 89
        %v1450 = vpop.permute.xlu0 %1449
        %1451 = vrot.lane.b32.xlu0 %v362, 89
        %v1452 = vpop.permute.xlu0 %1451
        %1453 = vrot.lane.b32.xlu0 %v347, 89
        %v1454 = vpop.permute.xlu0 %1453
        %1455 = vrot.lane.b32.xlu0 %v355, 89
        %v1456 = vpop.permute.xlu0 %1455
        %1457 = vrot.lane.b32.xlu0 %v363, 89
        %v1458 = vpop.permute.xlu0 %1457
        %1459 = vrot.lane.b32.xlu0 %v348, 89
        %v1460 = vpop.permute.xlu0 %1459
        %1461 = vrot.lane.b32.xlu0 %v356, 89
        %v1462 = vpop.permute.xlu0 %1461
        %1463 = vrot.lane.b32.xlu0 %v364, 89
        %v1464 = vpop.permute.xlu0 %1463
        %vm1465 = vcmp.lt.s32.totalorder %v421, 89
        %v1466 = vsel %vm1465, %v1454, %v1460
        %v1467 = vsel %vm1465, %v1456, %v1462
        %v1468 = vsel %vm1465, %v1458, %v1464
        %v1469 = vsel %vm1465, %v1448, %v1454
        %v1470 = vsel %vm1465, %v1450, %v1456
        %v1471 = vsel %vm1465, %v1452, %v1458
        %v1472 = vsel %vm1465, %v1442, %v1448
        %v1473 = vsel %vm1465, %v1444, %v1450
        %v1474 = vsel %vm1465, %v1446, %v1452
        %v1475 = vsel %vm1465, %v1436, %v1442
        %v1476 = vsel %vm1465, %v1438, %v1444
        %v1477 = vsel %vm1465, %v1440, %v1446
        %v1478 = vsel %vm1465, %v1430, %v1436
        %v1479 = vsel %vm1465, %v1432, %v1438
        %v1480 = vsel %vm1465, %v1434, %v1440
        %v1481 = vsel %vm1465, %v1424, %v1430
        %v1482 = vsel %vm1465, %v1426, %v1432
        %v1483 = vsel %vm1465, %v1428, %v1434
        %v1484 = vsel %vm1465, %v1418, %v1424
        %v1485 = vsel %vm1465, %v1420, %v1426
        %v1486 = vsel %vm1465, %v1422, %v1428
        %v1487 = vsel %vm1465, %v1460, %v1418
        %v1488 = vsel %vm1465, %v1462, %v1420
        %v1489 = vsel %vm1465, %v1464, %v1422
        %1490 = vset.pattern.permute.xlu0 8
        %1491 = vperm.xlu0 %1490, %v365
        %v1492 = vpop.permute.xlu0 %1491
        %1494 = vset.pattern.permute.xlu0 8
        %1495 = vperm.xlu0 %1494, %v366
        %v1496 = vpop.permute.xlu0 %1495
        %1498 = vset.pattern.permute.xlu0 8
        %1499 = vperm.xlu0 %1498, %v367
        %v1500 = vpop.permute.xlu0 %1499
        %v1502 = vmul.f32 %v1487, %v1492
        %v1503 = vmul.f32 %v1484, %v1492
        %v1504 = vmul.f32 %v1481, %v1492
        %v1505 = vmul.f32 %v1478, %v1492
        %v1506 = vmul.f32 %v1475, %v1492
        %v1507 = vmul.f32 %v1472, %v1492
        %v1508 = vmul.f32 %v1469, %v1492
        %v1509 = vmul.f32 %v1466, %v1492
        %v1510 = vmul.f32 %v1488, %v1496
        %v1511 = vmul.f32 %v1485, %v1496
        %v1512 = vmul.f32 %v1482, %v1496
        %v1513 = vmul.f32 %v1479, %v1496
        %v1514 = vmul.f32 %v1476, %v1496
        %v1515 = vmul.f32 %v1473, %v1496
        %v1516 = vmul.f32 %v1470, %v1496
        %v1517 = vmul.f32 %v1467, %v1496
        %v1518 = vmul.f32 %v1489, %v1500
        %v1519 = vmul.f32 %v1486, %v1500
        %v1520 = vmul.f32 %v1483, %v1500
        %v1521 = vmul.f32 %v1480, %v1500
        %v1522 = vmul.f32 %v1477, %v1500
        %v1523 = vmul.f32 %v1474, %v1500
        %v1524 = vmul.f32 %v1471, %v1500
        %v1525 = vmul.f32 %v1468, %v1500
        %v1526 = vadd.f32 %v1393, %v1502
        %v1527 = vadd.f32 %v1394, %v1503
        %v1528 = vadd.f32 %v1395, %v1504
        %v1529 = vadd.f32 %v1396, %v1505
        %v1530 = vadd.f32 %v1397, %v1506
        %v1531 = vadd.f32 %v1398, %v1507
        %v1532 = vadd.f32 %v1399, %v1508
        %v1533 = vadd.f32 %v1400, %v1509
        %v1534 = vadd.f32 %v1401, %v1510
        %v1535 = vadd.f32 %v1402, %v1511
        %v1536 = vadd.f32 %v1403, %v1512
        %v1537 = vadd.f32 %v1404, %v1513
        %v1538 = vadd.f32 %v1405, %v1514
        %v1539 = vadd.f32 %v1406, %v1515
        %v1540 = vadd.f32 %v1407, %v1516
        %v1541 = vadd.f32 %v1408, %v1517
        %v1542 = vadd.f32 %v1409, %v1518
        %v1543 = vadd.f32 %v1410, %v1519
        %v1544 = vadd.f32 %v1411, %v1520
        %v1545 = vadd.f32 %v1412, %v1521
        %v1546 = vadd.f32 %v1413, %v1522
        %v1547 = vadd.f32 %v1414, %v1523
        %v1548 = vadd.f32 %v1415, %v1524
        %v1549 = vadd.f32 %v1416, %v1525
        %1550 = vrot.lane.b32.xlu0 %v341, 11
        %v1551 = vpop.permute.xlu0 %1550
        %1552 = vrot.lane.b32.xlu0 %v349, 11
        %v1553 = vpop.permute.xlu0 %1552
        %1554 = vrot.lane.b32.xlu0 %v357, 11
        %v1555 = vpop.permute.xlu0 %1554
        %1556 = vrot.lane.b32.xlu0 %v342, 11
        %v1557 = vpop.permute.xlu0 %1556
        %1558 = vrot.lane.b32.xlu0 %v350, 11
        %v1559 = vpop.permute.xlu0 %1558
        %1560 = vrot.lane.b32.xlu0 %v358, 11
        %v1561 = vpop.permute.xlu0 %1560
        %1562 = vrot.lane.b32.xlu0 %v343, 11
        %v1563 = vpop.permute.xlu0 %1562
        %1564 = vrot.lane.b32.xlu0 %v351, 11
        %v1565 = vpop.permute.xlu0 %1564
        %1566 = vrot.lane.b32.xlu0 %v359, 11
        %v1567 = vpop.permute.xlu0 %1566
        %1568 = vrot.lane.b32.xlu0 %v344, 11
        %v1569 = vpop.permute.xlu0 %1568
        %1570 = vrot.lane.b32.xlu0 %v352, 11
        %v1571 = vpop.permute.xlu0 %1570
        %1572 = vrot.lane.b32.xlu0 %v360, 11
        %v1573 = vpop.permute.xlu0 %1572
        %1574 = vrot.lane.b32.xlu0 %v345, 11
        %v1575 = vpop.permute.xlu0 %1574
        %1576 = vrot.lane.b32.xlu0 %v353, 11
        %v1577 = vpop.permute.xlu0 %1576
        %1578 = vrot.lane.b32.xlu0 %v361, 11
        %v1579 = vpop.permute.xlu0 %1578
        %1580 = vrot.lane.b32.xlu0 %v346, 11
        %v1581 = vpop.permute.xlu0 %1580
        %1582 = vrot.lane.b32.xlu0 %v354, 11
        %v1583 = vpop.permute.xlu0 %1582
        %1584 = vrot.lane.b32.xlu0 %v362, 11
        %v1585 = vpop.permute.xlu0 %1584
        %1586 = vrot.lane.b32.xlu0 %v347, 11
        %v1587 = vpop.permute.xlu0 %1586
        %1588 = vrot.lane.b32.xlu0 %v355, 11
        %v1589 = vpop.permute.xlu0 %1588
        %1590 = vrot.lane.b32.xlu0 %v363, 11
        %v1591 = vpop.permute.xlu0 %1590
        %1592 = vrot.lane.b32.xlu0 %v348, 11
        %v1593 = vpop.permute.xlu0 %1592
        %1594 = vrot.lane.b32.xlu0 %v356, 11
        %v1595 = vpop.permute.xlu0 %1594
        %1596 = vrot.lane.b32.xlu0 %v364, 11
        %v1597 = vpop.permute.xlu0 %1596
        %vm1598 = vcmp.lt.s32.totalorder %v421, 11
        %v1599 = vsel %vm1598, %v1587, %v1593
        %v1600 = vsel %vm1598, %v1589, %v1595
        %v1601 = vsel %vm1598, %v1591, %v1597
        %v1602 = vsel %vm1598, %v1581, %v1587
        %v1603 = vsel %vm1598, %v1583, %v1589
        %v1604 = vsel %vm1598, %v1585, %v1591
        %v1605 = vsel %vm1598, %v1575, %v1581
        %v1606 = vsel %vm1598, %v1577, %v1583
        %v1607 = vsel %vm1598, %v1579, %v1585
        %v1608 = vsel %vm1598, %v1569, %v1575
        %v1609 = vsel %vm1598, %v1571, %v1577
        %v1610 = vsel %vm1598, %v1573, %v1579
        %v1611 = vsel %vm1598, %v1563, %v1569
        %v1612 = vsel %vm1598, %v1565, %v1571
        %v1613 = vsel %vm1598, %v1567, %v1573
        %v1614 = vsel %vm1598, %v1557, %v1563
        %v1615 = vsel %vm1598, %v1559, %v1565
        %v1616 = vsel %vm1598, %v1561, %v1567
        %v1617 = vsel %vm1598, %v1551, %v1557
        %v1618 = vsel %vm1598, %v1553, %v1559
        %v1619 = vsel %vm1598, %v1555, %v1561
        %v1620 = vsel %vm1598, %v1593, %v1551
        %v1621 = vsel %vm1598, %v1595, %v1553
        %v1622 = vsel %vm1598, %v1597, %v1555
        %1623 = vset.pattern.permute.xlu0 9
        %1624 = vperm.xlu0 %1623, %v365
        %v1625 = vpop.permute.xlu0 %1624
        %1627 = vset.pattern.permute.xlu0 9
        %1628 = vperm.xlu0 %1627, %v366
        %v1629 = vpop.permute.xlu0 %1628
        %1631 = vset.pattern.permute.xlu0 9
        %1632 = vperm.xlu0 %1631, %v367
        %v1633 = vpop.permute.xlu0 %1632
        %v1635 = vmul.f32 %v1620, %v1625
        %v1636 = vmul.f32 %v1617, %v1625
        %v1637 = vmul.f32 %v1614, %v1625
        %v1638 = vmul.f32 %v1611, %v1625
        %v1639 = vmul.f32 %v1608, %v1625
        %v1640 = vmul.f32 %v1605, %v1625
        %v1641 = vmul.f32 %v1602, %v1625
        %v1642 = vmul.f32 %v1599, %v1625
        %v1643 = vmul.f32 %v1621, %v1629
        %v1644 = vmul.f32 %v1618, %v1629
        %v1645 = vmul.f32 %v1615, %v1629
        %v1646 = vmul.f32 %v1612, %v1629
        %v1647 = vmul.f32 %v1609, %v1629
        %v1648 = vmul.f32 %v1606, %v1629
        %v1649 = vmul.f32 %v1603, %v1629
        %v1650 = vmul.f32 %v1600, %v1629
        %v1651 = vmul.f32 %v1622, %v1633
        %v1652 = vmul.f32 %v1619, %v1633
        %v1653 = vmul.f32 %v1616, %v1633
        %v1654 = vmul.f32 %v1613, %v1633
        %v1655 = vmul.f32 %v1610, %v1633
        %v1656 = vmul.f32 %v1607, %v1633
        %v1657 = vmul.f32 %v1604, %v1633
        %v1658 = vmul.f32 %v1601, %v1633
        %v1659 = vadd.f32 %v1526, %v1635
        %v1660 = vadd.f32 %v1527, %v1636
        %v1661 = vadd.f32 %v1528, %v1637
        %v1662 = vadd.f32 %v1529, %v1638
        %v1663 = vadd.f32 %v1530, %v1639
        %v1664 = vadd.f32 %v1531, %v1640
        %v1665 = vadd.f32 %v1532, %v1641
        %v1666 = vadd.f32 %v1533, %v1642
        %v1667 = vadd.f32 %v1534, %v1643
        %v1668 = vadd.f32 %v1535, %v1644
        %v1669 = vadd.f32 %v1536, %v1645
        %v1670 = vadd.f32 %v1537, %v1646
        %v1671 = vadd.f32 %v1538, %v1647
        %v1672 = vadd.f32 %v1539, %v1648
        %v1673 = vadd.f32 %v1540, %v1649
        %v1674 = vadd.f32 %v1541, %v1650
        %v1675 = vadd.f32 %v1542, %v1651
        %v1676 = vadd.f32 %v1543, %v1652
        %v1677 = vadd.f32 %v1544, %v1653
        %v1678 = vadd.f32 %v1545, %v1654
        %v1679 = vadd.f32 %v1546, %v1655
        %v1680 = vadd.f32 %v1547, %v1656
        %v1681 = vadd.f32 %v1548, %v1657
        %v1682 = vadd.f32 %v1549, %v1658
        %1683 = vrot.lane.b32.xlu0 %v341, 10
        %v1684 = vpop.permute.xlu0 %1683
        %1685 = vrot.lane.b32.xlu0 %v349, 10
        %v1686 = vpop.permute.xlu0 %1685
        %1687 = vrot.lane.b32.xlu0 %v357, 10
        %v1688 = vpop.permute.xlu0 %1687
        %1689 = vrot.lane.b32.xlu0 %v342, 10
        %v1690 = vpop.permute.xlu0 %1689
        %1691 = vrot.lane.b32.xlu0 %v350, 10
        %v1692 = vpop.permute.xlu0 %1691
        %1693 = vrot.lane.b32.xlu0 %v358, 10
        %v1694 = vpop.permute.xlu0 %1693
        %1695 = vrot.lane.b32.xlu0 %v343, 10
        %v1696 = vpop.permute.xlu0 %1695
        %1697 = vrot.lane.b32.xlu0 %v351, 10
        %v1698 = vpop.permute.xlu0 %1697
        %1699 = vrot.lane.b32.xlu0 %v359, 10
        %v1700 = vpop.permute.xlu0 %1699
        %1701 = vrot.lane.b32.xlu0 %v344, 10
        %v1702 = vpop.permute.xlu0 %1701
        %1703 = vrot.lane.b32.xlu0 %v352, 10
        %v1704 = vpop.permute.xlu0 %1703
        %1705 = vrot.lane.b32.xlu0 %v360, 10
        %v1706 = vpop.permute.xlu0 %1705
        %1707 = vrot.lane.b32.xlu0 %v345, 10
        %v1708 = vpop.permute.xlu0 %1707
        %1709 = vrot.lane.b32.xlu0 %v353, 10
        %v1710 = vpop.permute.xlu0 %1709
        %1711 = vrot.lane.b32.xlu0 %v361, 10
        %v1712 = vpop.permute.xlu0 %1711
        %1713 = vrot.lane.b32.xlu0 %v346, 10
        %v1714 = vpop.permute.xlu0 %1713
        %1715 = vrot.lane.b32.xlu0 %v354, 10
        %v1716 = vpop.permute.xlu0 %1715
        %1717 = vrot.lane.b32.xlu0 %v362, 10
        %v1718 = vpop.permute.xlu0 %1717
        %1719 = vrot.lane.b32.xlu0 %v347, 10
        %v1720 = vpop.permute.xlu0 %1719
        %1721 = vrot.lane.b32.xlu0 %v355, 10
        %v1722 = vpop.permute.xlu0 %1721
        %1723 = vrot.lane.b32.xlu0 %v363, 10
        %v1724 = vpop.permute.xlu0 %1723
        %1725 = vrot.lane.b32.xlu0 %v348, 10
        %v1726 = vpop.permute.xlu0 %1725
        %1727 = vrot.lane.b32.xlu0 %v356, 10
        %v1728 = vpop.permute.xlu0 %1727
        %1729 = vrot.lane.b32.xlu0 %v364, 10
        %v1730 = vpop.permute.xlu0 %1729
        %vm1731 = vcmp.lt.s32.totalorder %v421, 10
        %v1732 = vsel %vm1731, %v1720, %v1726
        %v1733 = vsel %vm1731, %v1722, %v1728
        %v1734 = vsel %vm1731, %v1724, %v1730
        %v1735 = vsel %vm1731, %v1714, %v1720
        %v1736 = vsel %vm1731, %v1716, %v1722
        %v1737 = vsel %vm1731, %v1718, %v1724
        %v1738 = vsel %vm1731, %v1708, %v1714
        %v1739 = vsel %vm1731, %v1710, %v1716
        %v1740 = vsel %vm1731, %v1712, %v1718
        %v1741 = vsel %vm1731, %v1702, %v1708
        %v1742 = vsel %vm1731, %v1704, %v1710
        %v1743 = vsel %vm1731, %v1706, %v1712
        %v1744 = vsel %vm1731, %v1696, %v1702
        %v1745 = vsel %vm1731, %v1698, %v1704
        %v1746 = vsel %vm1731, %v1700, %v1706
        %v1747 = vsel %vm1731, %v1690, %v1696
        %v1748 = vsel %vm1731, %v1692, %v1698
        %v1749 = vsel %vm1731, %v1694, %v1700
        %v1750 = vsel %vm1731, %v1684, %v1690
        %v1751 = vsel %vm1731, %v1686, %v1692
        %v1752 = vsel %vm1731, %v1688, %v1694
        %v1753 = vsel %vm1731, %v1726, %v1684
        %v1754 = vsel %vm1731, %v1728, %v1686
        %v1755 = vsel %vm1731, %v1730, %v1688
        %1756 = vset.pattern.permute.xlu0 10
        %1757 = vperm.xlu0 %1756, %v365
        %v1758 = vpop.permute.xlu0 %1757
        %1760 = vset.pattern.permute.xlu0 10
        %1761 = vperm.xlu0 %1760, %v366
        %v1762 = vpop.permute.xlu0 %1761
        %1764 = vset.pattern.permute.xlu0 10
        %1765 = vperm.xlu0 %1764, %v367
        %v1766 = vpop.permute.xlu0 %1765
        %v1768 = vmul.f32 %v1753, %v1758
        %v1769 = vmul.f32 %v1750, %v1758
        %v1770 = vmul.f32 %v1747, %v1758
        %v1771 = vmul.f32 %v1744, %v1758
        %v1772 = vmul.f32 %v1741, %v1758
        %v1773 = vmul.f32 %v1738, %v1758
        %v1774 = vmul.f32 %v1735, %v1758
        %v1775 = vmul.f32 %v1732, %v1758
        %v1776 = vmul.f32 %v1754, %v1762
        %v1777 = vmul.f32 %v1751, %v1762
        %v1778 = vmul.f32 %v1748, %v1762
        %v1779 = vmul.f32 %v1745, %v1762
        %v1780 = vmul.f32 %v1742, %v1762
        %v1781 = vmul.f32 %v1739, %v1762
        %v1782 = vmul.f32 %v1736, %v1762
        %v1783 = vmul.f32 %v1733, %v1762
        %v1784 = vmul.f32 %v1755, %v1766
        %v1785 = vmul.f32 %v1752, %v1766
        %v1786 = vmul.f32 %v1749, %v1766
        %v1787 = vmul.f32 %v1746, %v1766
        %v1788 = vmul.f32 %v1743, %v1766
        %v1789 = vmul.f32 %v1740, %v1766
        %v1790 = vmul.f32 %v1737, %v1766
        %v1791 = vmul.f32 %v1734, %v1766
        %v1792 = vadd.f32 %v1659, %v1768
        %v1793 = vadd.f32 %v1660, %v1769
        %v1794 = vadd.f32 %v1661, %v1770
        %v1795 = vadd.f32 %v1662, %v1771
        %v1796 = vadd.f32 %v1663, %v1772
        %v1797 = vadd.f32 %v1664, %v1773
        %v1798 = vadd.f32 %v1665, %v1774
        %v1799 = vadd.f32 %v1666, %v1775
        %v1800 = vadd.f32 %v1667, %v1776
        %v1801 = vadd.f32 %v1668, %v1777
        %v1802 = vadd.f32 %v1669, %v1778
        %v1803 = vadd.f32 %v1670, %v1779
        %v1804 = vadd.f32 %v1671, %v1780
        %v1805 = vadd.f32 %v1672, %v1781
        %v1806 = vadd.f32 %v1673, %v1782
        %v1807 = vadd.f32 %v1674, %v1783
        %v1808 = vadd.f32 %v1675, %v1784
        %v1809 = vadd.f32 %v1676, %v1785
        %v1810 = vadd.f32 %v1677, %v1786
        %v1811 = vadd.f32 %v1678, %v1787
        %v1812 = vadd.f32 %v1679, %v1788
        %v1813 = vadd.f32 %v1680, %v1789
        %v1814 = vadd.f32 %v1681, %v1790
        %v1815 = vadd.f32 %v1682, %v1791
        %1816 = vrot.lane.b32.xlu0 %v341, 9
        %v1817 = vpop.permute.xlu0 %1816
        %1818 = vrot.lane.b32.xlu0 %v349, 9
        %v1819 = vpop.permute.xlu0 %1818
        %1820 = vrot.lane.b32.xlu0 %v357, 9
        %v1821 = vpop.permute.xlu0 %1820
        %1822 = vrot.lane.b32.xlu0 %v342, 9
        %v1823 = vpop.permute.xlu0 %1822
        %1824 = vrot.lane.b32.xlu0 %v350, 9
        %v1825 = vpop.permute.xlu0 %1824
        %1826 = vrot.lane.b32.xlu0 %v358, 9
        %v1827 = vpop.permute.xlu0 %1826
        %1828 = vrot.lane.b32.xlu0 %v343, 9
        %v1829 = vpop.permute.xlu0 %1828
        %1830 = vrot.lane.b32.xlu0 %v351, 9
        %v1831 = vpop.permute.xlu0 %1830
        %1832 = vrot.lane.b32.xlu0 %v359, 9
        %v1833 = vpop.permute.xlu0 %1832
        %1834 = vrot.lane.b32.xlu0 %v344, 9
        %v1835 = vpop.permute.xlu0 %1834
        %1836 = vrot.lane.b32.xlu0 %v352, 9
        %v1837 = vpop.permute.xlu0 %1836
        %1838 = vrot.lane.b32.xlu0 %v360, 9
        %v1839 = vpop.permute.xlu0 %1838
        %1840 = vrot.lane.b32.xlu0 %v345, 9
        %v1841 = vpop.permute.xlu0 %1840
        %1842 = vrot.lane.b32.xlu0 %v353, 9
        %v1843 = vpop.permute.xlu0 %1842
        %1844 = vrot.lane.b32.xlu0 %v361, 9
        %v1845 = vpop.permute.xlu0 %1844
        %1846 = vrot.lane.b32.xlu0 %v346, 9
        %v1847 = vpop.permute.xlu0 %1846
        %1848 = vrot.lane.b32.xlu0 %v354, 9
        %v1849 = vpop.permute.xlu0 %1848
        %1850 = vrot.lane.b32.xlu0 %v362, 9
        %v1851 = vpop.permute.xlu0 %1850
        %1852 = vrot.lane.b32.xlu0 %v347, 9
        %v1853 = vpop.permute.xlu0 %1852
        %1854 = vrot.lane.b32.xlu0 %v355, 9
        %v1855 = vpop.permute.xlu0 %1854
        %1856 = vrot.lane.b32.xlu0 %v363, 9
        %v1857 = vpop.permute.xlu0 %1856
        %1858 = vrot.lane.b32.xlu0 %v348, 9
        %v1859 = vpop.permute.xlu0 %1858
        %1860 = vrot.lane.b32.xlu0 %v356, 9
        %v1861 = vpop.permute.xlu0 %1860
        %1862 = vrot.lane.b32.xlu0 %v364, 9
        %v1863 = vpop.permute.xlu0 %1862
        %vm1864 = vcmp.lt.s32.totalorder %v421, 9
        %v1865 = vsel %vm1864, %v1853, %v1859
        %v1866 = vsel %vm1864, %v1855, %v1861
        %v1867 = vsel %vm1864, %v1857, %v1863
        %v1868 = vsel %vm1864, %v1847, %v1853
        %v1869 = vsel %vm1864, %v1849, %v1855
        %v1870 = vsel %vm1864, %v1851, %v1857
        %v1871 = vsel %vm1864, %v1841, %v1847
        %v1872 = vsel %vm1864, %v1843, %v1849
        %v1873 = vsel %vm1864, %v1845, %v1851
        %v1874 = vsel %vm1864, %v1835, %v1841
        %v1875 = vsel %vm1864, %v1837, %v1843
        %v1876 = vsel %vm1864, %v1839, %v1845
        %v1877 = vsel %vm1864, %v1829, %v1835
        %v1878 = vsel %vm1864, %v1831, %v1837
        %v1879 = vsel %vm1864, %v1833, %v1839
        %v1880 = vsel %vm1864, %v1823, %v1829
        %v1881 = vsel %vm1864, %v1825, %v1831
        %v1882 = vsel %vm1864, %v1827, %v1833
        %v1883 = vsel %vm1864, %v1817, %v1823
        %v1884 = vsel %vm1864, %v1819, %v1825
        %v1885 = vsel %vm1864, %v1821, %v1827
        %v1886 = vsel %vm1864, %v1859, %v1817
        %v1887 = vsel %vm1864, %v1861, %v1819
        %v1888 = vsel %vm1864, %v1863, %v1821
        %1889 = vset.pattern.permute.xlu0 11
        %1890 = vperm.xlu0 %1889, %v365
        %v1891 = vpop.permute.xlu0 %1890
        %1893 = vset.pattern.permute.xlu0 11
        %1894 = vperm.xlu0 %1893, %v366
        %v1895 = vpop.permute.xlu0 %1894
        %1897 = vset.pattern.permute.xlu0 11
        %1898 = vperm.xlu0 %1897, %v367
        %v1899 = vpop.permute.xlu0 %1898
        %v1901 = vmul.f32 %v1886, %v1891
        %v1902 = vmul.f32 %v1883, %v1891
        %v1903 = vmul.f32 %v1880, %v1891
        %v1904 = vmul.f32 %v1877, %v1891
        %v1905 = vmul.f32 %v1874, %v1891
        %v1906 = vmul.f32 %v1871, %v1891
        %v1907 = vmul.f32 %v1868, %v1891
        %v1908 = vmul.f32 %v1865, %v1891
        %v1909 = vmul.f32 %v1887, %v1895
        %v1910 = vmul.f32 %v1884, %v1895
        %v1911 = vmul.f32 %v1881, %v1895
        %v1912 = vmul.f32 %v1878, %v1895
        %v1913 = vmul.f32 %v1875, %v1895
        %v1914 = vmul.f32 %v1872, %v1895
        %v1915 = vmul.f32 %v1869, %v1895
        %v1916 = vmul.f32 %v1866, %v1895
        %v1917 = vmul.f32 %v1888, %v1899
        %v1918 = vmul.f32 %v1885, %v1899
        %v1919 = vmul.f32 %v1882, %v1899
        %v1920 = vmul.f32 %v1879, %v1899
        %v1921 = vmul.f32 %v1876, %v1899
        %v1922 = vmul.f32 %v1873, %v1899
        %v1923 = vmul.f32 %v1870, %v1899
        %v1924 = vmul.f32 %v1867, %v1899
        %v1925 = vadd.f32 %v1792, %v1901
        %v1926 = vadd.f32 %v1793, %v1902
        %v1927 = vadd.f32 %v1794, %v1903
        %v1928 = vadd.f32 %v1795, %v1904
        %v1929 = vadd.f32 %v1796, %v1905
        %v1930 = vadd.f32 %v1797, %v1906
        %v1931 = vadd.f32 %v1798, %v1907
        %v1932 = vadd.f32 %v1799, %v1908
        %v1933 = vadd.f32 %v1800, %v1909
        %v1934 = vadd.f32 %v1801, %v1910
        %v1935 = vadd.f32 %v1802, %v1911
        %v1936 = vadd.f32 %v1803, %v1912
        %v1937 = vadd.f32 %v1804, %v1913
        %v1938 = vadd.f32 %v1805, %v1914
        %v1939 = vadd.f32 %v1806, %v1915
        %v1940 = vadd.f32 %v1807, %v1916
        %v1941 = vadd.f32 %v1808, %v1917
        %v1942 = vadd.f32 %v1809, %v1918
        %v1943 = vadd.f32 %v1810, %v1919
        %v1944 = vadd.f32 %v1811, %v1920
        %v1945 = vadd.f32 %v1812, %v1921
        %v1946 = vadd.f32 %v1813, %v1922
        %v1947 = vadd.f32 %v1814, %v1923
        %v1948 = vadd.f32 %v1815, %v1924
        %1949 = vrot.lane.b32.xlu0 %v341, 1
        %v1950 = vpop.permute.xlu0 %1949
        %1951 = vrot.lane.b32.xlu0 %v349, 1
        %v1952 = vpop.permute.xlu0 %1951
        %1953 = vrot.lane.b32.xlu0 %v357, 1
        %v1954 = vpop.permute.xlu0 %1953
        %1955 = vrot.lane.b32.xlu0 %v342, 1
        %v1956 = vpop.permute.xlu0 %1955
        %1957 = vrot.lane.b32.xlu0 %v350, 1
        %v1958 = vpop.permute.xlu0 %1957
        %1959 = vrot.lane.b32.xlu0 %v358, 1
        %v1960 = vpop.permute.xlu0 %1959
        %1961 = vrot.lane.b32.xlu0 %v343, 1
        %v1962 = vpop.permute.xlu0 %1961
        %1963 = vrot.lane.b32.xlu0 %v351, 1
        %v1964 = vpop.permute.xlu0 %1963
        %1965 = vrot.lane.b32.xlu0 %v359, 1
        %v1966 = vpop.permute.xlu0 %1965
        %1967 = vrot.lane.b32.xlu0 %v344, 1
        %v1968 = vpop.permute.xlu0 %1967
        %1969 = vrot.lane.b32.xlu0 %v352, 1
        %v1970 = vpop.permute.xlu0 %1969
        %1971 = vrot.lane.b32.xlu0 %v360, 1
        %v1972 = vpop.permute.xlu0 %1971
        %1973 = vrot.lane.b32.xlu0 %v345, 1
        %v1974 = vpop.permute.xlu0 %1973
        %1975 = vrot.lane.b32.xlu0 %v353, 1
        %v1976 = vpop.permute.xlu0 %1975
        %1977 = vrot.lane.b32.xlu0 %v361, 1
        %v1978 = vpop.permute.xlu0 %1977
        %1979 = vrot.lane.b32.xlu0 %v346, 1
        %v1980 = vpop.permute.xlu0 %1979
        %1981 = vrot.lane.b32.xlu0 %v354, 1
        %v1982 = vpop.permute.xlu0 %1981
        %1983 = vrot.lane.b32.xlu0 %v362, 1
        %v1984 = vpop.permute.xlu0 %1983
        %1985 = vrot.lane.b32.xlu0 %v347, 1
        %v1986 = vpop.permute.xlu0 %1985
        %1987 = vrot.lane.b32.xlu0 %v355, 1
        %v1988 = vpop.permute.xlu0 %1987
        %1989 = vrot.lane.b32.xlu0 %v363, 1
        %v1990 = vpop.permute.xlu0 %1989
        %1991 = vrot.lane.b32.xlu0 %v348, 1
        %v1992 = vpop.permute.xlu0 %1991
        %1993 = vrot.lane.b32.xlu0 %v356, 1
        %v1994 = vpop.permute.xlu0 %1993
        %1995 = vrot.lane.b32.xlu0 %v364, 1
        %v1996 = vpop.permute.xlu0 %1995
        %vm1997 = vcmp.lt.s32.totalorder %v421, 1
        %v1998 = vsel %vm1997, %v1986, %v1992
        %v1999 = vsel %vm1997, %v1988, %v1994
        %v2000 = vsel %vm1997, %v1990, %v1996
        %v2001 = vsel %vm1997, %v1980, %v1986
        %v2002 = vsel %vm1997, %v1982, %v1988
        %v2003 = vsel %vm1997, %v1984, %v1990
        %v2004 = vsel %vm1997, %v1974, %v1980
        %v2005 = vsel %vm1997, %v1976, %v1982
        %v2006 = vsel %vm1997, %v1978, %v1984
        %v2007 = vsel %vm1997, %v1968, %v1974
        %v2008 = vsel %vm1997, %v1970, %v1976
        %v2009 = vsel %vm1997, %v1972, %v1978
        %v2010 = vsel %vm1997, %v1962, %v1968
        %v2011 = vsel %vm1997, %v1964, %v1970
        %v2012 = vsel %vm1997, %v1966, %v1972
        %v2013 = vsel %vm1997, %v1956, %v1962
        %v2014 = vsel %vm1997, %v1958, %v1964
        %v2015 = vsel %vm1997, %v1960, %v1966
        %v2016 = vsel %vm1997, %v1950, %v1956
        %v2017 = vsel %vm1997, %v1952, %v1958
        %v2018 = vsel %vm1997, %v1954, %v1960
        %v2019 = vsel %vm1997, %v1992, %v1950
        %v2020 = vsel %vm1997, %v1994, %v1952
        %v2021 = vsel %vm1997, %v1996, %v1954
        %2022 = vset.pattern.permute.xlu0 12
        %2023 = vperm.xlu0 %2022, %v365
        %v2024 = vpop.permute.xlu0 %2023
        %2026 = vset.pattern.permute.xlu0 12
        %2027 = vperm.xlu0 %2026, %v366
        %v2028 = vpop.permute.xlu0 %2027
        %2030 = vset.pattern.permute.xlu0 12
        %2031 = vperm.xlu0 %2030, %v367
        %v2032 = vpop.permute.xlu0 %2031
        %v2034 = vmul.f32 %v2019, %v2024
        %v2035 = vmul.f32 %v2016, %v2024
        %v2036 = vmul.f32 %v2013, %v2024
        %v2037 = vmul.f32 %v2010, %v2024
        %v2038 = vmul.f32 %v2007, %v2024
        %v2039 = vmul.f32 %v2004, %v2024
        %v2040 = vmul.f32 %v2001, %v2024
        %v2041 = vmul.f32 %v1998, %v2024
        %v2042 = vmul.f32 %v2020, %v2028
        %v2043 = vmul.f32 %v2017, %v2028
        %v2044 = vmul.f32 %v2014, %v2028
        %v2045 = vmul.f32 %v2011, %v2028
        %v2046 = vmul.f32 %v2008, %v2028
        %v2047 = vmul.f32 %v2005, %v2028
        %v2048 = vmul.f32 %v2002, %v2028
        %v2049 = vmul.f32 %v1999, %v2028
        %v2050 = vmul.f32 %v2021, %v2032
        %v2051 = vmul.f32 %v2018, %v2032
        %v2052 = vmul.f32 %v2015, %v2032
        %v2053 = vmul.f32 %v2012, %v2032
        %v2054 = vmul.f32 %v2009, %v2032
        %v2055 = vmul.f32 %v2006, %v2032
        %v2056 = vmul.f32 %v2003, %v2032
        %v2057 = vmul.f32 %v2000, %v2032
        %v2058 = vadd.f32 %v1925, %v2034
        %v2059 = vadd.f32 %v1926, %v2035
        %v2060 = vadd.f32 %v1927, %v2036
        %v2061 = vadd.f32 %v1928, %v2037
        %v2062 = vadd.f32 %v1929, %v2038
        %v2063 = vadd.f32 %v1930, %v2039
        %v2064 = vadd.f32 %v1931, %v2040
        %v2065 = vadd.f32 %v1932, %v2041
        %v2066 = vadd.f32 %v1933, %v2042
        %v2067 = vadd.f32 %v1934, %v2043
        %v2068 = vadd.f32 %v1935, %v2044
        %v2069 = vadd.f32 %v1936, %v2045
        %v2070 = vadd.f32 %v1937, %v2046
        %v2071 = vadd.f32 %v1938, %v2047
        %v2072 = vadd.f32 %v1939, %v2048
        %v2073 = vadd.f32 %v1940, %v2049
        %v2074 = vadd.f32 %v1941, %v2050
        %v2075 = vadd.f32 %v1942, %v2051
        %v2076 = vadd.f32 %v1943, %v2052
        %v2077 = vadd.f32 %v1944, %v2053
        %v2078 = vadd.f32 %v1945, %v2054
        %v2079 = vadd.f32 %v1946, %v2055
        %v2080 = vadd.f32 %v1947, %v2056
        %v2081 = vadd.f32 %v1948, %v2057
        %2082 = vset.pattern.permute.xlu0 13
        %2083 = vperm.xlu0 %2082, %v365
        %v2084 = vpop.permute.xlu0 %2083
        %2086 = vset.pattern.permute.xlu0 13
        %2087 = vperm.xlu0 %2086, %v366
        %v2088 = vpop.permute.xlu0 %2087
        %2090 = vset.pattern.permute.xlu0 13
        %2091 = vperm.xlu0 %2090, %v367
        %v2092 = vpop.permute.xlu0 %2091
        %v2094 = vmul.f32 %v341, %v2084
        %v2095 = vmul.f32 %v342, %v2084
        %v2096 = vmul.f32 %v343, %v2084
        %v2097 = vmul.f32 %v344, %v2084
        %v2098 = vmul.f32 %v345, %v2084
        %v2099 = vmul.f32 %v346, %v2084
        %v2100 = vmul.f32 %v347, %v2084
        %v2101 = vmul.f32 %v348, %v2084
        %v2102 = vmul.f32 %v349, %v2088
        %v2103 = vmul.f32 %v350, %v2088
        %v2104 = vmul.f32 %v351, %v2088
        %v2105 = vmul.f32 %v352, %v2088
        %v2106 = vmul.f32 %v353, %v2088
        %v2107 = vmul.f32 %v354, %v2088
        %v2108 = vmul.f32 %v355, %v2088
        %v2109 = vmul.f32 %v356, %v2088
        %v2110 = vmul.f32 %v357, %v2092
        %v2111 = vmul.f32 %v358, %v2092
        %v2112 = vmul.f32 %v359, %v2092
        %v2113 = vmul.f32 %v360, %v2092
        %v2114 = vmul.f32 %v361, %v2092
        %v2115 = vmul.f32 %v362, %v2092
        %v2116 = vmul.f32 %v363, %v2092
        %v2117 = vmul.f32 %v364, %v2092
        %v2118 = vadd.f32 %v2058, %v2094
        %v2119 = vadd.f32 %v2059, %v2095
        %v2120 = vadd.f32 %v2060, %v2096
        %v2121 = vadd.f32 %v2061, %v2097
        %v2122 = vadd.f32 %v2062, %v2098
        %v2123 = vadd.f32 %v2063, %v2099
        %v2124 = vadd.f32 %v2064, %v2100
        %v2125 = vadd.f32 %v2065, %v2101
        %v2126 = vadd.f32 %v2066, %v2102
        %v2127 = vadd.f32 %v2067, %v2103
        %v2128 = vadd.f32 %v2068, %v2104
        %v2129 = vadd.f32 %v2069, %v2105
        %v2130 = vadd.f32 %v2070, %v2106
        %v2131 = vadd.f32 %v2071, %v2107
        %v2132 = vadd.f32 %v2072, %v2108
        %v2133 = vadd.f32 %v2073, %v2109
        %v2134 = vadd.f32 %v2074, %v2110
        %v2135 = vadd.f32 %v2075, %v2111
        %v2136 = vadd.f32 %v2076, %v2112
        %v2137 = vadd.f32 %v2077, %v2113
        %v2138 = vadd.f32 %v2078, %v2114
        %v2139 = vadd.f32 %v2079, %v2115
        %v2140 = vadd.f32 %v2080, %v2116
        %v2141 = vadd.f32 %v2081, %v2117
        %2142 = vrot.lane.b32.xlu0 %v341, 127
        %v2143 = vpop.permute.xlu0 %2142
        %2144 = vrot.lane.b32.xlu0 %v349, 127
        %v2145 = vpop.permute.xlu0 %2144
        %2146 = vrot.lane.b32.xlu0 %v357, 127
        %v2147 = vpop.permute.xlu0 %2146
        %2148 = vrot.lane.b32.xlu0 %v342, 127
        %v2149 = vpop.permute.xlu0 %2148
        %2150 = vrot.lane.b32.xlu0 %v350, 127
        %v2151 = vpop.permute.xlu0 %2150
        %2152 = vrot.lane.b32.xlu0 %v358, 127
        %v2153 = vpop.permute.xlu0 %2152
        %2154 = vrot.lane.b32.xlu0 %v343, 127
        %v2155 = vpop.permute.xlu0 %2154
        %2156 = vrot.lane.b32.xlu0 %v351, 127
        %v2157 = vpop.permute.xlu0 %2156
        %2158 = vrot.lane.b32.xlu0 %v359, 127
        %v2159 = vpop.permute.xlu0 %2158
        %2160 = vrot.lane.b32.xlu0 %v344, 127
        %v2161 = vpop.permute.xlu0 %2160
        %2162 = vrot.lane.b32.xlu0 %v352, 127
        %v2163 = vpop.permute.xlu0 %2162
        %2164 = vrot.lane.b32.xlu0 %v360, 127
        %v2165 = vpop.permute.xlu0 %2164
        %2166 = vrot.lane.b32.xlu0 %v345, 127
        %v2167 = vpop.permute.xlu0 %2166
        %2168 = vrot.lane.b32.xlu0 %v353, 127
        %v2169 = vpop.permute.xlu0 %2168
        %2170 = vrot.lane.b32.xlu0 %v361, 127
        %v2171 = vpop.permute.xlu0 %2170
        %2172 = vrot.lane.b32.xlu0 %v346, 127
        %v2173 = vpop.permute.xlu0 %2172
        %2174 = vrot.lane.b32.xlu0 %v354, 127
        %v2175 = vpop.permute.xlu0 %2174
        %2176 = vrot.lane.b32.xlu0 %v362, 127
        %v2177 = vpop.permute.xlu0 %2176
        %2178 = vrot.lane.b32.xlu0 %v347, 127
        %v2179 = vpop.permute.xlu0 %2178
        %2180 = vrot.lane.b32.xlu0 %v355, 127
        %v2181 = vpop.permute.xlu0 %2180
        %2182 = vrot.lane.b32.xlu0 %v363, 127
        %v2183 = vpop.permute.xlu0 %2182
        %2184 = vrot.lane.b32.xlu0 %v348, 127
        %v2185 = vpop.permute.xlu0 %2184
        %2186 = vrot.lane.b32.xlu0 %v356, 127
        %v2187 = vpop.permute.xlu0 %2186
        %2188 = vrot.lane.b32.xlu0 %v364, 127
        %v2189 = vpop.permute.xlu0 %2188
        %vm2190 = vcmp.lt.s32.totalorder %v421, 127
        %v2191 = vsel %vm2190, %v2179, %v2185
        %v2192 = vsel %vm2190, %v2181, %v2187
        %v2193 = vsel %vm2190, %v2183, %v2189
        %v2194 = vsel %vm2190, %v2173, %v2179
        %v2195 = vsel %vm2190, %v2175, %v2181
        %v2196 = vsel %vm2190, %v2177, %v2183
        %v2197 = vsel %vm2190, %v2167, %v2173
        %v2198 = vsel %vm2190, %v2169, %v2175
        %v2199 = vsel %vm2190, %v2171, %v2177
        %v2200 = vsel %vm2190, %v2161, %v2167
        %v2201 = vsel %vm2190, %v2163, %v2169
        %v2202 = vsel %vm2190, %v2165, %v2171
        %v2203 = vsel %vm2190, %v2155, %v2161
        %v2204 = vsel %vm2190, %v2157, %v2163
        %v2205 = vsel %vm2190, %v2159, %v2165
        %v2206 = vsel %vm2190, %v2149, %v2155
        %v2207 = vsel %vm2190, %v2151, %v2157
        %v2208 = vsel %vm2190, %v2153, %v2159
        %v2209 = vsel %vm2190, %v2143, %v2149
        %v2210 = vsel %vm2190, %v2145, %v2151
        %v2211 = vsel %vm2190, %v2147, %v2153
        %v2212 = vsel %vm2190, %v2185, %v2143
        %v2213 = vsel %vm2190, %v2187, %v2145
        %v2214 = vsel %vm2190, %v2189, %v2147
        %2215 = vset.pattern.permute.xlu0 14
        %2216 = vperm.xlu0 %2215, %v365
        %v2217 = vpop.permute.xlu0 %2216
        %2219 = vset.pattern.permute.xlu0 14
        %2220 = vperm.xlu0 %2219, %v366
        %v2221 = vpop.permute.xlu0 %2220
        %2223 = vset.pattern.permute.xlu0 14
        %2224 = vperm.xlu0 %2223, %v367
        %v2225 = vpop.permute.xlu0 %2224
        %v2227 = vmul.f32 %v2209, %v2217
        %v2228 = vmul.f32 %v2206, %v2217
        %v2229 = vmul.f32 %v2203, %v2217
        %v2230 = vmul.f32 %v2200, %v2217
        %v2231 = vmul.f32 %v2197, %v2217
        %v2232 = vmul.f32 %v2194, %v2217
        %v2233 = vmul.f32 %v2191, %v2217
        %v2234 = vmul.f32 %v2212, %v2217
        %v2235 = vmul.f32 %v2210, %v2221
        %v2236 = vmul.f32 %v2207, %v2221
        %v2237 = vmul.f32 %v2204, %v2221
        %v2238 = vmul.f32 %v2201, %v2221
        %v2239 = vmul.f32 %v2198, %v2221
        %v2240 = vmul.f32 %v2195, %v2221
        %v2241 = vmul.f32 %v2192, %v2221
        %v2242 = vmul.f32 %v2213, %v2221
        %v2243 = vmul.f32 %v2211, %v2225
        %v2244 = vmul.f32 %v2208, %v2225
        %v2245 = vmul.f32 %v2205, %v2225
        %v2246 = vmul.f32 %v2202, %v2225
        %v2247 = vmul.f32 %v2199, %v2225
        %v2248 = vmul.f32 %v2196, %v2225
        %v2249 = vmul.f32 %v2193, %v2225
        %v2250 = vmul.f32 %v2214, %v2225
        %v2251 = vadd.f32 %v2118, %v2227
        %v2252 = vadd.f32 %v2119, %v2228
        %v2253 = vadd.f32 %v2120, %v2229
        %v2254 = vadd.f32 %v2121, %v2230
        %v2255 = vadd.f32 %v2122, %v2231
        %v2256 = vadd.f32 %v2123, %v2232
        %v2257 = vadd.f32 %v2124, %v2233
        %v2258 = vadd.f32 %v2125, %v2234
        %v2259 = vadd.f32 %v2126, %v2235
        %v2260 = vadd.f32 %v2127, %v2236
        %v2261 = vadd.f32 %v2128, %v2237
        %v2262 = vadd.f32 %v2129, %v2238
        %v2263 = vadd.f32 %v2130, %v2239
        %v2264 = vadd.f32 %v2131, %v2240
        %v2265 = vadd.f32 %v2132, %v2241
        %v2266 = vadd.f32 %v2133, %v2242
        %v2267 = vadd.f32 %v2134, %v2243
        %v2268 = vadd.f32 %v2135, %v2244
        %v2269 = vadd.f32 %v2136, %v2245
        %v2270 = vadd.f32 %v2137, %v2246
        %v2271 = vadd.f32 %v2138, %v2247
        %v2272 = vadd.f32 %v2139, %v2248
        %v2273 = vadd.f32 %v2140, %v2249
        %v2274 = vadd.f32 %v2141, %v2250
        %2275 = vrot.lane.b32.xlu0 %v341, 119
        %v2276 = vpop.permute.xlu0 %2275
        %2277 = vrot.lane.b32.xlu0 %v349, 119
        %v2278 = vpop.permute.xlu0 %2277
        %2279 = vrot.lane.b32.xlu0 %v357, 119
        %v2280 = vpop.permute.xlu0 %2279
        %2281 = vrot.lane.b32.xlu0 %v342, 119
        %v2282 = vpop.permute.xlu0 %2281
        %2283 = vrot.lane.b32.xlu0 %v350, 119
        %v2284 = vpop.permute.xlu0 %2283
        %2285 = vrot.lane.b32.xlu0 %v358, 119
        %v2286 = vpop.permute.xlu0 %2285
        %2287 = vrot.lane.b32.xlu0 %v343, 119
        %v2288 = vpop.permute.xlu0 %2287
        %2289 = vrot.lane.b32.xlu0 %v351, 119
        %v2290 = vpop.permute.xlu0 %2289
        %2291 = vrot.lane.b32.xlu0 %v359, 119
        %v2292 = vpop.permute.xlu0 %2291
        %2293 = vrot.lane.b32.xlu0 %v344, 119
        %v2294 = vpop.permute.xlu0 %2293
        %2295 = vrot.lane.b32.xlu0 %v352, 119
        %v2296 = vpop.permute.xlu0 %2295
        %2297 = vrot.lane.b32.xlu0 %v360, 119
        %v2298 = vpop.permute.xlu0 %2297
        %2299 = vrot.lane.b32.xlu0 %v345, 119
        %v2300 = vpop.permute.xlu0 %2299
        %2301 = vrot.lane.b32.xlu0 %v353, 119
        %v2302 = vpop.permute.xlu0 %2301
        %2303 = vrot.lane.b32.xlu0 %v361, 119
        %v2304 = vpop.permute.xlu0 %2303
        %2305 = vrot.lane.b32.xlu0 %v346, 119
        %v2306 = vpop.permute.xlu0 %2305
        %2307 = vrot.lane.b32.xlu0 %v354, 119
        %v2308 = vpop.permute.xlu0 %2307
        %2309 = vrot.lane.b32.xlu0 %v362, 119
        %v2310 = vpop.permute.xlu0 %2309
        %2311 = vrot.lane.b32.xlu0 %v347, 119
        %v2312 = vpop.permute.xlu0 %2311
        %2313 = vrot.lane.b32.xlu0 %v355, 119
        %v2314 = vpop.permute.xlu0 %2313
        %2315 = vrot.lane.b32.xlu0 %v363, 119
        %v2316 = vpop.permute.xlu0 %2315
        %2317 = vrot.lane.b32.xlu0 %v348, 119
        %v2318 = vpop.permute.xlu0 %2317
        %2319 = vrot.lane.b32.xlu0 %v356, 119
        %v2320 = vpop.permute.xlu0 %2319
        %2321 = vrot.lane.b32.xlu0 %v364, 119
        %v2322 = vpop.permute.xlu0 %2321
        %vm2323 = vcmp.lt.s32.totalorder %v421, 119
        %v2324 = vsel %vm2323, %v2312, %v2318
        %v2325 = vsel %vm2323, %v2314, %v2320
        %v2326 = vsel %vm2323, %v2316, %v2322
        %v2327 = vsel %vm2323, %v2306, %v2312
        %v2328 = vsel %vm2323, %v2308, %v2314
        %v2329 = vsel %vm2323, %v2310, %v2316
        %v2330 = vsel %vm2323, %v2300, %v2306
        %v2331 = vsel %vm2323, %v2302, %v2308
        %v2332 = vsel %vm2323, %v2304, %v2310
        %v2333 = vsel %vm2323, %v2294, %v2300
        %v2334 = vsel %vm2323, %v2296, %v2302
        %v2335 = vsel %vm2323, %v2298, %v2304
        %v2336 = vsel %vm2323, %v2288, %v2294
        %v2337 = vsel %vm2323, %v2290, %v2296
        %v2338 = vsel %vm2323, %v2292, %v2298
        %v2339 = vsel %vm2323, %v2282, %v2288
        %v2340 = vsel %vm2323, %v2284, %v2290
        %v2341 = vsel %vm2323, %v2286, %v2292
        %v2342 = vsel %vm2323, %v2276, %v2282
        %v2343 = vsel %vm2323, %v2278, %v2284
        %v2344 = vsel %vm2323, %v2280, %v2286
        %v2345 = vsel %vm2323, %v2318, %v2276
        %v2346 = vsel %vm2323, %v2320, %v2278
        %v2347 = vsel %vm2323, %v2322, %v2280
        %2348 = vset.pattern.permute.xlu0 15
        %2349 = vperm.xlu0 %2348, %v365
        %v2350 = vpop.permute.xlu0 %2349
        %2352 = vset.pattern.permute.xlu0 15
        %2353 = vperm.xlu0 %2352, %v366
        %v2354 = vpop.permute.xlu0 %2353
        %2356 = vset.pattern.permute.xlu0 15
        %2357 = vperm.xlu0 %2356, %v367
        %v2358 = vpop.permute.xlu0 %2357
        %v2360 = vmul.f32 %v2342, %v2350
        %v2361 = vmul.f32 %v2339, %v2350
        %v2362 = vmul.f32 %v2336, %v2350
        %v2363 = vmul.f32 %v2333, %v2350
        %v2364 = vmul.f32 %v2330, %v2350
        %v2365 = vmul.f32 %v2327, %v2350
        %v2366 = vmul.f32 %v2324, %v2350
        %v2367 = vmul.f32 %v2345, %v2350
        %v2368 = vmul.f32 %v2343, %v2354
        %v2369 = vmul.f32 %v2340, %v2354
        %v2370 = vmul.f32 %v2337, %v2354
        %v2371 = vmul.f32 %v2334, %v2354
        %v2372 = vmul.f32 %v2331, %v2354
        %v2373 = vmul.f32 %v2328, %v2354
        %v2374 = vmul.f32 %v2325, %v2354
        %v2375 = vmul.f32 %v2346, %v2354
        %v2376 = vmul.f32 %v2344, %v2358
        %v2377 = vmul.f32 %v2341, %v2358
        %v2378 = vmul.f32 %v2338, %v2358
        %v2379 = vmul.f32 %v2335, %v2358
        %v2380 = vmul.f32 %v2332, %v2358
        %v2381 = vmul.f32 %v2329, %v2358
        %v2382 = vmul.f32 %v2326, %v2358
        %v2383 = vmul.f32 %v2347, %v2358
        %v2384 = vadd.f32 %v2251, %v2360
        %v2385 = vadd.f32 %v2252, %v2361
        %v2386 = vadd.f32 %v2253, %v2362
        %v2387 = vadd.f32 %v2254, %v2363
        %v2388 = vadd.f32 %v2255, %v2364
        %v2389 = vadd.f32 %v2256, %v2365
        %v2390 = vadd.f32 %v2257, %v2366
        %v2391 = vadd.f32 %v2258, %v2367
        %v2392 = vadd.f32 %v2259, %v2368
        %v2393 = vadd.f32 %v2260, %v2369
        %v2394 = vadd.f32 %v2261, %v2370
        %v2395 = vadd.f32 %v2262, %v2371
        %v2396 = vadd.f32 %v2263, %v2372
        %v2397 = vadd.f32 %v2264, %v2373
        %v2398 = vadd.f32 %v2265, %v2374
        %v2399 = vadd.f32 %v2266, %v2375
        %v2400 = vadd.f32 %v2267, %v2376
        %v2401 = vadd.f32 %v2268, %v2377
        %v2402 = vadd.f32 %v2269, %v2378
        %v2403 = vadd.f32 %v2270, %v2379
        %v2404 = vadd.f32 %v2271, %v2380
        %v2405 = vadd.f32 %v2272, %v2381
        %v2406 = vadd.f32 %v2273, %v2382
        %v2407 = vadd.f32 %v2274, %v2383
        %2408 = vrot.lane.b32.xlu0 %v341, 118
        %v2409 = vpop.permute.xlu0 %2408
        %2410 = vrot.lane.b32.xlu0 %v349, 118
        %v2411 = vpop.permute.xlu0 %2410
        %2412 = vrot.lane.b32.xlu0 %v357, 118
        %v2413 = vpop.permute.xlu0 %2412
        %2414 = vrot.lane.b32.xlu0 %v342, 118
        %v2415 = vpop.permute.xlu0 %2414
        %2416 = vrot.lane.b32.xlu0 %v350, 118
        %v2417 = vpop.permute.xlu0 %2416
        %2418 = vrot.lane.b32.xlu0 %v358, 118
        %v2419 = vpop.permute.xlu0 %2418
        %2420 = vrot.lane.b32.xlu0 %v343, 118
        %v2421 = vpop.permute.xlu0 %2420
        %2422 = vrot.lane.b32.xlu0 %v351, 118
        %v2423 = vpop.permute.xlu0 %2422
        %2424 = vrot.lane.b32.xlu0 %v359, 118
        %v2425 = vpop.permute.xlu0 %2424
        %2426 = vrot.lane.b32.xlu0 %v344, 118
        %v2427 = vpop.permute.xlu0 %2426
        %2428 = vrot.lane.b32.xlu0 %v352, 118
        %v2429 = vpop.permute.xlu0 %2428
        %2430 = vrot.lane.b32.xlu0 %v360, 118
        %v2431 = vpop.permute.xlu0 %2430
        %2432 = vrot.lane.b32.xlu0 %v345, 118
        %v2433 = vpop.permute.xlu0 %2432
        %2434 = vrot.lane.b32.xlu0 %v353, 118
        %v2435 = vpop.permute.xlu0 %2434
        %2436 = vrot.lane.b32.xlu0 %v361, 118
        %v2437 = vpop.permute.xlu0 %2436
        %2438 = vrot.lane.b32.xlu0 %v346, 118
        %v2439 = vpop.permute.xlu0 %2438
        %2440 = vrot.lane.b32.xlu0 %v354, 118
        %v2441 = vpop.permute.xlu0 %2440
        %2442 = vrot.lane.b32.xlu0 %v362, 118
        %v2443 = vpop.permute.xlu0 %2442
        %2444 = vrot.lane.b32.xlu0 %v347, 118
        %v2445 = vpop.permute.xlu0 %2444
        %2446 = vrot.lane.b32.xlu0 %v355, 118
        %v2447 = vpop.permute.xlu0 %2446
        %2448 = vrot.lane.b32.xlu0 %v363, 118
        %v2449 = vpop.permute.xlu0 %2448
        %2450 = vrot.lane.b32.xlu0 %v348, 118
        %v2451 = vpop.permute.xlu0 %2450
        %2452 = vrot.lane.b32.xlu0 %v356, 118
        %v2453 = vpop.permute.xlu0 %2452
        %2454 = vrot.lane.b32.xlu0 %v364, 118
        %v2455 = vpop.permute.xlu0 %2454
        %vm2456 = vcmp.lt.s32.totalorder %v421, 118
        %v2457 = vsel %vm2456, %v2445, %v2451
        %v2458 = vsel %vm2456, %v2447, %v2453
        %v2459 = vsel %vm2456, %v2449, %v2455
        %v2460 = vsel %vm2456, %v2439, %v2445
        %v2461 = vsel %vm2456, %v2441, %v2447
        %v2462 = vsel %vm2456, %v2443, %v2449
        %v2463 = vsel %vm2456, %v2433, %v2439
        %v2464 = vsel %vm2456, %v2435, %v2441
        %v2465 = vsel %vm2456, %v2437, %v2443
        %v2466 = vsel %vm2456, %v2427, %v2433
        %v2467 = vsel %vm2456, %v2429, %v2435
        %v2468 = vsel %vm2456, %v2431, %v2437
        %v2469 = vsel %vm2456, %v2421, %v2427
        %v2470 = vsel %vm2456, %v2423, %v2429
        %v2471 = vsel %vm2456, %v2425, %v2431
        %v2472 = vsel %vm2456, %v2415, %v2421
        %v2473 = vsel %vm2456, %v2417, %v2423
        %v2474 = vsel %vm2456, %v2419, %v2425
        %v2475 = vsel %vm2456, %v2409, %v2415
        %v2476 = vsel %vm2456, %v2411, %v2417
        %v2477 = vsel %vm2456, %v2413, %v2419
        %v2478 = vsel %vm2456, %v2451, %v2409
        %v2479 = vsel %vm2456, %v2453, %v2411
        %v2480 = vsel %vm2456, %v2455, %v2413
        %2481 = vset.pattern.permute.xlu0 16
        %2482 = vperm.xlu0 %2481, %v365
        %v2483 = vpop.permute.xlu0 %2482
        %2485 = vset.pattern.permute.xlu0 16
        %2486 = vperm.xlu0 %2485, %v366
        %v2487 = vpop.permute.xlu0 %2486
        %2489 = vset.pattern.permute.xlu0 16
        %2490 = vperm.xlu0 %2489, %v367
        %v2491 = vpop.permute.xlu0 %2490
        %v2493 = vmul.f32 %v2475, %v2483
        %v2494 = vmul.f32 %v2472, %v2483
        %v2495 = vmul.f32 %v2469, %v2483
        %v2496 = vmul.f32 %v2466, %v2483
        %v2497 = vmul.f32 %v2463, %v2483
        %v2498 = vmul.f32 %v2460, %v2483
        %v2499 = vmul.f32 %v2457, %v2483
        %v2500 = vmul.f32 %v2478, %v2483
        %v2501 = vmul.f32 %v2476, %v2487
        %v2502 = vmul.f32 %v2473, %v2487
        %v2503 = vmul.f32 %v2470, %v2487
        %v2504 = vmul.f32 %v2467, %v2487
        %v2505 = vmul.f32 %v2464, %v2487
        %v2506 = vmul.f32 %v2461, %v2487
        %v2507 = vmul.f32 %v2458, %v2487
        %v2508 = vmul.f32 %v2479, %v2487
        %v2509 = vmul.f32 %v2477, %v2491
        %v2510 = vmul.f32 %v2474, %v2491
        %v2511 = vmul.f32 %v2471, %v2491
        %v2512 = vmul.f32 %v2468, %v2491
        %v2513 = vmul.f32 %v2465, %v2491
        %v2514 = vmul.f32 %v2462, %v2491
        %v2515 = vmul.f32 %v2459, %v2491
        %v2516 = vmul.f32 %v2480, %v2491
        %v2517 = vadd.f32 %v2384, %v2493
        %v2518 = vadd.f32 %v2385, %v2494
        %v2519 = vadd.f32 %v2386, %v2495
        %v2520 = vadd.f32 %v2387, %v2496
        %v2521 = vadd.f32 %v2388, %v2497
        %v2522 = vadd.f32 %v2389, %v2498
        %v2523 = vadd.f32 %v2390, %v2499
        %v2524 = vadd.f32 %v2391, %v2500
        %v2525 = vadd.f32 %v2392, %v2501
        %v2526 = vadd.f32 %v2393, %v2502
        %v2527 = vadd.f32 %v2394, %v2503
        %v2528 = vadd.f32 %v2395, %v2504
        %v2529 = vadd.f32 %v2396, %v2505
        %v2530 = vadd.f32 %v2397, %v2506
        %v2531 = vadd.f32 %v2398, %v2507
        %v2532 = vadd.f32 %v2399, %v2508
        %v2533 = vadd.f32 %v2400, %v2509
        %v2534 = vadd.f32 %v2401, %v2510
        %v2535 = vadd.f32 %v2402, %v2511
        %v2536 = vadd.f32 %v2403, %v2512
        %v2537 = vadd.f32 %v2404, %v2513
        %v2538 = vadd.f32 %v2405, %v2514
        %v2539 = vadd.f32 %v2406, %v2515
        %v2540 = vadd.f32 %v2407, %v2516
        %2541 = vrot.lane.b32.xlu0 %v341, 117
        %v2542 = vpop.permute.xlu0 %2541
        %2543 = vrot.lane.b32.xlu0 %v349, 117
        %v2544 = vpop.permute.xlu0 %2543
        %2545 = vrot.lane.b32.xlu0 %v357, 117
        %v2546 = vpop.permute.xlu0 %2545
        %2547 = vrot.lane.b32.xlu0 %v342, 117
        %v2548 = vpop.permute.xlu0 %2547
        %2549 = vrot.lane.b32.xlu0 %v350, 117
        %v2550 = vpop.permute.xlu0 %2549
        %2551 = vrot.lane.b32.xlu0 %v358, 117
        %v2552 = vpop.permute.xlu0 %2551
        %2553 = vrot.lane.b32.xlu0 %v343, 117
        %v2554 = vpop.permute.xlu0 %2553
        %2555 = vrot.lane.b32.xlu0 %v351, 117
        %v2556 = vpop.permute.xlu0 %2555
        %2557 = vrot.lane.b32.xlu0 %v359, 117
        %v2558 = vpop.permute.xlu0 %2557
        %2559 = vrot.lane.b32.xlu0 %v344, 117
        %v2560 = vpop.permute.xlu0 %2559
        %2561 = vrot.lane.b32.xlu0 %v352, 117
        %v2562 = vpop.permute.xlu0 %2561
        %2563 = vrot.lane.b32.xlu0 %v360, 117
        %v2564 = vpop.permute.xlu0 %2563
        %2565 = vrot.lane.b32.xlu0 %v345, 117
        %v2566 = vpop.permute.xlu0 %2565
        %2567 = vrot.lane.b32.xlu0 %v353, 117
        %v2568 = vpop.permute.xlu0 %2567
        %2569 = vrot.lane.b32.xlu0 %v361, 117
        %v2570 = vpop.permute.xlu0 %2569
        %2571 = vrot.lane.b32.xlu0 %v346, 117
        %v2572 = vpop.permute.xlu0 %2571
        %2573 = vrot.lane.b32.xlu0 %v354, 117
        %v2574 = vpop.permute.xlu0 %2573
        %2575 = vrot.lane.b32.xlu0 %v362, 117
        %v2576 = vpop.permute.xlu0 %2575
        %2577 = vrot.lane.b32.xlu0 %v347, 117
        %v2578 = vpop.permute.xlu0 %2577
        %2579 = vrot.lane.b32.xlu0 %v355, 117
        %v2580 = vpop.permute.xlu0 %2579
        %2581 = vrot.lane.b32.xlu0 %v363, 117
        %v2582 = vpop.permute.xlu0 %2581
        %2583 = vrot.lane.b32.xlu0 %v348, 117
        %v2584 = vpop.permute.xlu0 %2583
        %2585 = vrot.lane.b32.xlu0 %v356, 117
        %v2586 = vpop.permute.xlu0 %2585
        %2587 = vrot.lane.b32.xlu0 %v364, 117
        %v2588 = vpop.permute.xlu0 %2587
        %vm2589 = vcmp.lt.s32.totalorder %v421, 117
        %v2590 = vsel %vm2589, %v2578, %v2584
        %v2591 = vsel %vm2589, %v2580, %v2586
        %v2592 = vsel %vm2589, %v2582, %v2588
        %v2593 = vsel %vm2589, %v2572, %v2578
        %v2594 = vsel %vm2589, %v2574, %v2580
        %v2595 = vsel %vm2589, %v2576, %v2582
        %v2596 = vsel %vm2589, %v2566, %v2572
        %v2597 = vsel %vm2589, %v2568, %v2574
        %v2598 = vsel %vm2589, %v2570, %v2576
        %v2599 = vsel %vm2589, %v2560, %v2566
        %v2600 = vsel %vm2589, %v2562, %v2568
        %v2601 = vsel %vm2589, %v2564, %v2570
        %v2602 = vsel %vm2589, %v2554, %v2560
        %v2603 = vsel %vm2589, %v2556, %v2562
        %v2604 = vsel %vm2589, %v2558, %v2564
        %v2605 = vsel %vm2589, %v2548, %v2554
        %v2606 = vsel %vm2589, %v2550, %v2556
        %v2607 = vsel %vm2589, %v2552, %v2558
        %v2608 = vsel %vm2589, %v2542, %v2548
        %v2609 = vsel %vm2589, %v2544, %v2550
        %v2610 = vsel %vm2589, %v2546, %v2552
        %v2611 = vsel %vm2589, %v2584, %v2542
        %v2612 = vsel %vm2589, %v2586, %v2544
        %v2613 = vsel %vm2589, %v2588, %v2546
        %2614 = vset.pattern.permute.xlu0 17
        %2615 = vperm.xlu0 %2614, %v365
        %v2616 = vpop.permute.xlu0 %2615
        %2618 = vset.pattern.permute.xlu0 17
        %2619 = vperm.xlu0 %2618, %v366
        %v2620 = vpop.permute.xlu0 %2619
        %2622 = vset.pattern.permute.xlu0 17
        %2623 = vperm.xlu0 %2622, %v367
        %v2624 = vpop.permute.xlu0 %2623
        %v2626 = vmul.f32 %v2608, %v2616
        %v2627 = vmul.f32 %v2605, %v2616
        %v2628 = vmul.f32 %v2602, %v2616
        %v2629 = vmul.f32 %v2599, %v2616
        %v2630 = vmul.f32 %v2596, %v2616
        %v2631 = vmul.f32 %v2593, %v2616
        %v2632 = vmul.f32 %v2590, %v2616
        %v2633 = vmul.f32 %v2611, %v2616
        %v2634 = vmul.f32 %v2609, %v2620
        %v2635 = vmul.f32 %v2606, %v2620
        %v2636 = vmul.f32 %v2603, %v2620
        %v2637 = vmul.f32 %v2600, %v2620
        %v2638 = vmul.f32 %v2597, %v2620
        %v2639 = vmul.f32 %v2594, %v2620
        %v2640 = vmul.f32 %v2591, %v2620
        %v2641 = vmul.f32 %v2612, %v2620
        %v2642 = vmul.f32 %v2610, %v2624
        %v2643 = vmul.f32 %v2607, %v2624
        %v2644 = vmul.f32 %v2604, %v2624
        %v2645 = vmul.f32 %v2601, %v2624
        %v2646 = vmul.f32 %v2598, %v2624
        %v2647 = vmul.f32 %v2595, %v2624
        %v2648 = vmul.f32 %v2592, %v2624
        %v2649 = vmul.f32 %v2613, %v2624
        %v2650 = vadd.f32 %v2517, %v2626
        %v2651 = vadd.f32 %v2518, %v2627
        %v2652 = vadd.f32 %v2519, %v2628
        %v2653 = vadd.f32 %v2520, %v2629
        %v2654 = vadd.f32 %v2521, %v2630
        %v2655 = vadd.f32 %v2522, %v2631
        %v2656 = vadd.f32 %v2523, %v2632
        %v2657 = vadd.f32 %v2524, %v2633
        %v2658 = vadd.f32 %v2525, %v2634
        %v2659 = vadd.f32 %v2526, %v2635
        %v2660 = vadd.f32 %v2527, %v2636
        %v2661 = vadd.f32 %v2528, %v2637
        %v2662 = vadd.f32 %v2529, %v2638
        %v2663 = vadd.f32 %v2530, %v2639
        %v2664 = vadd.f32 %v2531, %v2640
        %v2665 = vadd.f32 %v2532, %v2641
        %v2666 = vadd.f32 %v2533, %v2642
        %v2667 = vadd.f32 %v2534, %v2643
        %v2668 = vadd.f32 %v2535, %v2644
        %v2669 = vadd.f32 %v2536, %v2645
        %v2670 = vadd.f32 %v2537, %v2646
        %v2671 = vadd.f32 %v2538, %v2647
        %v2672 = vadd.f32 %v2539, %v2648
        %v2673 = vadd.f32 %v2540, %v2649
        %2674 = vrot.lane.b32.xlu0 %v341, 39
        %v2675 = vpop.permute.xlu0 %2674
        %2676 = vrot.lane.b32.xlu0 %v349, 39
        %v2677 = vpop.permute.xlu0 %2676
        %2678 = vrot.lane.b32.xlu0 %v357, 39
        %v2679 = vpop.permute.xlu0 %2678
        %2680 = vrot.lane.b32.xlu0 %v342, 39
        %v2681 = vpop.permute.xlu0 %2680
        %2682 = vrot.lane.b32.xlu0 %v350, 39
        %v2683 = vpop.permute.xlu0 %2682
        %2684 = vrot.lane.b32.xlu0 %v358, 39
        %v2685 = vpop.permute.xlu0 %2684
        %2686 = vrot.lane.b32.xlu0 %v343, 39
        %v2687 = vpop.permute.xlu0 %2686
        %2688 = vrot.lane.b32.xlu0 %v351, 39
        %v2689 = vpop.permute.xlu0 %2688
        %2690 = vrot.lane.b32.xlu0 %v359, 39
        %v2691 = vpop.permute.xlu0 %2690
        %2692 = vrot.lane.b32.xlu0 %v344, 39
        %v2693 = vpop.permute.xlu0 %2692
        %2694 = vrot.lane.b32.xlu0 %v352, 39
        %v2695 = vpop.permute.xlu0 %2694
        %2696 = vrot.lane.b32.xlu0 %v360, 39
        %v2697 = vpop.permute.xlu0 %2696
        %2698 = vrot.lane.b32.xlu0 %v345, 39
        %v2699 = vpop.permute.xlu0 %2698
        %2700 = vrot.lane.b32.xlu0 %v353, 39
        %v2701 = vpop.permute.xlu0 %2700
        %2702 = vrot.lane.b32.xlu0 %v361, 39
        %v2703 = vpop.permute.xlu0 %2702
        %2704 = vrot.lane.b32.xlu0 %v346, 39
        %v2705 = vpop.permute.xlu0 %2704
        %2706 = vrot.lane.b32.xlu0 %v354, 39
        %v2707 = vpop.permute.xlu0 %2706
        %2708 = vrot.lane.b32.xlu0 %v362, 39
        %v2709 = vpop.permute.xlu0 %2708
        %2710 = vrot.lane.b32.xlu0 %v347, 39
        %v2711 = vpop.permute.xlu0 %2710
        %2712 = vrot.lane.b32.xlu0 %v355, 39
        %v2713 = vpop.permute.xlu0 %2712
        %2714 = vrot.lane.b32.xlu0 %v363, 39
        %v2715 = vpop.permute.xlu0 %2714
        %2716 = vrot.lane.b32.xlu0 %v348, 39
        %v2717 = vpop.permute.xlu0 %2716
        %2718 = vrot.lane.b32.xlu0 %v356, 39
        %v2719 = vpop.permute.xlu0 %2718
        %2720 = vrot.lane.b32.xlu0 %v364, 39
        %v2721 = vpop.permute.xlu0 %2720
        %vm2722 = vcmp.lt.s32.totalorder %v421, 39
        %v2723 = vsel %vm2722, %v2711, %v2717
        %v2724 = vsel %vm2722, %v2713, %v2719
        %v2725 = vsel %vm2722, %v2715, %v2721
        %v2726 = vsel %vm2722, %v2705, %v2711
        %v2727 = vsel %vm2722, %v2707, %v2713
        %v2728 = vsel %vm2722, %v2709, %v2715
        %v2729 = vsel %vm2722, %v2699, %v2705
        %v2730 = vsel %vm2722, %v2701, %v2707
        %v2731 = vsel %vm2722, %v2703, %v2709
        %v2732 = vsel %vm2722, %v2693, %v2699
        %v2733 = vsel %vm2722, %v2695, %v2701
        %v2734 = vsel %vm2722, %v2697, %v2703
        %v2735 = vsel %vm2722, %v2687, %v2693
        %v2736 = vsel %vm2722, %v2689, %v2695
        %v2737 = vsel %vm2722, %v2691, %v2697
        %v2738 = vsel %vm2722, %v2681, %v2687
        %v2739 = vsel %vm2722, %v2683, %v2689
        %v2740 = vsel %vm2722, %v2685, %v2691
        %v2741 = vsel %vm2722, %v2675, %v2681
        %v2742 = vsel %vm2722, %v2677, %v2683
        %v2743 = vsel %vm2722, %v2679, %v2685
        %v2744 = vsel %vm2722, %v2717, %v2675
        %v2745 = vsel %vm2722, %v2719, %v2677
        %v2746 = vsel %vm2722, %v2721, %v2679
        %2747 = vset.pattern.permute.xlu0 18
        %2748 = vperm.xlu0 %2747, %v365
        %v2749 = vpop.permute.xlu0 %2748
        %2751 = vset.pattern.permute.xlu0 18
        %2752 = vperm.xlu0 %2751, %v366
        %v2753 = vpop.permute.xlu0 %2752
        %2755 = vset.pattern.permute.xlu0 18
        %2756 = vperm.xlu0 %2755, %v367
        %v2757 = vpop.permute.xlu0 %2756
        %v2759 = vmul.f32 %v2741, %v2749
        %v2760 = vmul.f32 %v2738, %v2749
        %v2761 = vmul.f32 %v2735, %v2749
        %v2762 = vmul.f32 %v2732, %v2749
        %v2763 = vmul.f32 %v2729, %v2749
        %v2764 = vmul.f32 %v2726, %v2749
        %v2765 = vmul.f32 %v2723, %v2749
        %v2766 = vmul.f32 %v2744, %v2749
        %v2767 = vmul.f32 %v2742, %v2753
        %v2768 = vmul.f32 %v2739, %v2753
        %v2769 = vmul.f32 %v2736, %v2753
        %v2770 = vmul.f32 %v2733, %v2753
        %v2771 = vmul.f32 %v2730, %v2753
        %v2772 = vmul.f32 %v2727, %v2753
        %v2773 = vmul.f32 %v2724, %v2753
        %v2774 = vmul.f32 %v2745, %v2753
        %v2775 = vmul.f32 %v2743, %v2757
        %v2776 = vmul.f32 %v2740, %v2757
        %v2777 = vmul.f32 %v2737, %v2757
        %v2778 = vmul.f32 %v2734, %v2757
        %v2779 = vmul.f32 %v2731, %v2757
        %v2780 = vmul.f32 %v2728, %v2757
        %v2781 = vmul.f32 %v2725, %v2757
        %v2782 = vmul.f32 %v2746, %v2757
        %v2783 = vadd.f32 %v2650, %v2759
        %v2784 = vadd.f32 %v2651, %v2760
        %v2785 = vadd.f32 %v2652, %v2761
        %v2786 = vadd.f32 %v2653, %v2762
        %v2787 = vadd.f32 %v2654, %v2763
        %v2788 = vadd.f32 %v2655, %v2764
        %v2789 = vadd.f32 %v2656, %v2765
        %v2790 = vadd.f32 %v2657, %v2766
        %v2791 = vadd.f32 %v2658, %v2767
        %v2792 = vadd.f32 %v2659, %v2768
        %v2793 = vadd.f32 %v2660, %v2769
        %v2794 = vadd.f32 %v2661, %v2770
        %v2795 = vadd.f32 %v2662, %v2771
        %v2796 = vadd.f32 %v2663, %v2772
        %v2797 = vadd.f32 %v2664, %v2773
        %v2798 = vadd.f32 %v2665, %v2774
        %v2799 = vadd.f32 %v2666, %v2775
        %v2800 = vadd.f32 %v2667, %v2776
        %v2801 = vadd.f32 %v2668, %v2777
        %v2802 = vadd.f32 %v2669, %v2778
        %v2803 = vadd.f32 %v2670, %v2779
        %v2804 = vadd.f32 %v2671, %v2780
        %v2805 = vadd.f32 %v2672, %v2781
        %v2806 = vadd.f32 %v2673, %v2782
        %2807 = vrot.lane.b32.xlu0 %v341, 38
        %v2808 = vpop.permute.xlu0 %2807
        %2809 = vrot.lane.b32.xlu0 %v349, 38
        %v2810 = vpop.permute.xlu0 %2809
        %2811 = vrot.lane.b32.xlu0 %v357, 38
        %v2812 = vpop.permute.xlu0 %2811
        %2813 = vrot.lane.b32.xlu0 %v342, 38
        %v2814 = vpop.permute.xlu0 %2813
        %2815 = vrot.lane.b32.xlu0 %v350, 38
        %v2816 = vpop.permute.xlu0 %2815
        %2817 = vrot.lane.b32.xlu0 %v358, 38
        %v2818 = vpop.permute.xlu0 %2817
        %2819 = vrot.lane.b32.xlu0 %v343, 38
        %v2820 = vpop.permute.xlu0 %2819
        %2821 = vrot.lane.b32.xlu0 %v351, 38
        %v2822 = vpop.permute.xlu0 %2821
        %2823 = vrot.lane.b32.xlu0 %v359, 38
        %v2824 = vpop.permute.xlu0 %2823
        %2825 = vrot.lane.b32.xlu0 %v344, 38
        %v2826 = vpop.permute.xlu0 %2825
        %2827 = vrot.lane.b32.xlu0 %v352, 38
        %v2828 = vpop.permute.xlu0 %2827
        %2829 = vrot.lane.b32.xlu0 %v360, 38
        %v2830 = vpop.permute.xlu0 %2829
        %2831 = vrot.lane.b32.xlu0 %v345, 38
        %v2832 = vpop.permute.xlu0 %2831
        %2833 = vrot.lane.b32.xlu0 %v353, 38
        %v2834 = vpop.permute.xlu0 %2833
        %2835 = vrot.lane.b32.xlu0 %v361, 38
        %v2836 = vpop.permute.xlu0 %2835
        %2837 = vrot.lane.b32.xlu0 %v346, 38
        %v2838 = vpop.permute.xlu0 %2837
        %2839 = vrot.lane.b32.xlu0 %v354, 38
        %v2840 = vpop.permute.xlu0 %2839
        %2841 = vrot.lane.b32.xlu0 %v362, 38
        %v2842 = vpop.permute.xlu0 %2841
        %2843 = vrot.lane.b32.xlu0 %v347, 38
        %v2844 = vpop.permute.xlu0 %2843
        %2845 = vrot.lane.b32.xlu0 %v355, 38
        %v2846 = vpop.permute.xlu0 %2845
        %2847 = vrot.lane.b32.xlu0 %v363, 38
        %v2848 = vpop.permute.xlu0 %2847
        %2849 = vrot.lane.b32.xlu0 %v348, 38
        %v2850 = vpop.permute.xlu0 %2849
        %2851 = vrot.lane.b32.xlu0 %v356, 38
        %v2852 = vpop.permute.xlu0 %2851
        %2853 = vrot.lane.b32.xlu0 %v364, 38
        %v2854 = vpop.permute.xlu0 %2853
        %vm2855 = vcmp.lt.s32.totalorder %v421, 38
        %v2856 = vsel %vm2855, %v2844, %v2850
        %v2857 = vsel %vm2855, %v2846, %v2852
        %v2858 = vsel %vm2855, %v2848, %v2854
        %v2859 = vsel %vm2855, %v2838, %v2844
        %v2860 = vsel %vm2855, %v2840, %v2846
        %v2861 = vsel %vm2855, %v2842, %v2848
        %v2862 = vsel %vm2855, %v2832, %v2838
        %v2863 = vsel %vm2855, %v2834, %v2840
        %v2864 = vsel %vm2855, %v2836, %v2842
        %v2865 = vsel %vm2855, %v2826, %v2832
        %v2866 = vsel %vm2855, %v2828, %v2834
        %v2867 = vsel %vm2855, %v2830, %v2836
        %v2868 = vsel %vm2855, %v2820, %v2826
        %v2869 = vsel %vm2855, %v2822, %v2828
        %v2870 = vsel %vm2855, %v2824, %v2830
        %v2871 = vsel %vm2855, %v2814, %v2820
        %v2872 = vsel %vm2855, %v2816, %v2822
        %v2873 = vsel %vm2855, %v2818, %v2824
        %v2874 = vsel %vm2855, %v2808, %v2814
        %v2875 = vsel %vm2855, %v2810, %v2816
        %v2876 = vsel %vm2855, %v2812, %v2818
        %v2877 = vsel %vm2855, %v2850, %v2808
        %v2878 = vsel %vm2855, %v2852, %v2810
        %v2879 = vsel %vm2855, %v2854, %v2812
        %2880 = vset.pattern.permute.xlu0 19
        %2881 = vperm.xlu0 %2880, %v365
        %v2882 = vpop.permute.xlu0 %2881
        %2884 = vset.pattern.permute.xlu0 19
        %2885 = vperm.xlu0 %2884, %v366
        %v2886 = vpop.permute.xlu0 %2885
        %2888 = vset.pattern.permute.xlu0 19
        %2889 = vperm.xlu0 %2888, %v367
        %v2890 = vpop.permute.xlu0 %2889
        %v2892 = vmul.f32 %v2874, %v2882
        %v2893 = vmul.f32 %v2871, %v2882
        %v2894 = vmul.f32 %v2868, %v2882
        %v2895 = vmul.f32 %v2865, %v2882
        %v2896 = vmul.f32 %v2862, %v2882
        %v2897 = vmul.f32 %v2859, %v2882
        %v2898 = vmul.f32 %v2856, %v2882
        %v2899 = vmul.f32 %v2877, %v2882
        %v2900 = vmul.f32 %v2875, %v2886
        %v2901 = vmul.f32 %v2872, %v2886
        %v2902 = vmul.f32 %v2869, %v2886
        %v2903 = vmul.f32 %v2866, %v2886
        %v2904 = vmul.f32 %v2863, %v2886
        %v2905 = vmul.f32 %v2860, %v2886
        %v2906 = vmul.f32 %v2857, %v2886
        %v2907 = vmul.f32 %v2878, %v2886
        %v2908 = vmul.f32 %v2876, %v2890
        %v2909 = vmul.f32 %v2873, %v2890
        %v2910 = vmul.f32 %v2870, %v2890
        %v2911 = vmul.f32 %v2867, %v2890
        %v2912 = vmul.f32 %v2864, %v2890
        %v2913 = vmul.f32 %v2861, %v2890
        %v2914 = vmul.f32 %v2858, %v2890
        %v2915 = vmul.f32 %v2879, %v2890
        %v2916 = vadd.f32 %v2783, %v2892
        %v2917 = vadd.f32 %v2784, %v2893
        %v2918 = vadd.f32 %v2785, %v2894
        %v2919 = vadd.f32 %v2786, %v2895
        %v2920 = vadd.f32 %v2787, %v2896
        %v2921 = vadd.f32 %v2788, %v2897
        %v2922 = vadd.f32 %v2789, %v2898
        %v2923 = vadd.f32 %v2790, %v2899
        %v2924 = vadd.f32 %v2791, %v2900
        %v2925 = vadd.f32 %v2792, %v2901
        %v2926 = vadd.f32 %v2793, %v2902
        %v2927 = vadd.f32 %v2794, %v2903
        %v2928 = vadd.f32 %v2795, %v2904
        %v2929 = vadd.f32 %v2796, %v2905
        %v2930 = vadd.f32 %v2797, %v2906
        %v2931 = vadd.f32 %v2798, %v2907
        %v2932 = vadd.f32 %v2799, %v2908
        %v2933 = vadd.f32 %v2800, %v2909
        %v2934 = vadd.f32 %v2801, %v2910
        %v2935 = vadd.f32 %v2802, %v2911
        %v2936 = vadd.f32 %v2803, %v2912
        %v2937 = vadd.f32 %v2804, %v2913
        %v2938 = vadd.f32 %v2805, %v2914
        %v2939 = vadd.f32 %v2806, %v2915
        %2940 = vrot.lane.b32.xlu0 %v341, 37
        %v2941 = vpop.permute.xlu0 %2940
        %2942 = vrot.lane.b32.xlu0 %v349, 37
        %v2943 = vpop.permute.xlu0 %2942
        %2944 = vrot.lane.b32.xlu0 %v357, 37
        %v2945 = vpop.permute.xlu0 %2944
        %2946 = vrot.lane.b32.xlu0 %v342, 37
        %v2947 = vpop.permute.xlu0 %2946
        %2948 = vrot.lane.b32.xlu0 %v350, 37
        %v2949 = vpop.permute.xlu0 %2948
        %2950 = vrot.lane.b32.xlu0 %v358, 37
        %v2951 = vpop.permute.xlu0 %2950
        %2952 = vrot.lane.b32.xlu0 %v343, 37
        %v2953 = vpop.permute.xlu0 %2952
        %2954 = vrot.lane.b32.xlu0 %v351, 37
        %v2955 = vpop.permute.xlu0 %2954
        %2956 = vrot.lane.b32.xlu0 %v359, 37
        %v2957 = vpop.permute.xlu0 %2956
        %2958 = vrot.lane.b32.xlu0 %v344, 37
        %v2959 = vpop.permute.xlu0 %2958
        %2960 = vrot.lane.b32.xlu0 %v352, 37
        %v2961 = vpop.permute.xlu0 %2960
        %2962 = vrot.lane.b32.xlu0 %v360, 37
        %v2963 = vpop.permute.xlu0 %2962
        %2964 = vrot.lane.b32.xlu0 %v345, 37
        %v2965 = vpop.permute.xlu0 %2964
        %2966 = vrot.lane.b32.xlu0 %v353, 37
        %v2967 = vpop.permute.xlu0 %2966
        %2968 = vrot.lane.b32.xlu0 %v361, 37
        %v2969 = vpop.permute.xlu0 %2968
        %2970 = vrot.lane.b32.xlu0 %v346, 37
        %v2971 = vpop.permute.xlu0 %2970
        %2972 = vrot.lane.b32.xlu0 %v354, 37
        %v2973 = vpop.permute.xlu0 %2972
        %2974 = vrot.lane.b32.xlu0 %v362, 37
        %v2975 = vpop.permute.xlu0 %2974
        %2976 = vrot.lane.b32.xlu0 %v347, 37
        %v2977 = vpop.permute.xlu0 %2976
        %2978 = vrot.lane.b32.xlu0 %v355, 37
        %v2979 = vpop.permute.xlu0 %2978
        %2980 = vrot.lane.b32.xlu0 %v363, 37
        %v2981 = vpop.permute.xlu0 %2980
        %2982 = vrot.lane.b32.xlu0 %v348, 37
        %v2983 = vpop.permute.xlu0 %2982
        %2984 = vrot.lane.b32.xlu0 %v356, 37
        %v2985 = vpop.permute.xlu0 %2984
        %2986 = vrot.lane.b32.xlu0 %v364, 37
        %v2987 = vpop.permute.xlu0 %2986
        %vm2988 = vcmp.lt.s32.totalorder %v421, 37
        %v2989 = vsel %vm2988, %v2977, %v2983
        %v2990 = vsel %vm2988, %v2979, %v2985
        %v2991 = vsel %vm2988, %v2981, %v2987
        %v2992 = vsel %vm2988, %v2971, %v2977
        %v2993 = vsel %vm2988, %v2973, %v2979
        %v2994 = vsel %vm2988, %v2975, %v2981
        %v2995 = vsel %vm2988, %v2965, %v2971
        %v2996 = vsel %vm2988, %v2967, %v2973
        %v2997 = vsel %vm2988, %v2969, %v2975
        %v2998 = vsel %vm2988, %v2959, %v2965
        %v2999 = vsel %vm2988, %v2961, %v2967
        %v3000 = vsel %vm2988, %v2963, %v2969
        %v3001 = vsel %vm2988, %v2953, %v2959
        %v3002 = vsel %vm2988, %v2955, %v2961
        %v3003 = vsel %vm2988, %v2957, %v2963
        %v3004 = vsel %vm2988, %v2947, %v2953
        %v3005 = vsel %vm2988, %v2949, %v2955
        %v3006 = vsel %vm2988, %v2951, %v2957
        %v3007 = vsel %vm2988, %v2941, %v2947
        %v3008 = vsel %vm2988, %v2943, %v2949
        %v3009 = vsel %vm2988, %v2945, %v2951
        %v3010 = vsel %vm2988, %v2983, %v2941
        %v3011 = vsel %vm2988, %v2985, %v2943
        %v3012 = vsel %vm2988, %v2987, %v2945
        %3013 = vset.pattern.permute.xlu0 20
        %3014 = vperm.xlu0 %3013, %v365
        %v3015 = vpop.permute.xlu0 %3014
        %3017 = vset.pattern.permute.xlu0 20
        %3018 = vperm.xlu0 %3017, %v366
        %v3019 = vpop.permute.xlu0 %3018
        %3021 = vset.pattern.permute.xlu0 20
        %3022 = vperm.xlu0 %3021, %v367
        %v3023 = vpop.permute.xlu0 %3022
        %v3025 = vmul.f32 %v3007, %v3015
        %v3026 = vmul.f32 %v3004, %v3015
        %v3027 = vmul.f32 %v3001, %v3015
        %v3028 = vmul.f32 %v2998, %v3015
        %v3029 = vmul.f32 %v2995, %v3015
        %v3030 = vmul.f32 %v2992, %v3015
        %v3031 = vmul.f32 %v2989, %v3015
        %v3032 = vmul.f32 %v3010, %v3015
        %v3033 = vmul.f32 %v3008, %v3019
        %v3034 = vmul.f32 %v3005, %v3019
        %v3035 = vmul.f32 %v3002, %v3019
        %v3036 = vmul.f32 %v2999, %v3019
        %v3037 = vmul.f32 %v2996, %v3019
        %v3038 = vmul.f32 %v2993, %v3019
        %v3039 = vmul.f32 %v2990, %v3019
        %v3040 = vmul.f32 %v3011, %v3019
        %v3041 = vmul.f32 %v3009, %v3023
        %v3042 = vmul.f32 %v3006, %v3023
        %v3043 = vmul.f32 %v3003, %v3023
        %v3044 = vmul.f32 %v3000, %v3023
        %v3045 = vmul.f32 %v2997, %v3023
        %v3046 = vmul.f32 %v2994, %v3023
        %v3047 = vmul.f32 %v2991, %v3023
        %v3048 = vmul.f32 %v3012, %v3023
        %v3049 = vadd.f32 %v2916, %v3025
        %v3050 = vadd.f32 %v2917, %v3026
        %v3051 = vadd.f32 %v2918, %v3027
        %v3052 = vadd.f32 %v2919, %v3028
        %v3053 = vadd.f32 %v2920, %v3029
        %v3054 = vadd.f32 %v2921, %v3030
        %v3055 = vadd.f32 %v2922, %v3031
        %v3056 = vadd.f32 %v2923, %v3032
        %v3057 = vadd.f32 %v2924, %v3033
        %v3058 = vadd.f32 %v2925, %v3034
        %v3059 = vadd.f32 %v2926, %v3035
        %v3060 = vadd.f32 %v2927, %v3036
        %v3061 = vadd.f32 %v2928, %v3037
        %v3062 = vadd.f32 %v2929, %v3038
        %v3063 = vadd.f32 %v2930, %v3039
        %v3064 = vadd.f32 %v2931, %v3040
        %v3065 = vadd.f32 %v2932, %v3041
        %v3066 = vadd.f32 %v2933, %v3042
        %v3067 = vadd.f32 %v2934, %v3043
        %v3068 = vadd.f32 %v2935, %v3044
        %v3069 = vadd.f32 %v2936, %v3045
        %v3070 = vadd.f32 %v2937, %v3046
        %v3071 = vadd.f32 %v2938, %v3047
        %v3072 = vadd.f32 %v2939, %v3048
        %3073 = vrot.lane.b32.xlu0 %v341, 29
        %v3074 = vpop.permute.xlu0 %3073
        %3075 = vrot.lane.b32.xlu0 %v349, 29
        %v3076 = vpop.permute.xlu0 %3075
        %3077 = vrot.lane.b32.xlu0 %v357, 29
        %v3078 = vpop.permute.xlu0 %3077
        %3079 = vrot.lane.b32.xlu0 %v342, 29
        %v3080 = vpop.permute.xlu0 %3079
        %3081 = vrot.lane.b32.xlu0 %v350, 29
        %v3082 = vpop.permute.xlu0 %3081
        %3083 = vrot.lane.b32.xlu0 %v358, 29
        %v3084 = vpop.permute.xlu0 %3083
        %3085 = vrot.lane.b32.xlu0 %v343, 29
        %v3086 = vpop.permute.xlu0 %3085
        %3087 = vrot.lane.b32.xlu0 %v351, 29
        %v3088 = vpop.permute.xlu0 %3087
        %3089 = vrot.lane.b32.xlu0 %v359, 29
        %v3090 = vpop.permute.xlu0 %3089
        %3091 = vrot.lane.b32.xlu0 %v344, 29
        %v3092 = vpop.permute.xlu0 %3091
        %3093 = vrot.lane.b32.xlu0 %v352, 29
        %v3094 = vpop.permute.xlu0 %3093
        %3095 = vrot.lane.b32.xlu0 %v360, 29
        %v3096 = vpop.permute.xlu0 %3095
        %3097 = vrot.lane.b32.xlu0 %v345, 29
        %v3098 = vpop.permute.xlu0 %3097
        %3099 = vrot.lane.b32.xlu0 %v353, 29
        %v3100 = vpop.permute.xlu0 %3099
        %3101 = vrot.lane.b32.xlu0 %v361, 29
        %v3102 = vpop.permute.xlu0 %3101
        %3103 = vrot.lane.b32.xlu0 %v346, 29
        %v3104 = vpop.permute.xlu0 %3103
        %3105 = vrot.lane.b32.xlu0 %v354, 29
        %v3106 = vpop.permute.xlu0 %3105
        %3107 = vrot.lane.b32.xlu0 %v362, 29
        %v3108 = vpop.permute.xlu0 %3107
        %3109 = vrot.lane.b32.xlu0 %v347, 29
        %v3110 = vpop.permute.xlu0 %3109
        %3111 = vrot.lane.b32.xlu0 %v355, 29
        %v3112 = vpop.permute.xlu0 %3111
        %3113 = vrot.lane.b32.xlu0 %v363, 29
        %v3114 = vpop.permute.xlu0 %3113
        %3115 = vrot.lane.b32.xlu0 %v348, 29
        %v3116 = vpop.permute.xlu0 %3115
        %3117 = vrot.lane.b32.xlu0 %v356, 29
        %v3118 = vpop.permute.xlu0 %3117
        %3119 = vrot.lane.b32.xlu0 %v364, 29
        %v3120 = vpop.permute.xlu0 %3119
        %vm3121 = vcmp.lt.s32.totalorder %v421, 29
        %v3122 = vsel %vm3121, %v3110, %v3116
        %v3123 = vsel %vm3121, %v3112, %v3118
        %v3124 = vsel %vm3121, %v3114, %v3120
        %v3125 = vsel %vm3121, %v3104, %v3110
        %v3126 = vsel %vm3121, %v3106, %v3112
        %v3127 = vsel %vm3121, %v3108, %v3114
        %v3128 = vsel %vm3121, %v3098, %v3104
        %v3129 = vsel %vm3121, %v3100, %v3106
        %v3130 = vsel %vm3121, %v3102, %v3108
        %v3131 = vsel %vm3121, %v3092, %v3098
        %v3132 = vsel %vm3121, %v3094, %v3100
        %v3133 = vsel %vm3121, %v3096, %v3102
        %v3134 = vsel %vm3121, %v3086, %v3092
        %v3135 = vsel %vm3121, %v3088, %v3094
        %v3136 = vsel %vm3121, %v3090, %v3096
        %v3137 = vsel %vm3121, %v3080, %v3086
        %v3138 = vsel %vm3121, %v3082, %v3088
        %v3139 = vsel %vm3121, %v3084, %v3090
        %v3140 = vsel %vm3121, %v3074, %v3080
        %v3141 = vsel %vm3121, %v3076, %v3082
        %v3142 = vsel %vm3121, %v3078, %v3084
        %v3143 = vsel %vm3121, %v3116, %v3074
        %v3144 = vsel %vm3121, %v3118, %v3076
        %v3145 = vsel %vm3121, %v3120, %v3078
        %3146 = vset.pattern.permute.xlu0 21
        %3147 = vperm.xlu0 %3146, %v365
        %v3148 = vpop.permute.xlu0 %3147
        %3150 = vset.pattern.permute.xlu0 21
        %3151 = vperm.xlu0 %3150, %v366
        %v3152 = vpop.permute.xlu0 %3151
        %3154 = vset.pattern.permute.xlu0 21
        %3155 = vperm.xlu0 %3154, %v367
        %v3156 = vpop.permute.xlu0 %3155
        %v3158 = vmul.f32 %v3140, %v3148
        %v3159 = vmul.f32 %v3137, %v3148
        %v3160 = vmul.f32 %v3134, %v3148
        %v3161 = vmul.f32 %v3131, %v3148
        %v3162 = vmul.f32 %v3128, %v3148
        %v3163 = vmul.f32 %v3125, %v3148
        %v3164 = vmul.f32 %v3122, %v3148
        %v3165 = vmul.f32 %v3143, %v3148
        %v3166 = vmul.f32 %v3141, %v3152
        %v3167 = vmul.f32 %v3138, %v3152
        %v3168 = vmul.f32 %v3135, %v3152
        %v3169 = vmul.f32 %v3132, %v3152
        %v3170 = vmul.f32 %v3129, %v3152
        %v3171 = vmul.f32 %v3126, %v3152
        %v3172 = vmul.f32 %v3123, %v3152
        %v3173 = vmul.f32 %v3144, %v3152
        %v3174 = vmul.f32 %v3142, %v3156
        %v3175 = vmul.f32 %v3139, %v3156
        %v3176 = vmul.f32 %v3136, %v3156
        %v3177 = vmul.f32 %v3133, %v3156
        %v3178 = vmul.f32 %v3130, %v3156
        %v3179 = vmul.f32 %v3127, %v3156
        %v3180 = vmul.f32 %v3124, %v3156
        %v3181 = vmul.f32 %v3145, %v3156
        %v3182 = vadd.f32 %v3049, %v3158
        %v3183 = vadd.f32 %v3050, %v3159
        %v3184 = vadd.f32 %v3051, %v3160
        %v3185 = vadd.f32 %v3052, %v3161
        %v3186 = vadd.f32 %v3053, %v3162
        %v3187 = vadd.f32 %v3054, %v3163
        %v3188 = vadd.f32 %v3055, %v3164
        %v3189 = vadd.f32 %v3056, %v3165
        %v3190 = vadd.f32 %v3057, %v3166
        %v3191 = vadd.f32 %v3058, %v3167
        %v3192 = vadd.f32 %v3059, %v3168
        %v3193 = vadd.f32 %v3060, %v3169
        %v3194 = vadd.f32 %v3061, %v3170
        %v3195 = vadd.f32 %v3062, %v3171
        %v3196 = vadd.f32 %v3063, %v3172
        %v3197 = vadd.f32 %v3064, %v3173
        %v3198 = vadd.f32 %v3065, %v3174
        %v3199 = vadd.f32 %v3066, %v3175
        %v3200 = vadd.f32 %v3067, %v3176
        %v3201 = vadd.f32 %v3068, %v3177
        %v3202 = vadd.f32 %v3069, %v3178
        %v3203 = vadd.f32 %v3070, %v3179
        %v3204 = vadd.f32 %v3071, %v3180
        %v3205 = vadd.f32 %v3072, %v3181
        %3206 = vrot.lane.b32.xlu0 %v341, 28
        %v3207 = vpop.permute.xlu0 %3206
        %3208 = vrot.lane.b32.xlu0 %v349, 28
        %v3209 = vpop.permute.xlu0 %3208
        %3210 = vrot.lane.b32.xlu0 %v357, 28
        %v3211 = vpop.permute.xlu0 %3210
        %3212 = vrot.lane.b32.xlu0 %v342, 28
        %v3213 = vpop.permute.xlu0 %3212
        %3214 = vrot.lane.b32.xlu0 %v350, 28
        %v3215 = vpop.permute.xlu0 %3214
        %3216 = vrot.lane.b32.xlu0 %v358, 28
        %v3217 = vpop.permute.xlu0 %3216
        %3218 = vrot.lane.b32.xlu0 %v343, 28
        %v3219 = vpop.permute.xlu0 %3218
        %3220 = vrot.lane.b32.xlu0 %v351, 28
        %v3221 = vpop.permute.xlu0 %3220
        %3222 = vrot.lane.b32.xlu0 %v359, 28
        %v3223 = vpop.permute.xlu0 %3222
        %3224 = vrot.lane.b32.xlu0 %v344, 28
        %v3225 = vpop.permute.xlu0 %3224
        %3226 = vrot.lane.b32.xlu0 %v352, 28
        %v3227 = vpop.permute.xlu0 %3226
        %3228 = vrot.lane.b32.xlu0 %v360, 28
        %v3229 = vpop.permute.xlu0 %3228
        %3230 = vrot.lane.b32.xlu0 %v345, 28
        %v3231 = vpop.permute.xlu0 %3230
        %3232 = vrot.lane.b32.xlu0 %v353, 28
        %v3233 = vpop.permute.xlu0 %3232
        %3234 = vrot.lane.b32.xlu0 %v361, 28
        %v3235 = vpop.permute.xlu0 %3234
        %3236 = vrot.lane.b32.xlu0 %v346, 28
        %v3237 = vpop.permute.xlu0 %3236
        %3238 = vrot.lane.b32.xlu0 %v354, 28
        %v3239 = vpop.permute.xlu0 %3238
        %3240 = vrot.lane.b32.xlu0 %v362, 28
        %v3241 = vpop.permute.xlu0 %3240
        %3242 = vrot.lane.b32.xlu0 %v347, 28
        %v3243 = vpop.permute.xlu0 %3242
        %3244 = vrot.lane.b32.xlu0 %v355, 28
        %v3245 = vpop.permute.xlu0 %3244
        %3246 = vrot.lane.b32.xlu0 %v363, 28
        %v3247 = vpop.permute.xlu0 %3246
        %3248 = vrot.lane.b32.xlu0 %v348, 28
        %v3249 = vpop.permute.xlu0 %3248
        %3250 = vrot.lane.b32.xlu0 %v356, 28
        %v3251 = vpop.permute.xlu0 %3250
        %3252 = vrot.lane.b32.xlu0 %v364, 28
        %v3253 = vpop.permute.xlu0 %3252
        %vm3254 = vcmp.lt.s32.totalorder %v421, 28
        %v3255 = vsel %vm3254, %v3243, %v3249
        %v3256 = vsel %vm3254, %v3245, %v3251
        %v3257 = vsel %vm3254, %v3247, %v3253
        %v3258 = vsel %vm3254, %v3237, %v3243
        %v3259 = vsel %vm3254, %v3239, %v3245
        %v3260 = vsel %vm3254, %v3241, %v3247
        %v3261 = vsel %vm3254, %v3231, %v3237
        %v3262 = vsel %vm3254, %v3233, %v3239
        %v3263 = vsel %vm3254, %v3235, %v3241
        %v3264 = vsel %vm3254, %v3225, %v3231
        %v3265 = vsel %vm3254, %v3227, %v3233
        %v3266 = vsel %vm3254, %v3229, %v3235
        %v3267 = vsel %vm3254, %v3219, %v3225
        %v3268 = vsel %vm3254, %v3221, %v3227
        %v3269 = vsel %vm3254, %v3223, %v3229
        %v3270 = vsel %vm3254, %v3213, %v3219
        %v3271 = vsel %vm3254, %v3215, %v3221
        %v3272 = vsel %vm3254, %v3217, %v3223
        %v3273 = vsel %vm3254, %v3207, %v3213
        %v3274 = vsel %vm3254, %v3209, %v3215
        %v3275 = vsel %vm3254, %v3211, %v3217
        %v3276 = vsel %vm3254, %v3249, %v3207
        %v3277 = vsel %vm3254, %v3251, %v3209
        %v3278 = vsel %vm3254, %v3253, %v3211
        %3279 = vset.pattern.permute.xlu0 22
        %3280 = vperm.xlu0 %3279, %v365
        %v3281 = vpop.permute.xlu0 %3280
        %3283 = vset.pattern.permute.xlu0 22
        %3284 = vperm.xlu0 %3283, %v366
        %v3285 = vpop.permute.xlu0 %3284
        %3287 = vset.pattern.permute.xlu0 22
        %3288 = vperm.xlu0 %3287, %v367
        %v3289 = vpop.permute.xlu0 %3288
        %v3291 = vmul.f32 %v3273, %v3281
        %v3292 = vmul.f32 %v3270, %v3281
        %v3293 = vmul.f32 %v3267, %v3281
        %v3294 = vmul.f32 %v3264, %v3281
        %v3295 = vmul.f32 %v3261, %v3281
        %v3296 = vmul.f32 %v3258, %v3281
        %v3297 = vmul.f32 %v3255, %v3281
        %v3298 = vmul.f32 %v3276, %v3281
        %v3299 = vmul.f32 %v3274, %v3285
        %v3300 = vmul.f32 %v3271, %v3285
        %v3301 = vmul.f32 %v3268, %v3285
        %v3302 = vmul.f32 %v3265, %v3285
        %v3303 = vmul.f32 %v3262, %v3285
        %v3304 = vmul.f32 %v3259, %v3285
        %v3305 = vmul.f32 %v3256, %v3285
        %v3306 = vmul.f32 %v3277, %v3285
        %v3307 = vmul.f32 %v3275, %v3289
        %v3308 = vmul.f32 %v3272, %v3289
        %v3309 = vmul.f32 %v3269, %v3289
        %v3310 = vmul.f32 %v3266, %v3289
        %v3311 = vmul.f32 %v3263, %v3289
        %v3312 = vmul.f32 %v3260, %v3289
        %v3313 = vmul.f32 %v3257, %v3289
        %v3314 = vmul.f32 %v3278, %v3289
        %v3315 = vadd.f32 %v3182, %v3291
        %v3316 = vadd.f32 %v3183, %v3292
        %v3317 = vadd.f32 %v3184, %v3293
        %v3318 = vadd.f32 %v3185, %v3294
        %v3319 = vadd.f32 %v3186, %v3295
        %v3320 = vadd.f32 %v3187, %v3296
        %v3321 = vadd.f32 %v3188, %v3297
        %v3322 = vadd.f32 %v3189, %v3298
        %v3323 = vadd.f32 %v3190, %v3299
        %v3324 = vadd.f32 %v3191, %v3300
        %v3325 = vadd.f32 %v3192, %v3301
        %v3326 = vadd.f32 %v3193, %v3302
        %v3327 = vadd.f32 %v3194, %v3303
        %v3328 = vadd.f32 %v3195, %v3304
        %v3329 = vadd.f32 %v3196, %v3305
        %v3330 = vadd.f32 %v3197, %v3306
        %v3331 = vadd.f32 %v3198, %v3307
        %v3332 = vadd.f32 %v3199, %v3308
        %v3333 = vadd.f32 %v3200, %v3309
        %v3334 = vadd.f32 %v3201, %v3310
        %v3335 = vadd.f32 %v3202, %v3311
        %v3336 = vadd.f32 %v3203, %v3312
        %v3337 = vadd.f32 %v3204, %v3313
        %v3338 = vadd.f32 %v3205, %v3314
        %3339 = vrot.lane.b32.xlu0 %v341, 27
        %v3340 = vpop.permute.xlu0 %3339
        %3341 = vrot.lane.b32.xlu0 %v349, 27
        %v3342 = vpop.permute.xlu0 %3341
        %3343 = vrot.lane.b32.xlu0 %v357, 27
        %v3344 = vpop.permute.xlu0 %3343
        %3345 = vrot.lane.b32.xlu0 %v342, 27
        %v3346 = vpop.permute.xlu0 %3345
        %3347 = vrot.lane.b32.xlu0 %v350, 27
        %v3348 = vpop.permute.xlu0 %3347
        %3349 = vrot.lane.b32.xlu0 %v358, 27
        %v3350 = vpop.permute.xlu0 %3349
        %3351 = vrot.lane.b32.xlu0 %v343, 27
        %v3352 = vpop.permute.xlu0 %3351
        %3353 = vrot.lane.b32.xlu0 %v351, 27
        %v3354 = vpop.permute.xlu0 %3353
        %3355 = vrot.lane.b32.xlu0 %v359, 27
        %v3356 = vpop.permute.xlu0 %3355
        %3357 = vrot.lane.b32.xlu0 %v344, 27
        %v3358 = vpop.permute.xlu0 %3357
        %3359 = vrot.lane.b32.xlu0 %v352, 27
        %v3360 = vpop.permute.xlu0 %3359
        %3361 = vrot.lane.b32.xlu0 %v360, 27
        %v3362 = vpop.permute.xlu0 %3361
        %3363 = vrot.lane.b32.xlu0 %v345, 27
        %v3364 = vpop.permute.xlu0 %3363
        %3365 = vrot.lane.b32.xlu0 %v353, 27
        %v3366 = vpop.permute.xlu0 %3365
        %3367 = vrot.lane.b32.xlu0 %v361, 27
        %v3368 = vpop.permute.xlu0 %3367
        %3369 = vrot.lane.b32.xlu0 %v346, 27
        %v3370 = vpop.permute.xlu0 %3369
        %3371 = vrot.lane.b32.xlu0 %v354, 27
        %v3372 = vpop.permute.xlu0 %3371
        %3373 = vrot.lane.b32.xlu0 %v362, 27
        %v3374 = vpop.permute.xlu0 %3373
        %3375 = vrot.lane.b32.xlu0 %v347, 27
        %v3376 = vpop.permute.xlu0 %3375
        %3377 = vrot.lane.b32.xlu0 %v355, 27
        %v3378 = vpop.permute.xlu0 %3377
        %3379 = vrot.lane.b32.xlu0 %v363, 27
        %v3380 = vpop.permute.xlu0 %3379
        %3381 = vrot.lane.b32.xlu0 %v348, 27
        %v3382 = vpop.permute.xlu0 %3381
        %3383 = vrot.lane.b32.xlu0 %v356, 27
        %v3384 = vpop.permute.xlu0 %3383
        %3385 = vrot.lane.b32.xlu0 %v364, 27
        %v3386 = vpop.permute.xlu0 %3385
        %vm3387 = vcmp.lt.s32.totalorder %v421, 27
        %v3388 = vsel %vm3387, %v3376, %v3382
        %v3389 = vsel %vm3387, %v3378, %v3384
        %v3390 = vsel %vm3387, %v3380, %v3386
        %v3391 = vsel %vm3387, %v3370, %v3376
        %v3392 = vsel %vm3387, %v3372, %v3378
        %v3393 = vsel %vm3387, %v3374, %v3380
        %v3394 = vsel %vm3387, %v3364, %v3370
        %v3395 = vsel %vm3387, %v3366, %v3372
        %v3396 = vsel %vm3387, %v3368, %v3374
        %v3397 = vsel %vm3387, %v3358, %v3364
        %v3398 = vsel %vm3387, %v3360, %v3366
        %v3399 = vsel %vm3387, %v3362, %v3368
        %v3400 = vsel %vm3387, %v3352, %v3358
        %v3401 = vsel %vm3387, %v3354, %v3360
        %v3402 = vsel %vm3387, %v3356, %v3362
        %v3403 = vsel %vm3387, %v3346, %v3352
        %v3404 = vsel %vm3387, %v3348, %v3354
        %v3405 = vsel %vm3387, %v3350, %v3356
        %v3406 = vsel %vm3387, %v3340, %v3346
        %v3407 = vsel %vm3387, %v3342, %v3348
        %v3408 = vsel %vm3387, %v3344, %v3350
        %v3409 = vsel %vm3387, %v3382, %v3340
        %v3410 = vsel %vm3387, %v3384, %v3342
        %v3411 = vsel %vm3387, %v3386, %v3344
        %3412 = vset.pattern.permute.xlu0 23
        %3413 = vperm.xlu0 %3412, %v365
        %v3414 = vpop.permute.xlu0 %3413
        %3416 = vset.pattern.permute.xlu0 23
        %3417 = vperm.xlu0 %3416, %v366
        %v3418 = vpop.permute.xlu0 %3417
        %3420 = vset.pattern.permute.xlu0 23
        %3421 = vperm.xlu0 %3420, %v367
        %v3422 = vpop.permute.xlu0 %3421
        %v3424 = vmul.f32 %v3406, %v3414
        %v3425 = vmul.f32 %v3403, %v3414
        %v3426 = vmul.f32 %v3400, %v3414
        %v3427 = vmul.f32 %v3397, %v3414
        %v3428 = vmul.f32 %v3394, %v3414
        %v3429 = vmul.f32 %v3391, %v3414
        %v3430 = vmul.f32 %v3388, %v3414
        %v3431 = vmul.f32 %v3409, %v3414
        %v3432 = vmul.f32 %v3407, %v3418
        %v3433 = vmul.f32 %v3404, %v3418
        %v3434 = vmul.f32 %v3401, %v3418
        %v3435 = vmul.f32 %v3398, %v3418
        %v3436 = vmul.f32 %v3395, %v3418
        %v3437 = vmul.f32 %v3392, %v3418
        %v3438 = vmul.f32 %v3389, %v3418
        %v3439 = vmul.f32 %v3410, %v3418
        %v3440 = vmul.f32 %v3408, %v3422
        %v3441 = vmul.f32 %v3405, %v3422
        %v3442 = vmul.f32 %v3402, %v3422
        %v3443 = vmul.f32 %v3399, %v3422
        %v3444 = vmul.f32 %v3396, %v3422
        %v3445 = vmul.f32 %v3393, %v3422
        %v3446 = vmul.f32 %v3390, %v3422
        %v3447 = vmul.f32 %v3411, %v3422
        %v3448 = vadd.f32 %v3315, %v3424
        %v3449 = vadd.f32 %v3316, %v3425
        %v3450 = vadd.f32 %v3317, %v3426
        %v3451 = vadd.f32 %v3318, %v3427
        %v3452 = vadd.f32 %v3319, %v3428
        %v3453 = vadd.f32 %v3320, %v3429
        %v3454 = vadd.f32 %v3321, %v3430
        %v3455 = vadd.f32 %v3322, %v3431
        %v3456 = vadd.f32 %v3323, %v3432
        %v3457 = vadd.f32 %v3324, %v3433
        %v3458 = vadd.f32 %v3325, %v3434
        %v3459 = vadd.f32 %v3326, %v3435
        %v3460 = vadd.f32 %v3327, %v3436
        %v3461 = vadd.f32 %v3328, %v3437
        %v3462 = vadd.f32 %v3329, %v3438
        %v3463 = vadd.f32 %v3330, %v3439
        %v3464 = vadd.f32 %v3331, %v3440
        %v3465 = vadd.f32 %v3332, %v3441
        %v3466 = vadd.f32 %v3333, %v3442
        %v3467 = vadd.f32 %v3334, %v3443
        %v3468 = vadd.f32 %v3335, %v3444
        %v3469 = vadd.f32 %v3336, %v3445
        %v3470 = vadd.f32 %v3337, %v3446
        %v3471 = vadd.f32 %v3338, %v3447
        %3472 = vrot.lane.b32.xlu0 %v341, 19
        %v3473 = vpop.permute.xlu0 %3472
        %3474 = vrot.lane.b32.xlu0 %v349, 19
        %v3475 = vpop.permute.xlu0 %3474
        %3476 = vrot.lane.b32.xlu0 %v357, 19
        %v3477 = vpop.permute.xlu0 %3476
        %3478 = vrot.lane.b32.xlu0 %v342, 19
        %v3479 = vpop.permute.xlu0 %3478
        %3480 = vrot.lane.b32.xlu0 %v350, 19
        %v3481 = vpop.permute.xlu0 %3480
        %3482 = vrot.lane.b32.xlu0 %v358, 19
        %v3483 = vpop.permute.xlu0 %3482
        %3484 = vrot.lane.b32.xlu0 %v343, 19
        %v3485 = vpop.permute.xlu0 %3484
        %3486 = vrot.lane.b32.xlu0 %v351, 19
        %v3487 = vpop.permute.xlu0 %3486
        %3488 = vrot.lane.b32.xlu0 %v359, 19
        %v3489 = vpop.permute.xlu0 %3488
        %3490 = vrot.lane.b32.xlu0 %v344, 19
        %v3491 = vpop.permute.xlu0 %3490
        %3492 = vrot.lane.b32.xlu0 %v352, 19
        %v3493 = vpop.permute.xlu0 %3492
        %3494 = vrot.lane.b32.xlu0 %v360, 19
        %v3495 = vpop.permute.xlu0 %3494
        %3496 = vrot.lane.b32.xlu0 %v345, 19
        %v3497 = vpop.permute.xlu0 %3496
        %3498 = vrot.lane.b32.xlu0 %v353, 19
        %v3499 = vpop.permute.xlu0 %3498
        %3500 = vrot.lane.b32.xlu0 %v361, 19
        %v3501 = vpop.permute.xlu0 %3500
        %3502 = vrot.lane.b32.xlu0 %v346, 19
        %v3503 = vpop.permute.xlu0 %3502
        %3504 = vrot.lane.b32.xlu0 %v354, 19
        %v3505 = vpop.permute.xlu0 %3504
        %3506 = vrot.lane.b32.xlu0 %v362, 19
        %v3507 = vpop.permute.xlu0 %3506
        %3508 = vrot.lane.b32.xlu0 %v347, 19
        %v3509 = vpop.permute.xlu0 %3508
        %3510 = vrot.lane.b32.xlu0 %v355, 19
        %v3511 = vpop.permute.xlu0 %3510
        %3512 = vrot.lane.b32.xlu0 %v363, 19
        %v3513 = vpop.permute.xlu0 %3512
        %3514 = vrot.lane.b32.xlu0 %v348, 19
        %v3515 = vpop.permute.xlu0 %3514
        %3516 = vrot.lane.b32.xlu0 %v356, 19
        %v3517 = vpop.permute.xlu0 %3516
        %3518 = vrot.lane.b32.xlu0 %v364, 19
        %v3519 = vpop.permute.xlu0 %3518
        %vm3520 = vcmp.lt.s32.totalorder %v421, 19
        %v3521 = vsel %vm3520, %v3509, %v3515
        %v3522 = vsel %vm3520, %v3511, %v3517
        %v3523 = vsel %vm3520, %v3513, %v3519
        %v3524 = vsel %vm3520, %v3503, %v3509
        %v3525 = vsel %vm3520, %v3505, %v3511
        %v3526 = vsel %vm3520, %v3507, %v3513
        %v3527 = vsel %vm3520, %v3497, %v3503
        %v3528 = vsel %vm3520, %v3499, %v3505
        %v3529 = vsel %vm3520, %v3501, %v3507
        %v3530 = vsel %vm3520, %v3491, %v3497
        %v3531 = vsel %vm3520, %v3493, %v3499
        %v3532 = vsel %vm3520, %v3495, %v3501
        %v3533 = vsel %vm3520, %v3485, %v3491
        %v3534 = vsel %vm3520, %v3487, %v3493
        %v3535 = vsel %vm3520, %v3489, %v3495
        %v3536 = vsel %vm3520, %v3479, %v3485
        %v3537 = vsel %vm3520, %v3481, %v3487
        %v3538 = vsel %vm3520, %v3483, %v3489
        %v3539 = vsel %vm3520, %v3473, %v3479
        %v3540 = vsel %vm3520, %v3475, %v3481
        %v3541 = vsel %vm3520, %v3477, %v3483
        %v3542 = vsel %vm3520, %v3515, %v3473
        %v3543 = vsel %vm3520, %v3517, %v3475
        %v3544 = vsel %vm3520, %v3519, %v3477
        %3545 = vset.pattern.permute.xlu0 24
        %3546 = vperm.xlu0 %3545, %v365
        %v3547 = vpop.permute.xlu0 %3546
        %3549 = vset.pattern.permute.xlu0 24
        %3550 = vperm.xlu0 %3549, %v366
        %v3551 = vpop.permute.xlu0 %3550
        %3553 = vset.pattern.permute.xlu0 24
        %3554 = vperm.xlu0 %3553, %v367
        %v3555 = vpop.permute.xlu0 %3554
        %v3557 = vmul.f32 %v3539, %v3547
        %v3558 = vmul.f32 %v3536, %v3547
        %v3559 = vmul.f32 %v3533, %v3547
        %v3560 = vmul.f32 %v3530, %v3547
        %v3561 = vmul.f32 %v3527, %v3547
        %v3562 = vmul.f32 %v3524, %v3547
        %v3563 = vmul.f32 %v3521, %v3547
        %v3564 = vmul.f32 %v3542, %v3547
        %v3565 = vmul.f32 %v3540, %v3551
        %v3566 = vmul.f32 %v3537, %v3551
        %v3567 = vmul.f32 %v3534, %v3551
        %v3568 = vmul.f32 %v3531, %v3551
        %v3569 = vmul.f32 %v3528, %v3551
        %v3570 = vmul.f32 %v3525, %v3551
        %v3571 = vmul.f32 %v3522, %v3551
        %v3572 = vmul.f32 %v3543, %v3551
        %v3573 = vmul.f32 %v3541, %v3555
        %v3574 = vmul.f32 %v3538, %v3555
        %v3575 = vmul.f32 %v3535, %v3555
        %v3576 = vmul.f32 %v3532, %v3555
        %v3577 = vmul.f32 %v3529, %v3555
        %v3578 = vmul.f32 %v3526, %v3555
        %v3579 = vmul.f32 %v3523, %v3555
        %v3580 = vmul.f32 %v3544, %v3555
        %v3581 = vadd.f32 %v3448, %v3557
        %v3582 = vadd.f32 %v3449, %v3558
        %v3583 = vadd.f32 %v3450, %v3559
        %v3584 = vadd.f32 %v3451, %v3560
        %v3585 = vadd.f32 %v3452, %v3561
        %v3586 = vadd.f32 %v3453, %v3562
        %v3587 = vadd.f32 %v3454, %v3563
        %v3588 = vadd.f32 %v3455, %v3564
        %v3589 = vadd.f32 %v3456, %v3565
        %v3590 = vadd.f32 %v3457, %v3566
        %v3591 = vadd.f32 %v3458, %v3567
        %v3592 = vadd.f32 %v3459, %v3568
        %v3593 = vadd.f32 %v3460, %v3569
        %v3594 = vadd.f32 %v3461, %v3570
        %v3595 = vadd.f32 %v3462, %v3571
        %v3596 = vadd.f32 %v3463, %v3572
        %v3597 = vadd.f32 %v3464, %v3573
        %v3598 = vadd.f32 %v3465, %v3574
        %v3599 = vadd.f32 %v3466, %v3575
        %v3600 = vadd.f32 %v3467, %v3576
        %v3601 = vadd.f32 %v3468, %v3577
        %v3602 = vadd.f32 %v3469, %v3578
        %v3603 = vadd.f32 %v3470, %v3579
        %v3604 = vadd.f32 %v3471, %v3580
        %3605 = vrot.lane.b32.xlu0 %v341, 18
        %v3606 = vpop.permute.xlu0 %3605
        %3607 = vrot.lane.b32.xlu0 %v349, 18
        %v3608 = vpop.permute.xlu0 %3607
        %3609 = vrot.lane.b32.xlu0 %v357, 18
        %v3610 = vpop.permute.xlu0 %3609
        %3611 = vrot.lane.b32.xlu0 %v342, 18
        %v3612 = vpop.permute.xlu0 %3611
        %3613 = vrot.lane.b32.xlu0 %v350, 18
        %v3614 = vpop.permute.xlu0 %3613
        %3615 = vrot.lane.b32.xlu0 %v358, 18
        %v3616 = vpop.permute.xlu0 %3615
        %3617 = vrot.lane.b32.xlu0 %v343, 18
        %v3618 = vpop.permute.xlu0 %3617
        %3619 = vrot.lane.b32.xlu0 %v351, 18
        %v3620 = vpop.permute.xlu0 %3619
        %3621 = vrot.lane.b32.xlu0 %v359, 18
        %v3622 = vpop.permute.xlu0 %3621
        %3623 = vrot.lane.b32.xlu0 %v344, 18
        %v3624 = vpop.permute.xlu0 %3623
        %3625 = vrot.lane.b32.xlu0 %v352, 18
        %v3626 = vpop.permute.xlu0 %3625
        %3627 = vrot.lane.b32.xlu0 %v360, 18
        %v3628 = vpop.permute.xlu0 %3627
        %3629 = vrot.lane.b32.xlu0 %v345, 18
        %v3630 = vpop.permute.xlu0 %3629
        %3631 = vrot.lane.b32.xlu0 %v353, 18
        %v3632 = vpop.permute.xlu0 %3631
        %3633 = vrot.lane.b32.xlu0 %v361, 18
        %v3634 = vpop.permute.xlu0 %3633
        %3635 = vrot.lane.b32.xlu0 %v346, 18
        %v3636 = vpop.permute.xlu0 %3635
        %3637 = vrot.lane.b32.xlu0 %v354, 18
        %v3638 = vpop.permute.xlu0 %3637
        %3639 = vrot.lane.b32.xlu0 %v362, 18
        %v3640 = vpop.permute.xlu0 %3639
        %3641 = vrot.lane.b32.xlu0 %v347, 18
        %v3642 = vpop.permute.xlu0 %3641
        %3643 = vrot.lane.b32.xlu0 %v355, 18
        %v3644 = vpop.permute.xlu0 %3643
        %3645 = vrot.lane.b32.xlu0 %v363, 18
        %v3646 = vpop.permute.xlu0 %3645
        %3647 = vrot.lane.b32.xlu0 %v348, 18
        %v3648 = vpop.permute.xlu0 %3647
        %3649 = vrot.lane.b32.xlu0 %v356, 18
        %v3650 = vpop.permute.xlu0 %3649
        %3651 = vrot.lane.b32.xlu0 %v364, 18
        %v3652 = vpop.permute.xlu0 %3651
        %vm3653 = vcmp.lt.s32.totalorder %v421, 18
        %v3654 = vsel %vm3653, %v3642, %v3648
        %v3655 = vsel %vm3653, %v3644, %v3650
        %v3656 = vsel %vm3653, %v3646, %v3652
        %v3657 = vsel %vm3653, %v3636, %v3642
        %v3658 = vsel %vm3653, %v3638, %v3644
        %v3659 = vsel %vm3653, %v3640, %v3646
        %v3660 = vsel %vm3653, %v3630, %v3636
        %v3661 = vsel %vm3653, %v3632, %v3638
        %v3662 = vsel %vm3653, %v3634, %v3640
        %v3663 = vsel %vm3653, %v3624, %v3630
        %v3664 = vsel %vm3653, %v3626, %v3632
        %v3665 = vsel %vm3653, %v3628, %v3634
        %v3666 = vsel %vm3653, %v3618, %v3624
        %v3667 = vsel %vm3653, %v3620, %v3626
        %v3668 = vsel %vm3653, %v3622, %v3628
        %v3669 = vsel %vm3653, %v3612, %v3618
        %v3670 = vsel %vm3653, %v3614, %v3620
        %v3671 = vsel %vm3653, %v3616, %v3622
        %v3672 = vsel %vm3653, %v3606, %v3612
        %v3673 = vsel %vm3653, %v3608, %v3614
        %v3674 = vsel %vm3653, %v3610, %v3616
        %v3675 = vsel %vm3653, %v3648, %v3606
        %v3676 = vsel %vm3653, %v3650, %v3608
        %v3677 = vsel %vm3653, %v3652, %v3610
        %3678 = vset.pattern.permute.xlu0 25
        %3679 = vperm.xlu0 %3678, %v365
        %v3680 = vpop.permute.xlu0 %3679
        %3682 = vset.pattern.permute.xlu0 25
        %3683 = vperm.xlu0 %3682, %v366
        %v3684 = vpop.permute.xlu0 %3683
        %3686 = vset.pattern.permute.xlu0 25
        %3687 = vperm.xlu0 %3686, %v367
        %v3688 = vpop.permute.xlu0 %3687
        %v3690 = vmul.f32 %v3672, %v3680
        %v3691 = vmul.f32 %v3669, %v3680
        %v3692 = vmul.f32 %v3666, %v3680
        %v3693 = vmul.f32 %v3663, %v3680
        %v3694 = vmul.f32 %v3660, %v3680
        %v3695 = vmul.f32 %v3657, %v3680
        %v3696 = vmul.f32 %v3654, %v3680
        %v3697 = vmul.f32 %v3675, %v3680
        %v3698 = vmul.f32 %v3673, %v3684
        %v3699 = vmul.f32 %v3670, %v3684
        %v3700 = vmul.f32 %v3667, %v3684
        %v3701 = vmul.f32 %v3664, %v3684
        %v3702 = vmul.f32 %v3661, %v3684
        %v3703 = vmul.f32 %v3658, %v3684
        %v3704 = vmul.f32 %v3655, %v3684
        %v3705 = vmul.f32 %v3676, %v3684
        %v3706 = vmul.f32 %v3674, %v3688
        %v3707 = vmul.f32 %v3671, %v3688
        %v3708 = vmul.f32 %v3668, %v3688
        %v3709 = vmul.f32 %v3665, %v3688
        %v3710 = vmul.f32 %v3662, %v3688
        %v3711 = vmul.f32 %v3659, %v3688
        %v3712 = vmul.f32 %v3656, %v3688
        %v3713 = vmul.f32 %v3677, %v3688
        %v3714 = vadd.f32 %v3581, %v3690
        %v3715 = vadd.f32 %v3582, %v3691
        %v3716 = vadd.f32 %v3583, %v3692
        %v3717 = vadd.f32 %v3584, %v3693
        %v3718 = vadd.f32 %v3585, %v3694
        %v3719 = vadd.f32 %v3586, %v3695
        %v3720 = vadd.f32 %v3587, %v3696
        %v3721 = vadd.f32 %v3588, %v3697
        %v3722 = vadd.f32 %v3589, %v3698
        %v3723 = vadd.f32 %v3590, %v3699
        %v3724 = vadd.f32 %v3591, %v3700
        %v3725 = vadd.f32 %v3592, %v3701
        %v3726 = vadd.f32 %v3593, %v3702
        %v3727 = vadd.f32 %v3594, %v3703
        %v3728 = vadd.f32 %v3595, %v3704
        %v3729 = vadd.f32 %v3596, %v3705
        %v3730 = vadd.f32 %v3597, %v3706
        %v3731 = vadd.f32 %v3598, %v3707
        %v3732 = vadd.f32 %v3599, %v3708
        %v3733 = vadd.f32 %v3600, %v3709
        %v3734 = vadd.f32 %v3601, %v3710
        %v3735 = vadd.f32 %v3602, %v3711
        %v3736 = vadd.f32 %v3603, %v3712
        %v3737 = vadd.f32 %v3604, %v3713
        %3738 = vrot.lane.b32.xlu0 %v341, 17
        %v3739 = vpop.permute.xlu0 %3738
        %3740 = vrot.lane.b32.xlu0 %v349, 17
        %v3741 = vpop.permute.xlu0 %3740
        %3742 = vrot.lane.b32.xlu0 %v357, 17
        %v3743 = vpop.permute.xlu0 %3742
        %3744 = vrot.lane.b32.xlu0 %v342, 17
        %v3745 = vpop.permute.xlu0 %3744
        %3746 = vrot.lane.b32.xlu0 %v350, 17
        %v3747 = vpop.permute.xlu0 %3746
        %3748 = vrot.lane.b32.xlu0 %v358, 17
        %v3749 = vpop.permute.xlu0 %3748
        %3750 = vrot.lane.b32.xlu0 %v343, 17
        %v3751 = vpop.permute.xlu0 %3750
        %3752 = vrot.lane.b32.xlu0 %v351, 17
        %v3753 = vpop.permute.xlu0 %3752
        %3754 = vrot.lane.b32.xlu0 %v359, 17
        %v3755 = vpop.permute.xlu0 %3754
        %3756 = vrot.lane.b32.xlu0 %v344, 17
        %v3757 = vpop.permute.xlu0 %3756
        %3758 = vrot.lane.b32.xlu0 %v352, 17
        %v3759 = vpop.permute.xlu0 %3758
        %3760 = vrot.lane.b32.xlu0 %v360, 17
        %v3761 = vpop.permute.xlu0 %3760
        %3762 = vrot.lane.b32.xlu0 %v345, 17
        %v3763 = vpop.permute.xlu0 %3762
        %3764 = vrot.lane.b32.xlu0 %v353, 17
        %v3765 = vpop.permute.xlu0 %3764
        %3766 = vrot.lane.b32.xlu0 %v361, 17
        %v3767 = vpop.permute.xlu0 %3766
        %3768 = vrot.lane.b32.xlu0 %v346, 17
        %v3769 = vpop.permute.xlu0 %3768
        %3770 = vrot.lane.b32.xlu0 %v354, 17
        %v3771 = vpop.permute.xlu0 %3770
        %3772 = vrot.lane.b32.xlu0 %v362, 17
        %v3773 = vpop.permute.xlu0 %3772
        %3774 = vrot.lane.b32.xlu0 %v347, 17
        %v3775 = vpop.permute.xlu0 %3774
        %3776 = vrot.lane.b32.xlu0 %v355, 17
        %v3777 = vpop.permute.xlu0 %3776
        %3778 = vrot.lane.b32.xlu0 %v363, 17
        %v3779 = vpop.permute.xlu0 %3778
        %3780 = vrot.lane.b32.xlu0 %v348, 17
        %v3781 = vpop.permute.xlu0 %3780
        %3782 = vrot.lane.b32.xlu0 %v356, 17
        %v3783 = vpop.permute.xlu0 %3782
        %3784 = vrot.lane.b32.xlu0 %v364, 17
        %v3785 = vpop.permute.xlu0 %3784
        %vm3786 = vcmp.lt.s32.totalorder %v421, 17
        %v3787 = vsel %vm3786, %v3775, %v3781
        %v3788 = vsel %vm3786, %v3777, %v3783
        %v3789 = vsel %vm3786, %v3779, %v3785
        %v3790 = vsel %vm3786, %v3769, %v3775
        %v3791 = vsel %vm3786, %v3771, %v3777
        %v3792 = vsel %vm3786, %v3773, %v3779
        %v3793 = vsel %vm3786, %v3763, %v3769
        %v3794 = vsel %vm3786, %v3765, %v3771
        %v3795 = vsel %vm3786, %v3767, %v3773
        %v3796 = vsel %vm3786, %v3757, %v3763
        %v3797 = vsel %vm3786, %v3759, %v3765
        %v3798 = vsel %vm3786, %v3761, %v3767
        %v3799 = vsel %vm3786, %v3751, %v3757
        %v3800 = vsel %vm3786, %v3753, %v3759
        %v3801 = vsel %vm3786, %v3755, %v3761
        %v3802 = vsel %vm3786, %v3745, %v3751
        %v3803 = vsel %vm3786, %v3747, %v3753
        %v3804 = vsel %vm3786, %v3749, %v3755
        %v3805 = vsel %vm3786, %v3739, %v3745
        %v3806 = vsel %vm3786, %v3741, %v3747
        %v3807 = vsel %vm3786, %v3743, %v3749
        %v3808 = vsel %vm3786, %v3781, %v3739
        %v3809 = vsel %vm3786, %v3783, %v3741
        %v3810 = vsel %vm3786, %v3785, %v3743
        %3811 = vset.pattern.permute.xlu0 26
        %3812 = vperm.xlu0 %3811, %v365
        %v3813 = vpop.permute.xlu0 %3812
        %3815 = vset.pattern.permute.xlu0 26
        %3816 = vperm.xlu0 %3815, %v366
        %v3817 = vpop.permute.xlu0 %3816
        %3819 = vset.pattern.permute.xlu0 26
        %3820 = vperm.xlu0 %3819, %v367
        %v3821 = vpop.permute.xlu0 %3820
        %v3823 = vmul.f32 %v3805, %v3813
        %v3824 = vmul.f32 %v3802, %v3813
        %v3825 = vmul.f32 %v3799, %v3813
        %v3826 = vmul.f32 %v3796, %v3813
        %v3827 = vmul.f32 %v3793, %v3813
        %v3828 = vmul.f32 %v3790, %v3813
        %v3829 = vmul.f32 %v3787, %v3813
        %v3830 = vmul.f32 %v3808, %v3813
        %v3831 = vmul.f32 %v3806, %v3817
        %v3832 = vmul.f32 %v3803, %v3817
        %v3833 = vmul.f32 %v3800, %v3817
        %v3834 = vmul.f32 %v3797, %v3817
        %v3835 = vmul.f32 %v3794, %v3817
        %v3836 = vmul.f32 %v3791, %v3817
        %v3837 = vmul.f32 %v3788, %v3817
        %v3838 = vmul.f32 %v3809, %v3817
        %v3839 = vmul.f32 %v3807, %v3821
        %v3840 = vmul.f32 %v3804, %v3821
        %v3841 = vmul.f32 %v3801, %v3821
        %v3842 = vmul.f32 %v3798, %v3821
        %v3843 = vmul.f32 %v3795, %v3821
        %v3844 = vmul.f32 %v3792, %v3821
        %v3845 = vmul.f32 %v3789, %v3821
        %v3846 = vmul.f32 %v3810, %v3821
        %v3847 = vadd.f32 %v3714, %v3823
        %v3848 = vadd.f32 %v3715, %v3824
        %v3849 = vadd.f32 %v3716, %v3825
        %v3850 = vadd.f32 %v3717, %v3826
        %v3851 = vadd.f32 %v3718, %v3827
        %v3852 = vadd.f32 %v3719, %v3828
        %v3853 = vadd.f32 %v3720, %v3829
        %v3854 = vadd.f32 %v3721, %v3830
        %v3855 = vadd.f32 %v3722, %v3831
        %v3856 = vadd.f32 %v3723, %v3832
        %v3857 = vadd.f32 %v3724, %v3833
        %v3858 = vadd.f32 %v3725, %v3834
        %v3859 = vadd.f32 %v3726, %v3835
        %v3860 = vadd.f32 %v3727, %v3836
        %v3861 = vadd.f32 %v3728, %v3837
        %v3862 = vadd.f32 %v3729, %v3838
        %v3863 = vadd.f32 %v3730, %v3839
        %v3864 = vadd.f32 %v3731, %v3840
        %v3865 = vadd.f32 %v3732, %v3841
        %v3866 = vadd.f32 %v3733, %v3842
        %v3867 = vadd.f32 %v3734, %v3843
        %v3868 = vadd.f32 %v3735, %v3844
        %v3869 = vadd.f32 %v3736, %v3845
        %v3870 = vadd.f32 %v3737, %v3846
        %v3871 = vld [vmem:[#allocation7] sm:$0xff]
        %v3872 = vld [vmem:[#allocation7 + $0x8] sm:$0xff]
        %v3873 = vld [vmem:[#allocation7 + $0x10] sm:$0xff]
        %3875 = vset.pattern.permute.xlu0 0
        %3876 = vperm.xlu0 %3875, %v3871
        %v3877 = vpop.permute.xlu0 %3876
        %3880 = vset.pattern.permute.xlu0 0
        %3881 = vperm.xlu0 %3880, %v3872
        %v3882 = vpop.permute.xlu0 %3881
        %3885 = vset.pattern.permute.xlu0 0
        %3886 = vperm.xlu0 %3885, %v3873
        %v3887 = vpop.permute.xlu0 %3886
        %v3889 = vadd.f32 %v3847, %v3877
        %v3890 = vadd.f32 %v3848, %v3877
        %v3891 = vadd.f32 %v3849, %v3877
        %v3892 = vadd.f32 %v3850, %v3877
        %v3893 = vadd.f32 %v3851, %v3877
        %v3894 = vadd.f32 %v3852, %v3877
        %v3895 = vadd.f32 %v3853, %v3877
        %v3896 = vadd.f32 %v3854, %v3877
        %v3897 = vadd.f32 %v3855, %v3882
        %v3898 = vadd.f32 %v3856, %v3882
        %v3899 = vadd.f32 %v3857, %v3882
        %v3900 = vadd.f32 %v3858, %v3882
        %v3901 = vadd.f32 %v3859, %v3882
        %v3902 = vadd.f32 %v3860, %v3882
        %v3903 = vadd.f32 %v3861, %v3882
        %v3904 = vadd.f32 %v3862, %v3882
        %v3905 = vadd.f32 %v3863, %v3887
        %v3906 = vadd.f32 %v3864, %v3887
        %v3907 = vadd.f32 %v3865, %v3887
        %v3908 = vadd.f32 %v3866, %v3887
        %v3909 = vadd.f32 %v3867, %v3887
        %v3910 = vadd.f32 %v3868, %v3887
        %v3911 = vadd.f32 %v3869, %v3887
        %v3912 = vadd.f32 %v3870, %v3887
        %v3913 = vmul.f32 %v3889, 0.1
        %v3914 = vmul.f32 %v3890, 0.1
        %v3915 = vmul.f32 %v3891, 0.1
        %v3916 = vmul.f32 %v3892, 0.1
        %v3917 = vmul.f32 %v3893, 0.1
        %v3918 = vmul.f32 %v3894, 0.1
        %v3919 = vmul.f32 %v3895, 0.1
        %v3920 = vmul.f32 %v3896, 0.1
        %v3921 = vmul.f32 %v3897, 0.1
        %v3922 = vmul.f32 %v3898, 0.1
        %v3923 = vmul.f32 %v3899, 0.1
        %v3924 = vmul.f32 %v3900, 0.1
        %v3925 = vmul.f32 %v3901, 0.1
        %v3926 = vmul.f32 %v3902, 0.1
        %v3927 = vmul.f32 %v3903, 0.1
        %v3928 = vmul.f32 %v3904, 0.1
        %v3929 = vmul.f32 %v3905, 0.1
        %v3930 = vmul.f32 %v3906, 0.1
        %v3931 = vmul.f32 %v3907, 0.1
        %v3932 = vmul.f32 %v3908, 0.1
        %v3933 = vmul.f32 %v3909, 0.1
        %v3934 = vmul.f32 %v3910, 0.1
        %v3935 = vmul.f32 %v3911, 0.1
        %v3936 = vmul.f32 %v3912, 0.1
        %v3937 = vmax.f32 %v3889, %v3913
        %v3938 = vmax.f32 %v3890, %v3914
        %v3939 = vmax.f32 %v3891, %v3915
        %v3940 = vmax.f32 %v3892, %v3916
        %v3941 = vmax.f32 %v3893, %v3917
        %v3942 = vmax.f32 %v3894, %v3918
        %v3943 = vmax.f32 %v3895, %v3919
        %v3944 = vmax.f32 %v3896, %v3920
        %v3945 = vmax.f32 %v3897, %v3921
        %v3946 = vmax.f32 %v3898, %v3922
        %v3947 = vmax.f32 %v3899, %v3923
        %v3948 = vmax.f32 %v3900, %v3924
        %v3949 = vmax.f32 %v3901, %v3925
        %v3950 = vmax.f32 %v3902, %v3926
        %v3951 = vmax.f32 %v3903, %v3927
        %v3952 = vmax.f32 %v3904, %v3928
        %v3953 = vmax.f32 %v3905, %v3929
        %v3954 = vmax.f32 %v3906, %v3930
        %v3955 = vmax.f32 %v3907, %v3931
        %v3956 = vmax.f32 %v3908, %v3932
        %v3957 = vmax.f32 %v3909, %v3933
        %v3958 = vmax.f32 %v3910, %v3934
        %v3959 = vmax.f32 %v3911, %v3935
        %v3960 = vmax.f32 %v3912, %v3936
        %v3962 = vlaneseq
        %v3963 = vshrl.u32 %v3962, 7
        %v3964 = vsub.s32 0, %v3963
        %v3965 = vrot.slane %v371, %v3964
        %v3966 = vlaneseq
        %v3967 = vshrl.u32 %v3966, 7
        %v3968 = vsub.s32 1, %v3967
        %v3969 = vrot.slane %v371, %v3968
        %v3970 = vlaneseq
        %v3971 = vshrl.u32 %v3970, 7
        %v3972 = vsub.s32 2, %v3971
        %v3973 = vrot.slane %v371, %v3972
        %v3974 = vlaneseq
        %v3975 = vshrl.u32 %v3974, 7
        %v3976 = vsub.s32 3, %v3975
        %v3977 = vrot.slane %v371, %v3976
        %v3978 = vlaneseq
        %v3979 = vshrl.u32 %v3978, 7
        %v3980 = vsub.s32 4, %v3979
        %v3981 = vrot.slane %v371, %v3980
        %v3982 = vlaneseq
        %v3983 = vshrl.u32 %v3982, 7
        %v3984 = vsub.s32 5, %v3983
        %v3985 = vrot.slane %v371, %v3984
        %v3986 = vlaneseq
        %v3987 = vshrl.u32 %v3986, 7
        %v3988 = vsub.s32 6, %v3987
        %v3989 = vrot.slane %v371, %v3988
        %v3990 = vlaneseq
        %v3991 = vshrl.u32 %v3990, 7
        %v3992 = vsub.s32 7, %v3991
        %v3993 = vrot.slane %v371, %v3992
        %v4002 = vmul.f32 %v3937, %v3965
        %v4003 = vmul.f32 %v3938, %v3969
        %v4004 = vmul.f32 %v3939, %v3973
        %v4005 = vmul.f32 %v3940, %v3977
        %v4006 = vmul.f32 %v3941, %v3981
        %v4007 = vmul.f32 %v3942, %v3985
        %v4008 = vmul.f32 %v3943, %v3989
        %v4009 = vmul.f32 %v3944, %v3993
        %v4010 = vmul.f32 %v3945, %v3965
        %v4011 = vmul.f32 %v3946, %v3969
        %v4012 = vmul.f32 %v3947, %v3973
        %v4013 = vmul.f32 %v3948, %v3977
        %v4014 = vmul.f32 %v3949, %v3981
        %v4015 = vmul.f32 %v3950, %v3985
        %v4016 = vmul.f32 %v3951, %v3989
        %v4017 = vmul.f32 %v3952, %v3993
        %v4018 = vmul.f32 %v3953, %v3965
        %v4019 = vmul.f32 %v3954, %v3969
        %v4020 = vmul.f32 %v3955, %v3973
        %v4021 = vmul.f32 %v3956, %v3977
        %v4022 = vmul.f32 %v3957, %v3981
        %v4023 = vmul.f32 %v3958, %v3985
        %v4024 = vmul.f32 %v3959, %v3989
        %v4025 = vmul.f32 %v3960, %v3993
        %4026 = vrot.lane.b32.xlu0 %v4002, 111
        %v4027 = vpop.permute.xlu0 %4026
        %4028 = vrot.lane.b32.xlu0 %v4010, 111
        %v4029 = vpop.permute.xlu0 %4028
        %4030 = vrot.lane.b32.xlu0 %v4018, 111
        %v4031 = vpop.permute.xlu0 %4030
        %4032 = vrot.lane.b32.xlu0 %v4003, 111
        %v4033 = vpop.permute.xlu0 %4032
        %4034 = vrot.lane.b32.xlu0 %v4011, 111
        %v4035 = vpop.permute.xlu0 %4034
        %4036 = vrot.lane.b32.xlu0 %v4019, 111
        %v4037 = vpop.permute.xlu0 %4036
        %4038 = vrot.lane.b32.xlu0 %v4004, 111
        %v4039 = vpop.permute.xlu0 %4038
        %4040 = vrot.lane.b32.xlu0 %v4012, 111
        %v4041 = vpop.permute.xlu0 %4040
        %4042 = vrot.lane.b32.xlu0 %v4020, 111
        %v4043 = vpop.permute.xlu0 %4042
        %4044 = vrot.lane.b32.xlu0 %v4005, 111
        %v4045 = vpop.permute.xlu0 %4044
        %4046 = vrot.lane.b32.xlu0 %v4013, 111
        %v4047 = vpop.permute.xlu0 %4046
        %4048 = vrot.lane.b32.xlu0 %v4021, 111
        %v4049 = vpop.permute.xlu0 %4048
        %4050 = vrot.lane.b32.xlu0 %v4006, 111
        %v4051 = vpop.permute.xlu0 %4050
        %4052 = vrot.lane.b32.xlu0 %v4014, 111
        %v4053 = vpop.permute.xlu0 %4052
        %4054 = vrot.lane.b32.xlu0 %v4022, 111
        %v4055 = vpop.permute.xlu0 %4054
        %4056 = vrot.lane.b32.xlu0 %v4007, 111
        %v4057 = vpop.permute.xlu0 %4056
        %4058 = vrot.lane.b32.xlu0 %v4015, 111
        %v4059 = vpop.permute.xlu0 %4058
        %4060 = vrot.lane.b32.xlu0 %v4023, 111
        %v4061 = vpop.permute.xlu0 %4060
        %4062 = vrot.lane.b32.xlu0 %v4008, 111
        %v4063 = vpop.permute.xlu0 %4062
        %4064 = vrot.lane.b32.xlu0 %v4016, 111
        %v4065 = vpop.permute.xlu0 %4064
        %4066 = vrot.lane.b32.xlu0 %v4024, 111
        %v4067 = vpop.permute.xlu0 %4066
        %4068 = vrot.lane.b32.xlu0 %v4009, 111
        %v4069 = vpop.permute.xlu0 %4068
        %4070 = vrot.lane.b32.xlu0 %v4017, 111
        %v4071 = vpop.permute.xlu0 %4070
        %4072 = vrot.lane.b32.xlu0 %v4025, 111
        %v4073 = vpop.permute.xlu0 %4072
        %v4074 = vsel %vm422, %v4063, %v4069
        %v4075 = vsel %vm422, %v4065, %v4071
        %v4076 = vsel %vm422, %v4067, %v4073
        %v4077 = vsel %vm422, %v4057, %v4063
        %v4078 = vsel %vm422, %v4059, %v4065
        %v4079 = vsel %vm422, %v4061, %v4067
        %v4080 = vsel %vm422, %v4051, %v4057
        %v4081 = vsel %vm422, %v4053, %v4059
        %v4082 = vsel %vm422, %v4055, %v4061
        %v4083 = vsel %vm422, %v4045, %v4051
        %v4084 = vsel %vm422, %v4047, %v4053
        %v4085 = vsel %vm422, %v4049, %v4055
        %v4086 = vsel %vm422, %v4039, %v4045
        %v4087 = vsel %vm422, %v4041, %v4047
        %v4088 = vsel %vm422, %v4043, %v4049
        %v4089 = vsel %vm422, %v4033, %v4039
        %v4090 = vsel %vm422, %v4035, %v4041
        %v4091 = vsel %vm422, %v4037, %v4043
        %v4092 = vsel %vm422, %v4027, %v4033
        %v4093 = vsel %vm422, %v4029, %v4035
        %v4094 = vsel %vm422, %v4031, %v4037
        %v4095 = vsel %vm422, %v4069, %v4027
        %v4096 = vsel %vm422, %v4071, %v4029
        %v4097 = vsel %vm422, %v4073, %v4031
        %4099 = vset.pattern.permute.xlu0 0
        %4100 = vperm.xlu0 %4099, %v368
        %v4101 = vpop.permute.xlu0 %4100
        %4104 = vset.pattern.permute.xlu0 0
        %4105 = vperm.xlu0 %4104, %v369
        %v4106 = vpop.permute.xlu0 %4105
        %4109 = vset.pattern.permute.xlu0 0
        %4110 = vperm.xlu0 %4109, %v370
        %v4111 = vpop.permute.xlu0 %4110
        %v4113 = vmul.f32 %v4095, %v4101
        %v4114 = vmul.f32 %v4092, %v4101
        %v4115 = vmul.f32 %v4089, %v4101
        %v4116 = vmul.f32 %v4086, %v4101
        %v4117 = vmul.f32 %v4083, %v4101
        %v4118 = vmul.f32 %v4080, %v4101
        %v4119 = vmul.f32 %v4077, %v4101
        %v4120 = vmul.f32 %v4074, %v4101
        %v4121 = vmul.f32 %v4096, %v4106
        %v4122 = vmul.f32 %v4093, %v4106
        %v4123 = vmul.f32 %v4090, %v4106
        %v4124 = vmul.f32 %v4087, %v4106
        %v4125 = vmul.f32 %v4084, %v4106
        %v4126 = vmul.f32 %v4081, %v4106
        %v4127 = vmul.f32 %v4078, %v4106
        %v4128 = vmul.f32 %v4075, %v4106
        %v4129 = vmul.f32 %v4097, %v4111
        %v4130 = vmul.f32 %v4094, %v4111
        %v4131 = vmul.f32 %v4091, %v4111
        %v4132 = vmul.f32 %v4088, %v4111
        %v4133 = vmul.f32 %v4085, %v4111
        %v4134 = vmul.f32 %v4082, %v4111
        %v4135 = vmul.f32 %v4079, %v4111
        %v4136 = vmul.f32 %v4076, %v4111
        %4137 = vrot.lane.b32.xlu0 %v4002, 110
        %v4138 = vpop.permute.xlu0 %4137
        %4139 = vrot.lane.b32.xlu0 %v4010, 110
        %v4140 = vpop.permute.xlu0 %4139
        %4141 = vrot.lane.b32.xlu0 %v4018, 110
        %v4142 = vpop.permute.xlu0 %4141
        %4143 = vrot.lane.b32.xlu0 %v4003, 110
        %v4144 = vpop.permute.xlu0 %4143
        %4145 = vrot.lane.b32.xlu0 %v4011, 110
        %v4146 = vpop.permute.xlu0 %4145
        %4147 = vrot.lane.b32.xlu0 %v4019, 110
        %v4148 = vpop.permute.xlu0 %4147
        %4149 = vrot.lane.b32.xlu0 %v4004, 110
        %v4150 = vpop.permute.xlu0 %4149
        %4151 = vrot.lane.b32.xlu0 %v4012, 110
        %v4152 = vpop.permute.xlu0 %4151
        %4153 = vrot.lane.b32.xlu0 %v4020, 110
        %v4154 = vpop.permute.xlu0 %4153
        %4155 = vrot.lane.b32.xlu0 %v4005, 110
        %v4156 = vpop.permute.xlu0 %4155
        %4157 = vrot.lane.b32.xlu0 %v4013, 110
        %v4158 = vpop.permute.xlu0 %4157
        %4159 = vrot.lane.b32.xlu0 %v4021, 110
        %v4160 = vpop.permute.xlu0 %4159
        %4161 = vrot.lane.b32.xlu0 %v4006, 110
        %v4162 = vpop.permute.xlu0 %4161
        %4163 = vrot.lane.b32.xlu0 %v4014, 110
        %v4164 = vpop.permute.xlu0 %4163
        %4165 = vrot.lane.b32.xlu0 %v4022, 110
        %v4166 = vpop.permute.xlu0 %4165
        %4167 = vrot.lane.b32.xlu0 %v4007, 110
        %v4168 = vpop.permute.xlu0 %4167
        %4169 = vrot.lane.b32.xlu0 %v4015, 110
        %v4170 = vpop.permute.xlu0 %4169
        %4171 = vrot.lane.b32.xlu0 %v4023, 110
        %v4172 = vpop.permute.xlu0 %4171
        %4173 = vrot.lane.b32.xlu0 %v4008, 110
        %v4174 = vpop.permute.xlu0 %4173
        %4175 = vrot.lane.b32.xlu0 %v4016, 110
        %v4176 = vpop.permute.xlu0 %4175
        %4177 = vrot.lane.b32.xlu0 %v4024, 110
        %v4178 = vpop.permute.xlu0 %4177
        %4179 = vrot.lane.b32.xlu0 %v4009, 110
        %v4180 = vpop.permute.xlu0 %4179
        %4181 = vrot.lane.b32.xlu0 %v4017, 110
        %v4182 = vpop.permute.xlu0 %4181
        %4183 = vrot.lane.b32.xlu0 %v4025, 110
        %v4184 = vpop.permute.xlu0 %4183
        %v4185 = vsel %vm534, %v4174, %v4180
        %v4186 = vsel %vm534, %v4176, %v4182
        %v4187 = vsel %vm534, %v4178, %v4184
        %v4188 = vsel %vm534, %v4168, %v4174
        %v4189 = vsel %vm534, %v4170, %v4176
        %v4190 = vsel %vm534, %v4172, %v4178
        %v4191 = vsel %vm534, %v4162, %v4168
        %v4192 = vsel %vm534, %v4164, %v4170
        %v4193 = vsel %vm534, %v4166, %v4172
        %v4194 = vsel %vm534, %v4156, %v4162
        %v4195 = vsel %vm534, %v4158, %v4164
        %v4196 = vsel %vm534, %v4160, %v4166
        %v4197 = vsel %vm534, %v4150, %v4156
        %v4198 = vsel %vm534, %v4152, %v4158
        %v4199 = vsel %vm534, %v4154, %v4160
        %v4200 = vsel %vm534, %v4144, %v4150
        %v4201 = vsel %vm534, %v4146, %v4152
        %v4202 = vsel %vm534, %v4148, %v4154
        %v4203 = vsel %vm534, %v4138, %v4144
        %v4204 = vsel %vm534, %v4140, %v4146
        %v4205 = vsel %vm534, %v4142, %v4148
        %v4206 = vsel %vm534, %v4180, %v4138
        %v4207 = vsel %vm534, %v4182, %v4140
        %v4208 = vsel %vm534, %v4184, %v4142
        %4209 = vset.pattern.permute.xlu0 1
        %4210 = vperm.xlu0 %4209, %v368
        %v4211 = vpop.permute.xlu0 %4210
        %4213 = vset.pattern.permute.xlu0 1
        %4214 = vperm.xlu0 %4213, %v369
        %v4215 = vpop.permute.xlu0 %4214
        %4217 = vset.pattern.permute.xlu0 1
        %4218 = vperm.xlu0 %4217, %v370
        %v4219 = vpop.permute.xlu0 %4218
        %v4221 = vmul.f32 %v4206, %v4211
        %v4222 = vmul.f32 %v4203, %v4211
        %v4223 = vmul.f32 %v4200, %v4211
        %v4224 = vmul.f32 %v4197, %v4211
        %v4225 = vmul.f32 %v4194, %v4211
        %v4226 = vmul.f32 %v4191, %v4211
        %v4227 = vmul.f32 %v4188, %v4211
        %v4228 = vmul.f32 %v4185, %v4211
        %v4229 = vmul.f32 %v4207, %v4215
        %v4230 = vmul.f32 %v4204, %v4215
        %v4231 = vmul.f32 %v4201, %v4215
        %v4232 = vmul.f32 %v4198, %v4215
        %v4233 = vmul.f32 %v4195, %v4215
        %v4234 = vmul.f32 %v4192, %v4215
        %v4235 = vmul.f32 %v4189, %v4215
        %v4236 = vmul.f32 %v4186, %v4215
        %v4237 = vmul.f32 %v4208, %v4219
        %v4238 = vmul.f32 %v4205, %v4219
        %v4239 = vmul.f32 %v4202, %v4219
        %v4240 = vmul.f32 %v4199, %v4219
        %v4241 = vmul.f32 %v4196, %v4219
        %v4242 = vmul.f32 %v4193, %v4219
        %v4243 = vmul.f32 %v4190, %v4219
        %v4244 = vmul.f32 %v4187, %v4219
        %v4245 = vadd.f32 %v4113, %v4221
        %v4246 = vadd.f32 %v4114, %v4222
        %v4247 = vadd.f32 %v4115, %v4223
        %v4248 = vadd.f32 %v4116, %v4224
        %v4249 = vadd.f32 %v4117, %v4225
        %v4250 = vadd.f32 %v4118, %v4226
        %v4251 = vadd.f32 %v4119, %v4227
        %v4252 = vadd.f32 %v4120, %v4228
        %v4253 = vadd.f32 %v4121, %v4229
        %v4254 = vadd.f32 %v4122, %v4230
        %v4255 = vadd.f32 %v4123, %v4231
        %v4256 = vadd.f32 %v4124, %v4232
        %v4257 = vadd.f32 %v4125, %v4233
        %v4258 = vadd.f32 %v4126, %v4234
        %v4259 = vadd.f32 %v4127, %v4235
        %v4260 = vadd.f32 %v4128, %v4236
        %v4261 = vadd.f32 %v4129, %v4237
        %v4262 = vadd.f32 %v4130, %v4238
        %v4263 = vadd.f32 %v4131, %v4239
        %v4264 = vadd.f32 %v4132, %v4240
        %v4265 = vadd.f32 %v4133, %v4241
        %v4266 = vadd.f32 %v4134, %v4242
        %v4267 = vadd.f32 %v4135, %v4243
        %v4268 = vadd.f32 %v4136, %v4244
        %4269 = vrot.lane.b32.xlu0 %v4002, 109
        %v4270 = vpop.permute.xlu0 %4269
        %4271 = vrot.lane.b32.xlu0 %v4010, 109
        %v4272 = vpop.permute.xlu0 %4271
        %4273 = vrot.lane.b32.xlu0 %v4018, 109
        %v4274 = vpop.permute.xlu0 %4273
        %4275 = vrot.lane.b32.xlu0 %v4003, 109
        %v4276 = vpop.permute.xlu0 %4275
        %4277 = vrot.lane.b32.xlu0 %v4011, 109
        %v4278 = vpop.permute.xlu0 %4277
        %4279 = vrot.lane.b32.xlu0 %v4019, 109
        %v4280 = vpop.permute.xlu0 %4279
        %4281 = vrot.lane.b32.xlu0 %v4004, 109
        %v4282 = vpop.permute.xlu0 %4281
        %4283 = vrot.lane.b32.xlu0 %v4012, 109
        %v4284 = vpop.permute.xlu0 %4283
        %4285 = vrot.lane.b32.xlu0 %v4020, 109
        %v4286 = vpop.permute.xlu0 %4285
        %4287 = vrot.lane.b32.xlu0 %v4005, 109
        %v4288 = vpop.permute.xlu0 %4287
        %4289 = vrot.lane.b32.xlu0 %v4013, 109
        %v4290 = vpop.permute.xlu0 %4289
        %4291 = vrot.lane.b32.xlu0 %v4021, 109
        %v4292 = vpop.permute.xlu0 %4291
        %4293 = vrot.lane.b32.xlu0 %v4006, 109
        %v4294 = vpop.permute.xlu0 %4293
        %4295 = vrot.lane.b32.xlu0 %v4014, 109
        %v4296 = vpop.permute.xlu0 %4295
        %4297 = vrot.lane.b32.xlu0 %v4022, 109
        %v4298 = vpop.permute.xlu0 %4297
        %4299 = vrot.lane.b32.xlu0 %v4007, 109
        %v4300 = vpop.permute.xlu0 %4299
        %4301 = vrot.lane.b32.xlu0 %v4015, 109
        %v4302 = vpop.permute.xlu0 %4301
        %4303 = vrot.lane.b32.xlu0 %v4023, 109
        %v4304 = vpop.permute.xlu0 %4303
        %4305 = vrot.lane.b32.xlu0 %v4008, 109
        %v4306 = vpop.permute.xlu0 %4305
        %4307 = vrot.lane.b32.xlu0 %v4016, 109
        %v4308 = vpop.permute.xlu0 %4307
        %4309 = vrot.lane.b32.xlu0 %v4024, 109
        %v4310 = vpop.permute.xlu0 %4309
        %4311 = vrot.lane.b32.xlu0 %v4009, 109
        %v4312 = vpop.permute.xlu0 %4311
        %4313 = vrot.lane.b32.xlu0 %v4017, 109
        %v4314 = vpop.permute.xlu0 %4313
        %4315 = vrot.lane.b32.xlu0 %v4025, 109
        %v4316 = vpop.permute.xlu0 %4315
        %v4317 = vsel %vm667, %v4306, %v4312
        %v4318 = vsel %vm667, %v4308, %v4314
        %v4319 = vsel %vm667, %v4310, %v4316
        %v4320 = vsel %vm667, %v4300, %v4306
        %v4321 = vsel %vm667, %v4302, %v4308
        %v4322 = vsel %vm667, %v4304, %v4310
        %v4323 = vsel %vm667, %v4294, %v4300
        %v4324 = vsel %vm667, %v4296, %v4302
        %v4325 = vsel %vm667, %v4298, %v4304
        %v4326 = vsel %vm667, %v4288, %v4294
        %v4327 = vsel %vm667, %v4290, %v4296
        %v4328 = vsel %vm667, %v4292, %v4298
        %v4329 = vsel %vm667, %v4282, %v4288
        %v4330 = vsel %vm667, %v4284, %v4290
        %v4331 = vsel %vm667, %v4286, %v4292
        %v4332 = vsel %vm667, %v4276, %v4282
        %v4333 = vsel %vm667, %v4278, %v4284
        %v4334 = vsel %vm667, %v4280, %v4286
        %v4335 = vsel %vm667, %v4270, %v4276
        %v4336 = vsel %vm667, %v4272, %v4278
        %v4337 = vsel %vm667, %v4274, %v4280
        %v4338 = vsel %vm667, %v4312, %v4270
        %v4339 = vsel %vm667, %v4314, %v4272
        %v4340 = vsel %vm667, %v4316, %v4274
        %4341 = vset.pattern.permute.xlu0 2
        %4342 = vperm.xlu0 %4341, %v368
        %v4343 = vpop.permute.xlu0 %4342
        %4345 = vset.pattern.permute.xlu0 2
        %4346 = vperm.xlu0 %4345, %v369
        %v4347 = vpop.permute.xlu0 %4346
        %4349 = vset.pattern.permute.xlu0 2
        %4350 = vperm.xlu0 %4349, %v370
        %v4351 = vpop.permute.xlu0 %4350
        %v4353 = vmul.f32 %v4338, %v4343
        %v4354 = vmul.f32 %v4335, %v4343
        %v4355 = vmul.f32 %v4332, %v4343
        %v4356 = vmul.f32 %v4329, %v4343
        %v4357 = vmul.f32 %v4326, %v4343
        %v4358 = vmul.f32 %v4323, %v4343
        %v4359 = vmul.f32 %v4320, %v4343
        %v4360 = vmul.f32 %v4317, %v4343
        %v4361 = vmul.f32 %v4339, %v4347
        %v4362 = vmul.f32 %v4336, %v4347
        %v4363 = vmul.f32 %v4333, %v4347
        %v4364 = vmul.f32 %v4330, %v4347
        %v4365 = vmul.f32 %v4327, %v4347
        %v4366 = vmul.f32 %v4324, %v4347
        %v4367 = vmul.f32 %v4321, %v4347
        %v4368 = vmul.f32 %v4318, %v4347
        %v4369 = vmul.f32 %v4340, %v4351
        %v4370 = vmul.f32 %v4337, %v4351
        %v4371 = vmul.f32 %v4334, %v4351
        %v4372 = vmul.f32 %v4331, %v4351
        %v4373 = vmul.f32 %v4328, %v4351
        %v4374 = vmul.f32 %v4325, %v4351
        %v4375 = vmul.f32 %v4322, %v4351
        %v4376 = vmul.f32 %v4319, %v4351
        %v4377 = vadd.f32 %v4245, %v4353
        %v4378 = vadd.f32 %v4246, %v4354
        %v4379 = vadd.f32 %v4247, %v4355
        %v4380 = vadd.f32 %v4248, %v4356
        %v4381 = vadd.f32 %v4249, %v4357
        %v4382 = vadd.f32 %v4250, %v4358
        %v4383 = vadd.f32 %v4251, %v4359
        %v4384 = vadd.f32 %v4252, %v4360
        %v4385 = vadd.f32 %v4253, %v4361
        %v4386 = vadd.f32 %v4254, %v4362
        %v4387 = vadd.f32 %v4255, %v4363
        %v4388 = vadd.f32 %v4256, %v4364
        %v4389 = vadd.f32 %v4257, %v4365
        %v4390 = vadd.f32 %v4258, %v4366
        %v4391 = vadd.f32 %v4259, %v4367
        %v4392 = vadd.f32 %v4260, %v4368
        %v4393 = vadd.f32 %v4261, %v4369
        %v4394 = vadd.f32 %v4262, %v4370
        %v4395 = vadd.f32 %v4263, %v4371
        %v4396 = vadd.f32 %v4264, %v4372
        %v4397 = vadd.f32 %v4265, %v4373
        %v4398 = vadd.f32 %v4266, %v4374
        %v4399 = vadd.f32 %v4267, %v4375
        %v4400 = vadd.f32 %v4268, %v4376
        %4401 = vrot.lane.b32.xlu0 %v4002, 101
        %v4402 = vpop.permute.xlu0 %4401
        %4403 = vrot.lane.b32.xlu0 %v4010, 101
        %v4404 = vpop.permute.xlu0 %4403
        %4405 = vrot.lane.b32.xlu0 %v4018, 101
        %v4406 = vpop.permute.xlu0 %4405
        %4407 = vrot.lane.b32.xlu0 %v4003, 101
        %v4408 = vpop.permute.xlu0 %4407
        %4409 = vrot.lane.b32.xlu0 %v4011, 101
        %v4410 = vpop.permute.xlu0 %4409
        %4411 = vrot.lane.b32.xlu0 %v4019, 101
        %v4412 = vpop.permute.xlu0 %4411
        %4413 = vrot.lane.b32.xlu0 %v4004, 101
        %v4414 = vpop.permute.xlu0 %4413
        %4415 = vrot.lane.b32.xlu0 %v4012, 101
        %v4416 = vpop.permute.xlu0 %4415
        %4417 = vrot.lane.b32.xlu0 %v4020, 101
        %v4418 = vpop.permute.xlu0 %4417
        %4419 = vrot.lane.b32.xlu0 %v4005, 101
        %v4420 = vpop.permute.xlu0 %4419
        %4421 = vrot.lane.b32.xlu0 %v4013, 101
        %v4422 = vpop.permute.xlu0 %4421
        %4423 = vrot.lane.b32.xlu0 %v4021, 101
        %v4424 = vpop.permute.xlu0 %4423
        %4425 = vrot.lane.b32.xlu0 %v4006, 101
        %v4426 = vpop.permute.xlu0 %4425
        %4427 = vrot.lane.b32.xlu0 %v4014, 101
        %v4428 = vpop.permute.xlu0 %4427
        %4429 = vrot.lane.b32.xlu0 %v4022, 101
        %v4430 = vpop.permute.xlu0 %4429
        %4431 = vrot.lane.b32.xlu0 %v4007, 101
        %v4432 = vpop.permute.xlu0 %4431
        %4433 = vrot.lane.b32.xlu0 %v4015, 101
        %v4434 = vpop.permute.xlu0 %4433
        %4435 = vrot.lane.b32.xlu0 %v4023, 101
        %v4436 = vpop.permute.xlu0 %4435
        %4437 = vrot.lane.b32.xlu0 %v4008, 101
        %v4438 = vpop.permute.xlu0 %4437
        %4439 = vrot.lane.b32.xlu0 %v4016, 101
        %v4440 = vpop.permute.xlu0 %4439
        %4441 = vrot.lane.b32.xlu0 %v4024, 101
        %v4442 = vpop.permute.xlu0 %4441
        %4443 = vrot.lane.b32.xlu0 %v4009, 101
        %v4444 = vpop.permute.xlu0 %4443
        %4445 = vrot.lane.b32.xlu0 %v4017, 101
        %v4446 = vpop.permute.xlu0 %4445
        %4447 = vrot.lane.b32.xlu0 %v4025, 101
        %v4448 = vpop.permute.xlu0 %4447
        %v4449 = vsel %vm800, %v4438, %v4444
        %v4450 = vsel %vm800, %v4440, %v4446
        %v4451 = vsel %vm800, %v4442, %v4448
        %v4452 = vsel %vm800, %v4432, %v4438
        %v4453 = vsel %vm800, %v4434, %v4440
        %v4454 = vsel %vm800, %v4436, %v4442
        %v4455 = vsel %vm800, %v4426, %v4432
        %v4456 = vsel %vm800, %v4428, %v4434
        %v4457 = vsel %vm800, %v4430, %v4436
        %v4458 = vsel %vm800, %v4420, %v4426
        %v4459 = vsel %vm800, %v4422, %v4428
        %v4460 = vsel %vm800, %v4424, %v4430
        %v4461 = vsel %vm800, %v4414, %v4420
        %v4462 = vsel %vm800, %v4416, %v4422
        %v4463 = vsel %vm800, %v4418, %v4424
        %v4464 = vsel %vm800, %v4408, %v4414
        %v4465 = vsel %vm800, %v4410, %v4416
        %v4466 = vsel %vm800, %v4412, %v4418
        %v4467 = vsel %vm800, %v4402, %v4408
        %v4468 = vsel %vm800, %v4404, %v4410
        %v4469 = vsel %vm800, %v4406, %v4412
        %v4470 = vsel %vm800, %v4444, %v4402
        %v4471 = vsel %vm800, %v4446, %v4404
        %v4472 = vsel %vm800, %v4448, %v4406
        %4473 = vset.pattern.permute.xlu0 3
        %4474 = vperm.xlu0 %4473, %v368
        %v4475 = vpop.permute.xlu0 %4474
        %4477 = vset.pattern.permute.xlu0 3
        %4478 = vperm.xlu0 %4477, %v369
        %v4479 = vpop.permute.xlu0 %4478
        %4481 = vset.pattern.permute.xlu0 3
        %4482 = vperm.xlu0 %4481, %v370
        %v4483 = vpop.permute.xlu0 %4482
        %v4485 = vmul.f32 %v4470, %v4475
        %v4486 = vmul.f32 %v4467, %v4475
        %v4487 = vmul.f32 %v4464, %v4475
        %v4488 = vmul.f32 %v4461, %v4475
        %v4489 = vmul.f32 %v4458, %v4475
        %v4490 = vmul.f32 %v4455, %v4475
        %v4491 = vmul.f32 %v4452, %v4475
        %v4492 = vmul.f32 %v4449, %v4475
        %v4493 = vmul.f32 %v4471, %v4479
        %v4494 = vmul.f32 %v4468, %v4479
        %v4495 = vmul.f32 %v4465, %v4479
        %v4496 = vmul.f32 %v4462, %v4479
        %v4497 = vmul.f32 %v4459, %v4479
        %v4498 = vmul.f32 %v4456, %v4479
        %v4499 = vmul.f32 %v4453, %v4479
        %v4500 = vmul.f32 %v4450, %v4479
        %v4501 = vmul.f32 %v4472, %v4483
        %v4502 = vmul.f32 %v4469, %v4483
        %v4503 = vmul.f32 %v4466, %v4483
        %v4504 = vmul.f32 %v4463, %v4483
        %v4505 = vmul.f32 %v4460, %v4483
        %v4506 = vmul.f32 %v4457, %v4483
        %v4507 = vmul.f32 %v4454, %v4483
        %v4508 = vmul.f32 %v4451, %v4483
        %v4509 = vadd.f32 %v4377, %v4485
        %v4510 = vadd.f32 %v4378, %v4486
        %v4511 = vadd.f32 %v4379, %v4487
        %v4512 = vadd.f32 %v4380, %v4488
        %v4513 = vadd.f32 %v4381, %v4489
        %v4514 = vadd.f32 %v4382, %v4490
        %v4515 = vadd.f32 %v4383, %v4491
        %v4516 = vadd.f32 %v4384, %v4492
        %v4517 = vadd.f32 %v4385, %v4493
        %v4518 = vadd.f32 %v4386, %v4494
        %v4519 = vadd.f32 %v4387, %v4495
        %v4520 = vadd.f32 %v4388, %v4496
        %v4521 = vadd.f32 %v4389, %v4497
        %v4522 = vadd.f32 %v4390, %v4498
        %v4523 = vadd.f32 %v4391, %v4499
        %v4524 = vadd.f32 %v4392, %v4500
        %v4525 = vadd.f32 %v4393, %v4501
        %v4526 = vadd.f32 %v4394, %v4502
        %v4527 = vadd.f32 %v4395, %v4503
        %v4528 = vadd.f32 %v4396, %v4504
        %v4529 = vadd.f32 %v4397, %v4505
        %v4530 = vadd.f32 %v4398, %v4506
        %v4531 = vadd.f32 %v4399, %v4507
        %v4532 = vadd.f32 %v4400, %v4508
        %4533 = vrot.lane.b32.xlu0 %v4002, 100
        %v4534 = vpop.permute.xlu0 %4533
        %4535 = vrot.lane.b32.xlu0 %v4010, 100
        %v4536 = vpop.permute.xlu0 %4535
        %4537 = vrot.lane.b32.xlu0 %v4018, 100
        %v4538 = vpop.permute.xlu0 %4537
        %4539 = vrot.lane.b32.xlu0 %v4003, 100
        %v4540 = vpop.permute.xlu0 %4539
        %4541 = vrot.lane.b32.xlu0 %v4011, 100
        %v4542 = vpop.permute.xlu0 %4541
        %4543 = vrot.lane.b32.xlu0 %v4019, 100
        %v4544 = vpop.permute.xlu0 %4543
        %4545 = vrot.lane.b32.xlu0 %v4004, 100
        %v4546 = vpop.permute.xlu0 %4545
        %4547 = vrot.lane.b32.xlu0 %v4012, 100
        %v4548 = vpop.permute.xlu0 %4547
        %4549 = vrot.lane.b32.xlu0 %v4020, 100
        %v4550 = vpop.permute.xlu0 %4549
        %4551 = vrot.lane.b32.xlu0 %v4005, 100
        %v4552 = vpop.permute.xlu0 %4551
        %4553 = vrot.lane.b32.xlu0 %v4013, 100
        %v4554 = vpop.permute.xlu0 %4553
        %4555 = vrot.lane.b32.xlu0 %v4021, 100
        %v4556 = vpop.permute.xlu0 %4555
        %4557 = vrot.lane.b32.xlu0 %v4006, 100
        %v4558 = vpop.permute.xlu0 %4557
        %4559 = vrot.lane.b32.xlu0 %v4014, 100
        %v4560 = vpop.permute.xlu0 %4559
        %4561 = vrot.lane.b32.xlu0 %v4022, 100
        %v4562 = vpop.permute.xlu0 %4561
        %4563 = vrot.lane.b32.xlu0 %v4007, 100
        %v4564 = vpop.permute.xlu0 %4563
        %4565 = vrot.lane.b32.xlu0 %v4015, 100
        %v4566 = vpop.permute.xlu0 %4565
        %4567 = vrot.lane.b32.xlu0 %v4023, 100
        %v4568 = vpop.permute.xlu0 %4567
        %4569 = vrot.lane.b32.xlu0 %v4008, 100
        %v4570 = vpop.permute.xlu0 %4569
        %4571 = vrot.lane.b32.xlu0 %v4016, 100
        %v4572 = vpop.permute.xlu0 %4571
        %4573 = vrot.lane.b32.xlu0 %v4024, 100
        %v4574 = vpop.permute.xlu0 %4573
        %4575 = vrot.lane.b32.xlu0 %v4009, 100
        %v4576 = vpop.permute.xlu0 %4575
        %4577 = vrot.lane.b32.xlu0 %v4017, 100
        %v4578 = vpop.permute.xlu0 %4577
        %4579 = vrot.lane.b32.xlu0 %v4025, 100
        %v4580 = vpop.permute.xlu0 %4579
        %v4581 = vsel %vm933, %v4570, %v4576
        %v4582 = vsel %vm933, %v4572, %v4578
        %v4583 = vsel %vm933, %v4574, %v4580
        %v4584 = vsel %vm933, %v4564, %v4570
        %v4585 = vsel %vm933, %v4566, %v4572
        %v4586 = vsel %vm933, %v4568, %v4574
        %v4587 = vsel %vm933, %v4558, %v4564
        %v4588 = vsel %vm933, %v4560, %v4566
        %v4589 = vsel %vm933, %v4562, %v4568
        %v4590 = vsel %vm933, %v4552, %v4558
        %v4591 = vsel %vm933, %v4554, %v4560
        %v4592 = vsel %vm933, %v4556, %v4562
        %v4593 = vsel %vm933, %v4546, %v4552
        %v4594 = vsel %vm933, %v4548, %v4554
        %v4595 = vsel %vm933, %v4550, %v4556
        %v4596 = vsel %vm933, %v4540, %v4546
        %v4597 = vsel %vm933, %v4542, %v4548
        %v4598 = vsel %vm933, %v4544, %v4550
        %v4599 = vsel %vm933, %v4534, %v4540
        %v4600 = vsel %vm933, %v4536, %v4542
        %v4601 = vsel %vm933, %v4538, %v4544
        %v4602 = vsel %vm933, %v4576, %v4534
        %v4603 = vsel %vm933, %v4578, %v4536
        %v4604 = vsel %vm933, %v4580, %v4538
        %4605 = vset.pattern.permute.xlu0 4
        %4606 = vperm.xlu0 %4605, %v368
        %v4607 = vpop.permute.xlu0 %4606
        %4609 = vset.pattern.permute.xlu0 4
        %4610 = vperm.xlu0 %4609, %v369
        %v4611 = vpop.permute.xlu0 %4610
        %4613 = vset.pattern.permute.xlu0 4
        %4614 = vperm.xlu0 %4613, %v370
        %v4615 = vpop.permute.xlu0 %4614
        %v4617 = vmul.f32 %v4602, %v4607
        %v4618 = vmul.f32 %v4599, %v4607
        %v4619 = vmul.f32 %v4596, %v4607
        %v4620 = vmul.f32 %v4593, %v4607
        %v4621 = vmul.f32 %v4590, %v4607
        %v4622 = vmul.f32 %v4587, %v4607
        %v4623 = vmul.f32 %v4584, %v4607
        %v4624 = vmul.f32 %v4581, %v4607
        %v4625 = vmul.f32 %v4603, %v4611
        %v4626 = vmul.f32 %v4600, %v4611
        %v4627 = vmul.f32 %v4597, %v4611
        %v4628 = vmul.f32 %v4594, %v4611
        %v4629 = vmul.f32 %v4591, %v4611
        %v4630 = vmul.f32 %v4588, %v4611
        %v4631 = vmul.f32 %v4585, %v4611
        %v4632 = vmul.f32 %v4582, %v4611
        %v4633 = vmul.f32 %v4604, %v4615
        %v4634 = vmul.f32 %v4601, %v4615
        %v4635 = vmul.f32 %v4598, %v4615
        %v4636 = vmul.f32 %v4595, %v4615
        %v4637 = vmul.f32 %v4592, %v4615
        %v4638 = vmul.f32 %v4589, %v4615
        %v4639 = vmul.f32 %v4586, %v4615
        %v4640 = vmul.f32 %v4583, %v4615
        %v4641 = vadd.f32 %v4509, %v4617
        %v4642 = vadd.f32 %v4510, %v4618
        %v4643 = vadd.f32 %v4511, %v4619
        %v4644 = vadd.f32 %v4512, %v4620
        %v4645 = vadd.f32 %v4513, %v4621
        %v4646 = vadd.f32 %v4514, %v4622
        %v4647 = vadd.f32 %v4515, %v4623
        %v4648 = vadd.f32 %v4516, %v4624
        %v4649 = vadd.f32 %v4517, %v4625
        %v4650 = vadd.f32 %v4518, %v4626
        %v4651 = vadd.f32 %v4519, %v4627
        %v4652 = vadd.f32 %v4520, %v4628
        %v4653 = vadd.f32 %v4521, %v4629
        %v4654 = vadd.f32 %v4522, %v4630
        %v4655 = vadd.f32 %v4523, %v4631
        %v4656 = vadd.f32 %v4524, %v4632
        %v4657 = vadd.f32 %v4525, %v4633
        %v4658 = vadd.f32 %v4526, %v4634
        %v4659 = vadd.f32 %v4527, %v4635
        %v4660 = vadd.f32 %v4528, %v4636
        %v4661 = vadd.f32 %v4529, %v4637
        %v4662 = vadd.f32 %v4530, %v4638
        %v4663 = vadd.f32 %v4531, %v4639
        %v4664 = vadd.f32 %v4532, %v4640
        %4665 = vrot.lane.b32.xlu0 %v4002, 99
        %v4666 = vpop.permute.xlu0 %4665
        %4667 = vrot.lane.b32.xlu0 %v4010, 99
        %v4668 = vpop.permute.xlu0 %4667
        %4669 = vrot.lane.b32.xlu0 %v4018, 99
        %v4670 = vpop.permute.xlu0 %4669
        %4671 = vrot.lane.b32.xlu0 %v4003, 99
        %v4672 = vpop.permute.xlu0 %4671
        %4673 = vrot.lane.b32.xlu0 %v4011, 99
        %v4674 = vpop.permute.xlu0 %4673
        %4675 = vrot.lane.b32.xlu0 %v4019, 99
        %v4676 = vpop.permute.xlu0 %4675
        %4677 = vrot.lane.b32.xlu0 %v4004, 99
        %v4678 = vpop.permute.xlu0 %4677
        %4679 = vrot.lane.b32.xlu0 %v4012, 99
        %v4680 = vpop.permute.xlu0 %4679
        %4681 = vrot.lane.b32.xlu0 %v4020, 99
        %v4682 = vpop.permute.xlu0 %4681
        %4683 = vrot.lane.b32.xlu0 %v4005, 99
        %v4684 = vpop.permute.xlu0 %4683
        %4685 = vrot.lane.b32.xlu0 %v4013, 99
        %v4686 = vpop.permute.xlu0 %4685
        %4687 = vrot.lane.b32.xlu0 %v4021, 99
        %v4688 = vpop.permute.xlu0 %4687
        %4689 = vrot.lane.b32.xlu0 %v4006, 99
        %v4690 = vpop.permute.xlu0 %4689
        %4691 = vrot.lane.b32.xlu0 %v4014, 99
        %v4692 = vpop.permute.xlu0 %4691
        %4693 = vrot.lane.b32.xlu0 %v4022, 99
        %v4694 = vpop.permute.xlu0 %4693
        %4695 = vrot.lane.b32.xlu0 %v4007, 99
        %v4696 = vpop.permute.xlu0 %4695
        %4697 = vrot.lane.b32.xlu0 %v4015, 99
        %v4698 = vpop.permute.xlu0 %4697
        %4699 = vrot.lane.b32.xlu0 %v4023, 99
        %v4700 = vpop.permute.xlu0 %4699
        %4701 = vrot.lane.b32.xlu0 %v4008, 99
        %v4702 = vpop.permute.xlu0 %4701
        %4703 = vrot.lane.b32.xlu0 %v4016, 99
        %v4704 = vpop.permute.xlu0 %4703
        %4705 = vrot.lane.b32.xlu0 %v4024, 99
        %v4706 = vpop.permute.xlu0 %4705
        %4707 = vrot.lane.b32.xlu0 %v4009, 99
        %v4708 = vpop.permute.xlu0 %4707
        %4709 = vrot.lane.b32.xlu0 %v4017, 99
        %v4710 = vpop.permute.xlu0 %4709
        %4711 = vrot.lane.b32.xlu0 %v4025, 99
        %v4712 = vpop.permute.xlu0 %4711
        %v4713 = vsel %vm1066, %v4702, %v4708
        %v4714 = vsel %vm1066, %v4704, %v4710
        %v4715 = vsel %vm1066, %v4706, %v4712
        %v4716 = vsel %vm1066, %v4696, %v4702
        %v4717 = vsel %vm1066, %v4698, %v4704
        %v4718 = vsel %vm1066, %v4700, %v4706
        %v4719 = vsel %vm1066, %v4690, %v4696
        %v4720 = vsel %vm1066, %v4692, %v4698
        %v4721 = vsel %vm1066, %v4694, %v4700
        %v4722 = vsel %vm1066, %v4684, %v4690
        %v4723 = vsel %vm1066, %v4686, %v4692
        %v4724 = vsel %vm1066, %v4688, %v4694
        %v4725 = vsel %vm1066, %v4678, %v4684
        %v4726 = vsel %vm1066, %v4680, %v4686
        %v4727 = vsel %vm1066, %v4682, %v4688
        %v4728 = vsel %vm1066, %v4672, %v4678
        %v4729 = vsel %vm1066, %v4674, %v4680
        %v4730 = vsel %vm1066, %v4676, %v4682
        %v4731 = vsel %vm1066, %v4666, %v4672
        %v4732 = vsel %vm1066, %v4668, %v4674
        %v4733 = vsel %vm1066, %v4670, %v4676
        %v4734 = vsel %vm1066, %v4708, %v4666
        %v4735 = vsel %vm1066, %v4710, %v4668
        %v4736 = vsel %vm1066, %v4712, %v4670
        %4737 = vset.pattern.permute.xlu0 5
        %4738 = vperm.xlu0 %4737, %v368
        %v4739 = vpop.permute.xlu0 %4738
        %4741 = vset.pattern.permute.xlu0 5
        %4742 = vperm.xlu0 %4741, %v369
        %v4743 = vpop.permute.xlu0 %4742
        %4745 = vset.pattern.permute.xlu0 5
        %4746 = vperm.xlu0 %4745, %v370
        %v4747 = vpop.permute.xlu0 %4746
        %v4749 = vmul.f32 %v4734, %v4739
        %v4750 = vmul.f32 %v4731, %v4739
        %v4751 = vmul.f32 %v4728, %v4739
        %v4752 = vmul.f32 %v4725, %v4739
        %v4753 = vmul.f32 %v4722, %v4739
        %v4754 = vmul.f32 %v4719, %v4739
        %v4755 = vmul.f32 %v4716, %v4739
        %v4756 = vmul.f32 %v4713, %v4739
        %v4757 = vmul.f32 %v4735, %v4743
        %v4758 = vmul.f32 %v4732, %v4743
        %v4759 = vmul.f32 %v4729, %v4743
        %v4760 = vmul.f32 %v4726, %v4743
        %v4761 = vmul.f32 %v4723, %v4743
        %v4762 = vmul.f32 %v4720, %v4743
        %v4763 = vmul.f32 %v4717, %v4743
        %v4764 = vmul.f32 %v4714, %v4743
        %v4765 = vmul.f32 %v4736, %v4747
        %v4766 = vmul.f32 %v4733, %v4747
        %v4767 = vmul.f32 %v4730, %v4747
        %v4768 = vmul.f32 %v4727, %v4747
        %v4769 = vmul.f32 %v4724, %v4747
        %v4770 = vmul.f32 %v4721, %v4747
        %v4771 = vmul.f32 %v4718, %v4747
        %v4772 = vmul.f32 %v4715, %v4747
        %v4773 = vadd.f32 %v4641, %v4749
        %v4774 = vadd.f32 %v4642, %v4750
        %v4775 = vadd.f32 %v4643, %v4751
        %v4776 = vadd.f32 %v4644, %v4752
        %v4777 = vadd.f32 %v4645, %v4753
        %v4778 = vadd.f32 %v4646, %v4754
        %v4779 = vadd.f32 %v4647, %v4755
        %v4780 = vadd.f32 %v4648, %v4756
        %v4781 = vadd.f32 %v4649, %v4757
        %v4782 = vadd.f32 %v4650, %v4758
        %v4783 = vadd.f32 %v4651, %v4759
        %v4784 = vadd.f32 %v4652, %v4760
        %v4785 = vadd.f32 %v4653, %v4761
        %v4786 = vadd.f32 %v4654, %v4762
        %v4787 = vadd.f32 %v4655, %v4763
        %v4788 = vadd.f32 %v4656, %v4764
        %v4789 = vadd.f32 %v4657, %v4765
        %v4790 = vadd.f32 %v4658, %v4766
        %v4791 = vadd.f32 %v4659, %v4767
        %v4792 = vadd.f32 %v4660, %v4768
        %v4793 = vadd.f32 %v4661, %v4769
        %v4794 = vadd.f32 %v4662, %v4770
        %v4795 = vadd.f32 %v4663, %v4771
        %v4796 = vadd.f32 %v4664, %v4772
        %4797 = vrot.lane.b32.xlu0 %v4002, 91
        %v4798 = vpop.permute.xlu0 %4797
        %4799 = vrot.lane.b32.xlu0 %v4010, 91
        %v4800 = vpop.permute.xlu0 %4799
        %4801 = vrot.lane.b32.xlu0 %v4018, 91
        %v4802 = vpop.permute.xlu0 %4801
        %4803 = vrot.lane.b32.xlu0 %v4003, 91
        %v4804 = vpop.permute.xlu0 %4803
        %4805 = vrot.lane.b32.xlu0 %v4011, 91
        %v4806 = vpop.permute.xlu0 %4805
        %4807 = vrot.lane.b32.xlu0 %v4019, 91
        %v4808 = vpop.permute.xlu0 %4807
        %4809 = vrot.lane.b32.xlu0 %v4004, 91
        %v4810 = vpop.permute.xlu0 %4809
        %4811 = vrot.lane.b32.xlu0 %v4012, 91
        %v4812 = vpop.permute.xlu0 %4811
        %4813 = vrot.lane.b32.xlu0 %v4020, 91
        %v4814 = vpop.permute.xlu0 %4813
        %4815 = vrot.lane.b32.xlu0 %v4005, 91
        %v4816 = vpop.permute.xlu0 %4815
        %4817 = vrot.lane.b32.xlu0 %v4013, 91
        %v4818 = vpop.permute.xlu0 %4817
        %4819 = vrot.lane.b32.xlu0 %v4021, 91
        %v4820 = vpop.permute.xlu0 %4819
        %4821 = vrot.lane.b32.xlu0 %v4006, 91
        %v4822 = vpop.permute.xlu0 %4821
        %4823 = vrot.lane.b32.xlu0 %v4014, 91
        %v4824 = vpop.permute.xlu0 %4823
        %4825 = vrot.lane.b32.xlu0 %v4022, 91
        %v4826 = vpop.permute.xlu0 %4825
        %4827 = vrot.lane.b32.xlu0 %v4007, 91
        %v4828 = vpop.permute.xlu0 %4827
        %4829 = vrot.lane.b32.xlu0 %v4015, 91
        %v4830 = vpop.permute.xlu0 %4829
        %4831 = vrot.lane.b32.xlu0 %v4023, 91
        %v4832 = vpop.permute.xlu0 %4831
        %4833 = vrot.lane.b32.xlu0 %v4008, 91
        %v4834 = vpop.permute.xlu0 %4833
        %4835 = vrot.lane.b32.xlu0 %v4016, 91
        %v4836 = vpop.permute.xlu0 %4835
        %4837 = vrot.lane.b32.xlu0 %v4024, 91
        %v4838 = vpop.permute.xlu0 %4837
        %4839 = vrot.lane.b32.xlu0 %v4009, 91
        %v4840 = vpop.permute.xlu0 %4839
        %4841 = vrot.lane.b32.xlu0 %v4017, 91
        %v4842 = vpop.permute.xlu0 %4841
        %4843 = vrot.lane.b32.xlu0 %v4025, 91
        %v4844 = vpop.permute.xlu0 %4843
        %v4845 = vsel %vm1199, %v4834, %v4840
        %v4846 = vsel %vm1199, %v4836, %v4842
        %v4847 = vsel %vm1199, %v4838, %v4844
        %v4848 = vsel %vm1199, %v4828, %v4834
        %v4849 = vsel %vm1199, %v4830, %v4836
        %v4850 = vsel %vm1199, %v4832, %v4838
        %v4851 = vsel %vm1199, %v4822, %v4828
        %v4852 = vsel %vm1199, %v4824, %v4830
        %v4853 = vsel %vm1199, %v4826, %v4832
        %v4854 = vsel %vm1199, %v4816, %v4822
        %v4855 = vsel %vm1199, %v4818, %v4824
        %v4856 = vsel %vm1199, %v4820, %v4826
        %v4857 = vsel %vm1199, %v4810, %v4816
        %v4858 = vsel %vm1199, %v4812, %v4818
        %v4859 = vsel %vm1199, %v4814, %v4820
        %v4860 = vsel %vm1199, %v4804, %v4810
        %v4861 = vsel %vm1199, %v4806, %v4812
        %v4862 = vsel %vm1199, %v4808, %v4814
        %v4863 = vsel %vm1199, %v4798, %v4804
        %v4864 = vsel %vm1199, %v4800, %v4806
        %v4865 = vsel %vm1199, %v4802, %v4808
        %v4866 = vsel %vm1199, %v4840, %v4798
        %v4867 = vsel %vm1199, %v4842, %v4800
        %v4868 = vsel %vm1199, %v4844, %v4802
        %4869 = vset.pattern.permute.xlu0 6
        %4870 = vperm.xlu0 %4869, %v368
        %v4871 = vpop.permute.xlu0 %4870
        %4873 = vset.pattern.permute.xlu0 6
        %4874 = vperm.xlu0 %4873, %v369
        %v4875 = vpop.permute.xlu0 %4874
        %4877 = vset.pattern.permute.xlu0 6
        %4878 = vperm.xlu0 %4877, %v370
        %v4879 = vpop.permute.xlu0 %4878
        %v4881 = vmul.f32 %v4866, %v4871
        %v4882 = vmul.f32 %v4863, %v4871
        %v4883 = vmul.f32 %v4860, %v4871
        %v4884 = vmul.f32 %v4857, %v4871
        %v4885 = vmul.f32 %v4854, %v4871
        %v4886 = vmul.f32 %v4851, %v4871
        %v4887 = vmul.f32 %v4848, %v4871
        %v4888 = vmul.f32 %v4845, %v4871
        %v4889 = vmul.f32 %v4867, %v4875
        %v4890 = vmul.f32 %v4864, %v4875
        %v4891 = vmul.f32 %v4861, %v4875
        %v4892 = vmul.f32 %v4858, %v4875
        %v4893 = vmul.f32 %v4855, %v4875
        %v4894 = vmul.f32 %v4852, %v4875
        %v4895 = vmul.f32 %v4849, %v4875
        %v4896 = vmul.f32 %v4846, %v4875
        %v4897 = vmul.f32 %v4868, %v4879
        %v4898 = vmul.f32 %v4865, %v4879
        %v4899 = vmul.f32 %v4862, %v4879
        %v4900 = vmul.f32 %v4859, %v4879
        %v4901 = vmul.f32 %v4856, %v4879
        %v4902 = vmul.f32 %v4853, %v4879
        %v4903 = vmul.f32 %v4850, %v4879
        %v4904 = vmul.f32 %v4847, %v4879
        %v4905 = vadd.f32 %v4773, %v4881
        %v4906 = vadd.f32 %v4774, %v4882
        %v4907 = vadd.f32 %v4775, %v4883
        %v4908 = vadd.f32 %v4776, %v4884
        %v4909 = vadd.f32 %v4777, %v4885
        %v4910 = vadd.f32 %v4778, %v4886
        %v4911 = vadd.f32 %v4779, %v4887
        %v4912 = vadd.f32 %v4780, %v4888
        %v4913 = vadd.f32 %v4781, %v4889
        %v4914 = vadd.f32 %v4782, %v4890
        %v4915 = vadd.f32 %v4783, %v4891
        %v4916 = vadd.f32 %v4784, %v4892
        %v4917 = vadd.f32 %v4785, %v4893
        %v4918 = vadd.f32 %v4786, %v4894
        %v4919 = vadd.f32 %v4787, %v4895
        %v4920 = vadd.f32 %v4788, %v4896
        %v4921 = vadd.f32 %v4789, %v4897
        %v4922 = vadd.f32 %v4790, %v4898
        %v4923 = vadd.f32 %v4791, %v4899
        %v4924 = vadd.f32 %v4792, %v4900
        %v4925 = vadd.f32 %v4793, %v4901
        %v4926 = vadd.f32 %v4794, %v4902
        %v4927 = vadd.f32 %v4795, %v4903
        %v4928 = vadd.f32 %v4796, %v4904
        %4929 = vrot.lane.b32.xlu0 %v4002, 90
        %v4930 = vpop.permute.xlu0 %4929
        %4931 = vrot.lane.b32.xlu0 %v4010, 90
        %v4932 = vpop.permute.xlu0 %4931
        %4933 = vrot.lane.b32.xlu0 %v4018, 90
        %v4934 = vpop.permute.xlu0 %4933
        %4935 = vrot.lane.b32.xlu0 %v4003, 90
        %v4936 = vpop.permute.xlu0 %4935
        %4937 = vrot.lane.b32.xlu0 %v4011, 90
        %v4938 = vpop.permute.xlu0 %4937
        %4939 = vrot.lane.b32.xlu0 %v4019, 90
        %v4940 = vpop.permute.xlu0 %4939
        %4941 = vrot.lane.b32.xlu0 %v4004, 90
        %v4942 = vpop.permute.xlu0 %4941
        %4943 = vrot.lane.b32.xlu0 %v4012, 90
        %v4944 = vpop.permute.xlu0 %4943
        %4945 = vrot.lane.b32.xlu0 %v4020, 90
        %v4946 = vpop.permute.xlu0 %4945
        %4947 = vrot.lane.b32.xlu0 %v4005, 90
        %v4948 = vpop.permute.xlu0 %4947
        %4949 = vrot.lane.b32.xlu0 %v4013, 90
        %v4950 = vpop.permute.xlu0 %4949
        %4951 = vrot.lane.b32.xlu0 %v4021, 90
        %v4952 = vpop.permute.xlu0 %4951
        %4953 = vrot.lane.b32.xlu0 %v4006, 90
        %v4954 = vpop.permute.xlu0 %4953
        %4955 = vrot.lane.b32.xlu0 %v4014, 90
        %v4956 = vpop.permute.xlu0 %4955
        %4957 = vrot.lane.b32.xlu0 %v4022, 90
        %v4958 = vpop.permute.xlu0 %4957
        %4959 = vrot.lane.b32.xlu0 %v4007, 90
        %v4960 = vpop.permute.xlu0 %4959
        %4961 = vrot.lane.b32.xlu0 %v4015, 90
        %v4962 = vpop.permute.xlu0 %4961
        %4963 = vrot.lane.b32.xlu0 %v4023, 90
        %v4964 = vpop.permute.xlu0 %4963
        %4965 = vrot.lane.b32.xlu0 %v4008, 90
        %v4966 = vpop.permute.xlu0 %4965
        %4967 = vrot.lane.b32.xlu0 %v4016, 90
        %v4968 = vpop.permute.xlu0 %4967
        %4969 = vrot.lane.b32.xlu0 %v4024, 90
        %v4970 = vpop.permute.xlu0 %4969
        %4971 = vrot.lane.b32.xlu0 %v4009, 90
        %v4972 = vpop.permute.xlu0 %4971
        %4973 = vrot.lane.b32.xlu0 %v4017, 90
        %v4974 = vpop.permute.xlu0 %4973
        %4975 = vrot.lane.b32.xlu0 %v4025, 90
        %v4976 = vpop.permute.xlu0 %4975
        %v4977 = vsel %vm1332, %v4966, %v4972
        %v4978 = vsel %vm1332, %v4968, %v4974
        %v4979 = vsel %vm1332, %v4970, %v4976
        %v4980 = vsel %vm1332, %v4960, %v4966
        %v4981 = vsel %vm1332, %v4962, %v4968
        %v4982 = vsel %vm1332, %v4964, %v4970
        %v4983 = vsel %vm1332, %v4954, %v4960
        %v4984 = vsel %vm1332, %v4956, %v4962
        %v4985 = vsel %vm1332, %v4958, %v4964
        %v4986 = vsel %vm1332, %v4948, %v4954
        %v4987 = vsel %vm1332, %v4950, %v4956
        %v4988 = vsel %vm1332, %v4952, %v4958
        %v4989 = vsel %vm1332, %v4942, %v4948
        %v4990 = vsel %vm1332, %v4944, %v4950
        %v4991 = vsel %vm1332, %v4946, %v4952
        %v4992 = vsel %vm1332, %v4936, %v4942
        %v4993 = vsel %vm1332, %v4938, %v4944
        %v4994 = vsel %vm1332, %v4940, %v4946
        %v4995 = vsel %vm1332, %v4930, %v4936
        %v4996 = vsel %vm1332, %v4932, %v4938
        %v4997 = vsel %vm1332, %v4934, %v4940
        %v4998 = vsel %vm1332, %v4972, %v4930
        %v4999 = vsel %vm1332, %v4974, %v4932
        %v5000 = vsel %vm1332, %v4976, %v4934
        %5001 = vset.pattern.permute.xlu0 7
        %5002 = vperm.xlu0 %5001, %v368
        %v5003 = vpop.permute.xlu0 %5002
        %5005 = vset.pattern.permute.xlu0 7
        %5006 = vperm.xlu0 %5005, %v369
        %v5007 = vpop.permute.xlu0 %5006
        %5009 = vset.pattern.permute.xlu0 7
        %5010 = vperm.xlu0 %5009, %v370
        %v5011 = vpop.permute.xlu0 %5010
        %v5013 = vmul.f32 %v4998, %v5003
        %v5014 = vmul.f32 %v4995, %v5003
        %v5015 = vmul.f32 %v4992, %v5003
        %v5016 = vmul.f32 %v4989, %v5003
        %v5017 = vmul.f32 %v4986, %v5003
        %v5018 = vmul.f32 %v4983, %v5003
        %v5019 = vmul.f32 %v4980, %v5003
        %v5020 = vmul.f32 %v4977, %v5003
        %v5021 = vmul.f32 %v4999, %v5007
        %v5022 = vmul.f32 %v4996, %v5007
        %v5023 = vmul.f32 %v4993, %v5007
        %v5024 = vmul.f32 %v4990, %v5007
        %v5025 = vmul.f32 %v4987, %v5007
        %v5026 = vmul.f32 %v4984, %v5007
        %v5027 = vmul.f32 %v4981, %v5007
        %v5028 = vmul.f32 %v4978, %v5007
        %v5029 = vmul.f32 %v5000, %v5011
        %v5030 = vmul.f32 %v4997, %v5011
        %v5031 = vmul.f32 %v4994, %v5011
        %v5032 = vmul.f32 %v4991, %v5011
        %v5033 = vmul.f32 %v4988, %v5011
        %v5034 = vmul.f32 %v4985, %v5011
        %v5035 = vmul.f32 %v4982, %v5011
        %v5036 = vmul.f32 %v4979, %v5011
        %v5037 = vadd.f32 %v4905, %v5013
        %v5038 = vadd.f32 %v4906, %v5014
        %v5039 = vadd.f32 %v4907, %v5015
        %v5040 = vadd.f32 %v4908, %v5016
        %v5041 = vadd.f32 %v4909, %v5017
        %v5042 = vadd.f32 %v4910, %v5018
        %v5043 = vadd.f32 %v4911, %v5019
        %v5044 = vadd.f32 %v4912, %v5020
        %v5045 = vadd.f32 %v4913, %v5021
        %v5046 = vadd.f32 %v4914, %v5022
        %v5047 = vadd.f32 %v4915, %v5023
        %v5048 = vadd.f32 %v4916, %v5024
        %v5049 = vadd.f32 %v4917, %v5025
        %v5050 = vadd.f32 %v4918, %v5026
        %v5051 = vadd.f32 %v4919, %v5027
        %v5052 = vadd.f32 %v4920, %v5028
        %v5053 = vadd.f32 %v4921, %v5029
        %v5054 = vadd.f32 %v4922, %v5030
        %v5055 = vadd.f32 %v4923, %v5031
        %v5056 = vadd.f32 %v4924, %v5032
        %v5057 = vadd.f32 %v4925, %v5033
        %v5058 = vadd.f32 %v4926, %v5034
        %v5059 = vadd.f32 %v4927, %v5035
        %v5060 = vadd.f32 %v4928, %v5036
        %5061 = vrot.lane.b32.xlu0 %v4002, 89
        %v5062 = vpop.permute.xlu0 %5061
        %5063 = vrot.lane.b32.xlu0 %v4010, 89
        %v5064 = vpop.permute.xlu0 %5063
        %5065 = vrot.lane.b32.xlu0 %v4018, 89
        %v5066 = vpop.permute.xlu0 %5065
        %5067 = vrot.lane.b32.xlu0 %v4003, 89
        %v5068 = vpop.permute.xlu0 %5067
        %5069 = vrot.lane.b32.xlu0 %v4011, 89
        %v5070 = vpop.permute.xlu0 %5069
        %5071 = vrot.lane.b32.xlu0 %v4019, 89
        %v5072 = vpop.permute.xlu0 %5071
        %5073 = vrot.lane.b32.xlu0 %v4004, 89
        %v5074 = vpop.permute.xlu0 %5073
        %5075 = vrot.lane.b32.xlu0 %v4012, 89
        %v5076 = vpop.permute.xlu0 %5075
        %5077 = vrot.lane.b32.xlu0 %v4020, 89
        %v5078 = vpop.permute.xlu0 %5077
        %5079 = vrot.lane.b32.xlu0 %v4005, 89
        %v5080 = vpop.permute.xlu0 %5079
        %5081 = vrot.lane.b32.xlu0 %v4013, 89
        %v5082 = vpop.permute.xlu0 %5081
        %5083 = vrot.lane.b32.xlu0 %v4021, 89
        %v5084 = vpop.permute.xlu0 %5083
        %5085 = vrot.lane.b32.xlu0 %v4006, 89
        %v5086 = vpop.permute.xlu0 %5085
        %5087 = vrot.lane.b32.xlu0 %v4014, 89
        %v5088 = vpop.permute.xlu0 %5087
        %5089 = vrot.lane.b32.xlu0 %v4022, 89
        %v5090 = vpop.permute.xlu0 %5089
        %5091 = vrot.lane.b32.xlu0 %v4007, 89
        %v5092 = vpop.permute.xlu0 %5091
        %5093 = vrot.lane.b32.xlu0 %v4015, 89
        %v5094 = vpop.permute.xlu0 %5093
        %5095 = vrot.lane.b32.xlu0 %v4023, 89
        %v5096 = vpop.permute.xlu0 %5095
        %5097 = vrot.lane.b32.xlu0 %v4008, 89
        %v5098 = vpop.permute.xlu0 %5097
        %5099 = vrot.lane.b32.xlu0 %v4016, 89
        %v5100 = vpop.permute.xlu0 %5099
        %5101 = vrot.lane.b32.xlu0 %v4024, 89
        %v5102 = vpop.permute.xlu0 %5101
        %5103 = vrot.lane.b32.xlu0 %v4009, 89
        %v5104 = vpop.permute.xlu0 %5103
        %5105 = vrot.lane.b32.xlu0 %v4017, 89
        %v5106 = vpop.permute.xlu0 %5105
        %5107 = vrot.lane.b32.xlu0 %v4025, 89
        %v5108 = vpop.permute.xlu0 %5107
        %v5109 = vsel %vm1465, %v5098, %v5104
        %v5110 = vsel %vm1465, %v5100, %v5106
        %v5111 = vsel %vm1465, %v5102, %v5108
        %v5112 = vsel %vm1465, %v5092, %v5098
        %v5113 = vsel %vm1465, %v5094, %v5100
        %v5114 = vsel %vm1465, %v5096, %v5102
        %v5115 = vsel %vm1465, %v5086, %v5092
        %v5116 = vsel %vm1465, %v5088, %v5094
        %v5117 = vsel %vm1465, %v5090, %v5096
        %v5118 = vsel %vm1465, %v5080, %v5086
        %v5119 = vsel %vm1465, %v5082, %v5088
        %v5120 = vsel %vm1465, %v5084, %v5090
        %v5121 = vsel %vm1465, %v5074, %v5080
        %v5122 = vsel %vm1465, %v5076, %v5082
        %v5123 = vsel %vm1465, %v5078, %v5084
        %v5124 = vsel %vm1465, %v5068, %v5074
        %v5125 = vsel %vm1465, %v5070, %v5076
        %v5126 = vsel %vm1465, %v5072, %v5078
        %v5127 = vsel %vm1465, %v5062, %v5068
        %v5128 = vsel %vm1465, %v5064, %v5070
        %v5129 = vsel %vm1465, %v5066, %v5072
        %v5130 = vsel %vm1465, %v5104, %v5062
        %v5131 = vsel %vm1465, %v5106, %v5064
        %v5132 = vsel %vm1465, %v5108, %v5066
        %5133 = vset.pattern.permute.xlu0 8
        %5134 = vperm.xlu0 %5133, %v368
        %v5135 = vpop.permute.xlu0 %5134
        %5137 = vset.pattern.permute.xlu0 8
        %5138 = vperm.xlu0 %5137, %v369
        %v5139 = vpop.permute.xlu0 %5138
        %5141 = vset.pattern.permute.xlu0 8
        %5142 = vperm.xlu0 %5141, %v370
        %v5143 = vpop.permute.xlu0 %5142
        %v5145 = vmul.f32 %v5130, %v5135
        %v5146 = vmul.f32 %v5127, %v5135
        %v5147 = vmul.f32 %v5124, %v5135
        %v5148 = vmul.f32 %v5121, %v5135
        %v5149 = vmul.f32 %v5118, %v5135
        %v5150 = vmul.f32 %v5115, %v5135
        %v5151 = vmul.f32 %v5112, %v5135
        %v5152 = vmul.f32 %v5109, %v5135
        %v5153 = vmul.f32 %v5131, %v5139
        %v5154 = vmul.f32 %v5128, %v5139
        %v5155 = vmul.f32 %v5125, %v5139
        %v5156 = vmul.f32 %v5122, %v5139
        %v5157 = vmul.f32 %v5119, %v5139
        %v5158 = vmul.f32 %v5116, %v5139
        %v5159 = vmul.f32 %v5113, %v5139
        %v5160 = vmul.f32 %v5110, %v5139
        %v5161 = vmul.f32 %v5132, %v5143
        %v5162 = vmul.f32 %v5129, %v5143
        %v5163 = vmul.f32 %v5126, %v5143
        %v5164 = vmul.f32 %v5123, %v5143
        %v5165 = vmul.f32 %v5120, %v5143
        %v5166 = vmul.f32 %v5117, %v5143
        %v5167 = vmul.f32 %v5114, %v5143
        %v5168 = vmul.f32 %v5111, %v5143
        %v5169 = vadd.f32 %v5037, %v5145
        %v5170 = vadd.f32 %v5038, %v5146
        %v5171 = vadd.f32 %v5039, %v5147
        %v5172 = vadd.f32 %v5040, %v5148
        %v5173 = vadd.f32 %v5041, %v5149
        %v5174 = vadd.f32 %v5042, %v5150
        %v5175 = vadd.f32 %v5043, %v5151
        %v5176 = vadd.f32 %v5044, %v5152
        %v5177 = vadd.f32 %v5045, %v5153
        %v5178 = vadd.f32 %v5046, %v5154
        %v5179 = vadd.f32 %v5047, %v5155
        %v5180 = vadd.f32 %v5048, %v5156
        %v5181 = vadd.f32 %v5049, %v5157
        %v5182 = vadd.f32 %v5050, %v5158
        %v5183 = vadd.f32 %v5051, %v5159
        %v5184 = vadd.f32 %v5052, %v5160
        %v5185 = vadd.f32 %v5053, %v5161
        %v5186 = vadd.f32 %v5054, %v5162
        %v5187 = vadd.f32 %v5055, %v5163
        %v5188 = vadd.f32 %v5056, %v5164
        %v5189 = vadd.f32 %v5057, %v5165
        %v5190 = vadd.f32 %v5058, %v5166
        %v5191 = vadd.f32 %v5059, %v5167
        %v5192 = vadd.f32 %v5060, %v5168
        %5193 = vrot.lane.b32.xlu0 %v4002, 11
        %v5194 = vpop.permute.xlu0 %5193
        %5195 = vrot.lane.b32.xlu0 %v4010, 11
        %v5196 = vpop.permute.xlu0 %5195
        %5197 = vrot.lane.b32.xlu0 %v4018, 11
        %v5198 = vpop.permute.xlu0 %5197
        %5199 = vrot.lane.b32.xlu0 %v4003, 11
        %v5200 = vpop.permute.xlu0 %5199
        %5201 = vrot.lane.b32.xlu0 %v4011, 11
        %v5202 = vpop.permute.xlu0 %5201
        %5203 = vrot.lane.b32.xlu0 %v4019, 11
        %v5204 = vpop.permute.xlu0 %5203
        %5205 = vrot.lane.b32.xlu0 %v4004, 11
        %v5206 = vpop.permute.xlu0 %5205
        %5207 = vrot.lane.b32.xlu0 %v4012, 11
        %v5208 = vpop.permute.xlu0 %5207
        %5209 = vrot.lane.b32.xlu0 %v4020, 11
        %v5210 = vpop.permute.xlu0 %5209
        %5211 = vrot.lane.b32.xlu0 %v4005, 11
        %v5212 = vpop.permute.xlu0 %5211
        %5213 = vrot.lane.b32.xlu0 %v4013, 11
        %v5214 = vpop.permute.xlu0 %5213
        %5215 = vrot.lane.b32.xlu0 %v4021, 11
        %v5216 = vpop.permute.xlu0 %5215
        %5217 = vrot.lane.b32.xlu0 %v4006, 11
        %v5218 = vpop.permute.xlu0 %5217
        %5219 = vrot.lane.b32.xlu0 %v4014, 11
        %v5220 = vpop.permute.xlu0 %5219
        %5221 = vrot.lane.b32.xlu0 %v4022, 11
        %v5222 = vpop.permute.xlu0 %5221
        %5223 = vrot.lane.b32.xlu0 %v4007, 11
        %v5224 = vpop.permute.xlu0 %5223
        %5225 = vrot.lane.b32.xlu0 %v4015, 11
        %v5226 = vpop.permute.xlu0 %5225
        %5227 = vrot.lane.b32.xlu0 %v4023, 11
        %v5228 = vpop.permute.xlu0 %5227
        %5229 = vrot.lane.b32.xlu0 %v4008, 11
        %v5230 = vpop.permute.xlu0 %5229
        %5231 = vrot.lane.b32.xlu0 %v4016, 11
        %v5232 = vpop.permute.xlu0 %5231
        %5233 = vrot.lane.b32.xlu0 %v4024, 11
        %v5234 = vpop.permute.xlu0 %5233
        %5235 = vrot.lane.b32.xlu0 %v4009, 11
        %v5236 = vpop.permute.xlu0 %5235
        %5237 = vrot.lane.b32.xlu0 %v4017, 11
        %v5238 = vpop.permute.xlu0 %5237
        %5239 = vrot.lane.b32.xlu0 %v4025, 11
        %v5240 = vpop.permute.xlu0 %5239
        %v5241 = vsel %vm1598, %v5230, %v5236
        %v5242 = vsel %vm1598, %v5232, %v5238
        %v5243 = vsel %vm1598, %v5234, %v5240
        %v5244 = vsel %vm1598, %v5224, %v5230
        %v5245 = vsel %vm1598, %v5226, %v5232
        %v5246 = vsel %vm1598, %v5228, %v5234
        %v5247 = vsel %vm1598, %v5218, %v5224
        %v5248 = vsel %vm1598, %v5220, %v5226
        %v5249 = vsel %vm1598, %v5222, %v5228
        %v5250 = vsel %vm1598, %v5212, %v5218
        %v5251 = vsel %vm1598, %v5214, %v5220
        %v5252 = vsel %vm1598, %v5216, %v5222
        %v5253 = vsel %vm1598, %v5206, %v5212
        %v5254 = vsel %vm1598, %v5208, %v5214
        %v5255 = vsel %vm1598, %v5210, %v5216
        %v5256 = vsel %vm1598, %v5200, %v5206
        %v5257 = vsel %vm1598, %v5202, %v5208
        %v5258 = vsel %vm1598, %v5204, %v5210
        %v5259 = vsel %vm1598, %v5194, %v5200
        %v5260 = vsel %vm1598, %v5196, %v5202
        %v5261 = vsel %vm1598, %v5198, %v5204
        %v5262 = vsel %vm1598, %v5236, %v5194
        %v5263 = vsel %vm1598, %v5238, %v5196
        %v5264 = vsel %vm1598, %v5240, %v5198
        %5265 = vset.pattern.permute.xlu0 9
        %5266 = vperm.xlu0 %5265, %v368
        %v5267 = vpop.permute.xlu0 %5266
        %5269 = vset.pattern.permute.xlu0 9
        %5270 = vperm.xlu0 %5269, %v369
        %v5271 = vpop.permute.xlu0 %5270
        %5273 = vset.pattern.permute.xlu0 9
        %5274 = vperm.xlu0 %5273, %v370
        %v5275 = vpop.permute.xlu0 %5274
        %v5277 = vmul.f32 %v5262, %v5267
        %v5278 = vmul.f32 %v5259, %v5267
        %v5279 = vmul.f32 %v5256, %v5267
        %v5280 = vmul.f32 %v5253, %v5267
        %v5281 = vmul.f32 %v5250, %v5267
        %v5282 = vmul.f32 %v5247, %v5267
        %v5283 = vmul.f32 %v5244, %v5267
        %v5284 = vmul.f32 %v5241, %v5267
        %v5285 = vmul.f32 %v5263, %v5271
        %v5286 = vmul.f32 %v5260, %v5271
        %v5287 = vmul.f32 %v5257, %v5271
        %v5288 = vmul.f32 %v5254, %v5271
        %v5289 = vmul.f32 %v5251, %v5271
        %v5290 = vmul.f32 %v5248, %v5271
        %v5291 = vmul.f32 %v5245, %v5271
        %v5292 = vmul.f32 %v5242, %v5271
        %v5293 = vmul.f32 %v5264, %v5275
        %v5294 = vmul.f32 %v5261, %v5275
        %v5295 = vmul.f32 %v5258, %v5275
        %v5296 = vmul.f32 %v5255, %v5275
        %v5297 = vmul.f32 %v5252, %v5275
        %v5298 = vmul.f32 %v5249, %v5275
        %v5299 = vmul.f32 %v5246, %v5275
        %v5300 = vmul.f32 %v5243, %v5275
        %v5301 = vadd.f32 %v5169, %v5277
        %v5302 = vadd.f32 %v5170, %v5278
        %v5303 = vadd.f32 %v5171, %v5279
        %v5304 = vadd.f32 %v5172, %v5280
        %v5305 = vadd.f32 %v5173, %v5281
        %v5306 = vadd.f32 %v5174, %v5282
        %v5307 = vadd.f32 %v5175, %v5283
        %v5308 = vadd.f32 %v5176, %v5284
        %v5309 = vadd.f32 %v5177, %v5285
        %v5310 = vadd.f32 %v5178, %v5286
        %v5311 = vadd.f32 %v5179, %v5287
        %v5312 = vadd.f32 %v5180, %v5288
        %v5313 = vadd.f32 %v5181, %v5289
        %v5314 = vadd.f32 %v5182, %v5290
        %v5315 = vadd.f32 %v5183, %v5291
        %v5316 = vadd.f32 %v5184, %v5292
        %v5317 = vadd.f32 %v5185, %v5293
        %v5318 = vadd.f32 %v5186, %v5294
        %v5319 = vadd.f32 %v5187, %v5295
        %v5320 = vadd.f32 %v5188, %v5296
        %v5321 = vadd.f32 %v5189, %v5297
        %v5322 = vadd.f32 %v5190, %v5298
        %v5323 = vadd.f32 %v5191, %v5299
        %v5324 = vadd.f32 %v5192, %v5300
        %5325 = vrot.lane.b32.xlu0 %v4002, 10
        %v5326 = vpop.permute.xlu0 %5325
        %5327 = vrot.lane.b32.xlu0 %v4010, 10
        %v5328 = vpop.permute.xlu0 %5327
        %5329 = vrot.lane.b32.xlu0 %v4018, 10
        %v5330 = vpop.permute.xlu0 %5329
        %5331 = vrot.lane.b32.xlu0 %v4003, 10
        %v5332 = vpop.permute.xlu0 %5331
        %5333 = vrot.lane.b32.xlu0 %v4011, 10
        %v5334 = vpop.permute.xlu0 %5333
        %5335 = vrot.lane.b32.xlu0 %v4019, 10
        %v5336 = vpop.permute.xlu0 %5335
        %5337 = vrot.lane.b32.xlu0 %v4004, 10
        %v5338 = vpop.permute.xlu0 %5337
        %5339 = vrot.lane.b32.xlu0 %v4012, 10
        %v5340 = vpop.permute.xlu0 %5339
        %5341 = vrot.lane.b32.xlu0 %v4020, 10
        %v5342 = vpop.permute.xlu0 %5341
        %5343 = vrot.lane.b32.xlu0 %v4005, 10
        %v5344 = vpop.permute.xlu0 %5343
        %5345 = vrot.lane.b32.xlu0 %v4013, 10
        %v5346 = vpop.permute.xlu0 %5345
        %5347 = vrot.lane.b32.xlu0 %v4021, 10
        %v5348 = vpop.permute.xlu0 %5347
        %5349 = vrot.lane.b32.xlu0 %v4006, 10
        %v5350 = vpop.permute.xlu0 %5349
        %5351 = vrot.lane.b32.xlu0 %v4014, 10
        %v5352 = vpop.permute.xlu0 %5351
        %5353 = vrot.lane.b32.xlu0 %v4022, 10
        %v5354 = vpop.permute.xlu0 %5353
        %5355 = vrot.lane.b32.xlu0 %v4007, 10
        %v5356 = vpop.permute.xlu0 %5355
        %5357 = vrot.lane.b32.xlu0 %v4015, 10
        %v5358 = vpop.permute.xlu0 %5357
        %5359 = vrot.lane.b32.xlu0 %v4023, 10
        %v5360 = vpop.permute.xlu0 %5359
        %5361 = vrot.lane.b32.xlu0 %v4008, 10
        %v5362 = vpop.permute.xlu0 %5361
        %5363 = vrot.lane.b32.xlu0 %v4016, 10
        %v5364 = vpop.permute.xlu0 %5363
        %5365 = vrot.lane.b32.xlu0 %v4024, 10
        %v5366 = vpop.permute.xlu0 %5365
        %5367 = vrot.lane.b32.xlu0 %v4009, 10
        %v5368 = vpop.permute.xlu0 %5367
        %5369 = vrot.lane.b32.xlu0 %v4017, 10
        %v5370 = vpop.permute.xlu0 %5369
        %5371 = vrot.lane.b32.xlu0 %v4025, 10
        %v5372 = vpop.permute.xlu0 %5371
        %v5373 = vsel %vm1731, %v5362, %v5368
        %v5374 = vsel %vm1731, %v5364, %v5370
        %v5375 = vsel %vm1731, %v5366, %v5372
        %v5376 = vsel %vm1731, %v5356, %v5362
        %v5377 = vsel %vm1731, %v5358, %v5364
        %v5378 = vsel %vm1731, %v5360, %v5366
        %v5379 = vsel %vm1731, %v5350, %v5356
        %v5380 = vsel %vm1731, %v5352, %v5358
        %v5381 = vsel %vm1731, %v5354, %v5360
        %v5382 = vsel %vm1731, %v5344, %v5350
        %v5383 = vsel %vm1731, %v5346, %v5352
        %v5384 = vsel %vm1731, %v5348, %v5354
        %v5385 = vsel %vm1731, %v5338, %v5344
        %v5386 = vsel %vm1731, %v5340, %v5346
        %v5387 = vsel %vm1731, %v5342, %v5348
        %v5388 = vsel %vm1731, %v5332, %v5338
        %v5389 = vsel %vm1731, %v5334, %v5340
        %v5390 = vsel %vm1731, %v5336, %v5342
        %v5391 = vsel %vm1731, %v5326, %v5332
        %v5392 = vsel %vm1731, %v5328, %v5334
        %v5393 = vsel %vm1731, %v5330, %v5336
        %v5394 = vsel %vm1731, %v5368, %v5326
        %v5395 = vsel %vm1731, %v5370, %v5328
        %v5396 = vsel %vm1731, %v5372, %v5330
        %5397 = vset.pattern.permute.xlu0 10
        %5398 = vperm.xlu0 %5397, %v368
        %v5399 = vpop.permute.xlu0 %5398
        %5401 = vset.pattern.permute.xlu0 10
        %5402 = vperm.xlu0 %5401, %v369
        %v5403 = vpop.permute.xlu0 %5402
        %5405 = vset.pattern.permute.xlu0 10
        %5406 = vperm.xlu0 %5405, %v370
        %v5407 = vpop.permute.xlu0 %5406
        %v5409 = vmul.f32 %v5394, %v5399
        %v5410 = vmul.f32 %v5391, %v5399
        %v5411 = vmul.f32 %v5388, %v5399
        %v5412 = vmul.f32 %v5385, %v5399
        %v5413 = vmul.f32 %v5382, %v5399
        %v5414 = vmul.f32 %v5379, %v5399
        %v5415 = vmul.f32 %v5376, %v5399
        %v5416 = vmul.f32 %v5373, %v5399
        %v5417 = vmul.f32 %v5395, %v5403
        %v5418 = vmul.f32 %v5392, %v5403
        %v5419 = vmul.f32 %v5389, %v5403
        %v5420 = vmul.f32 %v5386, %v5403
        %v5421 = vmul.f32 %v5383, %v5403
        %v5422 = vmul.f32 %v5380, %v5403
        %v5423 = vmul.f32 %v5377, %v5403
        %v5424 = vmul.f32 %v5374, %v5403
        %v5425 = vmul.f32 %v5396, %v5407
        %v5426 = vmul.f32 %v5393, %v5407
        %v5427 = vmul.f32 %v5390, %v5407
        %v5428 = vmul.f32 %v5387, %v5407
        %v5429 = vmul.f32 %v5384, %v5407
        %v5430 = vmul.f32 %v5381, %v5407
        %v5431 = vmul.f32 %v5378, %v5407
        %v5432 = vmul.f32 %v5375, %v5407
        %v5433 = vadd.f32 %v5301, %v5409
        %v5434 = vadd.f32 %v5302, %v5410
        %v5435 = vadd.f32 %v5303, %v5411
        %v5436 = vadd.f32 %v5304, %v5412
        %v5437 = vadd.f32 %v5305, %v5413
        %v5438 = vadd.f32 %v5306, %v5414
        %v5439 = vadd.f32 %v5307, %v5415
        %v5440 = vadd.f32 %v5308, %v5416
        %v5441 = vadd.f32 %v5309, %v5417
        %v5442 = vadd.f32 %v5310, %v5418
        %v5443 = vadd.f32 %v5311, %v5419
        %v5444 = vadd.f32 %v5312, %v5420
        %v5445 = vadd.f32 %v5313, %v5421
        %v5446 = vadd.f32 %v5314, %v5422
        %v5447 = vadd.f32 %v5315, %v5423
        %v5448 = vadd.f32 %v5316, %v5424
        %v5449 = vadd.f32 %v5317, %v5425
        %v5450 = vadd.f32 %v5318, %v5426
        %v5451 = vadd.f32 %v5319, %v5427
        %v5452 = vadd.f32 %v5320, %v5428
        %v5453 = vadd.f32 %v5321, %v5429
        %v5454 = vadd.f32 %v5322, %v5430
        %v5455 = vadd.f32 %v5323, %v5431
        %v5456 = vadd.f32 %v5324, %v5432
        %5457 = vrot.lane.b32.xlu0 %v4002, 9
        %v5458 = vpop.permute.xlu0 %5457
        %5459 = vrot.lane.b32.xlu0 %v4010, 9
        %v5460 = vpop.permute.xlu0 %5459
        %5461 = vrot.lane.b32.xlu0 %v4018, 9
        %v5462 = vpop.permute.xlu0 %5461
        %5463 = vrot.lane.b32.xlu0 %v4003, 9
        %v5464 = vpop.permute.xlu0 %5463
        %5465 = vrot.lane.b32.xlu0 %v4011, 9
        %v5466 = vpop.permute.xlu0 %5465
        %5467 = vrot.lane.b32.xlu0 %v4019, 9
        %v5468 = vpop.permute.xlu0 %5467
        %5469 = vrot.lane.b32.xlu0 %v4004, 9
        %v5470 = vpop.permute.xlu0 %5469
        %5471 = vrot.lane.b32.xlu0 %v4012, 9
        %v5472 = vpop.permute.xlu0 %5471
        %5473 = vrot.lane.b32.xlu0 %v4020, 9
        %v5474 = vpop.permute.xlu0 %5473
        %5475 = vrot.lane.b32.xlu0 %v4005, 9
        %v5476 = vpop.permute.xlu0 %5475
        %5477 = vrot.lane.b32.xlu0 %v4013, 9
        %v5478 = vpop.permute.xlu0 %5477
        %5479 = vrot.lane.b32.xlu0 %v4021, 9
        %v5480 = vpop.permute.xlu0 %5479
        %5481 = vrot.lane.b32.xlu0 %v4006, 9
        %v5482 = vpop.permute.xlu0 %5481
        %5483 = vrot.lane.b32.xlu0 %v4014, 9
        %v5484 = vpop.permute.xlu0 %5483
        %5485 = vrot.lane.b32.xlu0 %v4022, 9
        %v5486 = vpop.permute.xlu0 %5485
        %5487 = vrot.lane.b32.xlu0 %v4007, 9
        %v5488 = vpop.permute.xlu0 %5487
        %5489 = vrot.lane.b32.xlu0 %v4015, 9
        %v5490 = vpop.permute.xlu0 %5489
        %5491 = vrot.lane.b32.xlu0 %v4023, 9
        %v5492 = vpop.permute.xlu0 %5491
        %5493 = vrot.lane.b32.xlu0 %v4008, 9
        %v5494 = vpop.permute.xlu0 %5493
        %5495 = vrot.lane.b32.xlu0 %v4016, 9
        %v5496 = vpop.permute.xlu0 %5495
        %5497 = vrot.lane.b32.xlu0 %v4024, 9
        %v5498 = vpop.permute.xlu0 %5497
        %5499 = vrot.lane.b32.xlu0 %v4009, 9
        %v5500 = vpop.permute.xlu0 %5499
        %5501 = vrot.lane.b32.xlu0 %v4017, 9
        %v5502 = vpop.permute.xlu0 %5501
        %5503 = vrot.lane.b32.xlu0 %v4025, 9
        %v5504 = vpop.permute.xlu0 %5503
        %v5505 = vsel %vm1864, %v5494, %v5500
        %v5506 = vsel %vm1864, %v5496, %v5502
        %v5507 = vsel %vm1864, %v5498, %v5504
        %v5508 = vsel %vm1864, %v5488, %v5494
        %v5509 = vsel %vm1864, %v5490, %v5496
        %v5510 = vsel %vm1864, %v5492, %v5498
        %v5511 = vsel %vm1864, %v5482, %v5488
        %v5512 = vsel %vm1864, %v5484, %v5490
        %v5513 = vsel %vm1864, %v5486, %v5492
        %v5514 = vsel %vm1864, %v5476, %v5482
        %v5515 = vsel %vm1864, %v5478, %v5484
        %v5516 = vsel %vm1864, %v5480, %v5486
        %v5517 = vsel %vm1864, %v5470, %v5476
        %v5518 = vsel %vm1864, %v5472, %v5478
        %v5519 = vsel %vm1864, %v5474, %v5480
        %v5520 = vsel %vm1864, %v5464, %v5470
        %v5521 = vsel %vm1864, %v5466, %v5472
        %v5522 = vsel %vm1864, %v5468, %v5474
        %v5523 = vsel %vm1864, %v5458, %v5464
        %v5524 = vsel %vm1864, %v5460, %v5466
        %v5525 = vsel %vm1864, %v5462, %v5468
        %v5526 = vsel %vm1864, %v5500, %v5458
        %v5527 = vsel %vm1864, %v5502, %v5460
        %v5528 = vsel %vm1864, %v5504, %v5462
        %5529 = vset.pattern.permute.xlu0 11
        %5530 = vperm.xlu0 %5529, %v368
        %v5531 = vpop.permute.xlu0 %5530
        %5533 = vset.pattern.permute.xlu0 11
        %5534 = vperm.xlu0 %5533, %v369
        %v5535 = vpop.permute.xlu0 %5534
        %5537 = vset.pattern.permute.xlu0 11
        %5538 = vperm.xlu0 %5537, %v370
        %v5539 = vpop.permute.xlu0 %5538
        %v5541 = vmul.f32 %v5526, %v5531
        %v5542 = vmul.f32 %v5523, %v5531
        %v5543 = vmul.f32 %v5520, %v5531
        %v5544 = vmul.f32 %v5517, %v5531
        %v5545 = vmul.f32 %v5514, %v5531
        %v5546 = vmul.f32 %v5511, %v5531
        %v5547 = vmul.f32 %v5508, %v5531
        %v5548 = vmul.f32 %v5505, %v5531
        %v5549 = vmul.f32 %v5527, %v5535
        %v5550 = vmul.f32 %v5524, %v5535
        %v5551 = vmul.f32 %v5521, %v5535
        %v5552 = vmul.f32 %v5518, %v5535
        %v5553 = vmul.f32 %v5515, %v5535
        %v5554 = vmul.f32 %v5512, %v5535
        %v5555 = vmul.f32 %v5509, %v5535
        %v5556 = vmul.f32 %v5506, %v5535
        %v5557 = vmul.f32 %v5528, %v5539
        %v5558 = vmul.f32 %v5525, %v5539
        %v5559 = vmul.f32 %v5522, %v5539
        %v5560 = vmul.f32 %v5519, %v5539
        %v5561 = vmul.f32 %v5516, %v5539
        %v5562 = vmul.f32 %v5513, %v5539
        %v5563 = vmul.f32 %v5510, %v5539
        %v5564 = vmul.f32 %v5507, %v5539
        %v5565 = vadd.f32 %v5433, %v5541
        %v5566 = vadd.f32 %v5434, %v5542
        %v5567 = vadd.f32 %v5435, %v5543
        %v5568 = vadd.f32 %v5436, %v5544
        %v5569 = vadd.f32 %v5437, %v5545
        %v5570 = vadd.f32 %v5438, %v5546
        %v5571 = vadd.f32 %v5439, %v5547
        %v5572 = vadd.f32 %v5440, %v5548
        %v5573 = vadd.f32 %v5441, %v5549
        %v5574 = vadd.f32 %v5442, %v5550
        %v5575 = vadd.f32 %v5443, %v5551
        %v5576 = vadd.f32 %v5444, %v5552
        %v5577 = vadd.f32 %v5445, %v5553
        %v5578 = vadd.f32 %v5446, %v5554
        %v5579 = vadd.f32 %v5447, %v5555
        %v5580 = vadd.f32 %v5448, %v5556
        %v5581 = vadd.f32 %v5449, %v5557
        %v5582 = vadd.f32 %v5450, %v5558
        %v5583 = vadd.f32 %v5451, %v5559
        %v5584 = vadd.f32 %v5452, %v5560
        %v5585 = vadd.f32 %v5453, %v5561
        %v5586 = vadd.f32 %v5454, %v5562
        %v5587 = vadd.f32 %v5455, %v5563
        %v5588 = vadd.f32 %v5456, %v5564
        %5589 = vrot.lane.b32.xlu0 %v4002, 1
        %v5590 = vpop.permute.xlu0 %5589
        %5591 = vrot.lane.b32.xlu0 %v4010, 1
        %v5592 = vpop.permute.xlu0 %5591
        %5593 = vrot.lane.b32.xlu0 %v4018, 1
        %v5594 = vpop.permute.xlu0 %5593
        %5595 = vrot.lane.b32.xlu0 %v4003, 1
        %v5596 = vpop.permute.xlu0 %5595
        %5597 = vrot.lane.b32.xlu0 %v4011, 1
        %v5598 = vpop.permute.xlu0 %5597
        %5599 = vrot.lane.b32.xlu0 %v4019, 1
        %v5600 = vpop.permute.xlu0 %5599
        %5601 = vrot.lane.b32.xlu0 %v4004, 1
        %v5602 = vpop.permute.xlu0 %5601
        %5603 = vrot.lane.b32.xlu0 %v4012, 1
        %v5604 = vpop.permute.xlu0 %5603
        %5605 = vrot.lane.b32.xlu0 %v4020, 1
        %v5606 = vpop.permute.xlu0 %5605
        %5607 = vrot.lane.b32.xlu0 %v4005, 1
        %v5608 = vpop.permute.xlu0 %5607
        %5609 = vrot.lane.b32.xlu0 %v4013, 1
        %v5610 = vpop.permute.xlu0 %5609
        %5611 = vrot.lane.b32.xlu0 %v4021, 1
        %v5612 = vpop.permute.xlu0 %5611
        %5613 = vrot.lane.b32.xlu0 %v4006, 1
        %v5614 = vpop.permute.xlu0 %5613
        %5615 = vrot.lane.b32.xlu0 %v4014, 1
        %v5616 = vpop.permute.xlu0 %5615
        %5617 = vrot.lane.b32.xlu0 %v4022, 1
        %v5618 = vpop.permute.xlu0 %5617
        %5619 = vrot.lane.b32.xlu0 %v4007, 1
        %v5620 = vpop.permute.xlu0 %5619
        %5621 = vrot.lane.b32.xlu0 %v4015, 1
        %v5622 = vpop.permute.xlu0 %5621
        %5623 = vrot.lane.b32.xlu0 %v4023, 1
        %v5624 = vpop.permute.xlu0 %5623
        %5625 = vrot.lane.b32.xlu0 %v4008, 1
        %v5626 = vpop.permute.xlu0 %5625
        %5627 = vrot.lane.b32.xlu0 %v4016, 1
        %v5628 = vpop.permute.xlu0 %5627
        %5629 = vrot.lane.b32.xlu0 %v4024, 1
        %v5630 = vpop.permute.xlu0 %5629
        %5631 = vrot.lane.b32.xlu0 %v4009, 1
        %v5632 = vpop.permute.xlu0 %5631
        %5633 = vrot.lane.b32.xlu0 %v4017, 1
        %v5634 = vpop.permute.xlu0 %5633
        %5635 = vrot.lane.b32.xlu0 %v4025, 1
        %v5636 = vpop.permute.xlu0 %5635
        %v5637 = vsel %vm1997, %v5626, %v5632
        %v5638 = vsel %vm1997, %v5628, %v5634
        %v5639 = vsel %vm1997, %v5630, %v5636
        %v5640 = vsel %vm1997, %v5620, %v5626
        %v5641 = vsel %vm1997, %v5622, %v5628
        %v5642 = vsel %vm1997, %v5624, %v5630
        %v5643 = vsel %vm1997, %v5614, %v5620
        %v5644 = vsel %vm1997, %v5616, %v5622
        %v5645 = vsel %vm1997, %v5618, %v5624
        %v5646 = vsel %vm1997, %v5608, %v5614
        %v5647 = vsel %vm1997, %v5610, %v5616
        %v5648 = vsel %vm1997, %v5612, %v5618
        %v5649 = vsel %vm1997, %v5602, %v5608
        %v5650 = vsel %vm1997, %v5604, %v5610
        %v5651 = vsel %vm1997, %v5606, %v5612
        %v5652 = vsel %vm1997, %v5596, %v5602
        %v5653 = vsel %vm1997, %v5598, %v5604
        %v5654 = vsel %vm1997, %v5600, %v5606
        %v5655 = vsel %vm1997, %v5590, %v5596
        %v5656 = vsel %vm1997, %v5592, %v5598
        %v5657 = vsel %vm1997, %v5594, %v5600
        %v5658 = vsel %vm1997, %v5632, %v5590
        %v5659 = vsel %vm1997, %v5634, %v5592
        %v5660 = vsel %vm1997, %v5636, %v5594
        %5661 = vset.pattern.permute.xlu0 12
        %5662 = vperm.xlu0 %5661, %v368
        %v5663 = vpop.permute.xlu0 %5662
        %5665 = vset.pattern.permute.xlu0 12
        %5666 = vperm.xlu0 %5665, %v369
        %v5667 = vpop.permute.xlu0 %5666
        %5669 = vset.pattern.permute.xlu0 12
        %5670 = vperm.xlu0 %5669, %v370
        %v5671 = vpop.permute.xlu0 %5670
        %v5673 = vmul.f32 %v5658, %v5663
        %v5674 = vmul.f32 %v5655, %v5663
        %v5675 = vmul.f32 %v5652, %v5663
        %v5676 = vmul.f32 %v5649, %v5663
        %v5677 = vmul.f32 %v5646, %v5663
        %v5678 = vmul.f32 %v5643, %v5663
        %v5679 = vmul.f32 %v5640, %v5663
        %v5680 = vmul.f32 %v5637, %v5663
        %v5681 = vmul.f32 %v5659, %v5667
        %v5682 = vmul.f32 %v5656, %v5667
        %v5683 = vmul.f32 %v5653, %v5667
        %v5684 = vmul.f32 %v5650, %v5667
        %v5685 = vmul.f32 %v5647, %v5667
        %v5686 = vmul.f32 %v5644, %v5667
        %v5687 = vmul.f32 %v5641, %v5667
        %v5688 = vmul.f32 %v5638, %v5667
        %v5689 = vmul.f32 %v5660, %v5671
        %v5690 = vmul.f32 %v5657, %v5671
        %v5691 = vmul.f32 %v5654, %v5671
        %v5692 = vmul.f32 %v5651, %v5671
        %v5693 = vmul.f32 %v5648, %v5671
        %v5694 = vmul.f32 %v5645, %v5671
        %v5695 = vmul.f32 %v5642, %v5671
        %v5696 = vmul.f32 %v5639, %v5671
        %v5697 = vadd.f32 %v5565, %v5673
        %v5698 = vadd.f32 %v5566, %v5674
        %v5699 = vadd.f32 %v5567, %v5675
        %v5700 = vadd.f32 %v5568, %v5676
        %v5701 = vadd.f32 %v5569, %v5677
        %v5702 = vadd.f32 %v5570, %v5678
        %v5703 = vadd.f32 %v5571, %v5679
        %v5704 = vadd.f32 %v5572, %v5680
        %v5705 = vadd.f32 %v5573, %v5681
        %v5706 = vadd.f32 %v5574, %v5682
        %v5707 = vadd.f32 %v5575, %v5683
        %v5708 = vadd.f32 %v5576, %v5684
        %v5709 = vadd.f32 %v5577, %v5685
        %v5710 = vadd.f32 %v5578, %v5686
        %v5711 = vadd.f32 %v5579, %v5687
        %v5712 = vadd.f32 %v5580, %v5688
        %v5713 = vadd.f32 %v5581, %v5689
        %v5714 = vadd.f32 %v5582, %v5690
        %v5715 = vadd.f32 %v5583, %v5691
        %v5716 = vadd.f32 %v5584, %v5692
        %v5717 = vadd.f32 %v5585, %v5693
        %v5718 = vadd.f32 %v5586, %v5694
        %v5719 = vadd.f32 %v5587, %v5695
        %v5720 = vadd.f32 %v5588, %v5696
        %5721 = vset.pattern.permute.xlu0 13
        %5722 = vperm.xlu0 %5721, %v368
        %v5723 = vpop.permute.xlu0 %5722
        %5725 = vset.pattern.permute.xlu0 13
        %5726 = vperm.xlu0 %5725, %v369
        %v5727 = vpop.permute.xlu0 %5726
        %5729 = vset.pattern.permute.xlu0 13
        %5730 = vperm.xlu0 %5729, %v370
        %v5731 = vpop.permute.xlu0 %5730
        %v5733 = vmul.f32 %v4002, %v5723
        %v5734 = vmul.f32 %v4003, %v5723
        %v5735 = vmul.f32 %v4004, %v5723
        %v5736 = vmul.f32 %v4005, %v5723
        %v5737 = vmul.f32 %v4006, %v5723
        %v5738 = vmul.f32 %v4007, %v5723
        %v5739 = vmul.f32 %v4008, %v5723
        %v5740 = vmul.f32 %v4009, %v5723
        %v5741 = vmul.f32 %v4010, %v5727
        %v5742 = vmul.f32 %v4011, %v5727
        %v5743 = vmul.f32 %v4012, %v5727
        %v5744 = vmul.f32 %v4013, %v5727
        %v5745 = vmul.f32 %v4014, %v5727
        %v5746 = vmul.f32 %v4015, %v5727
        %v5747 = vmul.f32 %v4016, %v5727
        %v5748 = vmul.f32 %v4017, %v5727
        %v5749 = vmul.f32 %v4018, %v5731
        %v5750 = vmul.f32 %v4019, %v5731
        %v5751 = vmul.f32 %v4020, %v5731
        %v5752 = vmul.f32 %v4021, %v5731
        %v5753 = vmul.f32 %v4022, %v5731
        %v5754 = vmul.f32 %v4023, %v5731
        %v5755 = vmul.f32 %v4024, %v5731
        %v5756 = vmul.f32 %v4025, %v5731
        %v5757 = vadd.f32 %v5697, %v5733
        %v5758 = vadd.f32 %v5698, %v5734
        %v5759 = vadd.f32 %v5699, %v5735
        %v5760 = vadd.f32 %v5700, %v5736
        %v5761 = vadd.f32 %v5701, %v5737
        %v5762 = vadd.f32 %v5702, %v5738
        %v5763 = vadd.f32 %v5703, %v5739
        %v5764 = vadd.f32 %v5704, %v5740
        %v5765 = vadd.f32 %v5705, %v5741
        %v5766 = vadd.f32 %v5706, %v5742
        %v5767 = vadd.f32 %v5707, %v5743
        %v5768 = vadd.f32 %v5708, %v5744
        %v5769 = vadd.f32 %v5709, %v5745
        %v5770 = vadd.f32 %v5710, %v5746
        %v5771 = vadd.f32 %v5711, %v5747
        %v5772 = vadd.f32 %v5712, %v5748
        %v5773 = vadd.f32 %v5713, %v5749
        %v5774 = vadd.f32 %v5714, %v5750
        %v5775 = vadd.f32 %v5715, %v5751
        %v5776 = vadd.f32 %v5716, %v5752
        %v5777 = vadd.f32 %v5717, %v5753
        %v5778 = vadd.f32 %v5718, %v5754
        %v5779 = vadd.f32 %v5719, %v5755
        %v5780 = vadd.f32 %v5720, %v5756
        %5781 = vrot.lane.b32.xlu0 %v4002, 127
        %v5782 = vpop.permute.xlu0 %5781
        %5783 = vrot.lane.b32.xlu0 %v4010, 127
        %v5784 = vpop.permute.xlu0 %5783
        %5785 = vrot.lane.b32.xlu0 %v4018, 127
        %v5786 = vpop.permute.xlu0 %5785
        %5787 = vrot.lane.b32.xlu0 %v4003, 127
        %v5788 = vpop.permute.xlu0 %5787
        %5789 = vrot.lane.b32.xlu0 %v4011, 127
        %v5790 = vpop.permute.xlu0 %5789
        %5791 = vrot.lane.b32.xlu0 %v4019, 127
        %v5792 = vpop.permute.xlu0 %5791
        %5793 = vrot.lane.b32.xlu0 %v4004, 127
        %v5794 = vpop.permute.xlu0 %5793
        %5795 = vrot.lane.b32.xlu0 %v4012, 127
        %v5796 = vpop.permute.xlu0 %5795
        %5797 = vrot.lane.b32.xlu0 %v4020, 127
        %v5798 = vpop.permute.xlu0 %5797
        %5799 = vrot.lane.b32.xlu0 %v4005, 127
        %v5800 = vpop.permute.xlu0 %5799
        %5801 = vrot.lane.b32.xlu0 %v4013, 127
        %v5802 = vpop.permute.xlu0 %5801
        %5803 = vrot.lane.b32.xlu0 %v4021, 127
        %v5804 = vpop.permute.xlu0 %5803
        %5805 = vrot.lane.b32.xlu0 %v4006, 127
        %v5806 = vpop.permute.xlu0 %5805
        %5807 = vrot.lane.b32.xlu0 %v4014, 127
        %v5808 = vpop.permute.xlu0 %5807
        %5809 = vrot.lane.b32.xlu0 %v4022, 127
        %v5810 = vpop.permute.xlu0 %5809
        %5811 = vrot.lane.b32.xlu0 %v4007, 127
        %v5812 = vpop.permute.xlu0 %5811
        %5813 = vrot.lane.b32.xlu0 %v4015, 127
        %v5814 = vpop.permute.xlu0 %5813
        %5815 = vrot.lane.b32.xlu0 %v4023, 127
        %v5816 = vpop.permute.xlu0 %5815
        %5817 = vrot.lane.b32.xlu0 %v4008, 127
        %v5818 = vpop.permute.xlu0 %5817
        %5819 = vrot.lane.b32.xlu0 %v4016, 127
        %v5820 = vpop.permute.xlu0 %5819
        %5821 = vrot.lane.b32.xlu0 %v4024, 127
        %v5822 = vpop.permute.xlu0 %5821
        %5823 = vrot.lane.b32.xlu0 %v4009, 127
        %v5824 = vpop.permute.xlu0 %5823
        %5825 = vrot.lane.b32.xlu0 %v4017, 127
        %v5826 = vpop.permute.xlu0 %5825
        %5827 = vrot.lane.b32.xlu0 %v4025, 127
        %v5828 = vpop.permute.xlu0 %5827
        %v5829 = vsel %vm2190, %v5818, %v5824
        %v5830 = vsel %vm2190, %v5820, %v5826
        %v5831 = vsel %vm2190, %v5822, %v5828
        %v5832 = vsel %vm2190, %v5812, %v5818
        %v5833 = vsel %vm2190, %v5814, %v5820
        %v5834 = vsel %vm2190, %v5816, %v5822
        %v5835 = vsel %vm2190, %v5806, %v5812
        %v5836 = vsel %vm2190, %v5808, %v5814
        %v5837 = vsel %vm2190, %v5810, %v5816
        %v5838 = vsel %vm2190, %v5800, %v5806
        %v5839 = vsel %vm2190, %v5802, %v5808
        %v5840 = vsel %vm2190, %v5804, %v5810
        %v5841 = vsel %vm2190, %v5794, %v5800
        %v5842 = vsel %vm2190, %v5796, %v5802
        %v5843 = vsel %vm2190, %v5798, %v5804
        %v5844 = vsel %vm2190, %v5788, %v5794
        %v5845 = vsel %vm2190, %v5790, %v5796
        %v5846 = vsel %vm2190, %v5792, %v5798
        %v5847 = vsel %vm2190, %v5782, %v5788
        %v5848 = vsel %vm2190, %v5784, %v5790
        %v5849 = vsel %vm2190, %v5786, %v5792
        %v5850 = vsel %vm2190, %v5824, %v5782
        %v5851 = vsel %vm2190, %v5826, %v5784
        %v5852 = vsel %vm2190, %v5828, %v5786
        %5853 = vset.pattern.permute.xlu0 14
        %5854 = vperm.xlu0 %5853, %v368
        %v5855 = vpop.permute.xlu0 %5854
        %5857 = vset.pattern.permute.xlu0 14
        %5858 = vperm.xlu0 %5857, %v369
        %v5859 = vpop.permute.xlu0 %5858
        %5861 = vset.pattern.permute.xlu0 14
        %5862 = vperm.xlu0 %5861, %v370
        %v5863 = vpop.permute.xlu0 %5862
        %v5865 = vmul.f32 %v5847, %v5855
        %v5866 = vmul.f32 %v5844, %v5855
        %v5867 = vmul.f32 %v5841, %v5855
        %v5868 = vmul.f32 %v5838, %v5855
        %v5869 = vmul.f32 %v5835, %v5855
        %v5870 = vmul.f32 %v5832, %v5855
        %v5871 = vmul.f32 %v5829, %v5855
        %v5872 = vmul.f32 %v5850, %v5855
        %v5873 = vmul.f32 %v5848, %v5859
        %v5874 = vmul.f32 %v5845, %v5859
        %v5875 = vmul.f32 %v5842, %v5859
        %v5876 = vmul.f32 %v5839, %v5859
        %v5877 = vmul.f32 %v5836, %v5859
        %v5878 = vmul.f32 %v5833, %v5859
        %v5879 = vmul.f32 %v5830, %v5859
        %v5880 = vmul.f32 %v5851, %v5859
        %v5881 = vmul.f32 %v5849, %v5863
        %v5882 = vmul.f32 %v5846, %v5863
        %v5883 = vmul.f32 %v5843, %v5863
        %v5884 = vmul.f32 %v5840, %v5863
        %v5885 = vmul.f32 %v5837, %v5863
        %v5886 = vmul.f32 %v5834, %v5863
        %v5887 = vmul.f32 %v5831, %v5863
        %v5888 = vmul.f32 %v5852, %v5863
        %v5889 = vadd.f32 %v5757, %v5865
        %v5890 = vadd.f32 %v5758, %v5866
        %v5891 = vadd.f32 %v5759, %v5867
        %v5892 = vadd.f32 %v5760, %v5868
        %v5893 = vadd.f32 %v5761, %v5869
        %v5894 = vadd.f32 %v5762, %v5870
        %v5895 = vadd.f32 %v5763, %v5871
        %v5896 = vadd.f32 %v5764, %v5872
        %v5897 = vadd.f32 %v5765, %v5873
        %v5898 = vadd.f32 %v5766, %v5874
        %v5899 = vadd.f32 %v5767, %v5875
        %v5900 = vadd.f32 %v5768, %v5876
        %v5901 = vadd.f32 %v5769, %v5877
        %v5902 = vadd.f32 %v5770, %v5878
        %v5903 = vadd.f32 %v5771, %v5879
        %v5904 = vadd.f32 %v5772, %v5880
        %v5905 = vadd.f32 %v5773, %v5881
        %v5906 = vadd.f32 %v5774, %v5882
        %v5907 = vadd.f32 %v5775, %v5883
        %v5908 = vadd.f32 %v5776, %v5884
        %v5909 = vadd.f32 %v5777, %v5885
        %v5910 = vadd.f32 %v5778, %v5886
        %v5911 = vadd.f32 %v5779, %v5887
        %v5912 = vadd.f32 %v5780, %v5888
        %5913 = vrot.lane.b32.xlu0 %v4002, 119
        %v5914 = vpop.permute.xlu0 %5913
        %5915 = vrot.lane.b32.xlu0 %v4010, 119
        %v5916 = vpop.permute.xlu0 %5915
        %5917 = vrot.lane.b32.xlu0 %v4018, 119
        %v5918 = vpop.permute.xlu0 %5917
        %5919 = vrot.lane.b32.xlu0 %v4003, 119
        %v5920 = vpop.permute.xlu0 %5919
        %5921 = vrot.lane.b32.xlu0 %v4011, 119
        %v5922 = vpop.permute.xlu0 %5921
        %5923 = vrot.lane.b32.xlu0 %v4019, 119
        %v5924 = vpop.permute.xlu0 %5923
        %5925 = vrot.lane.b32.xlu0 %v4004, 119
        %v5926 = vpop.permute.xlu0 %5925
        %5927 = vrot.lane.b32.xlu0 %v4012, 119
        %v5928 = vpop.permute.xlu0 %5927
        %5929 = vrot.lane.b32.xlu0 %v4020, 119
        %v5930 = vpop.permute.xlu0 %5929
        %5931 = vrot.lane.b32.xlu0 %v4005, 119
        %v5932 = vpop.permute.xlu0 %5931
        %5933 = vrot.lane.b32.xlu0 %v4013, 119
        %v5934 = vpop.permute.xlu0 %5933
        %5935 = vrot.lane.b32.xlu0 %v4021, 119
        %v5936 = vpop.permute.xlu0 %5935
        %5937 = vrot.lane.b32.xlu0 %v4006, 119
        %v5938 = vpop.permute.xlu0 %5937
        %5939 = vrot.lane.b32.xlu0 %v4014, 119
        %v5940 = vpop.permute.xlu0 %5939
        %5941 = vrot.lane.b32.xlu0 %v4022, 119
        %v5942 = vpop.permute.xlu0 %5941
        %5943 = vrot.lane.b32.xlu0 %v4007, 119
        %v5944 = vpop.permute.xlu0 %5943
        %5945 = vrot.lane.b32.xlu0 %v4015, 119
        %v5946 = vpop.permute.xlu0 %5945
        %5947 = vrot.lane.b32.xlu0 %v4023, 119
        %v5948 = vpop.permute.xlu0 %5947
        %5949 = vrot.lane.b32.xlu0 %v4008, 119
        %v5950 = vpop.permute.xlu0 %5949
        %5951 = vrot.lane.b32.xlu0 %v4016, 119
        %v5952 = vpop.permute.xlu0 %5951
        %5953 = vrot.lane.b32.xlu0 %v4024, 119
        %v5954 = vpop.permute.xlu0 %5953
        %5955 = vrot.lane.b32.xlu0 %v4009, 119
        %v5956 = vpop.permute.xlu0 %5955
        %5957 = vrot.lane.b32.xlu0 %v4017, 119
        %v5958 = vpop.permute.xlu0 %5957
        %5959 = vrot.lane.b32.xlu0 %v4025, 119
        %v5960 = vpop.permute.xlu0 %5959
        %v5961 = vsel %vm2323, %v5950, %v5956
        %v5962 = vsel %vm2323, %v5952, %v5958
        %v5963 = vsel %vm2323, %v5954, %v5960
        %v5964 = vsel %vm2323, %v5944, %v5950
        %v5965 = vsel %vm2323, %v5946, %v5952
        %v5966 = vsel %vm2323, %v5948, %v5954
        %v5967 = vsel %vm2323, %v5938, %v5944
        %v5968 = vsel %vm2323, %v5940, %v5946
        %v5969 = vsel %vm2323, %v5942, %v5948
        %v5970 = vsel %vm2323, %v5932, %v5938
        %v5971 = vsel %vm2323, %v5934, %v5940
        %v5972 = vsel %vm2323, %v5936, %v5942
        %v5973 = vsel %vm2323, %v5926, %v5932
        %v5974 = vsel %vm2323, %v5928, %v5934
        %v5975 = vsel %vm2323, %v5930, %v5936
        %v5976 = vsel %vm2323, %v5920, %v5926
        %v5977 = vsel %vm2323, %v5922, %v5928
        %v5978 = vsel %vm2323, %v5924, %v5930
        %v5979 = vsel %vm2323, %v5914, %v5920
        %v5980 = vsel %vm2323, %v5916, %v5922
        %v5981 = vsel %vm2323, %v5918, %v5924
        %v5982 = vsel %vm2323, %v5956, %v5914
        %v5983 = vsel %vm2323, %v5958, %v5916
        %v5984 = vsel %vm2323, %v5960, %v5918
        %5985 = vset.pattern.permute.xlu0 15
        %5986 = vperm.xlu0 %5985, %v368
        %v5987 = vpop.permute.xlu0 %5986
        %5989 = vset.pattern.permute.xlu0 15
        %5990 = vperm.xlu0 %5989, %v369
        %v5991 = vpop.permute.xlu0 %5990
        %5993 = vset.pattern.permute.xlu0 15
        %5994 = vperm.xlu0 %5993, %v370
        %v5995 = vpop.permute.xlu0 %5994
        %v5997 = vmul.f32 %v5979, %v5987
        %v5998 = vmul.f32 %v5976, %v5987
        %v5999 = vmul.f32 %v5973, %v5987
        %v6000 = vmul.f32 %v5970, %v5987
        %v6001 = vmul.f32 %v5967, %v5987
        %v6002 = vmul.f32 %v5964, %v5987
        %v6003 = vmul.f32 %v5961, %v5987
        %v6004 = vmul.f32 %v5982, %v5987
        %v6005 = vmul.f32 %v5980, %v5991
        %v6006 = vmul.f32 %v5977, %v5991
        %v6007 = vmul.f32 %v5974, %v5991
        %v6008 = vmul.f32 %v5971, %v5991
        %v6009 = vmul.f32 %v5968, %v5991
        %v6010 = vmul.f32 %v5965, %v5991
        %v6011 = vmul.f32 %v5962, %v5991
        %v6012 = vmul.f32 %v5983, %v5991
        %v6013 = vmul.f32 %v5981, %v5995
        %v6014 = vmul.f32 %v5978, %v5995
        %v6015 = vmul.f32 %v5975, %v5995
        %v6016 = vmul.f32 %v5972, %v5995
        %v6017 = vmul.f32 %v5969, %v5995
        %v6018 = vmul.f32 %v5966, %v5995
        %v6019 = vmul.f32 %v5963, %v5995
        %v6020 = vmul.f32 %v5984, %v5995
        %v6021 = vadd.f32 %v5889, %v5997
        %v6022 = vadd.f32 %v5890, %v5998
        %v6023 = vadd.f32 %v5891, %v5999
        %v6024 = vadd.f32 %v5892, %v6000
        %v6025 = vadd.f32 %v5893, %v6001
        %v6026 = vadd.f32 %v5894, %v6002
        %v6027 = vadd.f32 %v5895, %v6003
        %v6028 = vadd.f32 %v5896, %v6004
        %v6029 = vadd.f32 %v5897, %v6005
        %v6030 = vadd.f32 %v5898, %v6006
        %v6031 = vadd.f32 %v5899, %v6007
        %v6032 = vadd.f32 %v5900, %v6008
        %v6033 = vadd.f32 %v5901, %v6009
        %v6034 = vadd.f32 %v5902, %v6010
        %v6035 = vadd.f32 %v5903, %v6011
        %v6036 = vadd.f32 %v5904, %v6012
        %v6037 = vadd.f32 %v5905, %v6013
        %v6038 = vadd.f32 %v5906, %v6014
        %v6039 = vadd.f32 %v5907, %v6015
        %v6040 = vadd.f32 %v5908, %v6016
        %v6041 = vadd.f32 %v5909, %v6017
        %v6042 = vadd.f32 %v5910, %v6018
        %v6043 = vadd.f32 %v5911, %v6019
        %v6044 = vadd.f32 %v5912, %v6020
        %6045 = vrot.lane.b32.xlu0 %v4002, 118
        %v6046 = vpop.permute.xlu0 %6045
        %6047 = vrot.lane.b32.xlu0 %v4010, 118
        %v6048 = vpop.permute.xlu0 %6047
        %6049 = vrot.lane.b32.xlu0 %v4018, 118
        %v6050 = vpop.permute.xlu0 %6049
        %6051 = vrot.lane.b32.xlu0 %v4003, 118
        %v6052 = vpop.permute.xlu0 %6051
        %6053 = vrot.lane.b32.xlu0 %v4011, 118
        %v6054 = vpop.permute.xlu0 %6053
        %6055 = vrot.lane.b32.xlu0 %v4019, 118
        %v6056 = vpop.permute.xlu0 %6055
        %6057 = vrot.lane.b32.xlu0 %v4004, 118
        %v6058 = vpop.permute.xlu0 %6057
        %6059 = vrot.lane.b32.xlu0 %v4012, 118
        %v6060 = vpop.permute.xlu0 %6059
        %6061 = vrot.lane.b32.xlu0 %v4020, 118
        %v6062 = vpop.permute.xlu0 %6061
        %6063 = vrot.lane.b32.xlu0 %v4005, 118
        %v6064 = vpop.permute.xlu0 %6063
        %6065 = vrot.lane.b32.xlu0 %v4013, 118
        %v6066 = vpop.permute.xlu0 %6065
        %6067 = vrot.lane.b32.xlu0 %v4021, 118
        %v6068 = vpop.permute.xlu0 %6067
        %6069 = vrot.lane.b32.xlu0 %v4006, 118
        %v6070 = vpop.permute.xlu0 %6069
        %6071 = vrot.lane.b32.xlu0 %v4014, 118
        %v6072 = vpop.permute.xlu0 %6071
        %6073 = vrot.lane.b32.xlu0 %v4022, 118
        %v6074 = vpop.permute.xlu0 %6073
        %6075 = vrot.lane.b32.xlu0 %v4007, 118
        %v6076 = vpop.permute.xlu0 %6075
        %6077 = vrot.lane.b32.xlu0 %v4015, 118
        %v6078 = vpop.permute.xlu0 %6077
        %6079 = vrot.lane.b32.xlu0 %v4023, 118
        %v6080 = vpop.permute.xlu0 %6079
        %6081 = vrot.lane.b32.xlu0 %v4008, 118
        %v6082 = vpop.permute.xlu0 %6081
        %6083 = vrot.lane.b32.xlu0 %v4016, 118
        %v6084 = vpop.permute.xlu0 %6083
        %6085 = vrot.lane.b32.xlu0 %v4024, 118
        %v6086 = vpop.permute.xlu0 %6085
        %6087 = vrot.lane.b32.xlu0 %v4009, 118
        %v6088 = vpop.permute.xlu0 %6087
        %6089 = vrot.lane.b32.xlu0 %v4017, 118
        %v6090 = vpop.permute.xlu0 %6089
        %6091 = vrot.lane.b32.xlu0 %v4025, 118
        %v6092 = vpop.permute.xlu0 %6091
        %v6093 = vsel %vm2456, %v6082, %v6088
        %v6094 = vsel %vm2456, %v6084, %v6090
        %v6095 = vsel %vm2456, %v6086, %v6092
        %v6096 = vsel %vm2456, %v6076, %v6082
        %v6097 = vsel %vm2456, %v6078, %v6084
        %v6098 = vsel %vm2456, %v6080, %v6086
        %v6099 = vsel %vm2456, %v6070, %v6076
        %v6100 = vsel %vm2456, %v6072, %v6078
        %v6101 = vsel %vm2456, %v6074, %v6080
        %v6102 = vsel %vm2456, %v6064, %v6070
        %v6103 = vsel %vm2456, %v6066, %v6072
        %v6104 = vsel %vm2456, %v6068, %v6074
        %v6105 = vsel %vm2456, %v6058, %v6064
        %v6106 = vsel %vm2456, %v6060, %v6066
        %v6107 = vsel %vm2456, %v6062, %v6068
        %v6108 = vsel %vm2456, %v6052, %v6058
        %v6109 = vsel %vm2456, %v6054, %v6060
        %v6110 = vsel %vm2456, %v6056, %v6062
        %v6111 = vsel %vm2456, %v6046, %v6052
        %v6112 = vsel %vm2456, %v6048, %v6054
        %v6113 = vsel %vm2456, %v6050, %v6056
        %v6114 = vsel %vm2456, %v6088, %v6046
        %v6115 = vsel %vm2456, %v6090, %v6048
        %v6116 = vsel %vm2456, %v6092, %v6050
        %6117 = vset.pattern.permute.xlu0 16
        %6118 = vperm.xlu0 %6117, %v368
        %v6119 = vpop.permute.xlu0 %6118
        %6121 = vset.pattern.permute.xlu0 16
        %6122 = vperm.xlu0 %6121, %v369
        %v6123 = vpop.permute.xlu0 %6122
        %6125 = vset.pattern.permute.xlu0 16
        %6126 = vperm.xlu0 %6125, %v370
        %v6127 = vpop.permute.xlu0 %6126
        %v6129 = vmul.f32 %v6111, %v6119
        %v6130 = vmul.f32 %v6108, %v6119
        %v6131 = vmul.f32 %v6105, %v6119
        %v6132 = vmul.f32 %v6102, %v6119
        %v6133 = vmul.f32 %v6099, %v6119
        %v6134 = vmul.f32 %v6096, %v6119
        %v6135 = vmul.f32 %v6093, %v6119
        %v6136 = vmul.f32 %v6114, %v6119
        %v6137 = vmul.f32 %v6112, %v6123
        %v6138 = vmul.f32 %v6109, %v6123
        %v6139 = vmul.f32 %v6106, %v6123
        %v6140 = vmul.f32 %v6103, %v6123
        %v6141 = vmul.f32 %v6100, %v6123
        %v6142 = vmul.f32 %v6097, %v6123
        %v6143 = vmul.f32 %v6094, %v6123
        %v6144 = vmul.f32 %v6115, %v6123
        %v6145 = vmul.f32 %v6113, %v6127
        %v6146 = vmul.f32 %v6110, %v6127
        %v6147 = vmul.f32 %v6107, %v6127
        %v6148 = vmul.f32 %v6104, %v6127
        %v6149 = vmul.f32 %v6101, %v6127
        %v6150 = vmul.f32 %v6098, %v6127
        %v6151 = vmul.f32 %v6095, %v6127
        %v6152 = vmul.f32 %v6116, %v6127
        %v6153 = vadd.f32 %v6021, %v6129
        %v6154 = vadd.f32 %v6022, %v6130
        %v6155 = vadd.f32 %v6023, %v6131
        %v6156 = vadd.f32 %v6024, %v6132
        %v6157 = vadd.f32 %v6025, %v6133
        %v6158 = vadd.f32 %v6026, %v6134
        %v6159 = vadd.f32 %v6027, %v6135
        %v6160 = vadd.f32 %v6028, %v6136
        %v6161 = vadd.f32 %v6029, %v6137
        %v6162 = vadd.f32 %v6030, %v6138
        %v6163 = vadd.f32 %v6031, %v6139
        %v6164 = vadd.f32 %v6032, %v6140
        %v6165 = vadd.f32 %v6033, %v6141
        %v6166 = vadd.f32 %v6034, %v6142
        %v6167 = vadd.f32 %v6035, %v6143
        %v6168 = vadd.f32 %v6036, %v6144
        %v6169 = vadd.f32 %v6037, %v6145
        %v6170 = vadd.f32 %v6038, %v6146
        %v6171 = vadd.f32 %v6039, %v6147
        %v6172 = vadd.f32 %v6040, %v6148
        %v6173 = vadd.f32 %v6041, %v6149
        %v6174 = vadd.f32 %v6042, %v6150
        %v6175 = vadd.f32 %v6043, %v6151
        %v6176 = vadd.f32 %v6044, %v6152
        %6177 = vrot.lane.b32.xlu0 %v4002, 117
        %v6178 = vpop.permute.xlu0 %6177
        %6179 = vrot.lane.b32.xlu0 %v4010, 117
        %v6180 = vpop.permute.xlu0 %6179
        %6181 = vrot.lane.b32.xlu0 %v4018, 117
        %v6182 = vpop.permute.xlu0 %6181
        %6183 = vrot.lane.b32.xlu0 %v4003, 117
        %v6184 = vpop.permute.xlu0 %6183
        %6185 = vrot.lane.b32.xlu0 %v4011, 117
        %v6186 = vpop.permute.xlu0 %6185
        %6187 = vrot.lane.b32.xlu0 %v4019, 117
        %v6188 = vpop.permute.xlu0 %6187
        %6189 = vrot.lane.b32.xlu0 %v4004, 117
        %v6190 = vpop.permute.xlu0 %6189
        %6191 = vrot.lane.b32.xlu0 %v4012, 117
        %v6192 = vpop.permute.xlu0 %6191
        %6193 = vrot.lane.b32.xlu0 %v4020, 117
        %v6194 = vpop.permute.xlu0 %6193
        %6195 = vrot.lane.b32.xlu0 %v4005, 117
        %v6196 = vpop.permute.xlu0 %6195
        %6197 = vrot.lane.b32.xlu0 %v4013, 117
        %v6198 = vpop.permute.xlu0 %6197
        %6199 = vrot.lane.b32.xlu0 %v4021, 117
        %v6200 = vpop.permute.xlu0 %6199
        %6201 = vrot.lane.b32.xlu0 %v4006, 117
        %v6202 = vpop.permute.xlu0 %6201
        %6203 = vrot.lane.b32.xlu0 %v4014, 117
        %v6204 = vpop.permute.xlu0 %6203
        %6205 = vrot.lane.b32.xlu0 %v4022, 117
        %v6206 = vpop.permute.xlu0 %6205
        %6207 = vrot.lane.b32.xlu0 %v4007, 117
        %v6208 = vpop.permute.xlu0 %6207
        %6209 = vrot.lane.b32.xlu0 %v4015, 117
        %v6210 = vpop.permute.xlu0 %6209
        %6211 = vrot.lane.b32.xlu0 %v4023, 117
        %v6212 = vpop.permute.xlu0 %6211
        %6213 = vrot.lane.b32.xlu0 %v4008, 117
        %v6214 = vpop.permute.xlu0 %6213
        %6215 = vrot.lane.b32.xlu0 %v4016, 117
        %v6216 = vpop.permute.xlu0 %6215
        %6217 = vrot.lane.b32.xlu0 %v4024, 117
        %v6218 = vpop.permute.xlu0 %6217
        %6219 = vrot.lane.b32.xlu0 %v4009, 117
        %v6220 = vpop.permute.xlu0 %6219
        %6221 = vrot.lane.b32.xlu0 %v4017, 117
        %v6222 = vpop.permute.xlu0 %6221
        %6223 = vrot.lane.b32.xlu0 %v4025, 117
        %v6224 = vpop.permute.xlu0 %6223
        %v6225 = vsel %vm2589, %v6214, %v6220
        %v6226 = vsel %vm2589, %v6216, %v6222
        %v6227 = vsel %vm2589, %v6218, %v6224
        %v6228 = vsel %vm2589, %v6208, %v6214
        %v6229 = vsel %vm2589, %v6210, %v6216
        %v6230 = vsel %vm2589, %v6212, %v6218
        %v6231 = vsel %vm2589, %v6202, %v6208
        %v6232 = vsel %vm2589, %v6204, %v6210
        %v6233 = vsel %vm2589, %v6206, %v6212
        %v6234 = vsel %vm2589, %v6196, %v6202
        %v6235 = vsel %vm2589, %v6198, %v6204
        %v6236 = vsel %vm2589, %v6200, %v6206
        %v6237 = vsel %vm2589, %v6190, %v6196
        %v6238 = vsel %vm2589, %v6192, %v6198
        %v6239 = vsel %vm2589, %v6194, %v6200
        %v6240 = vsel %vm2589, %v6184, %v6190
        %v6241 = vsel %vm2589, %v6186, %v6192
        %v6242 = vsel %vm2589, %v6188, %v6194
        %v6243 = vsel %vm2589, %v6178, %v6184
        %v6244 = vsel %vm2589, %v6180, %v6186
        %v6245 = vsel %vm2589, %v6182, %v6188
        %v6246 = vsel %vm2589, %v6220, %v6178
        %v6247 = vsel %vm2589, %v6222, %v6180
        %v6248 = vsel %vm2589, %v6224, %v6182
        %6249 = vset.pattern.permute.xlu0 17
        %6250 = vperm.xlu0 %6249, %v368
        %v6251 = vpop.permute.xlu0 %6250
        %6253 = vset.pattern.permute.xlu0 17
        %6254 = vperm.xlu0 %6253, %v369
        %v6255 = vpop.permute.xlu0 %6254
        %6257 = vset.pattern.permute.xlu0 17
        %6258 = vperm.xlu0 %6257, %v370
        %v6259 = vpop.permute.xlu0 %6258
        %v6261 = vmul.f32 %v6243, %v6251
        %v6262 = vmul.f32 %v6240, %v6251
        %v6263 = vmul.f32 %v6237, %v6251
        %v6264 = vmul.f32 %v6234, %v6251
        %v6265 = vmul.f32 %v6231, %v6251
        %v6266 = vmul.f32 %v6228, %v6251
        %v6267 = vmul.f32 %v6225, %v6251
        %v6268 = vmul.f32 %v6246, %v6251
        %v6269 = vmul.f32 %v6244, %v6255
        %v6270 = vmul.f32 %v6241, %v6255
        %v6271 = vmul.f32 %v6238, %v6255
        %v6272 = vmul.f32 %v6235, %v6255
        %v6273 = vmul.f32 %v6232, %v6255
        %v6274 = vmul.f32 %v6229, %v6255
        %v6275 = vmul.f32 %v6226, %v6255
        %v6276 = vmul.f32 %v6247, %v6255
        %v6277 = vmul.f32 %v6245, %v6259
        %v6278 = vmul.f32 %v6242, %v6259
        %v6279 = vmul.f32 %v6239, %v6259
        %v6280 = vmul.f32 %v6236, %v6259
        %v6281 = vmul.f32 %v6233, %v6259
        %v6282 = vmul.f32 %v6230, %v6259
        %v6283 = vmul.f32 %v6227, %v6259
        %v6284 = vmul.f32 %v6248, %v6259
        %v6285 = vadd.f32 %v6153, %v6261
        %v6286 = vadd.f32 %v6154, %v6262
        %v6287 = vadd.f32 %v6155, %v6263
        %v6288 = vadd.f32 %v6156, %v6264
        %v6289 = vadd.f32 %v6157, %v6265
        %v6290 = vadd.f32 %v6158, %v6266
        %v6291 = vadd.f32 %v6159, %v6267
        %v6292 = vadd.f32 %v6160, %v6268
        %v6293 = vadd.f32 %v6161, %v6269
        %v6294 = vadd.f32 %v6162, %v6270
        %v6295 = vadd.f32 %v6163, %v6271
        %v6296 = vadd.f32 %v6164, %v6272
        %v6297 = vadd.f32 %v6165, %v6273
        %v6298 = vadd.f32 %v6166, %v6274
        %v6299 = vadd.f32 %v6167, %v6275
        %v6300 = vadd.f32 %v6168, %v6276
        %v6301 = vadd.f32 %v6169, %v6277
        %v6302 = vadd.f32 %v6170, %v6278
        %v6303 = vadd.f32 %v6171, %v6279
        %v6304 = vadd.f32 %v6172, %v6280
        %v6305 = vadd.f32 %v6173, %v6281
        %v6306 = vadd.f32 %v6174, %v6282
        %v6307 = vadd.f32 %v6175, %v6283
        %v6308 = vadd.f32 %v6176, %v6284
        %6309 = vrot.lane.b32.xlu0 %v4002, 39
        %v6310 = vpop.permute.xlu0 %6309
        %6311 = vrot.lane.b32.xlu0 %v4010, 39
        %v6312 = vpop.permute.xlu0 %6311
        %6313 = vrot.lane.b32.xlu0 %v4018, 39
        %v6314 = vpop.permute.xlu0 %6313
        %6315 = vrot.lane.b32.xlu0 %v4003, 39
        %v6316 = vpop.permute.xlu0 %6315
        %6317 = vrot.lane.b32.xlu0 %v4011, 39
        %v6318 = vpop.permute.xlu0 %6317
        %6319 = vrot.lane.b32.xlu0 %v4019, 39
        %v6320 = vpop.permute.xlu0 %6319
        %6321 = vrot.lane.b32.xlu0 %v4004, 39
        %v6322 = vpop.permute.xlu0 %6321
        %6323 = vrot.lane.b32.xlu0 %v4012, 39
        %v6324 = vpop.permute.xlu0 %6323
        %6325 = vrot.lane.b32.xlu0 %v4020, 39
        %v6326 = vpop.permute.xlu0 %6325
        %6327 = vrot.lane.b32.xlu0 %v4005, 39
        %v6328 = vpop.permute.xlu0 %6327
        %6329 = vrot.lane.b32.xlu0 %v4013, 39
        %v6330 = vpop.permute.xlu0 %6329
        %6331 = vrot.lane.b32.xlu0 %v4021, 39
        %v6332 = vpop.permute.xlu0 %6331
        %6333 = vrot.lane.b32.xlu0 %v4006, 39
        %v6334 = vpop.permute.xlu0 %6333
        %6335 = vrot.lane.b32.xlu0 %v4014, 39
        %v6336 = vpop.permute.xlu0 %6335
        %6337 = vrot.lane.b32.xlu0 %v4022, 39
        %v6338 = vpop.permute.xlu0 %6337
        %6339 = vrot.lane.b32.xlu0 %v4007, 39
        %v6340 = vpop.permute.xlu0 %6339
        %6341 = vrot.lane.b32.xlu0 %v4015, 39
        %v6342 = vpop.permute.xlu0 %6341
        %6343 = vrot.lane.b32.xlu0 %v4023, 39
        %v6344 = vpop.permute.xlu0 %6343
        %6345 = vrot.lane.b32.xlu0 %v4008, 39
        %v6346 = vpop.permute.xlu0 %6345
        %6347 = vrot.lane.b32.xlu0 %v4016, 39
        %v6348 = vpop.permute.xlu0 %6347
        %6349 = vrot.lane.b32.xlu0 %v4024, 39
        %v6350 = vpop.permute.xlu0 %6349
        %6351 = vrot.lane.b32.xlu0 %v4009, 39
        %v6352 = vpop.permute.xlu0 %6351
        %6353 = vrot.lane.b32.xlu0 %v4017, 39
        %v6354 = vpop.permute.xlu0 %6353
        %6355 = vrot.lane.b32.xlu0 %v4025, 39
        %v6356 = vpop.permute.xlu0 %6355
        %v6357 = vsel %vm2722, %v6346, %v6352
        %v6358 = vsel %vm2722, %v6348, %v6354
        %v6359 = vsel %vm2722, %v6350, %v6356
        %v6360 = vsel %vm2722, %v6340, %v6346
        %v6361 = vsel %vm2722, %v6342, %v6348
        %v6362 = vsel %vm2722, %v6344, %v6350
        %v6363 = vsel %vm2722, %v6334, %v6340
        %v6364 = vsel %vm2722, %v6336, %v6342
        %v6365 = vsel %vm2722, %v6338, %v6344
        %v6366 = vsel %vm2722, %v6328, %v6334
        %v6367 = vsel %vm2722, %v6330, %v6336
        %v6368 = vsel %vm2722, %v6332, %v6338
        %v6369 = vsel %vm2722, %v6322, %v6328
        %v6370 = vsel %vm2722, %v6324, %v6330
        %v6371 = vsel %vm2722, %v6326, %v6332
        %v6372 = vsel %vm2722, %v6316, %v6322
        %v6373 = vsel %vm2722, %v6318, %v6324
        %v6374 = vsel %vm2722, %v6320, %v6326
        %v6375 = vsel %vm2722, %v6310, %v6316
        %v6376 = vsel %vm2722, %v6312, %v6318
        %v6377 = vsel %vm2722, %v6314, %v6320
        %v6378 = vsel %vm2722, %v6352, %v6310
        %v6379 = vsel %vm2722, %v6354, %v6312
        %v6380 = vsel %vm2722, %v6356, %v6314
        %6381 = vset.pattern.permute.xlu0 18
        %6382 = vperm.xlu0 %6381, %v368
        %v6383 = vpop.permute.xlu0 %6382
        %6385 = vset.pattern.permute.xlu0 18
        %6386 = vperm.xlu0 %6385, %v369
        %v6387 = vpop.permute.xlu0 %6386
        %6389 = vset.pattern.permute.xlu0 18
        %6390 = vperm.xlu0 %6389, %v370
        %v6391 = vpop.permute.xlu0 %6390
        %v6393 = vmul.f32 %v6375, %v6383
        %v6394 = vmul.f32 %v6372, %v6383
        %v6395 = vmul.f32 %v6369, %v6383
        %v6396 = vmul.f32 %v6366, %v6383
        %v6397 = vmul.f32 %v6363, %v6383
        %v6398 = vmul.f32 %v6360, %v6383
        %v6399 = vmul.f32 %v6357, %v6383
        %v6400 = vmul.f32 %v6378, %v6383
        %v6401 = vmul.f32 %v6376, %v6387
        %v6402 = vmul.f32 %v6373, %v6387
        %v6403 = vmul.f32 %v6370, %v6387
        %v6404 = vmul.f32 %v6367, %v6387
        %v6405 = vmul.f32 %v6364, %v6387
        %v6406 = vmul.f32 %v6361, %v6387
        %v6407 = vmul.f32 %v6358, %v6387
        %v6408 = vmul.f32 %v6379, %v6387
        %v6409 = vmul.f32 %v6377, %v6391
        %v6410 = vmul.f32 %v6374, %v6391
        %v6411 = vmul.f32 %v6371, %v6391
        %v6412 = vmul.f32 %v6368, %v6391
        %v6413 = vmul.f32 %v6365, %v6391
        %v6414 = vmul.f32 %v6362, %v6391
        %v6415 = vmul.f32 %v6359, %v6391
        %v6416 = vmul.f32 %v6380, %v6391
        %v6417 = vadd.f32 %v6285, %v6393
        %v6418 = vadd.f32 %v6286, %v6394
        %v6419 = vadd.f32 %v6287, %v6395
        %v6420 = vadd.f32 %v6288, %v6396
        %v6421 = vadd.f32 %v6289, %v6397
        %v6422 = vadd.f32 %v6290, %v6398
        %v6423 = vadd.f32 %v6291, %v6399
        %v6424 = vadd.f32 %v6292, %v6400
        %v6425 = vadd.f32 %v6293, %v6401
        %v6426 = vadd.f32 %v6294, %v6402
        %v6427 = vadd.f32 %v6295, %v6403
        %v6428 = vadd.f32 %v6296, %v6404
        %v6429 = vadd.f32 %v6297, %v6405
        %v6430 = vadd.f32 %v6298, %v6406
        %v6431 = vadd.f32 %v6299, %v6407
        %v6432 = vadd.f32 %v6300, %v6408
        %v6433 = vadd.f32 %v6301, %v6409
        %v6434 = vadd.f32 %v6302, %v6410
        %v6435 = vadd.f32 %v6303, %v6411
        %v6436 = vadd.f32 %v6304, %v6412
        %v6437 = vadd.f32 %v6305, %v6413
        %v6438 = vadd.f32 %v6306, %v6414
        %v6439 = vadd.f32 %v6307, %v6415
        %v6440 = vadd.f32 %v6308, %v6416
        %6441 = vrot.lane.b32.xlu0 %v4002, 38
        %v6442 = vpop.permute.xlu0 %6441
        %6443 = vrot.lane.b32.xlu0 %v4010, 38
        %v6444 = vpop.permute.xlu0 %6443
        %6445 = vrot.lane.b32.xlu0 %v4018, 38
        %v6446 = vpop.permute.xlu0 %6445
        %6447 = vrot.lane.b32.xlu0 %v4003, 38
        %v6448 = vpop.permute.xlu0 %6447
        %6449 = vrot.lane.b32.xlu0 %v4011, 38
        %v6450 = vpop.permute.xlu0 %6449
        %6451 = vrot.lane.b32.xlu0 %v4019, 38
        %v6452 = vpop.permute.xlu0 %6451
        %6453 = vrot.lane.b32.xlu0 %v4004, 38
        %v6454 = vpop.permute.xlu0 %6453
        %6455 = vrot.lane.b32.xlu0 %v4012, 38
        %v6456 = vpop.permute.xlu0 %6455
        %6457 = vrot.lane.b32.xlu0 %v4020, 38
        %v6458 = vpop.permute.xlu0 %6457
        %6459 = vrot.lane.b32.xlu0 %v4005, 38
        %v6460 = vpop.permute.xlu0 %6459
        %6461 = vrot.lane.b32.xlu0 %v4013, 38
        %v6462 = vpop.permute.xlu0 %6461
        %6463 = vrot.lane.b32.xlu0 %v4021, 38
        %v6464 = vpop.permute.xlu0 %6463
        %6465 = vrot.lane.b32.xlu0 %v4006, 38
        %v6466 = vpop.permute.xlu0 %6465
        %6467 = vrot.lane.b32.xlu0 %v4014, 38
        %v6468 = vpop.permute.xlu0 %6467
        %6469 = vrot.lane.b32.xlu0 %v4022, 38
        %v6470 = vpop.permute.xlu0 %6469
        %6471 = vrot.lane.b32.xlu0 %v4007, 38
        %v6472 = vpop.permute.xlu0 %6471
        %6473 = vrot.lane.b32.xlu0 %v4015, 38
        %v6474 = vpop.permute.xlu0 %6473
        %6475 = vrot.lane.b32.xlu0 %v4023, 38
        %v6476 = vpop.permute.xlu0 %6475
        %6477 = vrot.lane.b32.xlu0 %v4008, 38
        %v6478 = vpop.permute.xlu0 %6477
        %6479 = vrot.lane.b32.xlu0 %v4016, 38
        %v6480 = vpop.permute.xlu0 %6479
        %6481 = vrot.lane.b32.xlu0 %v4024, 38
        %v6482 = vpop.permute.xlu0 %6481
        %6483 = vrot.lane.b32.xlu0 %v4009, 38
        %v6484 = vpop.permute.xlu0 %6483
        %6485 = vrot.lane.b32.xlu0 %v4017, 38
        %v6486 = vpop.permute.xlu0 %6485
        %6487 = vrot.lane.b32.xlu0 %v4025, 38
        %v6488 = vpop.permute.xlu0 %6487
        %v6489 = vsel %vm2855, %v6478, %v6484
        %v6490 = vsel %vm2855, %v6480, %v6486
        %v6491 = vsel %vm2855, %v6482, %v6488
        %v6492 = vsel %vm2855, %v6472, %v6478
        %v6493 = vsel %vm2855, %v6474, %v6480
        %v6494 = vsel %vm2855, %v6476, %v6482
        %v6495 = vsel %vm2855, %v6466, %v6472
        %v6496 = vsel %vm2855, %v6468, %v6474
        %v6497 = vsel %vm2855, %v6470, %v6476
        %v6498 = vsel %vm2855, %v6460, %v6466
        %v6499 = vsel %vm2855, %v6462, %v6468
        %v6500 = vsel %vm2855, %v6464, %v6470
        %v6501 = vsel %vm2855, %v6454, %v6460
        %v6502 = vsel %vm2855, %v6456, %v6462
        %v6503 = vsel %vm2855, %v6458, %v6464
        %v6504 = vsel %vm2855, %v6448, %v6454
        %v6505 = vsel %vm2855, %v6450, %v6456
        %v6506 = vsel %vm2855, %v6452, %v6458
        %v6507 = vsel %vm2855, %v6442, %v6448
        %v6508 = vsel %vm2855, %v6444, %v6450
        %v6509 = vsel %vm2855, %v6446, %v6452
        %v6510 = vsel %vm2855, %v6484, %v6442
        %v6511 = vsel %vm2855, %v6486, %v6444
        %v6512 = vsel %vm2855, %v6488, %v6446
        %6513 = vset.pattern.permute.xlu0 19
        %6514 = vperm.xlu0 %6513, %v368
        %v6515 = vpop.permute.xlu0 %6514
        %6517 = vset.pattern.permute.xlu0 19
        %6518 = vperm.xlu0 %6517, %v369
        %v6519 = vpop.permute.xlu0 %6518
        %6521 = vset.pattern.permute.xlu0 19
        %6522 = vperm.xlu0 %6521, %v370
        %v6523 = vpop.permute.xlu0 %6522
        %v6525 = vmul.f32 %v6507, %v6515
        %v6526 = vmul.f32 %v6504, %v6515
        %v6527 = vmul.f32 %v6501, %v6515
        %v6528 = vmul.f32 %v6498, %v6515
        %v6529 = vmul.f32 %v6495, %v6515
        %v6530 = vmul.f32 %v6492, %v6515
        %v6531 = vmul.f32 %v6489, %v6515
        %v6532 = vmul.f32 %v6510, %v6515
        %v6533 = vmul.f32 %v6508, %v6519
        %v6534 = vmul.f32 %v6505, %v6519
        %v6535 = vmul.f32 %v6502, %v6519
        %v6536 = vmul.f32 %v6499, %v6519
        %v6537 = vmul.f32 %v6496, %v6519
        %v6538 = vmul.f32 %v6493, %v6519
        %v6539 = vmul.f32 %v6490, %v6519
        %v6540 = vmul.f32 %v6511, %v6519
        %v6541 = vmul.f32 %v6509, %v6523
        %v6542 = vmul.f32 %v6506, %v6523
        %v6543 = vmul.f32 %v6503, %v6523
        %v6544 = vmul.f32 %v6500, %v6523
        %v6545 = vmul.f32 %v6497, %v6523
        %v6546 = vmul.f32 %v6494, %v6523
        %v6547 = vmul.f32 %v6491, %v6523
        %v6548 = vmul.f32 %v6512, %v6523
        %v6549 = vadd.f32 %v6417, %v6525
        %v6550 = vadd.f32 %v6418, %v6526
        %v6551 = vadd.f32 %v6419, %v6527
        %v6552 = vadd.f32 %v6420, %v6528
        %v6553 = vadd.f32 %v6421, %v6529
        %v6554 = vadd.f32 %v6422, %v6530
        %v6555 = vadd.f32 %v6423, %v6531
        %v6556 = vadd.f32 %v6424, %v6532
        %v6557 = vadd.f32 %v6425, %v6533
        %v6558 = vadd.f32 %v6426, %v6534
        %v6559 = vadd.f32 %v6427, %v6535
        %v6560 = vadd.f32 %v6428, %v6536
        %v6561 = vadd.f32 %v6429, %v6537
        %v6562 = vadd.f32 %v6430, %v6538
        %v6563 = vadd.f32 %v6431, %v6539
        %v6564 = vadd.f32 %v6432, %v6540
        %v6565 = vadd.f32 %v6433, %v6541
        %v6566 = vadd.f32 %v6434, %v6542
        %v6567 = vadd.f32 %v6435, %v6543
        %v6568 = vadd.f32 %v6436, %v6544
        %v6569 = vadd.f32 %v6437, %v6545
        %v6570 = vadd.f32 %v6438, %v6546
        %v6571 = vadd.f32 %v6439, %v6547
        %v6572 = vadd.f32 %v6440, %v6548
        %6573 = vrot.lane.b32.xlu0 %v4002, 37
        %v6574 = vpop.permute.xlu0 %6573
        %6575 = vrot.lane.b32.xlu0 %v4010, 37
        %v6576 = vpop.permute.xlu0 %6575
        %6577 = vrot.lane.b32.xlu0 %v4018, 37
        %v6578 = vpop.permute.xlu0 %6577
        %6579 = vrot.lane.b32.xlu0 %v4003, 37
        %v6580 = vpop.permute.xlu0 %6579
        %6581 = vrot.lane.b32.xlu0 %v4011, 37
        %v6582 = vpop.permute.xlu0 %6581
        %6583 = vrot.lane.b32.xlu0 %v4019, 37
        %v6584 = vpop.permute.xlu0 %6583
        %6585 = vrot.lane.b32.xlu0 %v4004, 37
        %v6586 = vpop.permute.xlu0 %6585
        %6587 = vrot.lane.b32.xlu0 %v4012, 37
        %v6588 = vpop.permute.xlu0 %6587
        %6589 = vrot.lane.b32.xlu0 %v4020, 37
        %v6590 = vpop.permute.xlu0 %6589
        %6591 = vrot.lane.b32.xlu0 %v4005, 37
        %v6592 = vpop.permute.xlu0 %6591
        %6593 = vrot.lane.b32.xlu0 %v4013, 37
        %v6594 = vpop.permute.xlu0 %6593
        %6595 = vrot.lane.b32.xlu0 %v4021, 37
        %v6596 = vpop.permute.xlu0 %6595
        %6597 = vrot.lane.b32.xlu0 %v4006, 37
        %v6598 = vpop.permute.xlu0 %6597
        %6599 = vrot.lane.b32.xlu0 %v4014, 37
        %v6600 = vpop.permute.xlu0 %6599
        %6601 = vrot.lane.b32.xlu0 %v4022, 37
        %v6602 = vpop.permute.xlu0 %6601
        %6603 = vrot.lane.b32.xlu0 %v4007, 37
        %v6604 = vpop.permute.xlu0 %6603
        %6605 = vrot.lane.b32.xlu0 %v4015, 37
        %v6606 = vpop.permute.xlu0 %6605
        %6607 = vrot.lane.b32.xlu0 %v4023, 37
        %v6608 = vpop.permute.xlu0 %6607
        %6609 = vrot.lane.b32.xlu0 %v4008, 37
        %v6610 = vpop.permute.xlu0 %6609
        %6611 = vrot.lane.b32.xlu0 %v4016, 37
        %v6612 = vpop.permute.xlu0 %6611
        %6613 = vrot.lane.b32.xlu0 %v4024, 37
        %v6614 = vpop.permute.xlu0 %6613
        %6615 = vrot.lane.b32.xlu0 %v4009, 37
        %v6616 = vpop.permute.xlu0 %6615
        %6617 = vrot.lane.b32.xlu0 %v4017, 37
        %v6618 = vpop.permute.xlu0 %6617
        %6619 = vrot.lane.b32.xlu0 %v4025, 37
        %v6620 = vpop.permute.xlu0 %6619
        %v6621 = vsel %vm2988, %v6610, %v6616
        %v6622 = vsel %vm2988, %v6612, %v6618
        %v6623 = vsel %vm2988, %v6614, %v6620
        %v6624 = vsel %vm2988, %v6604, %v6610
        %v6625 = vsel %vm2988, %v6606, %v6612
        %v6626 = vsel %vm2988, %v6608, %v6614
        %v6627 = vsel %vm2988, %v6598, %v6604
        %v6628 = vsel %vm2988, %v6600, %v6606
        %v6629 = vsel %vm2988, %v6602, %v6608
        %v6630 = vsel %vm2988, %v6592, %v6598
        %v6631 = vsel %vm2988, %v6594, %v6600
        %v6632 = vsel %vm2988, %v6596, %v6602
        %v6633 = vsel %vm2988, %v6586, %v6592
        %v6634 = vsel %vm2988, %v6588, %v6594
        %v6635 = vsel %vm2988, %v6590, %v6596
        %v6636 = vsel %vm2988, %v6580, %v6586
        %v6637 = vsel %vm2988, %v6582, %v6588
        %v6638 = vsel %vm2988, %v6584, %v6590
        %v6639 = vsel %vm2988, %v6574, %v6580
        %v6640 = vsel %vm2988, %v6576, %v6582
        %v6641 = vsel %vm2988, %v6578, %v6584
        %v6642 = vsel %vm2988, %v6616, %v6574
        %v6643 = vsel %vm2988, %v6618, %v6576
        %v6644 = vsel %vm2988, %v6620, %v6578
        %6645 = vset.pattern.permute.xlu0 20
        %6646 = vperm.xlu0 %6645, %v368
        %v6647 = vpop.permute.xlu0 %6646
        %6649 = vset.pattern.permute.xlu0 20
        %6650 = vperm.xlu0 %6649, %v369
        %v6651 = vpop.permute.xlu0 %6650
        %6653 = vset.pattern.permute.xlu0 20
        %6654 = vperm.xlu0 %6653, %v370
        %v6655 = vpop.permute.xlu0 %6654
        %v6657 = vmul.f32 %v6639, %v6647
        %v6658 = vmul.f32 %v6636, %v6647
        %v6659 = vmul.f32 %v6633, %v6647
        %v6660 = vmul.f32 %v6630, %v6647
        %v6661 = vmul.f32 %v6627, %v6647
        %v6662 = vmul.f32 %v6624, %v6647
        %v6663 = vmul.f32 %v6621, %v6647
        %v6664 = vmul.f32 %v6642, %v6647
        %v6665 = vmul.f32 %v6640, %v6651
        %v6666 = vmul.f32 %v6637, %v6651
        %v6667 = vmul.f32 %v6634, %v6651
        %v6668 = vmul.f32 %v6631, %v6651
        %v6669 = vmul.f32 %v6628, %v6651
        %v6670 = vmul.f32 %v6625, %v6651
        %v6671 = vmul.f32 %v6622, %v6651
        %v6672 = vmul.f32 %v6643, %v6651
        %v6673 = vmul.f32 %v6641, %v6655
        %v6674 = vmul.f32 %v6638, %v6655
        %v6675 = vmul.f32 %v6635, %v6655
        %v6676 = vmul.f32 %v6632, %v6655
        %v6677 = vmul.f32 %v6629, %v6655
        %v6678 = vmul.f32 %v6626, %v6655
        %v6679 = vmul.f32 %v6623, %v6655
        %v6680 = vmul.f32 %v6644, %v6655
        %v6681 = vadd.f32 %v6549, %v6657
        %v6682 = vadd.f32 %v6550, %v6658
        %v6683 = vadd.f32 %v6551, %v6659
        %v6684 = vadd.f32 %v6552, %v6660
        %v6685 = vadd.f32 %v6553, %v6661
        %v6686 = vadd.f32 %v6554, %v6662
        %v6687 = vadd.f32 %v6555, %v6663
        %v6688 = vadd.f32 %v6556, %v6664
        %v6689 = vadd.f32 %v6557, %v6665
        %v6690 = vadd.f32 %v6558, %v6666
        %v6691 = vadd.f32 %v6559, %v6667
        %v6692 = vadd.f32 %v6560, %v6668
        %v6693 = vadd.f32 %v6561, %v6669
        %v6694 = vadd.f32 %v6562, %v6670
        %v6695 = vadd.f32 %v6563, %v6671
        %v6696 = vadd.f32 %v6564, %v6672
        %v6697 = vadd.f32 %v6565, %v6673
        %v6698 = vadd.f32 %v6566, %v6674
        %v6699 = vadd.f32 %v6567, %v6675
        %v6700 = vadd.f32 %v6568, %v6676
        %v6701 = vadd.f32 %v6569, %v6677
        %v6702 = vadd.f32 %v6570, %v6678
        %v6703 = vadd.f32 %v6571, %v6679
        %v6704 = vadd.f32 %v6572, %v6680
        %6705 = vrot.lane.b32.xlu0 %v4002, 29
        %v6706 = vpop.permute.xlu0 %6705
        %6707 = vrot.lane.b32.xlu0 %v4010, 29
        %v6708 = vpop.permute.xlu0 %6707
        %6709 = vrot.lane.b32.xlu0 %v4018, 29
        %v6710 = vpop.permute.xlu0 %6709
        %6711 = vrot.lane.b32.xlu0 %v4003, 29
        %v6712 = vpop.permute.xlu0 %6711
        %6713 = vrot.lane.b32.xlu0 %v4011, 29
        %v6714 = vpop.permute.xlu0 %6713
        %6715 = vrot.lane.b32.xlu0 %v4019, 29
        %v6716 = vpop.permute.xlu0 %6715
        %6717 = vrot.lane.b32.xlu0 %v4004, 29
        %v6718 = vpop.permute.xlu0 %6717
        %6719 = vrot.lane.b32.xlu0 %v4012, 29
        %v6720 = vpop.permute.xlu0 %6719
        %6721 = vrot.lane.b32.xlu0 %v4020, 29
        %v6722 = vpop.permute.xlu0 %6721
        %6723 = vrot.lane.b32.xlu0 %v4005, 29
        %v6724 = vpop.permute.xlu0 %6723
        %6725 = vrot.lane.b32.xlu0 %v4013, 29
        %v6726 = vpop.permute.xlu0 %6725
        %6727 = vrot.lane.b32.xlu0 %v4021, 29
        %v6728 = vpop.permute.xlu0 %6727
        %6729 = vrot.lane.b32.xlu0 %v4006, 29
        %v6730 = vpop.permute.xlu0 %6729
        %6731 = vrot.lane.b32.xlu0 %v4014, 29
        %v6732 = vpop.permute.xlu0 %6731
        %6733 = vrot.lane.b32.xlu0 %v4022, 29
        %v6734 = vpop.permute.xlu0 %6733
        %6735 = vrot.lane.b32.xlu0 %v4007, 29
        %v6736 = vpop.permute.xlu0 %6735
        %6737 = vrot.lane.b32.xlu0 %v4015, 29
        %v6738 = vpop.permute.xlu0 %6737
        %6739 = vrot.lane.b32.xlu0 %v4023, 29
        %v6740 = vpop.permute.xlu0 %6739
        %6741 = vrot.lane.b32.xlu0 %v4008, 29
        %v6742 = vpop.permute.xlu0 %6741
        %6743 = vrot.lane.b32.xlu0 %v4016, 29
        %v6744 = vpop.permute.xlu0 %6743
        %6745 = vrot.lane.b32.xlu0 %v4024, 29
        %v6746 = vpop.permute.xlu0 %6745
        %6747 = vrot.lane.b32.xlu0 %v4009, 29
        %v6748 = vpop.permute.xlu0 %6747
        %6749 = vrot.lane.b32.xlu0 %v4017, 29
        %v6750 = vpop.permute.xlu0 %6749
        %6751 = vrot.lane.b32.xlu0 %v4025, 29
        %v6752 = vpop.permute.xlu0 %6751
        %v6753 = vsel %vm3121, %v6742, %v6748
        %v6754 = vsel %vm3121, %v6744, %v6750
        %v6755 = vsel %vm3121, %v6746, %v6752
        %v6756 = vsel %vm3121, %v6736, %v6742
        %v6757 = vsel %vm3121, %v6738, %v6744
        %v6758 = vsel %vm3121, %v6740, %v6746
        %v6759 = vsel %vm3121, %v6730, %v6736
        %v6760 = vsel %vm3121, %v6732, %v6738
        %v6761 = vsel %vm3121, %v6734, %v6740
        %v6762 = vsel %vm3121, %v6724, %v6730
        %v6763 = vsel %vm3121, %v6726, %v6732
        %v6764 = vsel %vm3121, %v6728, %v6734
        %v6765 = vsel %vm3121, %v6718, %v6724
        %v6766 = vsel %vm3121, %v6720, %v6726
        %v6767 = vsel %vm3121, %v6722, %v6728
        %v6768 = vsel %vm3121, %v6712, %v6718
        %v6769 = vsel %vm3121, %v6714, %v6720
        %v6770 = vsel %vm3121, %v6716, %v6722
        %v6771 = vsel %vm3121, %v6706, %v6712
        %v6772 = vsel %vm3121, %v6708, %v6714
        %v6773 = vsel %vm3121, %v6710, %v6716
        %v6774 = vsel %vm3121, %v6748, %v6706
        %v6775 = vsel %vm3121, %v6750, %v6708
        %v6776 = vsel %vm3121, %v6752, %v6710
        %6777 = vset.pattern.permute.xlu0 21
        %6778 = vperm.xlu0 %6777, %v368
        %v6779 = vpop.permute.xlu0 %6778
        %6781 = vset.pattern.permute.xlu0 21
        %6782 = vperm.xlu0 %6781, %v369
        %v6783 = vpop.permute.xlu0 %6782
        %6785 = vset.pattern.permute.xlu0 21
        %6786 = vperm.xlu0 %6785, %v370
        %v6787 = vpop.permute.xlu0 %6786
        %v6789 = vmul.f32 %v6771, %v6779
        %v6790 = vmul.f32 %v6768, %v6779
        %v6791 = vmul.f32 %v6765, %v6779
        %v6792 = vmul.f32 %v6762, %v6779
        %v6793 = vmul.f32 %v6759, %v6779
        %v6794 = vmul.f32 %v6756, %v6779
        %v6795 = vmul.f32 %v6753, %v6779
        %v6796 = vmul.f32 %v6774, %v6779
        %v6797 = vmul.f32 %v6772, %v6783
        %v6798 = vmul.f32 %v6769, %v6783
        %v6799 = vmul.f32 %v6766, %v6783
        %v6800 = vmul.f32 %v6763, %v6783
        %v6801 = vmul.f32 %v6760, %v6783
        %v6802 = vmul.f32 %v6757, %v6783
        %v6803 = vmul.f32 %v6754, %v6783
        %v6804 = vmul.f32 %v6775, %v6783
        %v6805 = vmul.f32 %v6773, %v6787
        %v6806 = vmul.f32 %v6770, %v6787
        %v6807 = vmul.f32 %v6767, %v6787
        %v6808 = vmul.f32 %v6764, %v6787
        %v6809 = vmul.f32 %v6761, %v6787
        %v6810 = vmul.f32 %v6758, %v6787
        %v6811 = vmul.f32 %v6755, %v6787
        %v6812 = vmul.f32 %v6776, %v6787
        %v6813 = vadd.f32 %v6681, %v6789
        %v6814 = vadd.f32 %v6682, %v6790
        %v6815 = vadd.f32 %v6683, %v6791
        %v6816 = vadd.f32 %v6684, %v6792
        %v6817 = vadd.f32 %v6685, %v6793
        %v6818 = vadd.f32 %v6686, %v6794
        %v6819 = vadd.f32 %v6687, %v6795
        %v6820 = vadd.f32 %v6688, %v6796
        %v6821 = vadd.f32 %v6689, %v6797
        %v6822 = vadd.f32 %v6690, %v6798
        %v6823 = vadd.f32 %v6691, %v6799
        %v6824 = vadd.f32 %v6692, %v6800
        %v6825 = vadd.f32 %v6693, %v6801
        %v6826 = vadd.f32 %v6694, %v6802
        %v6827 = vadd.f32 %v6695, %v6803
        %v6828 = vadd.f32 %v6696, %v6804
        %v6829 = vadd.f32 %v6697, %v6805
        %v6830 = vadd.f32 %v6698, %v6806
        %v6831 = vadd.f32 %v6699, %v6807
        %v6832 = vadd.f32 %v6700, %v6808
        %v6833 = vadd.f32 %v6701, %v6809
        %v6834 = vadd.f32 %v6702, %v6810
        %v6835 = vadd.f32 %v6703, %v6811
        %v6836 = vadd.f32 %v6704, %v6812
        %6837 = vrot.lane.b32.xlu0 %v4002, 28
        %v6838 = vpop.permute.xlu0 %6837
        %6839 = vrot.lane.b32.xlu0 %v4010, 28
        %v6840 = vpop.permute.xlu0 %6839
        %6841 = vrot.lane.b32.xlu0 %v4018, 28
        %v6842 = vpop.permute.xlu0 %6841
        %6843 = vrot.lane.b32.xlu0 %v4003, 28
        %v6844 = vpop.permute.xlu0 %6843
        %6845 = vrot.lane.b32.xlu0 %v4011, 28
        %v6846 = vpop.permute.xlu0 %6845
        %6847 = vrot.lane.b32.xlu0 %v4019, 28
        %v6848 = vpop.permute.xlu0 %6847
        %6849 = vrot.lane.b32.xlu0 %v4004, 28
        %v6850 = vpop.permute.xlu0 %6849
        %6851 = vrot.lane.b32.xlu0 %v4012, 28
        %v6852 = vpop.permute.xlu0 %6851
        %6853 = vrot.lane.b32.xlu0 %v4020, 28
        %v6854 = vpop.permute.xlu0 %6853
        %6855 = vrot.lane.b32.xlu0 %v4005, 28
        %v6856 = vpop.permute.xlu0 %6855
        %6857 = vrot.lane.b32.xlu0 %v4013, 28
        %v6858 = vpop.permute.xlu0 %6857
        %6859 = vrot.lane.b32.xlu0 %v4021, 28
        %v6860 = vpop.permute.xlu0 %6859
        %6861 = vrot.lane.b32.xlu0 %v4006, 28
        %v6862 = vpop.permute.xlu0 %6861
        %6863 = vrot.lane.b32.xlu0 %v4014, 28
        %v6864 = vpop.permute.xlu0 %6863
        %6865 = vrot.lane.b32.xlu0 %v4022, 28
        %v6866 = vpop.permute.xlu0 %6865
        %6867 = vrot.lane.b32.xlu0 %v4007, 28
        %v6868 = vpop.permute.xlu0 %6867
        %6869 = vrot.lane.b32.xlu0 %v4015, 28
        %v6870 = vpop.permute.xlu0 %6869
        %6871 = vrot.lane.b32.xlu0 %v4023, 28
        %v6872 = vpop.permute.xlu0 %6871
        %6873 = vrot.lane.b32.xlu0 %v4008, 28
        %v6874 = vpop.permute.xlu0 %6873
        %6875 = vrot.lane.b32.xlu0 %v4016, 28
        %v6876 = vpop.permute.xlu0 %6875
        %6877 = vrot.lane.b32.xlu0 %v4024, 28
        %v6878 = vpop.permute.xlu0 %6877
        %6879 = vrot.lane.b32.xlu0 %v4009, 28
        %v6880 = vpop.permute.xlu0 %6879
        %6881 = vrot.lane.b32.xlu0 %v4017, 28
        %v6882 = vpop.permute.xlu0 %6881
        %6883 = vrot.lane.b32.xlu0 %v4025, 28
        %v6884 = vpop.permute.xlu0 %6883
        %v6885 = vsel %vm3254, %v6874, %v6880
        %v6886 = vsel %vm3254, %v6876, %v6882
        %v6887 = vsel %vm3254, %v6878, %v6884
        %v6888 = vsel %vm3254, %v6868, %v6874
        %v6889 = vsel %vm3254, %v6870, %v6876
        %v6890 = vsel %vm3254, %v6872, %v6878
        %v6891 = vsel %vm3254, %v6862, %v6868
        %v6892 = vsel %vm3254, %v6864, %v6870
        %v6893 = vsel %vm3254, %v6866, %v6872
        %v6894 = vsel %vm3254, %v6856, %v6862
        %v6895 = vsel %vm3254, %v6858, %v6864
        %v6896 = vsel %vm3254, %v6860, %v6866
        %v6897 = vsel %vm3254, %v6850, %v6856
        %v6898 = vsel %vm3254, %v6852, %v6858
        %v6899 = vsel %vm3254, %v6854, %v6860
        %v6900 = vsel %vm3254, %v6844, %v6850
        %v6901 = vsel %vm3254, %v6846, %v6852
        %v6902 = vsel %vm3254, %v6848, %v6854
        %v6903 = vsel %vm3254, %v6838, %v6844
        %v6904 = vsel %vm3254, %v6840, %v6846
        %v6905 = vsel %vm3254, %v6842, %v6848
        %v6906 = vsel %vm3254, %v6880, %v6838
        %v6907 = vsel %vm3254, %v6882, %v6840
        %v6908 = vsel %vm3254, %v6884, %v6842
        %6909 = vset.pattern.permute.xlu0 22
        %6910 = vperm.xlu0 %6909, %v368
        %v6911 = vpop.permute.xlu0 %6910
        %6913 = vset.pattern.permute.xlu0 22
        %6914 = vperm.xlu0 %6913, %v369
        %v6915 = vpop.permute.xlu0 %6914
        %6917 = vset.pattern.permute.xlu0 22
        %6918 = vperm.xlu0 %6917, %v370
        %v6919 = vpop.permute.xlu0 %6918
        %v6921 = vmul.f32 %v6903, %v6911
        %v6922 = vmul.f32 %v6900, %v6911
        %v6923 = vmul.f32 %v6897, %v6911
        %v6924 = vmul.f32 %v6894, %v6911
        %v6925 = vmul.f32 %v6891, %v6911
        %v6926 = vmul.f32 %v6888, %v6911
        %v6927 = vmul.f32 %v6885, %v6911
        %v6928 = vmul.f32 %v6906, %v6911
        %v6929 = vmul.f32 %v6904, %v6915
        %v6930 = vmul.f32 %v6901, %v6915
        %v6931 = vmul.f32 %v6898, %v6915
        %v6932 = vmul.f32 %v6895, %v6915
        %v6933 = vmul.f32 %v6892, %v6915
        %v6934 = vmul.f32 %v6889, %v6915
        %v6935 = vmul.f32 %v6886, %v6915
        %v6936 = vmul.f32 %v6907, %v6915
        %v6937 = vmul.f32 %v6905, %v6919
        %v6938 = vmul.f32 %v6902, %v6919
        %v6939 = vmul.f32 %v6899, %v6919
        %v6940 = vmul.f32 %v6896, %v6919
        %v6941 = vmul.f32 %v6893, %v6919
        %v6942 = vmul.f32 %v6890, %v6919
        %v6943 = vmul.f32 %v6887, %v6919
        %v6944 = vmul.f32 %v6908, %v6919
        %v6945 = vadd.f32 %v6813, %v6921
        %v6946 = vadd.f32 %v6814, %v6922
        %v6947 = vadd.f32 %v6815, %v6923
        %v6948 = vadd.f32 %v6816, %v6924
        %v6949 = vadd.f32 %v6817, %v6925
        %v6950 = vadd.f32 %v6818, %v6926
        %v6951 = vadd.f32 %v6819, %v6927
        %v6952 = vadd.f32 %v6820, %v6928
        %v6953 = vadd.f32 %v6821, %v6929
        %v6954 = vadd.f32 %v6822, %v6930
        %v6955 = vadd.f32 %v6823, %v6931
        %v6956 = vadd.f32 %v6824, %v6932
        %v6957 = vadd.f32 %v6825, %v6933
        %v6958 = vadd.f32 %v6826, %v6934
        %v6959 = vadd.f32 %v6827, %v6935
        %v6960 = vadd.f32 %v6828, %v6936
        %v6961 = vadd.f32 %v6829, %v6937
        %v6962 = vadd.f32 %v6830, %v6938
        %v6963 = vadd.f32 %v6831, %v6939
        %v6964 = vadd.f32 %v6832, %v6940
        %v6965 = vadd.f32 %v6833, %v6941
        %v6966 = vadd.f32 %v6834, %v6942
        %v6967 = vadd.f32 %v6835, %v6943
        %v6968 = vadd.f32 %v6836, %v6944
        %6969 = vrot.lane.b32.xlu0 %v4002, 27
        %v6970 = vpop.permute.xlu0 %6969
        %6971 = vrot.lane.b32.xlu0 %v4010, 27
        %v6972 = vpop.permute.xlu0 %6971
        %6973 = vrot.lane.b32.xlu0 %v4018, 27
        %v6974 = vpop.permute.xlu0 %6973
        %6975 = vrot.lane.b32.xlu0 %v4003, 27
        %v6976 = vpop.permute.xlu0 %6975
        %6977 = vrot.lane.b32.xlu0 %v4011, 27
        %v6978 = vpop.permute.xlu0 %6977
        %6979 = vrot.lane.b32.xlu0 %v4019, 27
        %v6980 = vpop.permute.xlu0 %6979
        %6981 = vrot.lane.b32.xlu0 %v4004, 27
        %v6982 = vpop.permute.xlu0 %6981
        %6983 = vrot.lane.b32.xlu0 %v4012, 27
        %v6984 = vpop.permute.xlu0 %6983
        %6985 = vrot.lane.b32.xlu0 %v4020, 27
        %v6986 = vpop.permute.xlu0 %6985
        %6987 = vrot.lane.b32.xlu0 %v4005, 27
        %v6988 = vpop.permute.xlu0 %6987
        %6989 = vrot.lane.b32.xlu0 %v4013, 27
        %v6990 = vpop.permute.xlu0 %6989
        %6991 = vrot.lane.b32.xlu0 %v4021, 27
        %v6992 = vpop.permute.xlu0 %6991
        %6993 = vrot.lane.b32.xlu0 %v4006, 27
        %v6994 = vpop.permute.xlu0 %6993
        %6995 = vrot.lane.b32.xlu0 %v4014, 27
        %v6996 = vpop.permute.xlu0 %6995
        %6997 = vrot.lane.b32.xlu0 %v4022, 27
        %v6998 = vpop.permute.xlu0 %6997
        %6999 = vrot.lane.b32.xlu0 %v4007, 27
        %v7000 = vpop.permute.xlu0 %6999
        %7001 = vrot.lane.b32.xlu0 %v4015, 27
        %v7002 = vpop.permute.xlu0 %7001
        %7003 = vrot.lane.b32.xlu0 %v4023, 27
        %v7004 = vpop.permute.xlu0 %7003
        %7005 = vrot.lane.b32.xlu0 %v4008, 27
        %v7006 = vpop.permute.xlu0 %7005
        %7007 = vrot.lane.b32.xlu0 %v4016, 27
        %v7008 = vpop.permute.xlu0 %7007
        %7009 = vrot.lane.b32.xlu0 %v4024, 27
        %v7010 = vpop.permute.xlu0 %7009
        %7011 = vrot.lane.b32.xlu0 %v4009, 27
        %v7012 = vpop.permute.xlu0 %7011
        %7013 = vrot.lane.b32.xlu0 %v4017, 27
        %v7014 = vpop.permute.xlu0 %7013
        %7015 = vrot.lane.b32.xlu0 %v4025, 27
        %v7016 = vpop.permute.xlu0 %7015
        %v7017 = vsel %vm3387, %v7006, %v7012
        %v7018 = vsel %vm3387, %v7008, %v7014
        %v7019 = vsel %vm3387, %v7010, %v7016
        %v7020 = vsel %vm3387, %v7000, %v7006
        %v7021 = vsel %vm3387, %v7002, %v7008
        %v7022 = vsel %vm3387, %v7004, %v7010
        %v7023 = vsel %vm3387, %v6994, %v7000
        %v7024 = vsel %vm3387, %v6996, %v7002
        %v7025 = vsel %vm3387, %v6998, %v7004
        %v7026 = vsel %vm3387, %v6988, %v6994
        %v7027 = vsel %vm3387, %v6990, %v6996
        %v7028 = vsel %vm3387, %v6992, %v6998
        %v7029 = vsel %vm3387, %v6982, %v6988
        %v7030 = vsel %vm3387, %v6984, %v6990
        %v7031 = vsel %vm3387, %v6986, %v6992
        %v7032 = vsel %vm3387, %v6976, %v6982
        %v7033 = vsel %vm3387, %v6978, %v6984
        %v7034 = vsel %vm3387, %v6980, %v6986
        %v7035 = vsel %vm3387, %v6970, %v6976
        %v7036 = vsel %vm3387, %v6972, %v6978
        %v7037 = vsel %vm3387, %v6974, %v6980
        %v7038 = vsel %vm3387, %v7012, %v6970
        %v7039 = vsel %vm3387, %v7014, %v6972
        %v7040 = vsel %vm3387, %v7016, %v6974
        %7041 = vset.pattern.permute.xlu0 23
        %7042 = vperm.xlu0 %7041, %v368
        %v7043 = vpop.permute.xlu0 %7042
        %7045 = vset.pattern.permute.xlu0 23
        %7046 = vperm.xlu0 %7045, %v369
        %v7047 = vpop.permute.xlu0 %7046
        %7049 = vset.pattern.permute.xlu0 23
        %7050 = vperm.xlu0 %7049, %v370
        %v7051 = vpop.permute.xlu0 %7050
        %v7053 = vmul.f32 %v7035, %v7043
        %v7054 = vmul.f32 %v7032, %v7043
        %v7055 = vmul.f32 %v7029, %v7043
        %v7056 = vmul.f32 %v7026, %v7043
        %v7057 = vmul.f32 %v7023, %v7043
        %v7058 = vmul.f32 %v7020, %v7043
        %v7059 = vmul.f32 %v7017, %v7043
        %v7060 = vmul.f32 %v7038, %v7043
        %v7061 = vmul.f32 %v7036, %v7047
        %v7062 = vmul.f32 %v7033, %v7047
        %v7063 = vmul.f32 %v7030, %v7047
        %v7064 = vmul.f32 %v7027, %v7047
        %v7065 = vmul.f32 %v7024, %v7047
        %v7066 = vmul.f32 %v7021, %v7047
        %v7067 = vmul.f32 %v7018, %v7047
        %v7068 = vmul.f32 %v7039, %v7047
        %v7069 = vmul.f32 %v7037, %v7051
        %v7070 = vmul.f32 %v7034, %v7051
        %v7071 = vmul.f32 %v7031, %v7051
        %v7072 = vmul.f32 %v7028, %v7051
        %v7073 = vmul.f32 %v7025, %v7051
        %v7074 = vmul.f32 %v7022, %v7051
        %v7075 = vmul.f32 %v7019, %v7051
        %v7076 = vmul.f32 %v7040, %v7051
        %v7077 = vadd.f32 %v6945, %v7053
        %v7078 = vadd.f32 %v6946, %v7054
        %v7079 = vadd.f32 %v6947, %v7055
        %v7080 = vadd.f32 %v6948, %v7056
        %v7081 = vadd.f32 %v6949, %v7057
        %v7082 = vadd.f32 %v6950, %v7058
        %v7083 = vadd.f32 %v6951, %v7059
        %v7084 = vadd.f32 %v6952, %v7060
        %v7085 = vadd.f32 %v6953, %v7061
        %v7086 = vadd.f32 %v6954, %v7062
        %v7087 = vadd.f32 %v6955, %v7063
        %v7088 = vadd.f32 %v6956, %v7064
        %v7089 = vadd.f32 %v6957, %v7065
        %v7090 = vadd.f32 %v6958, %v7066
        %v7091 = vadd.f32 %v6959, %v7067
        %v7092 = vadd.f32 %v6960, %v7068
        %v7093 = vadd.f32 %v6961, %v7069
        %v7094 = vadd.f32 %v6962, %v7070
        %v7095 = vadd.f32 %v6963, %v7071
        %v7096 = vadd.f32 %v6964, %v7072
        %v7097 = vadd.f32 %v6965, %v7073
        %v7098 = vadd.f32 %v6966, %v7074
        %v7099 = vadd.f32 %v6967, %v7075
        %v7100 = vadd.f32 %v6968, %v7076
        %7101 = vrot.lane.b32.xlu0 %v4002, 19
        %v7102 = vpop.permute.xlu0 %7101
        %7103 = vrot.lane.b32.xlu0 %v4010, 19
        %v7104 = vpop.permute.xlu0 %7103
        %7105 = vrot.lane.b32.xlu0 %v4018, 19
        %v7106 = vpop.permute.xlu0 %7105
        %7107 = vrot.lane.b32.xlu0 %v4003, 19
        %v7108 = vpop.permute.xlu0 %7107
        %7109 = vrot.lane.b32.xlu0 %v4011, 19
        %v7110 = vpop.permute.xlu0 %7109
        %7111 = vrot.lane.b32.xlu0 %v4019, 19
        %v7112 = vpop.permute.xlu0 %7111
        %7113 = vrot.lane.b32.xlu0 %v4004, 19
        %v7114 = vpop.permute.xlu0 %7113
        %7115 = vrot.lane.b32.xlu0 %v4012, 19
        %v7116 = vpop.permute.xlu0 %7115
        %7117 = vrot.lane.b32.xlu0 %v4020, 19
        %v7118 = vpop.permute.xlu0 %7117
        %7119 = vrot.lane.b32.xlu0 %v4005, 19
        %v7120 = vpop.permute.xlu0 %7119
        %7121 = vrot.lane.b32.xlu0 %v4013, 19
        %v7122 = vpop.permute.xlu0 %7121
        %7123 = vrot.lane.b32.xlu0 %v4021, 19
        %v7124 = vpop.permute.xlu0 %7123
        %7125 = vrot.lane.b32.xlu0 %v4006, 19
        %v7126 = vpop.permute.xlu0 %7125
        %7127 = vrot.lane.b32.xlu0 %v4014, 19
        %v7128 = vpop.permute.xlu0 %7127
        %7129 = vrot.lane.b32.xlu0 %v4022, 19
        %v7130 = vpop.permute.xlu0 %7129
        %7131 = vrot.lane.b32.xlu0 %v4007, 19
        %v7132 = vpop.permute.xlu0 %7131
        %7133 = vrot.lane.b32.xlu0 %v4015, 19
        %v7134 = vpop.permute.xlu0 %7133
        %7135 = vrot.lane.b32.xlu0 %v4023, 19
        %v7136 = vpop.permute.xlu0 %7135
        %7137 = vrot.lane.b32.xlu0 %v4008, 19
        %v7138 = vpop.permute.xlu0 %7137
        %7139 = vrot.lane.b32.xlu0 %v4016, 19
        %v7140 = vpop.permute.xlu0 %7139
        %7141 = vrot.lane.b32.xlu0 %v4024, 19
        %v7142 = vpop.permute.xlu0 %7141
        %7143 = vrot.lane.b32.xlu0 %v4009, 19
        %v7144 = vpop.permute.xlu0 %7143
        %7145 = vrot.lane.b32.xlu0 %v4017, 19
        %v7146 = vpop.permute.xlu0 %7145
        %7147 = vrot.lane.b32.xlu0 %v4025, 19
        %v7148 = vpop.permute.xlu0 %7147
        %v7149 = vsel %vm3520, %v7138, %v7144
        %v7150 = vsel %vm3520, %v7140, %v7146
        %v7151 = vsel %vm3520, %v7142, %v7148
        %v7152 = vsel %vm3520, %v7132, %v7138
        %v7153 = vsel %vm3520, %v7134, %v7140
        %v7154 = vsel %vm3520, %v7136, %v7142
        %v7155 = vsel %vm3520, %v7126, %v7132
        %v7156 = vsel %vm3520, %v7128, %v7134
        %v7157 = vsel %vm3520, %v7130, %v7136
        %v7158 = vsel %vm3520, %v7120, %v7126
        %v7159 = vsel %vm3520, %v7122, %v7128
        %v7160 = vsel %vm3520, %v7124, %v7130
        %v7161 = vsel %vm3520, %v7114, %v7120
        %v7162 = vsel %vm3520, %v7116, %v7122
        %v7163 = vsel %vm3520, %v7118, %v7124
        %v7164 = vsel %vm3520, %v7108, %v7114
        %v7165 = vsel %vm3520, %v7110, %v7116
        %v7166 = vsel %vm3520, %v7112, %v7118
        %v7167 = vsel %vm3520, %v7102, %v7108
        %v7168 = vsel %vm3520, %v7104, %v7110
        %v7169 = vsel %vm3520, %v7106, %v7112
        %v7170 = vsel %vm3520, %v7144, %v7102
        %v7171 = vsel %vm3520, %v7146, %v7104
        %v7172 = vsel %vm3520, %v7148, %v7106
        %7173 = vset.pattern.permute.xlu0 24
        %7174 = vperm.xlu0 %7173, %v368
        %v7175 = vpop.permute.xlu0 %7174
        %7177 = vset.pattern.permute.xlu0 24
        %7178 = vperm.xlu0 %7177, %v369
        %v7179 = vpop.permute.xlu0 %7178
        %7181 = vset.pattern.permute.xlu0 24
        %7182 = vperm.xlu0 %7181, %v370
        %v7183 = vpop.permute.xlu0 %7182
        %v7185 = vmul.f32 %v7167, %v7175
        %v7186 = vmul.f32 %v7164, %v7175
        %v7187 = vmul.f32 %v7161, %v7175
        %v7188 = vmul.f32 %v7158, %v7175
        %v7189 = vmul.f32 %v7155, %v7175
        %v7190 = vmul.f32 %v7152, %v7175
        %v7191 = vmul.f32 %v7149, %v7175
        %v7192 = vmul.f32 %v7170, %v7175
        %v7193 = vmul.f32 %v7168, %v7179
        %v7194 = vmul.f32 %v7165, %v7179
        %v7195 = vmul.f32 %v7162, %v7179
        %v7196 = vmul.f32 %v7159, %v7179
        %v7197 = vmul.f32 %v7156, %v7179
        %v7198 = vmul.f32 %v7153, %v7179
        %v7199 = vmul.f32 %v7150, %v7179
        %v7200 = vmul.f32 %v7171, %v7179
        %v7201 = vmul.f32 %v7169, %v7183
        %v7202 = vmul.f32 %v7166, %v7183
        %v7203 = vmul.f32 %v7163, %v7183
        %v7204 = vmul.f32 %v7160, %v7183
        %v7205 = vmul.f32 %v7157, %v7183
        %v7206 = vmul.f32 %v7154, %v7183
        %v7207 = vmul.f32 %v7151, %v7183
        %v7208 = vmul.f32 %v7172, %v7183
        %v7209 = vadd.f32 %v7077, %v7185
        %v7210 = vadd.f32 %v7078, %v7186
        %v7211 = vadd.f32 %v7079, %v7187
        %v7212 = vadd.f32 %v7080, %v7188
        %v7213 = vadd.f32 %v7081, %v7189
        %v7214 = vadd.f32 %v7082, %v7190
        %v7215 = vadd.f32 %v7083, %v7191
        %v7216 = vadd.f32 %v7084, %v7192
        %v7217 = vadd.f32 %v7085, %v7193
        %v7218 = vadd.f32 %v7086, %v7194
        %v7219 = vadd.f32 %v7087, %v7195
        %v7220 = vadd.f32 %v7088, %v7196
        %v7221 = vadd.f32 %v7089, %v7197
        %v7222 = vadd.f32 %v7090, %v7198
        %v7223 = vadd.f32 %v7091, %v7199
        %v7224 = vadd.f32 %v7092, %v7200
        %v7225 = vadd.f32 %v7093, %v7201
        %v7226 = vadd.f32 %v7094, %v7202
        %v7227 = vadd.f32 %v7095, %v7203
        %v7228 = vadd.f32 %v7096, %v7204
        %v7229 = vadd.f32 %v7097, %v7205
        %v7230 = vadd.f32 %v7098, %v7206
        %v7231 = vadd.f32 %v7099, %v7207
        %v7232 = vadd.f32 %v7100, %v7208
        %7233 = vrot.lane.b32.xlu0 %v4002, 18
        %v7234 = vpop.permute.xlu0 %7233
        %7235 = vrot.lane.b32.xlu0 %v4010, 18
        %v7236 = vpop.permute.xlu0 %7235
        %7237 = vrot.lane.b32.xlu0 %v4018, 18
        %v7238 = vpop.permute.xlu0 %7237
        %7239 = vrot.lane.b32.xlu0 %v4003, 18
        %v7240 = vpop.permute.xlu0 %7239
        %7241 = vrot.lane.b32.xlu0 %v4011, 18
        %v7242 = vpop.permute.xlu0 %7241
        %7243 = vrot.lane.b32.xlu0 %v4019, 18
        %v7244 = vpop.permute.xlu0 %7243
        %7245 = vrot.lane.b32.xlu0 %v4004, 18
        %v7246 = vpop.permute.xlu0 %7245
        %7247 = vrot.lane.b32.xlu0 %v4012, 18
        %v7248 = vpop.permute.xlu0 %7247
        %7249 = vrot.lane.b32.xlu0 %v4020, 18
        %v7250 = vpop.permute.xlu0 %7249
        %7251 = vrot.lane.b32.xlu0 %v4005, 18
        %v7252 = vpop.permute.xlu0 %7251
        %7253 = vrot.lane.b32.xlu0 %v4013, 18
        %v7254 = vpop.permute.xlu0 %7253
        %7255 = vrot.lane.b32.xlu0 %v4021, 18
        %v7256 = vpop.permute.xlu0 %7255
        %7257 = vrot.lane.b32.xlu0 %v4006, 18
        %v7258 = vpop.permute.xlu0 %7257
        %7259 = vrot.lane.b32.xlu0 %v4014, 18
        %v7260 = vpop.permute.xlu0 %7259
        %7261 = vrot.lane.b32.xlu0 %v4022, 18
        %v7262 = vpop.permute.xlu0 %7261
        %7263 = vrot.lane.b32.xlu0 %v4007, 18
        %v7264 = vpop.permute.xlu0 %7263
        %7265 = vrot.lane.b32.xlu0 %v4015, 18
        %v7266 = vpop.permute.xlu0 %7265
        %7267 = vrot.lane.b32.xlu0 %v4023, 18
        %v7268 = vpop.permute.xlu0 %7267
        %7269 = vrot.lane.b32.xlu0 %v4008, 18
        %v7270 = vpop.permute.xlu0 %7269
        %7271 = vrot.lane.b32.xlu0 %v4016, 18
        %v7272 = vpop.permute.xlu0 %7271
        %7273 = vrot.lane.b32.xlu0 %v4024, 18
        %v7274 = vpop.permute.xlu0 %7273
        %7275 = vrot.lane.b32.xlu0 %v4009, 18
        %v7276 = vpop.permute.xlu0 %7275
        %7277 = vrot.lane.b32.xlu0 %v4017, 18
        %v7278 = vpop.permute.xlu0 %7277
        %7279 = vrot.lane.b32.xlu0 %v4025, 18
        %v7280 = vpop.permute.xlu0 %7279
        %v7281 = vsel %vm3653, %v7270, %v7276
        %v7282 = vsel %vm3653, %v7272, %v7278
        %v7283 = vsel %vm3653, %v7274, %v7280
        %v7284 = vsel %vm3653, %v7264, %v7270
        %v7285 = vsel %vm3653, %v7266, %v7272
        %v7286 = vsel %vm3653, %v7268, %v7274
        %v7287 = vsel %vm3653, %v7258, %v7264
        %v7288 = vsel %vm3653, %v7260, %v7266
        %v7289 = vsel %vm3653, %v7262, %v7268
        %v7290 = vsel %vm3653, %v7252, %v7258
        %v7291 = vsel %vm3653, %v7254, %v7260
        %v7292 = vsel %vm3653, %v7256, %v7262
        %v7293 = vsel %vm3653, %v7246, %v7252
        %v7294 = vsel %vm3653, %v7248, %v7254
        %v7295 = vsel %vm3653, %v7250, %v7256
        %v7296 = vsel %vm3653, %v7240, %v7246
        %v7297 = vsel %vm3653, %v7242, %v7248
        %v7298 = vsel %vm3653, %v7244, %v7250
        %v7299 = vsel %vm3653, %v7234, %v7240
        %v7300 = vsel %vm3653, %v7236, %v7242
        %v7301 = vsel %vm3653, %v7238, %v7244
        %v7302 = vsel %vm3653, %v7276, %v7234
        %v7303 = vsel %vm3653, %v7278, %v7236
        %v7304 = vsel %vm3653, %v7280, %v7238
        %7305 = vset.pattern.permute.xlu0 25
        %7306 = vperm.xlu0 %7305, %v368
        %v7307 = vpop.permute.xlu0 %7306
        %7309 = vset.pattern.permute.xlu0 25
        %7310 = vperm.xlu0 %7309, %v369
        %v7311 = vpop.permute.xlu0 %7310
        %7313 = vset.pattern.permute.xlu0 25
        %7314 = vperm.xlu0 %7313, %v370
        %v7315 = vpop.permute.xlu0 %7314
        %v7317 = vmul.f32 %v7299, %v7307
        %v7318 = vmul.f32 %v7296, %v7307
        %v7319 = vmul.f32 %v7293, %v7307
        %v7320 = vmul.f32 %v7290, %v7307
        %v7321 = vmul.f32 %v7287, %v7307
        %v7322 = vmul.f32 %v7284, %v7307
        %v7323 = vmul.f32 %v7281, %v7307
        %v7324 = vmul.f32 %v7302, %v7307
        %v7325 = vmul.f32 %v7300, %v7311
        %v7326 = vmul.f32 %v7297, %v7311
        %v7327 = vmul.f32 %v7294, %v7311
        %v7328 = vmul.f32 %v7291, %v7311
        %v7329 = vmul.f32 %v7288, %v7311
        %v7330 = vmul.f32 %v7285, %v7311
        %v7331 = vmul.f32 %v7282, %v7311
        %v7332 = vmul.f32 %v7303, %v7311
        %v7333 = vmul.f32 %v7301, %v7315
        %v7334 = vmul.f32 %v7298, %v7315
        %v7335 = vmul.f32 %v7295, %v7315
        %v7336 = vmul.f32 %v7292, %v7315
        %v7337 = vmul.f32 %v7289, %v7315
        %v7338 = vmul.f32 %v7286, %v7315
        %v7339 = vmul.f32 %v7283, %v7315
        %v7340 = vmul.f32 %v7304, %v7315
        %v7341 = vadd.f32 %v7209, %v7317
        %v7342 = vadd.f32 %v7210, %v7318
        %v7343 = vadd.f32 %v7211, %v7319
        %v7344 = vadd.f32 %v7212, %v7320
        %v7345 = vadd.f32 %v7213, %v7321
        %v7346 = vadd.f32 %v7214, %v7322
        %v7347 = vadd.f32 %v7215, %v7323
        %v7348 = vadd.f32 %v7216, %v7324
        %v7349 = vadd.f32 %v7217, %v7325
        %v7350 = vadd.f32 %v7218, %v7326
        %v7351 = vadd.f32 %v7219, %v7327
        %v7352 = vadd.f32 %v7220, %v7328
        %v7353 = vadd.f32 %v7221, %v7329
        %v7354 = vadd.f32 %v7222, %v7330
        %v7355 = vadd.f32 %v7223, %v7331
        %v7356 = vadd.f32 %v7224, %v7332
        %v7357 = vadd.f32 %v7225, %v7333
        %v7358 = vadd.f32 %v7226, %v7334
        %v7359 = vadd.f32 %v7227, %v7335
        %v7360 = vadd.f32 %v7228, %v7336
        %v7361 = vadd.f32 %v7229, %v7337
        %v7362 = vadd.f32 %v7230, %v7338
        %v7363 = vadd.f32 %v7231, %v7339
        %v7364 = vadd.f32 %v7232, %v7340
        %7365 = vrot.lane.b32.xlu0 %v4002, 17
        %v7366 = vpop.permute.xlu0 %7365
        %7367 = vrot.lane.b32.xlu0 %v4010, 17
        %v7368 = vpop.permute.xlu0 %7367
        %7369 = vrot.lane.b32.xlu0 %v4018, 17
        %v7370 = vpop.permute.xlu0 %7369
        %7371 = vrot.lane.b32.xlu0 %v4003, 17
        %v7372 = vpop.permute.xlu0 %7371
        %7373 = vrot.lane.b32.xlu0 %v4011, 17
        %v7374 = vpop.permute.xlu0 %7373
        %7375 = vrot.lane.b32.xlu0 %v4019, 17
        %v7376 = vpop.permute.xlu0 %7375
        %7377 = vrot.lane.b32.xlu0 %v4004, 17
        %v7378 = vpop.permute.xlu0 %7377
        %7379 = vrot.lane.b32.xlu0 %v4012, 17
        %v7380 = vpop.permute.xlu0 %7379
        %7381 = vrot.lane.b32.xlu0 %v4020, 17
        %v7382 = vpop.permute.xlu0 %7381
        %7383 = vrot.lane.b32.xlu0 %v4005, 17
        %v7384 = vpop.permute.xlu0 %7383
        %7385 = vrot.lane.b32.xlu0 %v4013, 17
        %v7386 = vpop.permute.xlu0 %7385
        %7387 = vrot.lane.b32.xlu0 %v4021, 17
        %v7388 = vpop.permute.xlu0 %7387
        %7389 = vrot.lane.b32.xlu0 %v4006, 17
        %v7390 = vpop.permute.xlu0 %7389
        %7391 = vrot.lane.b32.xlu0 %v4014, 17
        %v7392 = vpop.permute.xlu0 %7391
        %7393 = vrot.lane.b32.xlu0 %v4022, 17
        %v7394 = vpop.permute.xlu0 %7393
        %7395 = vrot.lane.b32.xlu0 %v4007, 17
        %v7396 = vpop.permute.xlu0 %7395
        %7397 = vrot.lane.b32.xlu0 %v4015, 17
        %v7398 = vpop.permute.xlu0 %7397
        %7399 = vrot.lane.b32.xlu0 %v4023, 17
        %v7400 = vpop.permute.xlu0 %7399
        %7401 = vrot.lane.b32.xlu0 %v4008, 17
        %v7402 = vpop.permute.xlu0 %7401
        %7403 = vrot.lane.b32.xlu0 %v4016, 17
        %v7404 = vpop.permute.xlu0 %7403
        %7405 = vrot.lane.b32.xlu0 %v4024, 17
        %v7406 = vpop.permute.xlu0 %7405
        %7407 = vrot.lane.b32.xlu0 %v4009, 17
        %v7408 = vpop.permute.xlu0 %7407
        %7409 = vrot.lane.b32.xlu0 %v4017, 17
        %v7410 = vpop.permute.xlu0 %7409
        %7411 = vrot.lane.b32.xlu0 %v4025, 17
        %v7412 = vpop.permute.xlu0 %7411
        %v7413 = vsel %vm3786, %v7402, %v7408
        %v7414 = vsel %vm3786, %v7404, %v7410
        %v7415 = vsel %vm3786, %v7406, %v7412
        %v7416 = vsel %vm3786, %v7396, %v7402
        %v7417 = vsel %vm3786, %v7398, %v7404
        %v7418 = vsel %vm3786, %v7400, %v7406
        %v7419 = vsel %vm3786, %v7390, %v7396
        %v7420 = vsel %vm3786, %v7392, %v7398
        %v7421 = vsel %vm3786, %v7394, %v7400
        %v7422 = vsel %vm3786, %v7384, %v7390
        %v7423 = vsel %vm3786, %v7386, %v7392
        %v7424 = vsel %vm3786, %v7388, %v7394
        %v7425 = vsel %vm3786, %v7378, %v7384
        %v7426 = vsel %vm3786, %v7380, %v7386
        %v7427 = vsel %vm3786, %v7382, %v7388
        %v7428 = vsel %vm3786, %v7372, %v7378
        %v7429 = vsel %vm3786, %v7374, %v7380
        %v7430 = vsel %vm3786, %v7376, %v7382
        %v7431 = vsel %vm3786, %v7366, %v7372
        %v7432 = vsel %vm3786, %v7368, %v7374
        %v7433 = vsel %vm3786, %v7370, %v7376
        %v7434 = vsel %vm3786, %v7408, %v7366
        %v7435 = vsel %vm3786, %v7410, %v7368
        %v7436 = vsel %vm3786, %v7412, %v7370
        %7437 = vset.pattern.permute.xlu0 26
        %7438 = vperm.xlu0 %7437, %v368
        %v7439 = vpop.permute.xlu0 %7438
        %7441 = vset.pattern.permute.xlu0 26
        %7442 = vperm.xlu0 %7441, %v369
        %v7443 = vpop.permute.xlu0 %7442
        %7445 = vset.pattern.permute.xlu0 26
        %7446 = vperm.xlu0 %7445, %v370
        %v7447 = vpop.permute.xlu0 %7446
        %v7449 = vmul.f32 %v7431, %v7439
        %v7450 = vmul.f32 %v7428, %v7439
        %v7451 = vmul.f32 %v7425, %v7439
        %v7452 = vmul.f32 %v7422, %v7439
        %v7453 = vmul.f32 %v7419, %v7439
        %v7454 = vmul.f32 %v7416, %v7439
        %v7455 = vmul.f32 %v7413, %v7439
        %v7456 = vmul.f32 %v7434, %v7439
        %v7457 = vmul.f32 %v7432, %v7443
        %v7458 = vmul.f32 %v7429, %v7443
        %v7459 = vmul.f32 %v7426, %v7443
        %v7460 = vmul.f32 %v7423, %v7443
        %v7461 = vmul.f32 %v7420, %v7443
        %v7462 = vmul.f32 %v7417, %v7443
        %v7463 = vmul.f32 %v7414, %v7443
        %v7464 = vmul.f32 %v7435, %v7443
        %v7465 = vmul.f32 %v7433, %v7447
        %v7466 = vmul.f32 %v7430, %v7447
        %v7467 = vmul.f32 %v7427, %v7447
        %v7468 = vmul.f32 %v7424, %v7447
        %v7469 = vmul.f32 %v7421, %v7447
        %v7470 = vmul.f32 %v7418, %v7447
        %v7471 = vmul.f32 %v7415, %v7447
        %v7472 = vmul.f32 %v7436, %v7447
        %v7473 = vadd.f32 %v7341, %v7449
        %v7474 = vadd.f32 %v7342, %v7450
        %v7475 = vadd.f32 %v7343, %v7451
        %v7476 = vadd.f32 %v7344, %v7452
        %v7477 = vadd.f32 %v7345, %v7453
        %v7478 = vadd.f32 %v7346, %v7454
        %v7479 = vadd.f32 %v7347, %v7455
        %v7480 = vadd.f32 %v7348, %v7456
        %v7481 = vadd.f32 %v7349, %v7457
        %v7482 = vadd.f32 %v7350, %v7458
        %v7483 = vadd.f32 %v7351, %v7459
        %v7484 = vadd.f32 %v7352, %v7460
        %v7485 = vadd.f32 %v7353, %v7461
        %v7486 = vadd.f32 %v7354, %v7462
        %v7487 = vadd.f32 %v7355, %v7463
        %v7488 = vadd.f32 %v7356, %v7464
        %v7489 = vadd.f32 %v7357, %v7465
        %v7490 = vadd.f32 %v7358, %v7466
        %v7491 = vadd.f32 %v7359, %v7467
        %v7492 = vadd.f32 %v7360, %v7468
        %v7493 = vadd.f32 %v7361, %v7469
        %v7494 = vadd.f32 %v7362, %v7470
        %v7495 = vadd.f32 %v7363, %v7471
        %v7496 = vadd.f32 %v7364, %v7472
        %v7497 = vld [vmem:[#allocation10] sm:$0xff]
        %v7498 = vld [vmem:[#allocation10 + $0x8] sm:$0xff]
        %v7499 = vld [vmem:[#allocation10 + $0x10] sm:$0xff]
        %7501 = vset.pattern.permute.xlu0 0
        %7502 = vperm.xlu0 %7501, %v7497
        %v7503 = vpop.permute.xlu0 %7502
        %7506 = vset.pattern.permute.xlu0 0
        %7507 = vperm.xlu0 %7506, %v7498
        %v7508 = vpop.permute.xlu0 %7507
        %7511 = vset.pattern.permute.xlu0 0
        %7512 = vperm.xlu0 %7511, %v7499
        %v7513 = vpop.permute.xlu0 %7512
        %v7515 = vadd.f32 %v7473, %v7503
        %v7516 = vadd.f32 %v7474, %v7503
        %v7517 = vadd.f32 %v7475, %v7503
        %v7518 = vadd.f32 %v7476, %v7503
        %v7519 = vadd.f32 %v7477, %v7503
        %v7520 = vadd.f32 %v7478, %v7503
        %v7521 = vadd.f32 %v7479, %v7503
        %v7522 = vadd.f32 %v7480, %v7503
        %v7523 = vadd.f32 %v7481, %v7508
        %v7524 = vadd.f32 %v7482, %v7508
        %v7525 = vadd.f32 %v7483, %v7508
        %v7526 = vadd.f32 %v7484, %v7508
        %v7527 = vadd.f32 %v7485, %v7508
        %v7528 = vadd.f32 %v7486, %v7508
        %v7529 = vadd.f32 %v7487, %v7508
        %v7530 = vadd.f32 %v7488, %v7508
        %v7531 = vadd.f32 %v7489, %v7513
        %v7532 = vadd.f32 %v7490, %v7513
        %v7533 = vadd.f32 %v7491, %v7513
        %v7534 = vadd.f32 %v7492, %v7513
        %v7535 = vadd.f32 %v7493, %v7513
        %v7536 = vadd.f32 %v7494, %v7513
        %v7537 = vadd.f32 %v7495, %v7513
        %v7538 = vadd.f32 %v7496, %v7513
        %v7539 = vmul.f32 %v7515, 0.1
        %v7540 = vmul.f32 %v7516, 0.1
        %v7541 = vmul.f32 %v7517, 0.1
        %v7542 = vmul.f32 %v7518, 0.1
        %v7543 = vmul.f32 %v7519, 0.1
        %v7544 = vmul.f32 %v7520, 0.1
        %v7545 = vmul.f32 %v7521, 0.1
        %v7546 = vmul.f32 %v7522, 0.1
        %v7547 = vmul.f32 %v7523, 0.1
        %v7548 = vmul.f32 %v7524, 0.1
        %v7549 = vmul.f32 %v7525, 0.1
        %v7550 = vmul.f32 %v7526, 0.1
        %v7551 = vmul.f32 %v7527, 0.1
        %v7552 = vmul.f32 %v7528, 0.1
        %v7553 = vmul.f32 %v7529, 0.1
        %v7554 = vmul.f32 %v7530, 0.1
        %v7555 = vmul.f32 %v7531, 0.1
        %v7556 = vmul.f32 %v7532, 0.1
        %v7557 = vmul.f32 %v7533, 0.1
        %v7558 = vmul.f32 %v7534, 0.1
        %v7559 = vmul.f32 %v7535, 0.1
        %v7560 = vmul.f32 %v7536, 0.1
        %v7561 = vmul.f32 %v7537, 0.1
        %v7562 = vmul.f32 %v7538, 0.1
        %v7563 = vmax.f32 %v7515, %v7539
        %v7564 = vmax.f32 %v7516, %v7540
        %v7565 = vmax.f32 %v7517, %v7541
        %v7566 = vmax.f32 %v7518, %v7542
        %v7567 = vmax.f32 %v7519, %v7543
        %v7568 = vmax.f32 %v7520, %v7544
        %v7569 = vmax.f32 %v7521, %v7545
        %v7570 = vmax.f32 %v7522, %v7546
        %v7571 = vmax.f32 %v7523, %v7547
        %v7572 = vmax.f32 %v7524, %v7548
        %v7573 = vmax.f32 %v7525, %v7549
        %v7574 = vmax.f32 %v7526, %v7550
        %v7575 = vmax.f32 %v7527, %v7551
        %v7576 = vmax.f32 %v7528, %v7552
        %v7577 = vmax.f32 %v7529, %v7553
        %v7578 = vmax.f32 %v7530, %v7554
        %v7579 = vmax.f32 %v7531, %v7555
        %v7580 = vmax.f32 %v7532, %v7556
        %v7581 = vmax.f32 %v7533, %v7557
        %v7582 = vmax.f32 %v7534, %v7558
        %v7583 = vmax.f32 %v7535, %v7559
        %v7584 = vmax.f32 %v7536, %v7560
        %v7585 = vmax.f32 %v7537, %v7561
        %v7586 = vmax.f32 %v7538, %v7562
        %7587 = vst [vmem:[%s340] sm:$0xff] %v7563
        %7588 = vst [vmem:[%s340 + $0x8] sm:$0xff] %v7564
        %7589 = vst [vmem:[%s340 + $0x10] sm:$0xff] %v7565
        %7590 = vst [vmem:[%s340 + $0x18] sm:$0xff] %v7566
        %7591 = vst [vmem:[%s340 + $0x20] sm:$0xff] %v7567
        %7592 = vst [vmem:[%s340 + $0x28] sm:$0xff] %v7568
        %7593 = vst [vmem:[%s340 + $0x30] sm:$0xff] %v7569
        %7594 = vst [vmem:[%s340 + $0x38] sm:$0xff] %v7570
        %7595 = vst [vmem:[%s340 + $0x40] sm:$0xff] %v7571
        %7596 = vst [vmem:[%s340 + $0x48] sm:$0xff] %v7572
        %7597 = vst [vmem:[%s340 + $0x50] sm:$0xff] %v7573
        %7598 = vst [vmem:[%s340 + $0x58] sm:$0xff] %v7574
        %7599 = vst [vmem:[%s340 + $0x60] sm:$0xff] %v7575
        %7600 = vst [vmem:[%s340 + $0x68] sm:$0xff] %v7576
        %7601 = vst [vmem:[%s340 + $0x70] sm:$0xff] %v7577
        %7602 = vst [vmem:[%s340 + $0x78] sm:$0xff] %v7578
        %7603 = vst [vmem:[%s340 + $0x80] sm:$0xff] %v7579
        %7604 = vst [vmem:[%s340 + $0x88] sm:$0xff] %v7580
        %7605 = vst [vmem:[%s340 + $0x90] sm:$0xff] %v7581
        %7606 = vst [vmem:[%s340 + $0x98] sm:$0xff] %v7582
        %7607 = vst [vmem:[%s340 + $0xa0] sm:$0xff] %v7583
        %7608 = vst [vmem:[%s340 + $0xa8] sm:$0xff] %v7584
        %7609 = vst [vmem:[%s340 + $0xb0] sm:$0xff] %v7585
        %7610 = vst [vmem:[%s340 + $0xb8] sm:$0xff] %v7586
        %s7611 = sand.u32 %s165, 1
        %s7612 = scalar_lea.sflag [#allocation4], %s7611
        %s7613 = sand.u32 %s165, 1
        %s7614 = smul.addr %s7613, 192
        %s7615 = scalar_lea.vmem [#allocation13], %s7614
        // Predicated region
        $region69: #{pvb_forward.2} parent=43 // pred_check
          %p7616 = pneg %p175
        $region70: #{pvb_forward.2} parent=43 // pred_check_branch
          %7618 = sbr.rel (%p7616) target = $region72
        $region71: #{pvb_forward.2} parent=43 // pred_region
          %s7620 = ssub.s32 3072, 3072
          %7621 = vsyncadd %s7612, %s7620
          %s7622 = smul.addr %s26, 24
          %s7623 = smul.addr %s7622, 128
          %s7624 = scalar_lea.hbm %s6, %s7623
          %s7625 = sshll.u32 %s7615, 4
          %s7626 = int_to_ptr.vmem [resolvable:$true] %s7625
          %7631 = dma.vmem_to_hbm [thread:$0]  %s7626, 3072, %s7624, %s7612, 1024, 1024, 64
        $region72: #{pvb_forward.2} parent=43 // pred_fallthru
          _
      $region44: #{pvb_forward.2} parent=5 // pred_fallthru
        _
      %p7632 = scmp.le.s32.totalorder 2, %s21
      // Predicated region
      $region73: #{pvb_forward.2} parent=5 // pred_check
        %p7633 = pneg %p7632
      $region74: #{pvb_forward.2} parent=5 // pred_check_branch
        %7635 = sbr.rel (%p7633) target = $region76
      $region75: #{pvb_forward.2} parent=5 // pred_region
        %s7636 = ssub.s32 %s21, 2
        // Predicated region
        $region77: #{pvb_forward.2} parent=75 // pred_check
          %p7637 = pneg %p181
        $region78: #{pvb_forward.2} parent=75 // pred_check_branch
          %7639 = sbr.rel (%p7637) target = $region80
        $region79: #{pvb_forward.2} parent=75 // pred_region
          %s7640 = sand.u32 %s166, 1
          %s7641 = scalar_lea.sflag [#allocation4], %s7640
          %s7642 = sand.u32 %s166, 1
          %s7643 = smul.addr %s7642, 192
          %s7644 = scalar_lea.vmem [#allocation13], %s7643
          %7645 = dma.done %s7641, 3072
        $region80: #{pvb_forward.2} parent=75 // pred_fallthru
          _
      $region76: #{pvb_forward.2} parent=5 // pred_fallthru
        _
    $region6: #{pvb_forward.2} parent=1 // loop_footer
      %s25 = sadd.s32 1, %s21
    $region7: #{pvb_forward.2} parent=1 // loop_footer_branch
      %20 = sbr.rel target = $region3
    $region8: #{pvb_forward.2} parent=1 // loop_exit
      _
    %7646 = vsyncpa [#allocation3], 1
    %s7647 = scalar_lea.sflag [#allocation3], 1
    %7648 = vsyncpa %s7647, 1
    %7649 = vsyncpa [#allocation6], 1
    %7650 = vsyncpa [#allocation9], 1
    %7651 = vsyncpa [#allocation12], 1
    %7652 = vsyncpa [#allocation4], 1
    %s7653 = scalar_lea.sflag [#allocation4], 1
    %7654 = vsyncpa %s7653, 1

</llo_original>
